<compile_context>
chip_gen: v7x
topology: tpu7x:2x2x1
jax: 0.10.0
libtpu: 0.0.40
codegen_flags: <defaults>
</compile_context>

<pallas_src>
import functools
import math

import jax
import jax.numpy as jnp
from jax.experimental import pallas as pl
from jax.experimental.pallas import tpu as pltpu


def _round_up(x, m):
    return ((x + m - 1) // m) * m


# ---------------------------------------------------------------------------
# Fused whole-network kernel factory
# ---------------------------------------------------------------------------
def _make_dncnn_kernel(c0p, features, n_mid, H, W, M0):
    Hp, Wp = H + 2, W + 2
    Lp = Hp * Wp                       # padded spatial grid, flattened on lanes
    Ltot = Lp + 2 * M0                 # + zero margins so tap slices stay in range
    # flat-lane offset of each of the 9 conv taps in the padded grid
    taps = [(dy - 1) * Wp + (dx - 1) for dy in range(3) for dx in range(3)]

    def kernel(x_ref, mask_ref, w0_ref, wm_ref, sm_ref, bm_ref, wl_ref,
               o_ref, p0_ref, pf_ref, act_a, act_b):
        # x_ref  : (1, c0p, Ltot) bf16   zero-padded, lane-flattened input
        # mask   : (1, Lp) f32           1.0 on interior pixels, 0.0 on halo
        # w0_ref : (F, 9*c0p)  bf16      first-layer weight matrix
        # wm_ref : (n_mid, F, 9*F) bf16  middle-layer weight matrices
        # sm/bm  : (n_mid, F, 1) f32     folded BN scale / bias
        # wl_ref : (C, 9*F) bf16         last-layer weight matrix
        # o_ref  : (1, C, Lp) f32        output over the padded grid
        # p0_ref : (9*c0p, Lp) bf16      im2col patch scratch, layer 0
        # pf_ref : (9*F, Lp)   bf16      im2col patch scratch, other layers
        # act_a/b: (F, Ltot)   bf16      activation ping-pong buffers
        mask = mask_ref[...]                                   # (1, Lp) f32

        def build_patch(src_read, cin, patch_ref):
            # im2col: stack the 9 shifted views along the contraction dim.
            for t, d in enumerate(taps):
                patch_ref[t * cin:(t + 1) * cin, :] = src_read(d)

        def leaky(y):                                          # f32 LeakyReLU
            return jnp.where(y > 0, y, jnp.float32(0.01) * y)

        # Zero the activation buffers once: margins and halo lanes stay zero,
        # which implements the conv zero-padding for every fused layer.
        act_a[...] = jnp.zeros((features, Ltot), jnp.bfloat16)
        act_b[...] = jnp.zeros((features, Ltot), jnp.bfloat16)

        # ---- layer 0: channels -> features, conv + LeakyReLU (no BN) -------
        build_patch(lambda d: x_ref[0, :, pl.ds(M0 + d, Lp)], c0p, p0_ref)
        y = jnp.dot(w0_ref[...], p0_ref[...],
                    preferred_element_type=jnp.float32)        # (F, Lp) f32
        y = leaky(y)
        act_a[:, M0:M0 + Lp] = (y * mask).astype(jnp.bfloat16)

        # ---- middle layers: conv + folded BN + LeakyReLU (unrolled) --------
        src, dst = act_a, act_b
        for li in range(n_mid):
            build_patch(lambda d, s=src: s[:, pl.ds(M0 + d, Lp)],
                        features, pf_ref)
            y = jnp.dot(wm_ref[li], pf_ref[...],
                        preferred_element_type=jnp.float32)    # (F, Lp) f32
            y = y * sm_ref[li] + bm_ref[li]                    # BN in f32
            y = leaky(y)
            dst[:, M0:M0 + Lp] = (y * mask).astype(jnp.bfloat16)
            src, dst = dst, src

        # ---- last layer: features -> channels, conv only -------------------
        build_patch(lambda d, s=src: s[:, pl.ds(M0 + d, Lp)], features, pf_ref)
        y = jnp.dot(wl_ref[...], pf_ref[...],
                    preferred_element_type=jnp.float32)        # (C, Lp) f32
        o_ref[0] = y.astype(o_ref.dtype)

    return kernel


# ---------------------------------------------------------------------------
# Parameter construction (deterministic, matches DnCNN.__init__ shapes)
# ---------------------------------------------------------------------------
def init_dncnn_params(key, channels, num_of_layers=17, features=64):
    assert num_of_layers >= 3
    eps = 1e-5
    keys = jax.random.split(key, num_of_layers)

    # First conv: channels -> features (HWIO), LeakyReLU, no BN, no bias.
    w0 = jax.random.normal(keys[0], (3, 3, channels, features),
                           jnp.float32) * (1.0 / math.sqrt(9 * channels))

    # Middle convs: features -> features, BN (eval-mode folded), LeakyReLU.
    w_mid, scale_mid, bias_mid = [], [], []
    for i in range(1, num_of_layers - 1):
        k1, k2, k3, k4 = jax.random.split(keys[i], 4)
        w = jax.random.normal(k1, (3, 3, features, features),
                              jnp.float32) * (1.0 / math.sqrt(9 * features))
        gamma = 1.0 + 0.1 * jax.random.normal(k2, (features,), jnp.float32)
        beta = 0.1 * jax.random.normal(k3, (features,), jnp.float32)
        run_mean = 0.05 * jax.random.normal(k4, (features,), jnp.float32)
        run_var = jnp.ones((features,), jnp.float32)
        scale = gamma / jnp.sqrt(run_var + eps)     # eval-mode BN folded
        bias = beta - run_mean * scale
        w_mid.append(w)
        scale_mid.append(scale)
        bias_mid.append(bias)

    # Last conv: features -> channels, no BN, no activation.
    w_last = jax.random.normal(keys[-1], (3, 3, features, channels),
                               jnp.float32) * (1.0 / math.sqrt(9 * features))

    return dict(
        w0=w0,                               # (3, 3, C, F)
        w_mid=jnp.stack(w_mid),              # (n_mid, 3, 3, F, F)
        scale_mid=jnp.stack(scale_mid),      # (n_mid, F)
        bias_mid=jnp.stack(bias_mid),        # (n_mid, F)
        w_last=w_last,                       # (3, 3, F, C)
    )


# ---------------------------------------------------------------------------
# DnCNN forward (input/output NCHW to match the PyTorch module)
# ---------------------------------------------------------------------------
def dncnn_forward(x_nchw, params, tanh_out=False, built_in_residual=False):
    N, C, H, W = x_nchw.shape
    features = params["w0"].shape[-1]
    n_mid = params["w_mid"].shape[0]

    Hp, Wp = H + 2, W + 2
    Lp = Hp * Wp
    M0 = _round_up(max(128, W + 3), 128)      # lane margin (>= Wp+1), aligned
    Ltot = Lp + 2 * M0
    c0p = _round_up(max(C, 16), 16)           # pad layer-0 Cin for aligned bf16 slots

    # ---- pack parameters into (Cout, 9*Cin) matmul form, bf16 ---------------
    w0 = jnp.pad(params["w0"], ((0, 0), (0, 0), (0, c0p - C), (0, 0)))
    w0_mat = jnp.transpose(w0, (3, 0, 1, 2)).reshape(
        features, 9 * c0p).astype(jnp.bfloat16)
    wm_mat = jnp.transpose(params["w_mid"], (0, 4, 1, 2, 3)).reshape(
        n_mid, features, 9 * features).astype(jnp.bfloat16)
    wl_mat = jnp.transpose(params["w_last"], (3, 0, 1, 2)).reshape(
        C, 9 * features).astype(jnp.bfloat16)
    sm = params["scale_mid"].reshape(n_mid, features, 1).astype(jnp.float32)
    bm = params["bias_mid"].reshape(n_mid, features, 1).astype(jnp.float32)

    # ---- input: NCHW -> padded, lane-flattened (N, c0p, Ltot), bf16 ---------
    xp = jnp.pad(x_nchw, ((0, 0), (0, c0p - C), (1, 1), (1, 1)))     # one pad, total
    x_flat = jnp.pad(xp.reshape(N, c0p, Lp), ((0, 0), (0, 0), (M0, M0)))
    x_flat = x_flat.astype(jnp.bfloat16)

    # interior mask over the padded (Hp, Wp) grid, flattened along lanes
    hh = jnp.arange(Hp)[:, None]
    ww = jnp.arange(Wp)[None, :]
    interior = (hh >= 1) & (hh <= H) & (ww >= 1) & (ww <= W)
    mask = interior.reshape(1, Lp).astype(jnp.float32)

    # VMEM budget sanity check for the fully fused, VMEM-resident path.
    vmem_est = (2 * features * Ltot * 2            # activation ping-pong (bf16)
                + 9 * features * Lp * 2            # im2col patch
                + 9 * c0p * Lp * 2                 # layer-0 patch
                + n_mid * features * 9 * features * 2  # middle weights
                + 2 * c0p * Ltot * 2               # input block (double-buffered)
                + 2 * C * Lp * 4)                  # output block (double-buffered)
    if vmem_est > 48 * 1024 * 1024:
        # TODO(synk): add a spatially-tiled per-layer path (halo BlockSpecs)
        # for images too large to keep the whole activation resident in VMEM.
        raise NotImplementedError("image too large for the fused VMEM-resident path")

    kernel = _make_dncnn_kernel(c0p, features, n_mid, H, W, M0)
    out_flat = pl.pallas_call(
        kernel,
        out_shape=jax.ShapeDtypeStruct((N, C, Lp), jnp.float32),
        grid=(N,),
        in_specs=[
            pl.BlockSpec((1, c0p, Ltot), lambda n: (n, 0, 0)),
            pl.BlockSpec((1, Lp), lambda n: (0, 0)),
            pl.BlockSpec((features, 9 * c0p), lambda n: (0, 0)),
            pl.BlockSpec((n_mid, features, 9 * features), lambda n: (0, 0, 0)),
            pl.BlockSpec((n_mid, features, 1), lambda n: (0, 0, 0)),
            pl.BlockSpec((n_mid, features, 1), lambda n: (0, 0, 0)),
            pl.BlockSpec((C, 9 * features), lambda n: (0, 0)),
        ],
        out_specs=pl.BlockSpec((1, C, Lp), lambda n: (n, 0, 0)),
        scratch_shapes=[
            pltpu.VMEM((9 * c0p, Lp), jnp.bfloat16),       # layer-0 im2col patch
            pltpu.VMEM((9 * features, Lp), jnp.bfloat16),  # im2col patch (K = 9*F)
            pltpu.VMEM((features, Ltot), jnp.bfloat16),    # activation ping
            pltpu.VMEM((features, Ltot), jnp.bfloat16),    # activation pong
        ],
        compiler_params=pltpu.CompilerParams(
            dimension_semantics=("parallel",),
            vmem_limit_bytes=64 * 1024 * 1024),
    )(x_flat, mask, w0_mat, wm_mat, sm, bm, wl_mat)

    # extract the interior of the padded grid -> (N, C, H, W)
    out = out_flat.reshape(N, C, Hp, Wp)[:, :, 1:H + 1, 1:W + 1]
    if built_in_residual:
        out = x_nchw - out
    if tanh_out:
        out = jnp.tanh(out)
    return out


if __name__ == "__main__":
    key = jax.random.PRNGKey(0)
    k_param, k_input = jax.random.split(key)

    channels = 4
    num_of_layers = 5          # small stack for the example (module default is 17)
    N, H, W = 2, 16, 16

    params = init_dncnn_params(k_param, channels, num_of_layers=num_of_layers)
    x = jax.random.normal(k_input, (N, channels, H, W), jnp.float32)

    fwd = jax.jit(functools.partial(dncnn_forward,
                                    tanh_out=False, built_in_residual=False))
    out = fwd(x, params)
    jax.block_until_ready(out)
    assert out.shape == (N, channels, H, W)
    print("KERNEL_OK")
</pallas_src>

<mosaic_0001>
module attributes {stable_mosaic.version = 11 : i64} {
  func.func @kernel(%arg0: i32, %arg1: memref<1x16x580xbf16, #tpu.memory_space<vmem>>, %arg2: memref<1x324xf32, #tpu.memory_space<vmem>>, %arg3: memref<64x144xbf16, #tpu.memory_space<vmem>>, %arg4: memref<3x64x576xbf16, #tpu.memory_space<vmem>>, %arg5: memref<3x64x1xf32, #tpu.memory_space<vmem>>, %arg6: memref<3x64x1xf32, #tpu.memory_space<vmem>>, %arg7: memref<4x576xbf16, #tpu.memory_space<vmem>>, %arg8: memref<1x4x324xf32, #tpu.memory_space<vmem>>, %arg9: memref<144x324xbf16, #tpu.memory_space<vmem>>, %arg10: memref<576x324xbf16, #tpu.memory_space<vmem>>, %arg11: memref<64x580xbf16, #tpu.memory_space<vmem>>, %arg12: memref<64x580xbf16, #tpu.memory_space<vmem>>) attributes {dimension_semantics = [#tpu.dimension_semantics<parallel>], iteration_bounds = array<i64: 2>, scalar_prefetch = 0 : i64, scratch_operands = 4 : i64, tpu.core_type = #tpu.core_type<tc>, window_params = [{transform_indices = @transform_0, window_bounds = array<i64: 1, 16, 580>}, {pipeline_mode = #tpu.pipeline_mode<synchronous>, transform_indices = @transform_1, window_bounds = array<i64: 1, 324>}, {pipeline_mode = #tpu.pipeline_mode<synchronous>, transform_indices = @transform_2, window_bounds = array<i64: 64, 144>}, {pipeline_mode = #tpu.pipeline_mode<synchronous>, transform_indices = @transform_3, window_bounds = array<i64: 3, 64, 576>}, {pipeline_mode = #tpu.pipeline_mode<synchronous>, transform_indices = @transform_4, window_bounds = array<i64: 3, 64, 1>}, {pipeline_mode = #tpu.pipeline_mode<synchronous>, transform_indices = @transform_5, window_bounds = array<i64: 3, 64, 1>}, {pipeline_mode = #tpu.pipeline_mode<synchronous>, transform_indices = @transform_6, window_bounds = array<i64: 4, 576>}, {transform_indices = @transform_7, window_bounds = array<i64: 1, 4, 324>}]} {
    %c0 = arith.constant 0 : index
    %c0_0 = arith.constant 0 : index
    %0 = vector.load %arg2[%c0, %c0_0] : memref<1x324xf32, #tpu.memory_space<vmem>>, vector<1x324xf32>
    %cst = arith.constant 0.000000e+00 : bf16
    %1 = vector.broadcast %cst : bf16 to vector<64x580xbf16>
    %c0_1 = arith.constant 0 : index
    %c0_2 = arith.constant 0 : index
    %2 = vector.load %arg11[%c0_1, %c0_2] : memref<64x580xbf16, #tpu.memory_space<vmem>>, vector<64x580xbf16>
    tpu.vector_store %arg11[%c0_1, %c0_2], %1 {strides = array<i32>} : memref<64x580xbf16, #tpu.memory_space<vmem>>, vector<64x580xbf16>,
    %cst_3 = arith.constant 0.000000e+00 : bf16
    %3 = vector.broadcast %cst_3 : bf16 to vector<64x580xbf16>
    %c0_4 = arith.constant 0 : index
    %c0_5 = arith.constant 0 : index
    %4 = vector.load %arg12[%c0_4, %c0_5] : memref<64x580xbf16, #tpu.memory_space<vmem>>, vector<64x580xbf16>
    tpu.vector_store %arg12[%c0_4, %c0_5], %3 {strides = array<i32>} : memref<64x580xbf16, #tpu.memory_space<vmem>>, vector<64x580xbf16>,
    %c0_6 = arith.constant 0 : index
    %c0_7 = arith.constant 0 : index
    %c109 = arith.constant 109 : index
    %5 = vector.load %arg1[%c0_6, %c0_7, %c109] : memref<1x16x580xbf16, #tpu.memory_space<vmem>>, vector<1x16x324xbf16>
    %6 = vector.shape_cast %5 : vector<1x16x324xbf16> to vector<16x324xbf16>
    %c0_8 = arith.constant 0 : index
    %c0_9 = arith.constant 0 : index
    %7 = vector.load %arg9[%c0_8, %c0_9] : memref<144x324xbf16, #tpu.memory_space<vmem>>, vector<16x324xbf16>
    tpu.vector_store %arg9[%c0_8, %c0_9], %6 {strides = array<i32>} : memref<144x324xbf16, #tpu.memory_space<vmem>>, vector<16x324xbf16>,
    %c0_10 = arith.constant 0 : index
    %c0_11 = arith.constant 0 : index
    %c110 = arith.constant 110 : index
    %8 = vector.load %arg1[%c0_10, %c0_11, %c110] : memref<1x16x580xbf16, #tpu.memory_space<vmem>>, vector<1x16x324xbf16>
    %9 = vector.shape_cast %8 : vector<1x16x324xbf16> to vector<16x324xbf16>
    %c16 = arith.constant 16 : index
    %c0_12 = arith.constant 0 : index
    %10 = vector.load %arg9[%c16, %c0_12] : memref<144x324xbf16, #tpu.memory_space<vmem>>, vector<16x324xbf16>
    tpu.vector_store %arg9[%c16, %c0_12], %9 {strides = array<i32>} : memref<144x324xbf16, #tpu.memory_space<vmem>>, vector<16x324xbf16>,
    %c0_13 = arith.constant 0 : index
    %c0_14 = arith.constant 0 : index
    %c111 = arith.constant 111 : index
    %11 = vector.load %arg1[%c0_13, %c0_14, %c111] : memref<1x16x580xbf16, #tpu.memory_space<vmem>>, vector<1x16x324xbf16>
    %12 = vector.shape_cast %11 : vector<1x16x324xbf16> to vector<16x324xbf16>
    %c32 = arith.constant 32 : index
    %c0_15 = arith.constant 0 : index
    %13 = vector.load %arg9[%c32, %c0_15] : memref<144x324xbf16, #tpu.memory_space<vmem>>, vector<16x324xbf16>
    tpu.vector_store %arg9[%c32, %c0_15], %12 {strides = array<i32>} : memref<144x324xbf16, #tpu.memory_space<vmem>>, vector<16x324xbf16>,
    %c0_16 = arith.constant 0 : index
    %c0_17 = arith.constant 0 : index
    %c127 = arith.constant 127 : index
    %14 = vector.load %arg1[%c0_16, %c0_17, %c127] : memref<1x16x580xbf16, #tpu.memory_space<vmem>>, vector<1x16x324xbf16>
    %15 = vector.shape_cast %14 : vector<1x16x324xbf16> to vector<16x324xbf16>
    %c48 = arith.constant 48 : index
    %c0_18 = arith.constant 0 : index
    %16 = vector.load %arg9[%c48, %c0_18] : memref<144x324xbf16, #tpu.memory_space<vmem>>, vector<16x324xbf16>
    tpu.vector_store %arg9[%c48, %c0_18], %15 {strides = array<i32>} : memref<144x324xbf16, #tpu.memory_space<vmem>>, vector<16x324xbf16>,
    %c0_19 = arith.constant 0 : index
    %c0_20 = arith.constant 0 : index
    %c128 = arith.constant 128 : index
    %17 = vector.load %arg1[%c0_19, %c0_20, %c128] : memref<1x16x580xbf16, #tpu.memory_space<vmem>>, vector<1x16x324xbf16>
    %18 = vector.shape_cast %17 : vector<1x16x324xbf16> to vector<16x324xbf16>
    %c64 = arith.constant 64 : index
    %c0_21 = arith.constant 0 : index
    %19 = vector.load %arg9[%c64, %c0_21] : memref<144x324xbf16, #tpu.memory_space<vmem>>, vector<16x324xbf16>
    tpu.vector_store %arg9[%c64, %c0_21], %18 {strides = array<i32>} : memref<144x324xbf16, #tpu.memory_space<vmem>>, vector<16x324xbf16>,
    %c0_22 = arith.constant 0 : index
    %c0_23 = arith.constant 0 : index
    %c129 = arith.constant 129 : index
    %20 = vector.load %arg1[%c0_22, %c0_23, %c129] : memref<1x16x580xbf16, #tpu.memory_space<vmem>>, vector<1x16x324xbf16>
    %21 = vector.shape_cast %20 : vector<1x16x324xbf16> to vector<16x324xbf16>
    %c80 = arith.constant 80 : index
    %c0_24 = arith.constant 0 : index
    %22 = vector.load %arg9[%c80, %c0_24] : memref<144x324xbf16, #tpu.memory_space<vmem>>, vector<16x324xbf16>
    tpu.vector_store %arg9[%c80, %c0_24], %21 {strides = array<i32>} : memref<144x324xbf16, #tpu.memory_space<vmem>>, vector<16x324xbf16>,
    %c0_25 = arith.constant 0 : index
    %c0_26 = arith.constant 0 : index
    %c145 = arith.constant 145 : index
    %23 = vector.load %arg1[%c0_25, %c0_26, %c145] : memref<1x16x580xbf16, #tpu.memory_space<vmem>>, vector<1x16x324xbf16>
    %24 = vector.shape_cast %23 : vector<1x16x324xbf16> to vector<16x324xbf16>
    %c96 = arith.constant 96 : index
    %c0_27 = arith.constant 0 : index
    %25 = vector.load %arg9[%c96, %c0_27] : memref<144x324xbf16, #tpu.memory_space<vmem>>, vector<16x324xbf16>
    tpu.vector_store %arg9[%c96, %c0_27], %24 {strides = array<i32>} : memref<144x324xbf16, #tpu.memory_space<vmem>>, vector<16x324xbf16>,
    %c0_28 = arith.constant 0 : index
    %c0_29 = arith.constant 0 : index
    %c146 = arith.constant 146 : index
    %26 = vector.load %arg1[%c0_28, %c0_29, %c146] : memref<1x16x580xbf16, #tpu.memory_space<vmem>>, vector<1x16x324xbf16>
    %27 = vector.shape_cast %26 : vector<1x16x324xbf16> to vector<16x324xbf16>
    %c112 = arith.constant 112 : index
    %c0_30 = arith.constant 0 : index
    %28 = vector.load %arg9[%c112, %c0_30] : memref<144x324xbf16, #tpu.memory_space<vmem>>, vector<16x324xbf16>
    tpu.vector_store %arg9[%c112, %c0_30], %27 {strides = array<i32>} : memref<144x324xbf16, #tpu.memory_space<vmem>>, vector<16x324xbf16>,
    %c0_31 = arith.constant 0 : index
    %c0_32 = arith.constant 0 : index
    %c147 = arith.constant 147 : index
    %29 = vector.load %arg1[%c0_31, %c0_32, %c147] : memref<1x16x580xbf16, #tpu.memory_space<vmem>>, vector<1x16x324xbf16>
    %30 = vector.shape_cast %29 : vector<1x16x324xbf16> to vector<16x324xbf16>
    %c128_33 = arith.constant 128 : index
    %c0_34 = arith.constant 0 : index
    %31 = vector.load %arg9[%c128_33, %c0_34] : memref<144x324xbf16, #tpu.memory_space<vmem>>, vector<16x324xbf16>
    tpu.vector_store %arg9[%c128_33, %c0_34], %30 {strides = array<i32>} : memref<144x324xbf16, #tpu.memory_space<vmem>>, vector<16x324xbf16>,
    %c0_35 = arith.constant 0 : index
    %c0_36 = arith.constant 0 : index
    %32 = vector.load %arg3[%c0_35, %c0_36] : memref<64x144xbf16, #tpu.memory_space<vmem>>, vector<64x144xbf16>
    %c0_37 = arith.constant 0 : index
    %c0_38 = arith.constant 0 : index
    %33 = vector.load %arg9[%c0_37, %c0_38] : memref<144x324xbf16, #tpu.memory_space<vmem>>, vector<144x324xbf16>
    %cst_39 = arith.constant dense<0.000000e+00> : vector<64x324xf32>
    %34 = tpu.matmul %32, %33, %cst_39 {dimension_numbers = #tpu.dot_dimension_numbers<[1], [0], [0], [1], [0, 0, 1, 1], [], []>} : vector<64x144xbf16>, vector<144x324xbf16>, vector<64x324xf32> -> vector<64x324xf32>
    %cst_40 = arith.constant 0.000000e+00 : f32
    %35 = vector.broadcast %cst_40 : f32 to vector<64x324xf32>
    %36 = arith.cmpf ogt, %34, %35 : vector<64x324xf32>
    %cst_41 = arith.constant 0.00999999977 : f32
    %37 = vector.broadcast %cst_41 : f32 to vector<64x324xf32>
    %38 = arith.mulf %37, %34 : vector<64x324xf32>
    %39 = arith.select %36, %34, %38 : vector<64x324xi1>, vector<64x324xf32>
    %40 = vector.broadcast %0 : vector<1x324xf32> to vector<64x324xf32>
    %41 = arith.mulf %39, %40 : vector<64x324xf32>
    %42 = arith.truncf %41 : vector<64x324xf32> to vector<64x324xbf16>
    %c0_42 = arith.constant 0 : index
    %c128_43 = arith.constant 128 : index
    %43 = vector.load %arg11[%c0_42, %c128_43] : memref<64x580xbf16, #tpu.memory_space<vmem>>, vector<64x324xbf16>
    tpu.vector_store %arg11[%c0_42, %c128_43], %42 {strides = array<i32>} : memref<64x580xbf16, #tpu.memory_space<vmem>>, vector<64x324xbf16>,
    %c0_44 = arith.constant 0 : index
    %c109_45 = arith.constant 109 : index
    %44 = vector.load %arg11[%c0_44, %c109_45] : memref<64x580xbf16, #tpu.memory_space<vmem>>, vector<64x324xbf16>
    %c0_46 = arith.constant 0 : index
    %c0_47 = arith.constant 0 : index
    %45 = vector.load %arg10[%c0_46, %c0_47] : memref<576x324xbf16, #tpu.memory_space<vmem>>, vector<64x324xbf16>
    tpu.vector_store %arg10[%c0_46, %c0_47], %44 {strides = array<i32>} : memref<576x324xbf16, #tpu.memory_space<vmem>>, vector<64x324xbf16>,
    %c0_48 = arith.constant 0 : index
    %c110_49 = arith.constant 110 : index
    %46 = vector.load %arg11[%c0_48, %c110_49] : memref<64x580xbf16, #tpu.memory_space<vmem>>, vector<64x324xbf16>
    %c64_50 = arith.constant 64 : index
    %c0_51 = arith.constant 0 : index
    %47 = vector.load %arg10[%c64_50, %c0_51] : memref<576x324xbf16, #tpu.memory_space<vmem>>, vector<64x324xbf16>
    tpu.vector_store %arg10[%c64_50, %c0_51], %46 {strides = array<i32>} : memref<576x324xbf16, #tpu.memory_space<vmem>>, vector<64x324xbf16>,
    %c0_52 = arith.constant 0 : index
    %c111_53 = arith.constant 111 : index
    %48 = vector.load %arg11[%c0_52, %c111_53] : memref<64x580xbf16, #tpu.memory_space<vmem>>, vector<64x324xbf16>
    %c128_54 = arith.constant 128 : index
    %c0_55 = arith.constant 0 : index
    %49 = vector.load %arg10[%c128_54, %c0_55] : memref<576x324xbf16, #tpu.memory_space<vmem>>, vector<64x324xbf16>
    tpu.vector_store %arg10[%c128_54, %c0_55], %48 {strides = array<i32>} : memref<576x324xbf16, #tpu.memory_space<vmem>>, vector<64x324xbf16>,
    %c0_56 = arith.constant 0 : index
    %c127_57 = arith.constant 127 : index
    %50 = vector.load %arg11[%c0_56, %c127_57] : memref<64x580xbf16, #tpu.memory_space<vmem>>, vector<64x324xbf16>
    %c192 = arith.constant 192 : index
    %c0_58 = arith.constant 0 : index
    %51 = vector.load %arg10[%c192, %c0_58] : memref<576x324xbf16, #tpu.memory_space<vmem>>, vector<64x324xbf16>
    tpu.vector_store %arg10[%c192, %c0_58], %50 {strides = array<i32>} : memref<576x324xbf16, #tpu.memory_space<vmem>>, vector<64x324xbf16>,
    %c0_59 = arith.constant 0 : index
    %c128_60 = arith.constant 128 : index
    %52 = vector.load %arg11[%c0_59, %c128_60] : memref<64x580xbf16, #tpu.memory_space<vmem>>, vector<64x324xbf16>
    %c256 = arith.constant 256 : index
    %c0_61 = arith.constant 0 : index
    %53 = vector.load %arg10[%c256, %c0_61] : memref<576x324xbf16, #tpu.memory_space<vmem>>, vector<64x324xbf16>
    tpu.vector_store %arg10[%c256, %c0_61], %52 {strides = array<i32>} : memref<576x324xbf16, #tpu.memory_space<vmem>>, vector<64x324xbf16>,
    %c0_62 = arith.constant 0 : index
    %c129_63 = arith.constant 129 : index
    %54 = vector.load %arg11[%c0_62, %c129_63] : memref<64x580xbf16, #tpu.memory_space<vmem>>, vector<64x324xbf16>
    %c320 = arith.constant 320 : index
    %c0_64 = arith.constant 0 : index
    %55 = vector.load %arg10[%c320, %c0_64] : memref<576x324xbf16, #tpu.memory_space<vmem>>, vector<64x324xbf16>
    tpu.vector_store %arg10[%c320, %c0_64], %54 {strides = array<i32>} : memref<576x324xbf16, #tpu.memory_space<vmem>>, vector<64x324xbf16>,
    %c0_65 = arith.constant 0 : index
    %c145_66 = arith.constant 145 : index
    %56 = vector.load %arg11[%c0_65, %c145_66] : memref<64x580xbf16, #tpu.memory_space<vmem>>, vector<64x324xbf16>
    %c384 = arith.constant 384 : index
    %c0_67 = arith.constant 0 : index
    %57 = vector.load %arg10[%c384, %c0_67] : memref<576x324xbf16, #tpu.memory_space<vmem>>, vector<64x324xbf16>
    tpu.vector_store %arg10[%c384, %c0_67], %56 {strides = array<i32>} : memref<576x324xbf16, #tpu.memory_space<vmem>>, vector<64x324xbf16>,
    %c0_68 = arith.constant 0 : index
    %c146_69 = arith.constant 146 : index
    %58 = vector.load %arg11[%c0_68, %c146_69] : memref<64x580xbf16, #tpu.memory_space<vmem>>, vector<64x324xbf16>
    %c448 = arith.constant 448 : index
    %c0_70 = arith.constant 0 : index
    %59 = vector.load %arg10[%c448, %c0_70] : memref<576x324xbf16, #tpu.memory_space<vmem>>, vector<64x324xbf16>
    tpu.vector_store %arg10[%c448, %c0_70], %58 {strides = array<i32>} : memref<576x324xbf16, #tpu.memory_space<vmem>>, vector<64x324xbf16>,
    %c0_71 = arith.constant 0 : index
    %c147_72 = arith.constant 147 : index
    %60 = vector.load %arg11[%c0_71, %c147_72] : memref<64x580xbf16, #tpu.memory_space<vmem>>, vector<64x324xbf16>
    %c512 = arith.constant 512 : index
    %c0_73 = arith.constant 0 : index
    %61 = vector.load %arg10[%c512, %c0_73] : memref<576x324xbf16, #tpu.memory_space<vmem>>, vector<64x324xbf16>
    tpu.vector_store %arg10[%c512, %c0_73], %60 {strides = array<i32>} : memref<576x324xbf16, #tpu.memory_space<vmem>>, vector<64x324xbf16>,
    %c0_74 = arith.constant 0 : index
    %c0_75 = arith.constant 0 : index
    %c0_76 = arith.constant 0 : index
    %62 = vector.load %arg4[%c0_74, %c0_75, %c0_76] : memref<3x64x576xbf16, #tpu.memory_space<vmem>>, vector<1x64x576xbf16>
    %63 = vector.shape_cast %62 : vector<1x64x576xbf16> to vector<64x576xbf16>
    %c0_77 = arith.constant 0 : index
    %c0_78 = arith.constant 0 : index
    %64 = vector.load %arg10[%c0_77, %c0_78] : memref<576x324xbf16, #tpu.memory_space<vmem>>, vector<576x324xbf16>
    %cst_79 = arith.constant dense<0.000000e+00> : vector<64x324xf32>
    %65 = tpu.matmul %63, %64, %cst_79 {dimension_numbers = #tpu.dot_dimension_numbers<[1], [0], [0], [1], [0, 0, 1, 1], [], []>} : vector<64x576xbf16>, vector<576x324xbf16>, vector<64x324xf32> -> vector<64x324xf32>
    %c0_80 = arith.constant 0 : index
    %c0_81 = arith.constant 0 : index
    %c0_82 = arith.constant 0 : index
    %66 = vector.load %arg5[%c0_80, %c0_81, %c0_82] : memref<3x64x1xf32, #tpu.memory_space<vmem>>, vector<1x64x1xf32>
    %67 = vector.shape_cast %66 : vector<1x64x1xf32> to vector<64x1xf32>
    %68 = vector.broadcast %67 : vector<64x1xf32> to vector<64x324xf32>
    %69 = arith.mulf %65, %68 : vector<64x324xf32>
    %c0_83 = arith.constant 0 : index
    %c0_84 = arith.constant 0 : index
    %c0_85 = arith.constant 0 : index
    %70 = vector.load %arg6[%c0_83, %c0_84, %c0_85] : memref<3x64x1xf32, #tpu.memory_space<vmem>>, vector<1x64x1xf32>
    %71 = vector.shape_cast %70 : vector<1x64x1xf32> to vector<64x1xf32>
    %72 = vector.broadcast %71 : vector<64x1xf32> to vector<64x324xf32>
    %73 = arith.addf %69, %72 : vector<64x324xf32>
    %cst_86 = arith.constant 0.000000e+00 : f32
    %74 = vector.broadcast %cst_86 : f32 to vector<64x324xf32>
    %75 = arith.cmpf ogt, %73, %74 : vector<64x324xf32>
    %cst_87 = arith.constant 0.00999999977 : f32
    %76 = vector.broadcast %cst_87 : f32 to vector<64x324xf32>
    %77 = arith.mulf %76, %73 : vector<64x324xf32>
    %78 = arith.select %75, %73, %77 : vector<64x324xi1>, vector<64x324xf32>
    %79 = vector.broadcast %0 : vector<1x324xf32> to vector<64x324xf32>
    %80 = arith.mulf %78, %79 : vector<64x324xf32>
    %81 = arith.truncf %80 : vector<64x324xf32> to vector<64x324xbf16>
    %c0_88 = arith.constant 0 : index
    %c128_89 = arith.constant 128 : index
    %82 = vector.load %arg12[%c0_88, %c128_89] : memref<64x580xbf16, #tpu.memory_space<vmem>>, vector<64x324xbf16>
    tpu.vector_store %arg12[%c0_88, %c128_89], %81 {strides = array<i32>} : memref<64x580xbf16, #tpu.memory_space<vmem>>, vector<64x324xbf16>,
    %c0_90 = arith.constant 0 : index
    %c109_91 = arith.constant 109 : index
    %83 = vector.load %arg12[%c0_90, %c109_91] : memref<64x580xbf16, #tpu.memory_space<vmem>>, vector<64x324xbf16>
    %c0_92 = arith.constant 0 : index
    %c0_93 = arith.constant 0 : index
    %84 = vector.load %arg10[%c0_92, %c0_93] : memref<576x324xbf16, #tpu.memory_space<vmem>>, vector<64x324xbf16>
    tpu.vector_store %arg10[%c0_92, %c0_93], %83 {strides = array<i32>} : memref<576x324xbf16, #tpu.memory_space<vmem>>, vector<64x324xbf16>,
    %c0_94 = arith.constant 0 : index
    %c110_95 = arith.constant 110 : index
    %85 = vector.load %arg12[%c0_94, %c110_95] : memref<64x580xbf16, #tpu.memory_space<vmem>>, vector<64x324xbf16>
    %c64_96 = arith.constant 64 : index
    %c0_97 = arith.constant 0 : index
    %86 = vector.load %arg10[%c64_96, %c0_97] : memref<576x324xbf16, #tpu.memory_space<vmem>>, vector<64x324xbf16>
    tpu.vector_store %arg10[%c64_96, %c0_97], %85 {strides = array<i32>} : memref<576x324xbf16, #tpu.memory_space<vmem>>, vector<64x324xbf16>,
    %c0_98 = arith.constant 0 : index
    %c111_99 = arith.constant 111 : index
    %87 = vector.load %arg12[%c0_98, %c111_99] : memref<64x580xbf16, #tpu.memory_space<vmem>>, vector<64x324xbf16>
    %c128_100 = arith.constant 128 : index
    %c0_101 = arith.constant 0 : index
    %88 = vector.load %arg10[%c128_100, %c0_101] : memref<576x324xbf16, #tpu.memory_space<vmem>>, vector<64x324xbf16>
    tpu.vector_store %arg10[%c128_100, %c0_101], %87 {strides = array<i32>} : memref<576x324xbf16, #tpu.memory_space<vmem>>, vector<64x324xbf16>,
    %c0_102 = arith.constant 0 : index
    %c127_103 = arith.constant 127 : index
    %89 = vector.load %arg12[%c0_102, %c127_103] : memref<64x580xbf16, #tpu.memory_space<vmem>>, vector<64x324xbf16>
    %c192_104 = arith.constant 192 : index
    %c0_105 = arith.constant 0 : index
    %90 = vector.load %arg10[%c192_104, %c0_105] : memref<576x324xbf16, #tpu.memory_space<vmem>>, vector<64x324xbf16>
    tpu.vector_store %arg10[%c192_104, %c0_105], %89 {strides = array<i32>} : memref<576x324xbf16, #tpu.memory_space<vmem>>, vector<64x324xbf16>,
    %c0_106 = arith.constant 0 : index
    %c128_107 = arith.constant 128 : index
    %91 = vector.load %arg12[%c0_106, %c128_107] : memref<64x580xbf16, #tpu.memory_space<vmem>>, vector<64x324xbf16>
    %c256_108 = arith.constant 256 : index
    %c0_109 = arith.constant 0 : index
    %92 = vector.load %arg10[%c256_108, %c0_109] : memref<576x324xbf16, #tpu.memory_space<vmem>>, vector<64x324xbf16>
    tpu.vector_store %arg10[%c256_108, %c0_109], %91 {strides = array<i32>} : memref<576x324xbf16, #tpu.memory_space<vmem>>, vector<64x324xbf16>,
    %c0_110 = arith.constant 0 : index
    %c129_111 = arith.constant 129 : index
    %93 = vector.load %arg12[%c0_110, %c129_111] : memref<64x580xbf16, #tpu.memory_space<vmem>>, vector<64x324xbf16>
    %c320_112 = arith.constant 320 : index
    %c0_113 = arith.constant 0 : index
    %94 = vector.load %arg10[%c320_112, %c0_113] : memref<576x324xbf16, #tpu.memory_space<vmem>>, vector<64x324xbf16>
    tpu.vector_store %arg10[%c320_112, %c0_113], %93 {strides = array<i32>} : memref<576x324xbf16, #tpu.memory_space<vmem>>, vector<64x324xbf16>,
    %c0_114 = arith.constant 0 : index
    %c145_115 = arith.constant 145 : index
    %95 = vector.load %arg12[%c0_114, %c145_115] : memref<64x580xbf16, #tpu.memory_space<vmem>>, vector<64x324xbf16>
    %c384_116 = arith.constant 384 : index
    %c0_117 = arith.constant 0 : index
    %96 = vector.load %arg10[%c384_116, %c0_117] : memref<576x324xbf16, #tpu.memory_space<vmem>>, vector<64x324xbf16>
    tpu.vector_store %arg10[%c384_116, %c0_117], %95 {strides = array<i32>} : memref<576x324xbf16, #tpu.memory_space<vmem>>, vector<64x324xbf16>,
    %c0_118 = arith.constant 0 : index
    %c146_119 = arith.constant 146 : index
    %97 = vector.load %arg12[%c0_118, %c146_119] : memref<64x580xbf16, #tpu.memory_space<vmem>>, vector<64x324xbf16>
    %c448_120 = arith.constant 448 : index
    %c0_121 = arith.constant 0 : index
    %98 = vector.load %arg10[%c448_120, %c0_121] : memref<576x324xbf16, #tpu.memory_space<vmem>>, vector<64x324xbf16>
    tpu.vector_store %arg10[%c448_120, %c0_121], %97 {strides = array<i32>} : memref<576x324xbf16, #tpu.memory_space<vmem>>, vector<64x324xbf16>,
    %c0_122 = arith.constant 0 : index
    %c147_123 = arith.constant 147 : index
    %99 = vector.load %arg12[%c0_122, %c147_123] : memref<64x580xbf16, #tpu.memory_space<vmem>>, vector<64x324xbf16>
    %c512_124 = arith.constant 512 : index
    %c0_125 = arith.constant 0 : index
    %100 = vector.load %arg10[%c512_124, %c0_125] : memref<576x324xbf16, #tpu.memory_space<vmem>>, vector<64x324xbf16>
    tpu.vector_store %arg10[%c512_124, %c0_125], %99 {strides = array<i32>} : memref<576x324xbf16, #tpu.memory_space<vmem>>, vector<64x324xbf16>,
    %c1 = arith.constant 1 : index
    %c0_126 = arith.constant 0 : index
    %c0_127 = arith.constant 0 : index
    %101 = vector.load %arg4[%c1, %c0_126, %c0_127] : memref<3x64x576xbf16, #tpu.memory_space<vmem>>, vector<1x64x576xbf16>
    %102 = vector.shape_cast %101 : vector<1x64x576xbf16> to vector<64x576xbf16>
    %c0_128 = arith.constant 0 : index
    %c0_129 = arith.constant 0 : index
    %103 = vector.load %arg10[%c0_128, %c0_129] : memref<576x324xbf16, #tpu.memory_space<vmem>>, vector<576x324xbf16>
    %cst_130 = arith.constant dense<0.000000e+00> : vector<64x324xf32>
    %104 = tpu.matmul %102, %103, %cst_130 {dimension_numbers = #tpu.dot_dimension_numbers<[1], [0], [0], [1], [0, 0, 1, 1], [], []>} : vector<64x576xbf16>, vector<576x324xbf16>, vector<64x324xf32> -> vector<64x324xf32>
    %c1_131 = arith.constant 1 : index
    %c0_132 = arith.constant 0 : index
    %c0_133 = arith.constant 0 : index
    %105 = vector.load %arg5[%c1_131, %c0_132, %c0_133] : memref<3x64x1xf32, #tpu.memory_space<vmem>>, vector<1x64x1xf32>
    %106 = vector.shape_cast %105 : vector<1x64x1xf32> to vector<64x1xf32>
    %107 = vector.broadcast %106 : vector<64x1xf32> to vector<64x324xf32>
    %108 = arith.mulf %104, %107 : vector<64x324xf32>
    %c1_134 = arith.constant 1 : index
    %c0_135 = arith.constant 0 : index
    %c0_136 = arith.constant 0 : index
    %109 = vector.load %arg6[%c1_134, %c0_135, %c0_136] : memref<3x64x1xf32, #tpu.memory_space<vmem>>, vector<1x64x1xf32>
    %110 = vector.shape_cast %109 : vector<1x64x1xf32> to vector<64x1xf32>
    %111 = vector.broadcast %110 : vector<64x1xf32> to vector<64x324xf32>
    %112 = arith.addf %108, %111 : vector<64x324xf32>
    %cst_137 = arith.constant 0.000000e+00 : f32
    %113 = vector.broadcast %cst_137 : f32 to vector<64x324xf32>
    %114 = arith.cmpf ogt, %112, %113 : vector<64x324xf32>
    %cst_138 = arith.constant 0.00999999977 : f32
    %115 = vector.broadcast %cst_138 : f32 to vector<64x324xf32>
    %116 = arith.mulf %115, %112 : vector<64x324xf32>
    %117 = arith.select %114, %112, %116 : vector<64x324xi1>, vector<64x324xf32>
    %118 = vector.broadcast %0 : vector<1x324xf32> to vector<64x324xf32>
    %119 = arith.mulf %117, %118 : vector<64x324xf32>
    %120 = arith.truncf %119 : vector<64x324xf32> to vector<64x324xbf16>
    %c0_139 = arith.constant 0 : index
    %c128_140 = arith.constant 128 : index
    %121 = vector.load %arg11[%c0_139, %c128_140] : memref<64x580xbf16, #tpu.memory_space<vmem>>, vector<64x324xbf16>
    tpu.vector_store %arg11[%c0_139, %c128_140], %120 {strides = array<i32>} : memref<64x580xbf16, #tpu.memory_space<vmem>>, vector<64x324xbf16>,
    %c0_141 = arith.constant 0 : index
    %c109_142 = arith.constant 109 : index
    %122 = vector.load %arg11[%c0_141, %c109_142] : memref<64x580xbf16, #tpu.memory_space<vmem>>, vector<64x324xbf16>
    %c0_143 = arith.constant 0 : index
    %c0_144 = arith.constant 0 : index
    %123 = vector.load %arg10[%c0_143, %c0_144] : memref<576x324xbf16, #tpu.memory_space<vmem>>, vector<64x324xbf16>
    tpu.vector_store %arg10[%c0_143, %c0_144], %122 {strides = array<i32>} : memref<576x324xbf16, #tpu.memory_space<vmem>>, vector<64x324xbf16>,
    %c0_145 = arith.constant 0 : index
    %c110_146 = arith.constant 110 : index
    %124 = vector.load %arg11[%c0_145, %c110_146] : memref<64x580xbf16, #tpu.memory_space<vmem>>, vector<64x324xbf16>
    %c64_147 = arith.constant 64 : index
    %c0_148 = arith.constant 0 : index
    %125 = vector.load %arg10[%c64_147, %c0_148] : memref<576x324xbf16, #tpu.memory_space<vmem>>, vector<64x324xbf16>
    tpu.vector_store %arg10[%c64_147, %c0_148], %124 {strides = array<i32>} : memref<576x324xbf16, #tpu.memory_space<vmem>>, vector<64x324xbf16>,
    %c0_149 = arith.constant 0 : index
    %c111_150 = arith.constant 111 : index
    %126 = vector.load %arg11[%c0_149, %c111_150] : memref<64x580xbf16, #tpu.memory_space<vmem>>, vector<64x324xbf16>
    %c128_151 = arith.constant 128 : index
    %c0_152 = arith.constant 0 : index
    %127 = vector.load %arg10[%c128_151, %c0_152] : memref<576x324xbf16, #tpu.memory_space<vmem>>, vector<64x324xbf16>
    tpu.vector_store %arg10[%c128_151, %c0_152], %126 {strides = array<i32>} : memref<576x324xbf16, #tpu.memory_space<vmem>>, vector<64x324xbf16>,
    %c0_153 = arith.constant 0 : index
    %c127_154 = arith.constant 127 : index
    %128 = vector.load %arg11[%c0_153, %c127_154] : memref<64x580xbf16, #tpu.memory_space<vmem>>, vector<64x324xbf16>
    %c192_155 = arith.constant 192 : index
    %c0_156 = arith.constant 0 : index
    %129 = vector.load %arg10[%c192_155, %c0_156] : memref<576x324xbf16, #tpu.memory_space<vmem>>, vector<64x324xbf16>
    tpu.vector_store %arg10[%c192_155, %c0_156], %128 {strides = array<i32>} : memref<576x324xbf16, #tpu.memory_space<vmem>>, vector<64x324xbf16>,
    %c0_157 = arith.constant 0 : index
    %c128_158 = arith.constant 128 : index
    %130 = vector.load %arg11[%c0_157, %c128_158] : memref<64x580xbf16, #tpu.memory_space<vmem>>, vector<64x324xbf16>
    %c256_159 = arith.constant 256 : index
    %c0_160 = arith.constant 0 : index
    %131 = vector.load %arg10[%c256_159, %c0_160] : memref<576x324xbf16, #tpu.memory_space<vmem>>, vector<64x324xbf16>
    tpu.vector_store %arg10[%c256_159, %c0_160], %130 {strides = array<i32>} : memref<576x324xbf16, #tpu.memory_space<vmem>>, vector<64x324xbf16>,
    %c0_161 = arith.constant 0 : index
    %c129_162 = arith.constant 129 : index
    %132 = vector.load %arg11[%c0_161, %c129_162] : memref<64x580xbf16, #tpu.memory_space<vmem>>, vector<64x324xbf16>
    %c320_163 = arith.constant 320 : index
    %c0_164 = arith.constant 0 : index
    %133 = vector.load %arg10[%c320_163, %c0_164] : memref<576x324xbf16, #tpu.memory_space<vmem>>, vector<64x324xbf16>
    tpu.vector_store %arg10[%c320_163, %c0_164], %132 {strides = array<i32>} : memref<576x324xbf16, #tpu.memory_space<vmem>>, vector<64x324xbf16>,
    %c0_165 = arith.constant 0 : index
    %c145_166 = arith.constant 145 : index
    %134 = vector.load %arg11[%c0_165, %c145_166] : memref<64x580xbf16, #tpu.memory_space<vmem>>, vector<64x324xbf16>
    %c384_167 = arith.constant 384 : index
    %c0_168 = arith.constant 0 : index
    %135 = vector.load %arg10[%c384_167, %c0_168] : memref<576x324xbf16, #tpu.memory_space<vmem>>, vector<64x324xbf16>
    tpu.vector_store %arg10[%c384_167, %c0_168], %134 {strides = array<i32>} : memref<576x324xbf16, #tpu.memory_space<vmem>>, vector<64x324xbf16>,
    %c0_169 = arith.constant 0 : index
    %c146_170 = arith.constant 146 : index
    %136 = vector.load %arg11[%c0_169, %c146_170] : memref<64x580xbf16, #tpu.memory_space<vmem>>, vector<64x324xbf16>
    %c448_171 = arith.constant 448 : index
    %c0_172 = arith.constant 0 : index
    %137 = vector.load %arg10[%c448_171, %c0_172] : memref<576x324xbf16, #tpu.memory_space<vmem>>, vector<64x324xbf16>
    tpu.vector_store %arg10[%c448_171, %c0_172], %136 {strides = array<i32>} : memref<576x324xbf16, #tpu.memory_space<vmem>>, vector<64x324xbf16>,
    %c0_173 = arith.constant 0 : index
    %c147_174 = arith.constant 147 : index
    %138 = vector.load %arg11[%c0_173, %c147_174] : memref<64x580xbf16, #tpu.memory_space<vmem>>, vector<64x324xbf16>
    %c512_175 = arith.constant 512 : index
    %c0_176 = arith.constant 0 : index
    %139 = vector.load %arg10[%c512_175, %c0_176] : memref<576x324xbf16, #tpu.memory_space<vmem>>, vector<64x324xbf16>
    tpu.vector_store %arg10[%c512_175, %c0_176], %138 {strides = array<i32>} : memref<576x324xbf16, #tpu.memory_space<vmem>>, vector<64x324xbf16>,
    %c2 = arith.constant 2 : index
    %c0_177 = arith.constant 0 : index
    %c0_178 = arith.constant 0 : index
    %140 = vector.load %arg4[%c2, %c0_177, %c0_178] : memref<3x64x576xbf16, #tpu.memory_space<vmem>>, vector<1x64x576xbf16>
    %141 = vector.shape_cast %140 : vector<1x64x576xbf16> to vector<64x576xbf16>
    %c0_179 = arith.constant 0 : index
    %c0_180 = arith.constant 0 : index
    %142 = vector.load %arg10[%c0_179, %c0_180] : memref<576x324xbf16, #tpu.memory_space<vmem>>, vector<576x324xbf16>
    %cst_181 = arith.constant dense<0.000000e+00> : vector<64x324xf32>
    %143 = tpu.matmul %141, %142, %cst_181 {dimension_numbers = #tpu.dot_dimension_numbers<[1], [0], [0], [1], [0, 0, 1, 1], [], []>} : vector<64x576xbf16>, vector<576x324xbf16>, vector<64x324xf32> -> vector<64x324xf32>
    %c2_182 = arith.constant 2 : index
    %c0_183 = arith.constant 0 : index
    %c0_184 = arith.constant 0 : index
    %144 = vector.load %arg5[%c2_182, %c0_183, %c0_184] : memref<3x64x1xf32, #tpu.memory_space<vmem>>, vector<1x64x1xf32>
    %145 = vector.shape_cast %144 : vector<1x64x1xf32> to vector<64x1xf32>
    %146 = vector.broadcast %145 : vector<64x1xf32> to vector<64x324xf32>
    %147 = arith.mulf %143, %146 : vector<64x324xf32>
    %c2_185 = arith.constant 2 : index
    %c0_186 = arith.constant 0 : index
    %c0_187 = arith.constant 0 : index
    %148 = vector.load %arg6[%c2_185, %c0_186, %c0_187] : memref<3x64x1xf32, #tpu.memory_space<vmem>>, vector<1x64x1xf32>
    %149 = vector.shape_cast %148 : vector<1x64x1xf32> to vector<64x1xf32>
    %150 = vector.broadcast %149 : vector<64x1xf32> to vector<64x324xf32>
    %151 = arith.addf %147, %150 : vector<64x324xf32>
    %cst_188 = arith.constant 0.000000e+00 : f32
    %152 = vector.broadcast %cst_188 : f32 to vector<64x324xf32>
    %153 = arith.cmpf ogt, %151, %152 : vector<64x324xf32>
    %cst_189 = arith.constant 0.00999999977 : f32
    %154 = vector.broadcast %cst_189 : f32 to vector<64x324xf32>
    %155 = arith.mulf %154, %151 : vector<64x324xf32>
    %156 = arith.select %153, %151, %155 : vector<64x324xi1>, vector<64x324xf32>
    %157 = vector.broadcast %0 : vector<1x324xf32> to vector<64x324xf32>
    %158 = arith.mulf %156, %157 : vector<64x324xf32>
    %159 = arith.truncf %158 : vector<64x324xf32> to vector<64x324xbf16>
    %c0_190 = arith.constant 0 : index
    %c128_191 = arith.constant 128 : index
    %160 = vector.load %arg12[%c0_190, %c128_191] : memref<64x580xbf16, #tpu.memory_space<vmem>>, vector<64x324xbf16>
    tpu.vector_store %arg12[%c0_190, %c128_191], %159 {strides = array<i32>} : memref<64x580xbf16, #tpu.memory_space<vmem>>, vector<64x324xbf16>,
    %c0_192 = arith.constant 0 : index
    %c109_193 = arith.constant 109 : index
    %161 = vector.load %arg12[%c0_192, %c109_193] : memref<64x580xbf16, #tpu.memory_space<vmem>>, vector<64x324xbf16>
    %c0_194 = arith.constant 0 : index
    %c0_195 = arith.constant 0 : index
    %162 = vector.load %arg10[%c0_194, %c0_195] : memref<576x324xbf16, #tpu.memory_space<vmem>>, vector<64x324xbf16>
    tpu.vector_store %arg10[%c0_194, %c0_195], %161 {strides = array<i32>} : memref<576x324xbf16, #tpu.memory_space<vmem>>, vector<64x324xbf16>,
    %c0_196 = arith.constant 0 : index
    %c110_197 = arith.constant 110 : index
    %163 = vector.load %arg12[%c0_196, %c110_197] : memref<64x580xbf16, #tpu.memory_space<vmem>>, vector<64x324xbf16>
    %c64_198 = arith.constant 64 : index
    %c0_199 = arith.constant 0 : index
    %164 = vector.load %arg10[%c64_198, %c0_199] : memref<576x324xbf16, #tpu.memory_space<vmem>>, vector<64x324xbf16>
    tpu.vector_store %arg10[%c64_198, %c0_199], %163 {strides = array<i32>} : memref<576x324xbf16, #tpu.memory_space<vmem>>, vector<64x324xbf16>,
    %c0_200 = arith.constant 0 : index
    %c111_201 = arith.constant 111 : index
    %165 = vector.load %arg12[%c0_200, %c111_201] : memref<64x580xbf16, #tpu.memory_space<vmem>>, vector<64x324xbf16>
    %c128_202 = arith.constant 128 : index
    %c0_203 = arith.constant 0 : index
    %166 = vector.load %arg10[%c128_202, %c0_203] : memref<576x324xbf16, #tpu.memory_space<vmem>>, vector<64x324xbf16>
    tpu.vector_store %arg10[%c128_202, %c0_203], %165 {strides = array<i32>} : memref<576x324xbf16, #tpu.memory_space<vmem>>, vector<64x324xbf16>,
    %c0_204 = arith.constant 0 : index
    %c127_205 = arith.constant 127 : index
    %167 = vector.load %arg12[%c0_204, %c127_205] : memref<64x580xbf16, #tpu.memory_space<vmem>>, vector<64x324xbf16>
    %c192_206 = arith.constant 192 : index
    %c0_207 = arith.constant 0 : index
    %168 = vector.load %arg10[%c192_206, %c0_207] : memref<576x324xbf16, #tpu.memory_space<vmem>>, vector<64x324xbf16>
    tpu.vector_store %arg10[%c192_206, %c0_207], %167 {strides = array<i32>} : memref<576x324xbf16, #tpu.memory_space<vmem>>, vector<64x324xbf16>,
    %c0_208 = arith.constant 0 : index
    %c128_209 = arith.constant 128 : index
    %169 = vector.load %arg12[%c0_208, %c128_209] : memref<64x580xbf16, #tpu.memory_space<vmem>>, vector<64x324xbf16>
    %c256_210 = arith.constant 256 : index
    %c0_211 = arith.constant 0 : index
    %170 = vector.load %arg10[%c256_210, %c0_211] : memref<576x324xbf16, #tpu.memory_space<vmem>>, vector<64x324xbf16>
    tpu.vector_store %arg10[%c256_210, %c0_211], %169 {strides = array<i32>} : memref<576x324xbf16, #tpu.memory_space<vmem>>, vector<64x324xbf16>,
    %c0_212 = arith.constant 0 : index
    %c129_213 = arith.constant 129 : index
    %171 = vector.load %arg12[%c0_212, %c129_213] : memref<64x580xbf16, #tpu.memory_space<vmem>>, vector<64x324xbf16>
    %c320_214 = arith.constant 320 : index
    %c0_215 = arith.constant 0 : index
    %172 = vector.load %arg10[%c320_214, %c0_215] : memref<576x324xbf16, #tpu.memory_space<vmem>>, vector<64x324xbf16>
    tpu.vector_store %arg10[%c320_214, %c0_215], %171 {strides = array<i32>} : memref<576x324xbf16, #tpu.memory_space<vmem>>, vector<64x324xbf16>,
    %c0_216 = arith.constant 0 : index
    %c145_217 = arith.constant 145 : index
    %173 = vector.load %arg12[%c0_216, %c145_217] : memref<64x580xbf16, #tpu.memory_space<vmem>>, vector<64x324xbf16>
    %c384_218 = arith.constant 384 : index
    %c0_219 = arith.constant 0 : index
    %174 = vector.load %arg10[%c384_218, %c0_219] : memref<576x324xbf16, #tpu.memory_space<vmem>>, vector<64x324xbf16>
    tpu.vector_store %arg10[%c384_218, %c0_219], %173 {strides = array<i32>} : memref<576x324xbf16, #tpu.memory_space<vmem>>, vector<64x324xbf16>,
    %c0_220 = arith.constant 0 : index
    %c146_221 = arith.constant 146 : index
    %175 = vector.load %arg12[%c0_220, %c146_221] : memref<64x580xbf16, #tpu.memory_space<vmem>>, vector<64x324xbf16>
    %c448_222 = arith.constant 448 : index
    %c0_223 = arith.constant 0 : index
    %176 = vector.load %arg10[%c448_222, %c0_223] : memref<576x324xbf16, #tpu.memory_space<vmem>>, vector<64x324xbf16>
    tpu.vector_store %arg10[%c448_222, %c0_223], %175 {strides = array<i32>} : memref<576x324xbf16, #tpu.memory_space<vmem>>, vector<64x324xbf16>,
    %c0_224 = arith.constant 0 : index
    %c147_225 = arith.constant 147 : index
    %177 = vector.load %arg12[%c0_224, %c147_225] : memref<64x580xbf16, #tpu.memory_space<vmem>>, vector<64x324xbf16>
    %c512_226 = arith.constant 512 : index
    %c0_227 = arith.constant 0 : index
    %178 = vector.load %arg10[%c512_226, %c0_227] : memref<576x324xbf16, #tpu.memory_space<vmem>>, vector<64x324xbf16>
    tpu.vector_store %arg10[%c512_226, %c0_227], %177 {strides = array<i32>} : memref<576x324xbf16, #tpu.memory_space<vmem>>, vector<64x324xbf16>,
    %c0_228 = arith.constant 0 : index
    %c0_229 = arith.constant 0 : index
    %179 = vector.load %arg7[%c0_228, %c0_229] : memref<4x576xbf16, #tpu.memory_space<vmem>>, vector<4x576xbf16>
    %c0_230 = arith.constant 0 : index
    %c0_231 = arith.constant 0 : index
    %180 = vector.load %arg10[%c0_230, %c0_231] : memref<576x324xbf16, #tpu.memory_space<vmem>>, vector<576x324xbf16>
    %cst_232 = arith.constant dense<0.000000e+00> : vector<4x324xf32>
    %181 = tpu.matmul %179, %180, %cst_232 {dimension_numbers = #tpu.dot_dimension_numbers<[1], [0], [0], [1], [0, 0, 1, 1], [], []>} : vector<4x576xbf16>, vector<576x324xbf16>, vector<4x324xf32> -> vector<4x324xf32>
    %c0_233 = arith.constant 0 : index
    %c0_234 = arith.constant 0 : index
    %c0_235 = arith.constant 0 : index
    %182 = vector.load %arg8[%c0_233, %c0_234, %c0_235] : memref<1x4x324xf32, #tpu.memory_space<vmem>>, vector<1x4x324xf32>
    %183 = vector.shape_cast %182 : vector<1x4x324xf32> to vector<4x324xf32>
    %184 = vector.shape_cast %181 : vector<4x324xf32> to vector<1x4x324xf32>
    tpu.vector_store %arg8[%c0_233, %c0_234, %c0_235], %184 {strides = array<i32>} : memref<1x4x324xf32, #tpu.memory_space<vmem>>, vector<1x4x324xf32>,
    return
  }
  func.func @transform_0(%arg0: i32) -> (i32, i32, i32) {
    %c0_i32 = arith.constant 0 : i32
    %c0_i32_0 = arith.constant 0 : i32
    %c0_i32_1 = arith.constant 0 : i32
    return %arg0, %c0_i32, %c0_i32_0 : i32, i32, i32
  }
  func.func @transform_1(%arg0: i32) -> (i32, i32) {
    %c0_i32 = arith.constant 0 : i32
    %c0_i32_0 = arith.constant 0 : i32
    %c0_i32_1 = arith.constant 0 : i32
    return %c0_i32, %c0_i32_0 : i32, i32
  }
  func.func @transform_2(%arg0: i32) -> (i32, i32) {
    %c0_i32 = arith.constant 0 : i32
    %c0_i32_0 = arith.constant 0 : i32
    %c0_i32_1 = arith.constant 0 : i32
    return %c0_i32, %c0_i32_0 : i32, i32
  }
  func.func @transform_3(%arg0: i32) -> (i32, i32, i32) {
    %c0_i32 = arith.constant 0 : i32
    %c0_i32_0 = arith.constant 0 : i32
    %c0_i32_1 = arith.constant 0 : i32
    %c0_i32_2 = arith.constant 0 : i32
    return %c0_i32, %c0_i32_0, %c0_i32_1 : i32, i32, i32
  }
  func.func @transform_4(%arg0: i32) -> (i32, i32, i32) {
    %c0_i32 = arith.constant 0 : i32
    %c0_i32_0 = arith.constant 0 : i32
    %c0_i32_1 = arith.constant 0 : i32
    %c0_i32_2 = arith.constant 0 : i32
    return %c0_i32, %c0_i32_0, %c0_i32_1 : i32, i32, i32
  }
  func.func @transform_5(%arg0: i32) -> (i32, i32, i32) {
    %c0_i32 = arith.constant 0 : i32
    %c0_i32_0 = arith.constant 0 : i32
    %c0_i32_1 = arith.constant 0 : i32
    %c0_i32_2 = arith.constant 0 : i32
    return %c0_i32, %c0_i32_0, %c0_i32_1 : i32, i32, i32
  }
  func.func @transform_6(%arg0: i32) -> (i32, i32) {
    %c0_i32 = arith.constant 0 : i32
    %c0_i32_0 = arith.constant 0 : i32
    %c0_i32_1 = arith.constant 0 : i32
    return %c0_i32, %c0_i32_0 : i32, i32
  }
  func.func @transform_7(%arg0: i32) -> (i32, i32, i32) {
    %c0_i32 = arith.constant 0 : i32
    %c0_i32_0 = arith.constant 0 : i32
    %c0_i32_1 = arith.constant 0 : i32
    return %arg0, %c0_i32, %c0_i32_0 : i32, i32, i32
  }
}

</mosaic_0001>

<llo_original>
// kernel: dncnn_forward.1
$region0: #{dncnn_forward.1}
  #allocation0 [shape = 'u32[]', space=smem, size = 0x4, offset = 0x4, fixed_abs, tag = 'smem constant byte address 0x4 - core index']
  #allocation1 [shape = 'u32[144,128]{1,0:T(1,128)}', space=vmem, size = 0x12000, scoped, tag = 'internal scratch']
  #allocation2 [shape = 'bf16[144,324]{1,0:T(16,128)(2,1)}', space=vmem, size = 0x1b000, scoped, tag = 'scratch operand']
  #allocation3 [shape = 'bf16[576,324]{1,0:T(16,128)(2,1)}', space=vmem, size = 0x6c000, scoped, tag = 'scratch operand']
  #allocation4 [shape = 'bf16[64,580]{1,0:T(16,128)(2,1)}', space=vmem, size = 0x14000, scoped, tag = 'scratch operand']
  #allocation5 [shape = 'bf16[64,580]{1,0:T(16,128)(2,1)}', space=vmem, size = 0x14000, scoped, tag = 'scratch operand']
  %s0 = inlined_call_operand.hbm [shape: bf16[2,16,580], index: 0, kind: input, shape index: {}]
  %s1 = inlined_call_operand.hbm [shape: f32[1,324], index: 1, kind: input, shape index: {}]
  %s2 = inlined_call_operand.hbm [shape: bf16[64,144], index: 2, kind: input, shape index: {}]
  %s3 = inlined_call_operand.hbm [shape: bf16[3,64,576], index: 3, kind: input, shape index: {}]
  %s4 = inlined_call_operand.hbm [shape: f32[3,64,1], index: 4, kind: input, shape index: {}]
  %s5 = inlined_call_operand.hbm [shape: f32[3,64,1], index: 5, kind: input, shape index: {}]
  %s6 = inlined_call_operand.hbm [shape: bf16[4,576], index: 6, kind: input, shape index: {}]
  %s7 = inlined_call_operand.hbm [shape: f32[2,4,324], index: 7, kind: output, shape index: {}]
  %s8 = sld [smem:[#allocation0]]
  $region89: #{dncnn_forward.1} parent=0
    _
  %s10 = ssub.s32 1, %s8
  %s11 = scalar_select 0, %s10, %s8
  $region1: #{dncnn_forward.1} parent=0
    #allocation6 [shape = 'u8[40960]{0}', space=vmem, size = 0xa000, scoped, tag = 'input window, operand 0']
    #allocation7 [shape = 's32[2]{0}', space=sflag, size = 0x8, scoped, tag = 'scoped memory for dncnn_forward.1']
    #allocation8 [shape = 's32[2]{0}', space=sflag, size = 0x8, scoped, tag = 'scoped memory for dncnn_forward.1']
    #allocation9 [shape = 'u8[1536]{0}', space=vmem, size = 0x800, scoped, tag = 'input window, operand 1, single buffered']
    #allocation10 [shape = 's32[1]{0}', space=sflag, size = 0x4, scoped, tag = 'scoped memory for dncnn_forward.1']
    #allocation11 [shape = 'u8[32768]{0}', space=vmem, size = 0x8000, scoped, tag = 'input window, operand 2, single buffered']
    #allocation12 [shape = 'u8[245760]{0}', space=vmem, size = 0x3c000, scoped, tag = 'input window, operand 3, single buffered']
    #allocation13 [shape = 's32[1]{0}', space=sflag, size = 0x4, scoped, tag = 'scoped memory for dncnn_forward.1']
    #allocation14 [shape = 'u8[98304]{0}', space=vmem, size = 0x18000, scoped, tag = 'input window, operand 4, single buffered']
    #allocation15 [shape = 'u8[98304]{0}', space=vmem, size = 0x18000, scoped, tag = 'input window, operand 5, single buffered']
    #allocation16 [shape = 's32[1]{0}', space=sflag, size = 0x4, scoped, tag = 'scoped memory for dncnn_forward.1']
    #allocation17 [shape = 'u8[5120]{0}', space=vmem, size = 0x1400, scoped, tag = 'input window, operand 6, single buffered']
    #allocation18 [shape = 'u8[12288]{0}', space=vmem, size = 0x3000, scoped, tag = 'output window, operand 0']
    %12 = vsyncpa [#allocation7], 0
    %s13 = scalar_lea.sflag [#allocation7], 1
    %14 = vsyncpa %s13, 0
    %15 = vsyncpa [#allocation10], 0
    %16 = vsyncpa [#allocation13], 0
    %17 = vsyncpa [#allocation16], 0
    %18 = vsyncpa [#allocation8], 0
    %s19 = scalar_lea.sflag [#allocation8], 1
    %20 = vsyncpa %s19, 0
    loop: start=0, step=1, limit=4
    $region2: #{dncnn_forward.1} parent=1 // loop_pre_header
      _
    $region3: #{dncnn_forward.1} parent=1 // loop_header
      %s22 = sphi 0, %s26
      %p23 = scmp.ge.s32.totalorder %s22, 4
      %s32 = sphi 0, %s34
      %s35 = sphi 0, %s32
      %s36 = sphi 0, %s35
      %s52 = sphi 0, %s36
      %s56 = sphi 0, %s56
      %s58 = sphi 0, %s56
      %s59 = sphi 0, %s58
      %s73 = sphi 0, %s59
      %s77 = sphi 0, %s77
      %s79 = sphi 0, %s77
      %s80 = sphi 0, %s79
      %s94 = sphi 0, %s80
      %s98 = sphi 0, %s98
      %s100 = sphi 0, %s98
      %s101 = sphi 0, %s100
      %s115 = sphi 0, %s101
      %s119 = sphi 0, %s119
      %s121 = sphi 0, %s119
      %s122 = sphi 0, %s121
      %s136 = sphi 0, %s122
      %s140 = sphi 0, %s140
      %s142 = sphi 0, %s140
      %s143 = sphi 0, %s142
      %s157 = sphi 0, %s143
      %s161 = sphi 0, %s161
      %s163 = sphi 0, %s161
      %s164 = sphi 0, %s163
      %s178 = sphi 0, %s164
      %s184 = sphi 0, %s186
      %s187 = sphi 0, %s184
      %s188 = sphi 0, %s187
      %s204 = sphi 0, %s188
    $region4: #{dncnn_forward.1} parent=1 // loop_header_branch
      %25 = sbr.rel (%p23) target = $region8
    $region5: #{dncnn_forward.1} parent=1 // loop_body
      %s27 = ssub.s32 %s22, 1
      %s28 = ssub.s32 %s22, 2
      %s29 = sadd.s32 %s22, 1
      %s30 = ssub.s32 %s22, %s29
      %p31 = scmp.eq.s32.totalorder %s30, 0
      %s33 = sadd.s32 %s32, 1
      %s34 = scalar_select %p31, %s32, %s33
      %p37 = pneg %p31
      %p38 = scmp.eq.s32.totalorder %s22, 1
      %p39 = por %p37, %p38
      %p40 = scmp.ne.s32.totalorder %s32, %s35
      %p41 = scmp.eq.s32.totalorder %s22, 0
      %p42 = por %p40, %p41
      %p43 = scmp.ne.s32.totalorder %s32, %s35
      %p44 = scmp.eq.s32.totalorder %s27, 1
      %p45 = por %p43, %p44
      %p46 = scmp.ne.s32.totalorder %s35, %s36
      %p47 = scmp.eq.s32.totalorder %s27, 0
      %p48 = por %p46, %p47
      %p49 = scmp.ne.s32.totalorder %s35, %s36
      %p50 = scmp.eq.s32.totalorder %s28, 1
      %p51 = por %p49, %p50
      %p53 = scmp.ne.s32.totalorder %s36, %s52
      %p54 = scmp.eq.s32.totalorder %s28, 0
      %p55 = por %p53, %p54
      %s57 = sadd.s32 %s56, 1
      %p60 = scmp.eq.s32.totalorder %s22, 1
      %p61 = scmp.ne.s32.totalorder %s56, %s58
      %p62 = scmp.eq.s32.totalorder %s22, 0
      %p63 = por %p61, %p62
      %p64 = scmp.ne.s32.totalorder %s56, %s58
      %p65 = scmp.eq.s32.totalorder %s27, 1
      %p66 = por %p64, %p65
      %p67 = scmp.ne.s32.totalorder %s58, %s59
      %p68 = scmp.eq.s32.totalorder %s27, 0
      %p69 = por %p67, %p68
      %p70 = scmp.ne.s32.totalorder %s58, %s59
      %p71 = scmp.eq.s32.totalorder %s28, 1
      %p72 = por %p70, %p71
      %p74 = scmp.ne.s32.totalorder %s59, %s73
      %p75 = scmp.eq.s32.totalorder %s28, 0
      %p76 = por %p74, %p75
      %s78 = sadd.s32 %s77, 1
      %p81 = scmp.eq.s32.totalorder %s22, 1
      %p82 = scmp.ne.s32.totalorder %s77, %s79
      %p83 = scmp.eq.s32.totalorder %s22, 0
      %p84 = por %p82, %p83
      %p85 = scmp.ne.s32.totalorder %s77, %s79
      %p86 = scmp.eq.s32.totalorder %s27, 1
      %p87 = por %p85, %p86
      %p88 = scmp.ne.s32.totalorder %s79, %s80
      %p89 = scmp.eq.s32.totalorder %s27, 0
      %p90 = por %p88, %p89
      %p91 = scmp.ne.s32.totalorder %s79, %s80
      %p92 = scmp.eq.s32.totalorder %s28, 1
      %p93 = por %p91, %p92
      %p95 = scmp.ne.s32.totalorder %s80, %s94
      %p96 = scmp.eq.s32.totalorder %s28, 0
      %p97 = por %p95, %p96
      %s99 = sadd.s32 %s98, 1
      %p102 = scmp.eq.s32.totalorder %s22, 1
      %p103 = scmp.ne.s32.totalorder %s98, %s100
      %p104 = scmp.eq.s32.totalorder %s22, 0
      %p105 = por %p103, %p104
      %p106 = scmp.ne.s32.totalorder %s98, %s100
      %p107 = scmp.eq.s32.totalorder %s27, 1
      %p108 = por %p106, %p107
      %p109 = scmp.ne.s32.totalorder %s100, %s101
      %p110 = scmp.eq.s32.totalorder %s27, 0
      %p111 = por %p109, %p110
      %p112 = scmp.ne.s32.totalorder %s100, %s101
      %p113 = scmp.eq.s32.totalorder %s28, 1
      %p114 = por %p112, %p113
      %p116 = scmp.ne.s32.totalorder %s101, %s115
      %p117 = scmp.eq.s32.totalorder %s28, 0
      %p118 = por %p116, %p117
      %s120 = sadd.s32 %s119, 1
      %p123 = scmp.eq.s32.totalorder %s22, 1
      %p124 = scmp.ne.s32.totalorder %s119, %s121
      %p125 = scmp.eq.s32.totalorder %s22, 0
      %p126 = por %p124, %p125
      %p127 = scmp.ne.s32.totalorder %s119, %s121
      %p128 = scmp.eq.s32.totalorder %s27, 1
      %p129 = por %p127, %p128
      %p130 = scmp.ne.s32.totalorder %s121, %s122
      %p131 = scmp.eq.s32.totalorder %s27, 0
      %p132 = por %p130, %p131
      %p133 = scmp.ne.s32.totalorder %s121, %s122
      %p134 = scmp.eq.s32.totalorder %s28, 1
      %p135 = por %p133, %p134
      %p137 = scmp.ne.s32.totalorder %s122, %s136
      %p138 = scmp.eq.s32.totalorder %s28, 0
      %p139 = por %p137, %p138
      %s141 = sadd.s32 %s140, 1
      %p144 = scmp.eq.s32.totalorder %s22, 1
      %p145 = scmp.ne.s32.totalorder %s140, %s142
      %p146 = scmp.eq.s32.totalorder %s22, 0
      %p147 = por %p145, %p146
      %p148 = scmp.ne.s32.totalorder %s140, %s142
      %p149 = scmp.eq.s32.totalorder %s27, 1
      %p150 = por %p148, %p149
      %p151 = scmp.ne.s32.totalorder %s142, %s143
      %p152 = scmp.eq.s32.totalorder %s27, 0
      %p153 = por %p151, %p152
      %p154 = scmp.ne.s32.totalorder %s142, %s143
      %p155 = scmp.eq.s32.totalorder %s28, 1
      %p156 = por %p154, %p155
      %p158 = scmp.ne.s32.totalorder %s143, %s157
      %p159 = scmp.eq.s32.totalorder %s28, 0
      %p160 = por %p158, %p159
      %s162 = sadd.s32 %s161, 1
      %p165 = scmp.eq.s32.totalorder %s22, 1
      %p166 = scmp.ne.s32.totalorder %s161, %s163
      %p167 = scmp.eq.s32.totalorder %s22, 0
      %p168 = por %p166, %p167
      %p169 = scmp.ne.s32.totalorder %s161, %s163
      %p170 = scmp.eq.s32.totalorder %s27, 1
      %p171 = por %p169, %p170
      %p172 = scmp.ne.s32.totalorder %s163, %s164
      %p173 = scmp.eq.s32.totalorder %s27, 0
      %p174 = por %p172, %p173
      %p175 = scmp.ne.s32.totalorder %s163, %s164
      %p176 = scmp.eq.s32.totalorder %s28, 1
      %p177 = por %p175, %p176
      %p179 = scmp.ne.s32.totalorder %s164, %s178
      %p180 = scmp.eq.s32.totalorder %s28, 0
      %p181 = por %p179, %p180
      %s182 = ssub.s32 %s22, %s29
      %p183 = scmp.eq.s32.totalorder %s182, 0
      %s185 = sadd.s32 %s184, 1
      %s186 = scalar_select %p183, %s184, %s185
      %p189 = pneg %p183
      %p190 = scmp.eq.s32.totalorder %s22, 1
      %p191 = por %p189, %p190
      %p192 = scmp.ne.s32.totalorder %s184, %s187
      %p193 = scmp.eq.s32.totalorder %s22, 0
      %p194 = por %p192, %p193
      %p195 = scmp.ne.s32.totalorder %s184, %s187
      %p196 = scmp.eq.s32.totalorder %s27, 1
      %p197 = por %p195, %p196
      %p198 = scmp.ne.s32.totalorder %s187, %s188
      %p199 = scmp.eq.s32.totalorder %s27, 0
      %p200 = por %p198, %p199
      %p201 = scmp.ne.s32.totalorder %s187, %s188
      %p202 = scmp.eq.s32.totalorder %s28, 1
      %p203 = por %p201, %p202
      %p205 = scmp.ne.s32.totalorder %s188, %s204
      %p206 = scmp.eq.s32.totalorder %s28, 0
      %p207 = por %p205, %p206
      %p208 = scmp.le.s32.totalorder 1, %s22
      %p209 = scmp.lt.s32.totalorder %s22, 3
      %p210 = pnand %p208, %p209
      %p211 = pneg %p210
      // Predicated region
      $region9: #{dncnn_forward.1} parent=5 // pred_check
        _
      $region10: #{dncnn_forward.1} parent=5 // pred_check_branch
        %213 = sbr.rel (%p210) target = $region12
      $region11: #{dncnn_forward.1} parent=5 // pred_region
        %s214 = ssub.s32 %s22, 1
        // Predicated region
        $region13: #{dncnn_forward.1} parent=11 // pred_check
          %p215 = pneg %p69
        $region14: #{dncnn_forward.1} parent=11 // pred_check_branch
          %217 = sbr.rel (%p215) target = $region16
        $region15: #{dncnn_forward.1} parent=11 // pred_region
          %s219 = ssub.s32 48, 48
          %220 = vsyncadd [#allocation10], %s219
          %s222 = sshll.u32 [#allocation9], 4
          %s223 = int_to_ptr.vmem [resolvable:$true] %s222
          %225 = dma.hbm_to_vmem [thread:$0]  %s1, 48, %s223, [#allocation10]
        $region16: #{dncnn_forward.1} parent=11 // pred_fallthru
          _
        // Predicated region
        $region17: #{dncnn_forward.1} parent=11 // pred_check
          %p226 = pneg %p90
        $region18: #{dncnn_forward.1} parent=11 // pred_check_branch
          %228 = sbr.rel (%p226) target = $region20
        $region19: #{dncnn_forward.1} parent=11 // pred_region
          %s230 = ssub.s32 1024, 1024
          %231 = vsyncadd [#allocation10], %s230
          %s232 = sshll.u32 [#allocation11], 4
          %s233 = int_to_ptr.vmem [resolvable:$true] %s232
          %238 = dma.hbm_to_vmem [thread:$0]  %s2, 1024, %s233, [#allocation10], 128, 128, 8
        $region20: #{dncnn_forward.1} parent=11 // pred_fallthru
          _
        // Predicated region
        $region21: #{dncnn_forward.1} parent=11 // pred_check
          %p239 = pneg %p111
        $region22: #{dncnn_forward.1} parent=11 // pred_check_branch
          %241 = sbr.rel (%p239) target = $region24
        $region23: #{dncnn_forward.1} parent=11 // pred_region
          %s243 = ssub.s32 7680, 7680
          %244 = vsyncadd [#allocation13], %s243
          %s245 = sshll.u32 [#allocation12], 4
          %s246 = int_to_ptr.vmem [resolvable:$true] %s245
          %251 = dma.hbm_to_vmem [thread:$0]  %s3, 7680, %s246, [#allocation13], 320, 320, 20
        $region24: #{dncnn_forward.1} parent=11 // pred_fallthru
          _
        // Predicated region
        $region25: #{dncnn_forward.1} parent=11 // pred_check
          %p252 = pneg %p132
        $region26: #{dncnn_forward.1} parent=11 // pred_check_branch
          %254 = sbr.rel (%p252) target = $region28
        $region27: #{dncnn_forward.1} parent=11 // pred_region
          %s256 = ssub.s32 3072, 3072
          %257 = vsyncadd [#allocation13], %s256
          %s258 = sshll.u32 [#allocation14], 4
          %s259 = int_to_ptr.vmem [resolvable:$true] %s258
          %264 = dma.hbm_to_vmem [thread:$0]  %s4, 3072, %s259, [#allocation13], 128, 128, 8
        $region28: #{dncnn_forward.1} parent=11 // pred_fallthru
          _
        // Predicated region
        $region29: #{dncnn_forward.1} parent=11 // pred_check
          %p265 = pneg %p153
        $region30: #{dncnn_forward.1} parent=11 // pred_check_branch
          %267 = sbr.rel (%p265) target = $region32
        $region31: #{dncnn_forward.1} parent=11 // pred_region
          %s269 = ssub.s32 3072, 3072
          %270 = vsyncadd [#allocation16], %s269
          %s271 = sshll.u32 [#allocation15], 4
          %s272 = int_to_ptr.vmem [resolvable:$true] %s271
          %277 = dma.hbm_to_vmem [thread:$0]  %s5, 3072, %s272, [#allocation16], 128, 128, 8
        $region32: #{dncnn_forward.1} parent=11 // pred_fallthru
          _
        // Predicated region
        $region33: #{dncnn_forward.1} parent=11 // pred_check
          %p278 = pneg %p174
        $region34: #{dncnn_forward.1} parent=11 // pred_check_branch
          %280 = sbr.rel (%p278) target = $region36
        $region35: #{dncnn_forward.1} parent=11 // pred_region
          %s282 = ssub.s32 160, 160
          %283 = vsyncadd [#allocation16], %s282
          %s285 = sshll.u32 [#allocation17], 4
          %s286 = int_to_ptr.vmem [resolvable:$true] %s285
          %288 = dma.hbm_to_vmem [thread:$0]  %s6, 160, %s286, [#allocation16]
        $region36: #{dncnn_forward.1} parent=11 // pred_fallthru
          _
      $region12: #{dncnn_forward.1} parent=5 // pred_fallthru
        _
      %p289 = scmp.lt.s32.totalorder %s22, 2
      // Predicated region
      $region37: #{dncnn_forward.1} parent=5 // pred_check
        %p290 = pneg %p289
      $region38: #{dncnn_forward.1} parent=5 // pred_check_branch
        %292 = sbr.rel (%p290) target = $region40
      $region39: #{dncnn_forward.1} parent=5 // pred_region
        // Predicated region
        $region41: #{dncnn_forward.1} parent=39 // pred_check
          %p293 = pneg %p42
        $region42: #{dncnn_forward.1} parent=39 // pred_check_branch
          %295 = sbr.rel (%p293) target = $region44
        $region43: #{dncnn_forward.1} parent=39 // pred_region
          %s296 = sand.u32 %s32, 1
          %s297 = scalar_lea.sflag [#allocation7], %s296
          %s298 = sand.u32 %s32, 1
          %s299 = smul.addr %s298, 40
          %s300 = scalar_lea.vmem [#allocation6], %s299
          %s302 = ssub.s32 640, 640
          %303 = vsyncadd %s297, %s302
          %s304 = smul.addr %s22, 10
          %s305 = smul.addr %s304, 64
          %s306 = scalar_lea.hbm %s0, %s305
          %s307 = sshll.u32 %s300, 4
          %s308 = int_to_ptr.vmem [resolvable:$true] %s307
          %313 = dma.hbm_to_vmem [thread:$0]  %s306, 640, %s308, %s297, 320, 320, 20
        $region44: #{dncnn_forward.1} parent=39 // pred_fallthru
          _
      $region40: #{dncnn_forward.1} parent=5 // pred_fallthru
        _
      %p314 = scmp.le.s32.totalorder 1, %s22
      %p315 = scmp.lt.s32.totalorder %s22, 3
      %p316 = pnand %p314, %p315
      %p317 = pneg %p316
      // Predicated region
      $region45: #{dncnn_forward.1} parent=5 // pred_check
        _
      $region46: #{dncnn_forward.1} parent=5 // pred_check_branch
        %319 = sbr.rel (%p316) target = $region48
      $region47: #{dncnn_forward.1} parent=5 // pred_region
        %s320 = ssub.s32 %s22, 1
        %s321 = sand.u32 %s35, 1
        %s322 = scalar_lea.sflag [#allocation7], %s321
        %s323 = sand.u32 %s35, 1
        %s324 = smul.addr %s323, 40
        %s325 = scalar_lea.vmem [#allocation6], %s324
        // Predicated region
        $region49: #{dncnn_forward.1} parent=47 // pred_check
          %p326 = pneg %p48
        $region50: #{dncnn_forward.1} parent=47 // pred_check_branch
          %328 = sbr.rel (%p326) target = $region52
        $region51: #{dncnn_forward.1} parent=47 // pred_region
          %329 = dma.done %s322, 640
        $region52: #{dncnn_forward.1} parent=47 // pred_fallthru
          _
        // Predicated region
        $region53: #{dncnn_forward.1} parent=47 // pred_check
          %p330 = pneg %p69
        $region54: #{dncnn_forward.1} parent=47 // pred_check_branch
          %332 = sbr.rel (%p330) target = $region56
        $region55: #{dncnn_forward.1} parent=47 // pred_region
          %333 = dma.done [#allocation10], 48
        $region56: #{dncnn_forward.1} parent=47 // pred_fallthru
          _
        // Predicated region
        $region57: #{dncnn_forward.1} parent=47 // pred_check
          %p334 = pneg %p90
        $region58: #{dncnn_forward.1} parent=47 // pred_check_branch
          %336 = sbr.rel (%p334) target = $region60
        $region59: #{dncnn_forward.1} parent=47 // pred_region
          %337 = dma.done [#allocation10], 1024
        $region60: #{dncnn_forward.1} parent=47 // pred_fallthru
          _
        // Predicated region
        $region61: #{dncnn_forward.1} parent=47 // pred_check
          %p338 = pneg %p111
        $region62: #{dncnn_forward.1} parent=47 // pred_check_branch
          %340 = sbr.rel (%p338) target = $region64
        $region63: #{dncnn_forward.1} parent=47 // pred_region
          %341 = dma.done [#allocation13], 7680
        $region64: #{dncnn_forward.1} parent=47 // pred_fallthru
          _
        // Predicated region
        $region65: #{dncnn_forward.1} parent=47 // pred_check
          %p342 = pneg %p132
        $region66: #{dncnn_forward.1} parent=47 // pred_check_branch
          %344 = sbr.rel (%p342) target = $region68
        $region67: #{dncnn_forward.1} parent=47 // pred_region
          %345 = dma.done [#allocation13], 3072
        $region68: #{dncnn_forward.1} parent=47 // pred_fallthru
          _
        // Predicated region
        $region69: #{dncnn_forward.1} parent=47 // pred_check
          %p346 = pneg %p153
        $region70: #{dncnn_forward.1} parent=47 // pred_check_branch
          %348 = sbr.rel (%p346) target = $region72
        $region71: #{dncnn_forward.1} parent=47 // pred_region
          %349 = dma.done [#allocation16], 3072
        $region72: #{dncnn_forward.1} parent=47 // pred_fallthru
          _
        // Predicated region
        $region73: #{dncnn_forward.1} parent=47 // pred_check
          %p350 = pneg %p174
        $region74: #{dncnn_forward.1} parent=47 // pred_check_branch
          %352 = sbr.rel (%p350) target = $region76
        $region75: #{dncnn_forward.1} parent=47 // pred_region
          %353 = dma.done [#allocation16], 160
        $region76: #{dncnn_forward.1} parent=47 // pred_fallthru
          _
        %s354 = sand.u32 %s35, 1
        %s355 = scalar_lea.sflag [#allocation7], %s354
        %s356 = sand.u32 %s35, 1
        %s357 = smul.addr %s356, 40
        %s358 = scalar_lea.vmem [#allocation6], %s357
        %p359 = pneg %p48
        %p360 = pneg %p45
        %p361 = pneg %p69
        %p362 = pneg %p66
        %p363 = pneg %p90
        %p364 = pneg %p87
        %p365 = pneg %p111
        %p366 = pneg %p108
        %p367 = pneg %p132
        %p368 = pneg %p129
        %p369 = pneg %p153
        %p370 = pneg %p150
        %p371 = pneg %p174
        %p372 = pneg %p171
        %p373 = pneg %p200
        %p374 = pneg %p197
        %s375 = sand.u32 %s187, 1
        %s376 = scalar_lea.sflag [#allocation8], %s375
        %s377 = sand.u32 %s187, 1
        %s378 = smul.addr %s377, 12
        %s379 = scalar_lea.vmem [#allocation18], %s378
        %v381 = vld [vmem:[#allocation9] sm:$0x7]
        %382 = vst [vmem:[#allocation4] sm:$0xff] 0
        %383 = vst [vmem:[#allocation4 + $0x8] sm:$0xff] 0
        %384 = vst [vmem:[#allocation4 + $0x10] sm:$0xff] 0
        %385 = vst [vmem:[#allocation4 + $0x18] sm:$0xff] 0
        %vm386 = vcmask 556032
        %387 = vst.msk [vmem:[#allocation4 + $0x20] sm:$0xff] %vm386, 0
        %388 = vst [vmem:[#allocation4 + $0x28] sm:$0xff] 0
        %389 = vst [vmem:[#allocation4 + $0x30] sm:$0xff] 0
        %390 = vst [vmem:[#allocation4 + $0x38] sm:$0xff] 0
        %391 = vst [vmem:[#allocation4 + $0x40] sm:$0xff] 0
        %392 = vst.msk [vmem:[#allocation4 + $0x48] sm:$0xff] %vm386, 0
        %393 = vst [vmem:[#allocation4 + $0x50] sm:$0xff] 0
        %394 = vst [vmem:[#allocation4 + $0x58] sm:$0xff] 0
        %395 = vst [vmem:[#allocation4 + $0x60] sm:$0xff] 0
        %396 = vst [vmem:[#allocation4 + $0x68] sm:$0xff] 0
        %397 = vst.msk [vmem:[#allocation4 + $0x70] sm:$0xff] %vm386, 0
        %398 = vst [vmem:[#allocation4 + $0x78] sm:$0xff] 0
        %399 = vst [vmem:[#allocation4 + $0x80] sm:$0xff] 0
        %400 = vst [vmem:[#allocation4 + $0x88] sm:$0xff] 0
        %401 = vst [vmem:[#allocation4 + $0x90] sm:$0xff] 0
        %402 = vst.msk [vmem:[#allocation4 + $0x98] sm:$0xff] %vm386, 0
        %403 = vst [vmem:[#allocation5] sm:$0xff] 0
        %404 = vst [vmem:[#allocation5 + $0x8] sm:$0xff] 0
        %405 = vst [vmem:[#allocation5 + $0x10] sm:$0xff] 0
        %406 = vst [vmem:[#allocation5 + $0x18] sm:$0xff] 0
        %407 = vst.msk [vmem:[#allocation5 + $0x20] sm:$0xff] %vm386, 0
        %408 = vst [vmem:[#allocation5 + $0x28] sm:$0xff] 0
        %409 = vst [vmem:[#allocation5 + $0x30] sm:$0xff] 0
        %410 = vst [vmem:[#allocation5 + $0x38] sm:$0xff] 0
        %411 = vst [vmem:[#allocation5 + $0x40] sm:$0xff] 0
        %412 = vst.msk [vmem:[#allocation5 + $0x48] sm:$0xff] %vm386, 0
        %413 = vst [vmem:[#allocation5 + $0x50] sm:$0xff] 0
        %414 = vst [vmem:[#allocation5 + $0x58] sm:$0xff] 0
        %415 = vst [vmem:[#allocation5 + $0x60] sm:$0xff] 0
        %416 = vst [vmem:[#allocation5 + $0x68] sm:$0xff] 0
        %417 = vst.msk [vmem:[#allocation5 + $0x70] sm:$0xff] %vm386, 0
        %418 = vst [vmem:[#allocation5 + $0x78] sm:$0xff] 0
        %419 = vst [vmem:[#allocation5 + $0x80] sm:$0xff] 0
        %420 = vst [vmem:[#allocation5 + $0x88] sm:$0xff] 0
        %421 = vst [vmem:[#allocation5 + $0x90] sm:$0xff] 0
        %422 = vst.msk [vmem:[#allocation5 + $0x98] sm:$0xff] %vm386, 0
        %v423 = vld [vmem:[%s325] sm:$0xff]
        %v424 = vld [vmem:[%s325 + $0x8] sm:$0xff]
        %v425 = vld [vmem:[%s325 + $0x14] sm:$0xff]
        %v426 = vld [vmem:[%s325 + $0x1c] sm:$0xff]
        %v431 = vunpack.c.l.b16 %v423
        %v432 = vunpack.c.h.b16 %v423
        %v433 = vunpack.c.l.b16 %v424
        %v434 = vunpack.c.h.b16 %v424
        %v435 = vunpack.c.l.b16 %v425
        %v436 = vunpack.c.h.b16 %v425
        %v437 = vunpack.c.l.b16 %v426
        %v438 = vunpack.c.h.b16 %v426
        %v439 = vpack.c.b16 %v435, %v431
        %v440 = vpack.c.b16 %v436, %v432
        %v441 = vpack.c.b16 %v437, %v433
        %v442 = vpack.c.b16 %v438, %v434
        %443 = vrot.lane.b32.xlu0 %v439, 19
        %v444 = vpop.permute.xlu0 %443
        %445 = vrot.lane.b32.xlu0 %v440, 19
        %v446 = vpop.permute.xlu0 %445
        %447 = vrot.lane.b32.xlu0 %v441, 19
        %v448 = vpop.permute.xlu0 %447
        %449 = vrot.lane.b32.xlu0 %v442, 19
        %v450 = vpop.permute.xlu0 %449
        %vm451 = vcmask 154624
        %v452 = vsel %vm451, %v444, %v446
        %v453 = vsel %vm451, %v446, %v448
        %v454 = vsel %vm451, %v448, %v450
        %458 = vst [vmem:[#allocation2] sm:$0xff] %v452
        %459 = vst [vmem:[#allocation2 + $0x8] sm:$0xff] %v453
        %460 = vst.msk [vmem:[#allocation2 + $0x10] sm:$0xff] %vm386, %v454
        %v461 = vld [vmem:[%s325] sm:$0xff]
        %v462 = vld [vmem:[%s325 + $0x8] sm:$0xff]
        %v463 = vld [vmem:[%s325 + $0x14] sm:$0xff]
        %v464 = vld [vmem:[%s325 + $0x1c] sm:$0xff]
        %v469 = vunpack.c.l.b16 %v461
        %v470 = vunpack.c.h.b16 %v461
        %v471 = vunpack.c.l.b16 %v462
        %v472 = vunpack.c.h.b16 %v462
        %v473 = vunpack.c.l.b16 %v463
        %v474 = vunpack.c.h.b16 %v463
        %v475 = vunpack.c.l.b16 %v464
        %v476 = vunpack.c.h.b16 %v464
        %v477 = vpack.c.b16 %v473, %v469
        %v478 = vpack.c.b16 %v474, %v470
        %v479 = vpack.c.b16 %v475, %v471
        %v480 = vpack.c.b16 %v476, %v472
        %481 = vrot.lane.b32.xlu0 %v477, 18
        %v482 = vpop.permute.xlu0 %481
        %483 = vrot.lane.b32.xlu0 %v478, 18
        %v484 = vpop.permute.xlu0 %483
        %485 = vrot.lane.b32.xlu0 %v479, 18
        %v486 = vpop.permute.xlu0 %485
        %487 = vrot.lane.b32.xlu0 %v480, 18
        %v488 = vpop.permute.xlu0 %487
        %vm489 = vcmask 146432
        %v490 = vsel %vm489, %v482, %v484
        %v491 = vsel %vm489, %v484, %v486
        %v492 = vsel %vm489, %v486, %v488
        %496 = vst [vmem:[#allocation2 + $0x18] sm:$0xff] %v490
        %497 = vst [vmem:[#allocation2 + $0x20] sm:$0xff] %v491
        %498 = vst.msk [vmem:[#allocation2 + $0x28] sm:$0xff] %vm386, %v492
        %v499 = vld [vmem:[%s325] sm:$0xff]
        %v500 = vld [vmem:[%s325 + $0x8] sm:$0xff]
        %v501 = vld [vmem:[%s325 + $0x14] sm:$0xff]
        %v502 = vld [vmem:[%s325 + $0x1c] sm:$0xff]
        %v507 = vunpack.c.l.b16 %v499
        %v508 = vunpack.c.h.b16 %v499
        %v509 = vunpack.c.l.b16 %v500
        %v510 = vunpack.c.h.b16 %v500
        %v511 = vunpack.c.l.b16 %v501
        %v512 = vunpack.c.h.b16 %v501
        %v513 = vunpack.c.l.b16 %v502
        %v514 = vunpack.c.h.b16 %v502
        %v515 = vpack.c.b16 %v511, %v507
        %v516 = vpack.c.b16 %v512, %v508
        %v517 = vpack.c.b16 %v513, %v509
        %v518 = vpack.c.b16 %v514, %v510
        %519 = vrot.lane.b32.xlu0 %v515, 17
        %v520 = vpop.permute.xlu0 %519
        %521 = vrot.lane.b32.xlu0 %v516, 17
        %v522 = vpop.permute.xlu0 %521
        %523 = vrot.lane.b32.xlu0 %v517, 17
        %v524 = vpop.permute.xlu0 %523
        %525 = vrot.lane.b32.xlu0 %v518, 17
        %v526 = vpop.permute.xlu0 %525
        %vm527 = vcmask 138240
        %v528 = vsel %vm527, %v520, %v522
        %v529 = vsel %vm527, %v522, %v524
        %v530 = vsel %vm527, %v524, %v526
        %534 = vst [vmem:[#allocation2 + $0x30] sm:$0xff] %v528
        %535 = vst [vmem:[#allocation2 + $0x38] sm:$0xff] %v529
        %536 = vst.msk [vmem:[#allocation2 + $0x40] sm:$0xff] %vm386, %v530
        %v537 = vld [vmem:[%s325] sm:$0xff]
        %v538 = vld [vmem:[%s325 + $0x8] sm:$0xff]
        %v539 = vld [vmem:[%s325 + $0x14] sm:$0xff]
        %v540 = vld [vmem:[%s325 + $0x1c] sm:$0xff]
        %v545 = vunpack.c.l.b16 %v537
        %v546 = vunpack.c.h.b16 %v537
        %v547 = vunpack.c.l.b16 %v538
        %v548 = vunpack.c.h.b16 %v538
        %v549 = vunpack.c.l.b16 %v539
        %v550 = vunpack.c.h.b16 %v539
        %v551 = vunpack.c.l.b16 %v540
        %v552 = vunpack.c.h.b16 %v540
        %v553 = vpack.c.b16 %v549, %v545
        %v554 = vpack.c.b16 %v550, %v546
        %v555 = vpack.c.b16 %v551, %v547
        %v556 = vpack.c.b16 %v552, %v548
        %557 = vrot.lane.b32.xlu0 %v553, 1
        %v558 = vpop.permute.xlu0 %557
        %559 = vrot.lane.b32.xlu0 %v554, 1
        %v560 = vpop.permute.xlu0 %559
        %561 = vrot.lane.b32.xlu0 %v555, 1
        %v562 = vpop.permute.xlu0 %561
        %563 = vrot.lane.b32.xlu0 %v556, 1
        %v564 = vpop.permute.xlu0 %563
        %vm565 = vcmask 7168
        %v566 = vsel %vm565, %v558, %v560
        %v567 = vsel %vm565, %v560, %v562
        %v568 = vsel %vm565, %v562, %v564
        %572 = vst [vmem:[#allocation2 + $0x48] sm:$0xff] %v566
        %573 = vst [vmem:[#allocation2 + $0x50] sm:$0xff] %v567
        %574 = vst.msk [vmem:[#allocation2 + $0x58] sm:$0xff] %vm386, %v568
        %v575 = vld [vmem:[%s325 + $0x4] sm:$0xff]
        %v576 = vld [vmem:[%s325 + $0xc] sm:$0xf]
        %v577 = vld [vmem:[%s325 + $0x18] sm:$0xff]
        %v578 = vld [vmem:[%s325 + $0x20] sm:$0xf]
        %v583 = vunpack.c.l.b16 %v575
        %v584 = vunpack.c.h.b16 %v575
        %v585 = vunpack.c.l.b16 %v576
        %v586 = vunpack.c.l.b16 %v577
        %v587 = vunpack.c.h.b16 %v577
        %v588 = vunpack.c.l.b16 %v578
        %v589 = vpack.c.b16 %v586, %v583
        %v590 = vpack.c.b16 %v587, %v584
        %v591 = vpack.c.b16 %v588, %v585
        %595 = vst [vmem:[#allocation2 + $0x60] sm:$0xff] %v589
        %596 = vst [vmem:[#allocation2 + $0x68] sm:$0xff] %v590
        %597 = vst.msk [vmem:[#allocation2 + $0x70] sm:$0xff] %vm386, %v591
        %v598 = vld [vmem:[%s325 + $0x4] sm:$0xff]
        %v599 = vld [vmem:[%s325 + $0xc] sm:$0xf]
        %v600 = vld [vmem:[%s325 + $0x18] sm:$0xff]
        %v601 = vld [vmem:[%s325 + $0x20] sm:$0xf]
        %v606 = vunpack.c.l.b16 %v598
        %v607 = vunpack.c.h.b16 %v598
        %v608 = vunpack.c.l.b16 %v599
        %v609 = vunpack.c.l.b16 %v600
        %v610 = vunpack.c.h.b16 %v600
        %v611 = vunpack.c.l.b16 %v601
        %v612 = vpack.c.b16 %v609, %v606
        %v613 = vpack.c.b16 %v610, %v607
        %v614 = vpack.c.b16 %v611, %v608
        %615 = vrot.lane.b32.xlu0 %v612, 127
        %v616 = vpop.permute.xlu0 %615
        %617 = vrot.lane.b32.xlu0 %v613, 127
        %v618 = vpop.permute.xlu0 %617
        %619 = vrot.lane.b32.xlu0 %v614, 127
        %v620 = vpop.permute.xlu0 %619
        %vm621 = vcmask 1039360
        %v622 = vsel %vm621, %v616, %v618
        %v623 = vsel %vm621, %v618, %v620
        %627 = vst [vmem:[#allocation2 + $0x78] sm:$0xff] %v622
        %628 = vst [vmem:[#allocation2 + $0x80] sm:$0xff] %v623
        %629 = vst.msk [vmem:[#allocation2 + $0x88] sm:$0xff] %vm386, %v620
        %v630 = vld [vmem:[%s325 + $0x4] sm:$0xff]
        %v631 = vld [vmem:[%s325 + $0xc] sm:$0xf]
        %v632 = vld [vmem:[%s325 + $0x18] sm:$0xff]
        %v633 = vld [vmem:[%s325 + $0x20] sm:$0xf]
        %v638 = vunpack.c.l.b16 %v630
        %v639 = vunpack.c.h.b16 %v630
        %v640 = vunpack.c.l.b16 %v631
        %v641 = vunpack.c.l.b16 %v632
        %v642 = vunpack.c.h.b16 %v632
        %v643 = vunpack.c.l.b16 %v633
        %v644 = vpack.c.b16 %v641, %v638
        %v645 = vpack.c.b16 %v642, %v639
        %v646 = vpack.c.b16 %v643, %v640
        %647 = vrot.lane.b32.xlu0 %v644, 111
        %v648 = vpop.permute.xlu0 %647
        %649 = vrot.lane.b32.xlu0 %v645, 111
        %v650 = vpop.permute.xlu0 %649
        %651 = vrot.lane.b32.xlu0 %v646, 111
        %v652 = vpop.permute.xlu0 %651
        %vm653 = vcmask 908288
        %v654 = vsel %vm653, %v648, %v650
        %v655 = vsel %vm653, %v650, %v652
        %659 = vst [vmem:[#allocation2 + $0x90] sm:$0xff] %v654
        %660 = vst [vmem:[#allocation2 + $0x98] sm:$0xff] %v655
        %661 = vst.msk [vmem:[#allocation2 + $0xa0] sm:$0xff] %vm386, %v652
        %v662 = vld [vmem:[%s325 + $0x4] sm:$0xff]
        %v663 = vld [vmem:[%s325 + $0xc] sm:$0xf]
        %v664 = vld [vmem:[%s325 + $0x18] sm:$0xff]
        %v665 = vld [vmem:[%s325 + $0x20] sm:$0xf]
        %v670 = vunpack.c.l.b16 %v662
        %v671 = vunpack.c.h.b16 %v662
        %v672 = vunpack.c.l.b16 %v663
        %v673 = vunpack.c.l.b16 %v664
        %v674 = vunpack.c.h.b16 %v664
        %v675 = vunpack.c.l.b16 %v665
        %v676 = vpack.c.b16 %v673, %v670
        %v677 = vpack.c.b16 %v674, %v671
        %v678 = vpack.c.b16 %v675, %v672
        %679 = vrot.lane.b32.xlu0 %v676, 110
        %v680 = vpop.permute.xlu0 %679
        %681 = vrot.lane.b32.xlu0 %v677, 110
        %v682 = vpop.permute.xlu0 %681
        %683 = vrot.lane.b32.xlu0 %v678, 110
        %v684 = vpop.permute.xlu0 %683
        %vm685 = vcmask 900096
        %v686 = vsel %vm685, %v680, %v682
        %v687 = vsel %vm685, %v682, %v684
        %691 = vst [vmem:[#allocation2 + $0xa8] sm:$0xff] %v686
        %692 = vst [vmem:[#allocation2 + $0xb0] sm:$0xff] %v687
        %693 = vst.msk [vmem:[#allocation2 + $0xb8] sm:$0xff] %vm386, %v684
        %v694 = vld [vmem:[%s325 + $0x4] sm:$0xff]
        %v695 = vld [vmem:[%s325 + $0xc] sm:$0xf]
        %v696 = vld [vmem:[%s325 + $0x18] sm:$0xff]
        %v697 = vld [vmem:[%s325 + $0x20] sm:$0xf]
        %v702 = vunpack.c.l.b16 %v694
        %v703 = vunpack.c.h.b16 %v694
        %v704 = vunpack.c.l.b16 %v695
        %v705 = vunpack.c.l.b16 %v696
        %v706 = vunpack.c.h.b16 %v696
        %v707 = vunpack.c.l.b16 %v697
        %v708 = vpack.c.b16 %v705, %v702
        %v709 = vpack.c.b16 %v706, %v703
        %v710 = vpack.c.b16 %v707, %v704
        %711 = vrot.lane.b32.xlu0 %v708, 109
        %v712 = vpop.permute.xlu0 %711
        %713 = vrot.lane.b32.xlu0 %v709, 109
        %v714 = vpop.permute.xlu0 %713
        %715 = vrot.lane.b32.xlu0 %v710, 109
        %v716 = vpop.permute.xlu0 %715
        %vm717 = vcmask 891904
        %v718 = vsel %vm717, %v712, %v714
        %v719 = vsel %vm717, %v714, %v716
        %723 = vst [vmem:[#allocation2 + $0xc0] sm:$0xff] %v718
        %724 = vst [vmem:[#allocation2 + $0xc8] sm:$0xff] %v719
        %725 = vst.msk [vmem:[#allocation2 + $0xd0] sm:$0xff] %vm386, %v716
        %v726 = vld [vmem:[#allocation11] sm:$0xff]
        %v727 = vld [vmem:[#allocation11 + $0x8] sm:$0xff]
        %v728 = vld [vmem:[#allocation11 + $0x10] sm:$0xff]
        %v729 = vld [vmem:[#allocation11 + $0x18] sm:$0xff]
        %v730 = vld [vmem:[#allocation11 + $0x20] sm:$0xff]
        %v731 = vld [vmem:[#allocation11 + $0x28] sm:$0xff]
        %v732 = vld [vmem:[#allocation11 + $0x30] sm:$0xff]
        %v733 = vld [vmem:[#allocation11 + $0x38] sm:$0xff]
        %v734 = vld [vmem:[#allocation2] sm:$0xff]
        %v735 = vld [vmem:[#allocation2 + $0x8] sm:$0xff]
        %v736 = vld [vmem:[#allocation2 + $0x10] sm:$0xff]
        %v737 = vld [vmem:[#allocation2 + $0x18] sm:$0xff]
        %v738 = vld [vmem:[#allocation2 + $0x20] sm:$0xff]
        %v739 = vld [vmem:[#allocation2 + $0x28] sm:$0xff]
        %v740 = vld [vmem:[#allocation2 + $0x30] sm:$0xff]
        %v741 = vld [vmem:[#allocation2 + $0x38] sm:$0xff]
        %v742 = vld [vmem:[#allocation2 + $0x40] sm:$0xff]
        %v743 = vld [vmem:[#allocation2 + $0x48] sm:$0xff]
        %v744 = vld [vmem:[#allocation2 + $0x50] sm:$0xff]
        %v745 = vld [vmem:[#allocation2 + $0x58] sm:$0xff]
        %v746 = vld [vmem:[#allocation2 + $0x60] sm:$0xff]
        %v747 = vld [vmem:[#allocation2 + $0x68] sm:$0xff]
        %v748 = vld [vmem:[#allocation2 + $0x70] sm:$0xff]
        %v749 = vld [vmem:[#allocation2 + $0x78] sm:$0xff]
        %v750 = vld [vmem:[#allocation2 + $0x80] sm:$0xff]
        %v751 = vld [vmem:[#allocation2 + $0x88] sm:$0xff]
        %v752 = vld [vmem:[#allocation2 + $0x90] sm:$0xff]
        %v753 = vld [vmem:[#allocation2 + $0x98] sm:$0xff]
        %v754 = vld [vmem:[#allocation2 + $0xa0] sm:$0xff]
        %v755 = vld [vmem:[#allocation2 + $0xa8] sm:$0xff]
        %v756 = vld [vmem:[#allocation2 + $0xb0] sm:$0xff]
        %v757 = vld [vmem:[#allocation2 + $0xb8] sm:$0xff]
        %v758 = vld [vmem:[#allocation2 + $0xc0] sm:$0xff]
        %v759 = vld [vmem:[#allocation2 + $0xc8] sm:$0xff]
        %v760 = vld [vmem:[#allocation2 + $0xd0] sm:$0xff]
        %v769 = vunpack.c.l.b16 %v726
        %v770 = vunpack.c.h.b16 %v726
        %v771 = vunpack.c.l.b16 %v727
        %v772 = vunpack.c.h.b16 %v727
        %v773 = vunpack.c.l.b16 %v728
        %v774 = vunpack.c.h.b16 %v728
        %v775 = vunpack.c.l.b16 %v729
        %v776 = vunpack.c.h.b16 %v729
        %v777 = vunpack.c.l.b16 %v730
        %v778 = vunpack.c.h.b16 %v730
        %v779 = vunpack.c.l.b16 %v731
        %v780 = vunpack.c.h.b16 %v731
        %v781 = vunpack.c.l.b16 %v732
        %v782 = vunpack.c.h.b16 %v732
        %v783 = vunpack.c.l.b16 %v733
        %v784 = vunpack.c.h.b16 %v733
        %v785 = vpack.c.b16 %v771, %v769
        %v786 = vpack.c.b16 %v772, %v770
        %v787 = vpack.c.b16 %v775, %v773
        %v788 = vpack.c.b16 %v776, %v774
        %v789 = vpack.c.b16 %v779, %v777
        %v790 = vpack.c.b16 %v780, %v778
        %v791 = vpack.c.b16 %v783, %v781
        %v792 = vpack.c.b16 %v784, %v782
        %vm797 = vcmask 130048
        %v799 = vsel %vm797, %v786, 0
        %v802 = vsel %vm797, %v788, 0
        %v805 = vsel %vm797, %v790, 0
        %v808 = vsel %vm797, %v792, 0
        %810 = vmatprep.subr.bf16.mxu0 %v735
        %811 = vmatpush1.bf16.msra.mxu0 %v734
        %812 = vmatprep.subr.bf16.mxu0 %v738
        %813 = vmatpush1.bf16.msra.mxu0 %v737
        %814 = vmatprep.subr.bf16.mxu0 %v741
        %815 = vmatpush1.bf16.msra.mxu0 %v740
        %816 = vmatprep.subr.bf16.mxu0 %v744
        %817 = vmatpush1.bf16.msra.mxu0 %v743
        %818 = vmatprep.subr.bf16.mxu0 %v747
        %819 = vmatpush1.bf16.msra.mxu0 %v746
        %820 = vmatprep.subr.bf16.mxu0 %v750
        %821 = vmatpush1.bf16.msra.mxu0 %v749
        %822 = vmatprep.subr.bf16.mxu0 %v753
        %823 = vmatpush1.bf16.msra.mxu0 %v752
        %824 = vmatprep.subr.bf16.mxu0 %v756
        %825 = vmatpush1.bf16.msra.mxu0 %v755
        %826 = vmatprep.subr.bf16.mxu0 %v759
        %827 = vmatpush1.bf16.msra.mxu0 %v758
        %828 = vmatprep.subr.bf16.mxu0 0
        %829 = vmatpush1.bf16.msra.mxu0 0
        %830 = vmatprep.subr.bf16.mxu0 0
        %831 = vmatpush1.bf16.msra.mxu0 0
        %832 = vmatprep.subr.bf16.mxu0 0
        %833 = vmatpush1.bf16.msra.mxu0 0
        %834 = vmatprep.subr.bf16.mxu0 0
        %835 = vmatpush1.bf16.msra.mxu0 0
        %836 = vmatprep.subr.bf16.mxu0 0
        %837 = vmatpush1.bf16.msra.mxu0 0
        %838 = vmatprep.subr.bf16.mxu0 0
        %839 = vmatpush1.bf16.msra.mxu0 0
        %840 = vmatprep.subr.bf16.mxu0 0
        %841 = vmatpush1.bf16.msra.mxu0 0
        %842 = vmatprep.mubr.bf16.mxu0 %v799
        %843 = vmatmul.mubr.bf16.gmra.mrb[0].mxu0 %v785
        %v844 = vpop.f32.mrb[0].mxu0
        %v845 = vadd.f32 0.0, %v844
        %v846 = vpop.f32.mrb[0].mxu0
        %v847 = vadd.f32 0.0, %v846
        %v848 = vpop.f32.mrb[0].mxu0
        %v849 = vadd.f32 0.0, %v848
        %v850 = vpop.f32.mrb[0].mxu0
        %v851 = vadd.f32 0.0, %v850
        %852 = vmatprep.mubr.bf16.mxu0 %v802
        %853 = vmatmul.mubr.bf16.gmra.mrb[0].mxu0 %v787
        %v854 = vpop.f32.mrb[0].mxu0
        %v855 = vadd.f32 0.0, %v854
        %v856 = vpop.f32.mrb[0].mxu0
        %v857 = vadd.f32 0.0, %v856
        %v858 = vpop.f32.mrb[0].mxu0
        %v859 = vadd.f32 0.0, %v858
        %v860 = vpop.f32.mrb[0].mxu0
        %v861 = vadd.f32 0.0, %v860
        %862 = vmatprep.mubr.bf16.mxu0 %v805
        %863 = vmatmul.mubr.bf16.gmra.mrb[0].mxu0 %v789
        %v864 = vpop.f32.mrb[0].mxu0
        %v865 = vadd.f32 0.0, %v864
        %v866 = vpop.f32.mrb[0].mxu0
        %v867 = vadd.f32 0.0, %v866
        %v868 = vpop.f32.mrb[0].mxu0
        %v869 = vadd.f32 0.0, %v868
        %v870 = vpop.f32.mrb[0].mxu0
        %v871 = vadd.f32 0.0, %v870
        %872 = vmatprep.mubr.bf16.mxu0 %v808
        %873 = vmatmul.mubr.bf16.gmra.mrb[0].mxu0 %v791
        %v874 = vpop.f32.mrb[0].mxu0
        %v875 = vadd.f32 0.0, %v874
        %v876 = vpop.f32.mrb[0].mxu0
        %v877 = vadd.f32 0.0, %v876
        %v878 = vpop.f32.mrb[0].mxu0
        %v879 = vadd.f32 0.0, %v878
        %v880 = vpop.f32.mrb[0].mxu0
        %v881 = vadd.f32 0.0, %v880
        %882 = vdwg.mxu0
        %883 = vmatprep.subr.bf16.mxu0 0
        %884 = vmatpush1.bf16.msra.mxu0 %v736
        %885 = vmatprep.subr.bf16.mxu0 0
        %886 = vmatpush1.bf16.msra.mxu0 %v739
        %887 = vmatprep.subr.bf16.mxu0 0
        %888 = vmatpush1.bf16.msra.mxu0 %v742
        %889 = vmatprep.subr.bf16.mxu0 0
        %890 = vmatpush1.bf16.msra.mxu0 %v745
        %891 = vmatprep.subr.bf16.mxu0 0
        %892 = vmatpush1.bf16.msra.mxu0 %v748
        %893 = vmatprep.subr.bf16.mxu0 0
        %894 = vmatpush1.bf16.msra.mxu0 %v751
        %895 = vmatprep.subr.bf16.mxu0 0
        %896 = vmatpush1.bf16.msra.mxu0 %v754
        %897 = vmatprep.subr.bf16.mxu0 0
        %898 = vmatpush1.bf16.msra.mxu0 %v757
        %899 = vmatprep.subr.bf16.mxu0 0
        %900 = vmatpush1.bf16.msra.mxu0 %v760
        %901 = vmatprep.subr.bf16.mxu0 0
        %902 = vmatpush1.bf16.msra.mxu0 0
        %903 = vmatprep.subr.bf16.mxu0 0
        %904 = vmatpush1.bf16.msra.mxu0 0
        %905 = vmatprep.subr.bf16.mxu0 0
        %906 = vmatpush1.bf16.msra.mxu0 0
        %907 = vmatprep.subr.bf16.mxu0 0
        %908 = vmatpush1.bf16.msra.mxu0 0
        %909 = vmatprep.subr.bf16.mxu0 0
        %910 = vmatpush1.bf16.msra.mxu0 0
        %911 = vmatprep.subr.bf16.mxu0 0
        %912 = vmatpush1.bf16.msra.mxu0 0
        %913 = vmatprep.subr.bf16.mxu0 0
        %914 = vmatpush1.bf16.msra.mxu0 0
        %915 = vmatprep.mubr.bf16.mxu0 %v799
        %916 = vmatmul.mubr.bf16.gmra.mrb[0].mxu0 %v785
        %v917 = vpop.f32.mrb[0].mxu0
        %v918 = vadd.f32 0.0, %v917
        %v919 = vpop.f32.mrb[0].mxu0
        %v920 = vpop.f32.mrb[0].mxu0
        %v921 = vadd.f32 0.0, %v920
        %v922 = vpop.f32.mrb[0].mxu0
        %923 = vmatprep.mubr.bf16.mxu0 %v802
        %924 = vmatmul.mubr.bf16.gmra.mrb[0].mxu0 %v787
        %v925 = vpop.f32.mrb[0].mxu0
        %v926 = vadd.f32 0.0, %v925
        %v927 = vpop.f32.mrb[0].mxu0
        %v928 = vpop.f32.mrb[0].mxu0
        %v929 = vadd.f32 0.0, %v928
        %v930 = vpop.f32.mrb[0].mxu0
        %931 = vmatprep.mubr.bf16.mxu0 %v805
        %932 = vmatmul.mubr.bf16.gmra.mrb[0].mxu0 %v789
        %v933 = vpop.f32.mrb[0].mxu0
        %v934 = vadd.f32 0.0, %v933
        %v935 = vpop.f32.mrb[0].mxu0
        %v936 = vpop.f32.mrb[0].mxu0
        %v937 = vadd.f32 0.0, %v936
        %v938 = vpop.f32.mrb[0].mxu0
        %939 = vmatprep.mubr.bf16.mxu0 %v808
        %940 = vmatmul.mubr.bf16.gmra.mrb[0].mxu0 %v791
        %v941 = vpop.f32.mrb[0].mxu0
        %v942 = vadd.f32 0.0, %v941
        %v943 = vpop.f32.mrb[0].mxu0
        %v944 = vpop.f32.mrb[0].mxu0
        %v945 = vadd.f32 0.0, %v944
        %v946 = vpop.f32.mrb[0].mxu0
        %947 = vdwg.mxu0
        %vm948 = vcmp.gt.f32.partialorder %v845, 0.0
        %vm949 = vcmp.gt.f32.partialorder %v847, 0.0
        %vm950 = vcmp.gt.f32.partialorder %v918, 0.0
        %vm951 = vcmp.gt.f32.partialorder %v849, 0.0
        %vm952 = vcmp.gt.f32.partialorder %v851, 0.0
        %vm953 = vcmp.gt.f32.partialorder %v921, 0.0
        %vm954 = vcmp.gt.f32.partialorder %v855, 0.0
        %vm955 = vcmp.gt.f32.partialorder %v857, 0.0
        %vm956 = vcmp.gt.f32.partialorder %v926, 0.0
        %vm957 = vcmp.gt.f32.partialorder %v859, 0.0
        %vm958 = vcmp.gt.f32.partialorder %v861, 0.0
        %vm959 = vcmp.gt.f32.partialorder %v929, 0.0
        %vm960 = vcmp.gt.f32.partialorder %v865, 0.0
        %vm961 = vcmp.gt.f32.partialorder %v867, 0.0
        %vm962 = vcmp.gt.f32.partialorder %v934, 0.0
        %vm963 = vcmp.gt.f32.partialorder %v869, 0.0
        %vm964 = vcmp.gt.f32.partialorder %v871, 0.0
        %vm965 = vcmp.gt.f32.partialorder %v937, 0.0
        %vm966 = vcmp.gt.f32.partialorder %v875, 0.0
        %vm967 = vcmp.gt.f32.partialorder %v877, 0.0
        %vm968 = vcmp.gt.f32.partialorder %v942, 0.0
        %vm969 = vcmp.gt.f32.partialorder %v879, 0.0
        %vm970 = vcmp.gt.f32.partialorder %v881, 0.0
        %vm971 = vcmp.gt.f32.partialorder %v945, 0.0
        %v972 = vmul.f32 %v845, 0.01
        %v973 = vmul.f32 %v847, 0.01
        %v974 = vmul.f32 %v918, 0.01
        %v975 = vmul.f32 %v849, 0.01
        %v976 = vmul.f32 %v851, 0.01
        %v977 = vmul.f32 %v921, 0.01
        %v978 = vmul.f32 %v855, 0.01
        %v979 = vmul.f32 %v857, 0.01
        %v980 = vmul.f32 %v926, 0.01
        %v981 = vmul.f32 %v859, 0.01
        %v982 = vmul.f32 %v861, 0.01
        %v983 = vmul.f32 %v929, 0.01
        %v984 = vmul.f32 %v865, 0.01
        %v985 = vmul.f32 %v867, 0.01
        %v986 = vmul.f32 %v934, 0.01
        %v987 = vmul.f32 %v869, 0.01
        %v988 = vmul.f32 %v871, 0.01
        %v989 = vmul.f32 %v937, 0.01
        %v990 = vmul.f32 %v875, 0.01
        %v991 = vmul.f32 %v877, 0.01
        %v992 = vmul.f32 %v942, 0.01
        %v993 = vmul.f32 %v879, 0.01
        %v994 = vmul.f32 %v881, 0.01
        %v995 = vmul.f32 %v945, 0.01
        %v996 = vsel %vm948, %v845, %v972
        %v997 = vsel %vm949, %v847, %v973
        %v998 = vsel %vm950, %v918, %v974
        %v999 = vsel %vm951, %v849, %v975
        %v1000 = vsel %vm952, %v851, %v976
        %v1001 = vsel %vm953, %v921, %v977
        %v1002 = vsel %vm954, %v855, %v978
        %v1003 = vsel %vm955, %v857, %v979
        %v1004 = vsel %vm956, %v926, %v980
        %v1005 = vsel %vm957, %v859, %v981
        %v1006 = vsel %vm958, %v861, %v982
        %v1007 = vsel %vm959, %v929, %v983
        %v1008 = vsel %vm960, %v865, %v984
        %v1009 = vsel %vm961, %v867, %v985
        %v1010 = vsel %vm962, %v934, %v986
        %v1011 = vsel %vm963, %v869, %v987
        %v1012 = vsel %vm964, %v871, %v988
        %v1013 = vsel %vm965, %v937, %v989
        %v1014 = vsel %vm966, %v875, %v990
        %v1015 = vsel %vm967, %v877, %v991
        %v1016 = vsel %vm968, %v942, %v992
        %v1017 = vsel %vm969, %v879, %v993
        %v1018 = vsel %vm970, %v881, %v994
        %v1019 = vsel %vm971, %v945, %v995
        %v1021 = vlaneseq
        %v1022 = vshrl.u32 %v1021, 7
        %v1023 = vsub.s32 0, %v1022
        %v1024 = vrot.slane %v381, %v1023
        %v1025 = vlaneseq
        %v1026 = vshrl.u32 %v1025, 7
        %v1027 = vsub.s32 1, %v1026
        %v1028 = vrot.slane %v381, %v1027
        %v1029 = vlaneseq
        %v1030 = vshrl.u32 %v1029, 7
        %v1031 = vsub.s32 2, %v1030
        %v1032 = vrot.slane %v381, %v1031
        %v1036 = vmul.f32 %v996, %v1024
        %v1037 = vmul.f32 %v997, %v1028
        %v1038 = vmul.f32 %v998, %v1032
        %v1039 = vmul.f32 %v999, %v1024
        %v1040 = vmul.f32 %v1000, %v1028
        %v1041 = vmul.f32 %v1001, %v1032
        %v1042 = vmul.f32 %v1002, %v1024
        %v1043 = vmul.f32 %v1003, %v1028
        %v1044 = vmul.f32 %v1004, %v1032
        %v1045 = vmul.f32 %v1005, %v1024
        %v1046 = vmul.f32 %v1006, %v1028
        %v1047 = vmul.f32 %v1007, %v1032
        %v1048 = vmul.f32 %v1008, %v1024
        %v1049 = vmul.f32 %v1009, %v1028
        %v1050 = vmul.f32 %v1010, %v1032
        %v1051 = vmul.f32 %v1011, %v1024
        %v1052 = vmul.f32 %v1012, %v1028
        %v1053 = vmul.f32 %v1013, %v1032
        %v1054 = vmul.f32 %v1014, %v1024
        %v1055 = vmul.f32 %v1015, %v1028
        %v1056 = vmul.f32 %v1016, %v1032
        %v1057 = vmul.f32 %v1017, %v1024
        %v1058 = vmul.f32 %v1018, %v1028
        %v1059 = vmul.f32 %v1019, %v1032
        %v1060 = vpack.c.bf16 %v1039, %v1036
        %v1061 = vpack.c.bf16 %v1040, %v1037
        %v1062 = vpack.c.bf16 %v1041, %v1038
        %v1063 = vpack.c.bf16 %v1045, %v1042
        %v1064 = vpack.c.bf16 %v1046, %v1043
        %v1065 = vpack.c.bf16 %v1047, %v1044
        %v1066 = vpack.c.bf16 %v1051, %v1048
        %v1067 = vpack.c.bf16 %v1052, %v1049
        %v1068 = vpack.c.bf16 %v1053, %v1050
        %v1069 = vpack.c.bf16 %v1057, %v1054
        %v1070 = vpack.c.bf16 %v1058, %v1055
        %v1071 = vpack.c.bf16 %v1059, %v1056
        %1072 = vst [vmem:[#allocation4 + $0x8] sm:$0xff] %v1060
        %1073 = vst [vmem:[#allocation4 + $0x10] sm:$0xff] %v1061
        %1074 = vst.msk [vmem:[#allocation4 + $0x18] sm:$0xff] %vm386, %v1062
        %1075 = vst [vmem:[#allocation4 + $0x30] sm:$0xff] %v1063
        %1076 = vst [vmem:[#allocation4 + $0x38] sm:$0xff] %v1064
        %1077 = vst.msk [vmem:[#allocation4 + $0x40] sm:$0xff] %vm386, %v1065
        %1078 = vst [vmem:[#allocation4 + $0x58] sm:$0xff] %v1066
        %1079 = vst [vmem:[#allocation4 + $0x60] sm:$0xff] %v1067
        %1080 = vst.msk [vmem:[#allocation4 + $0x68] sm:$0xff] %vm386, %v1068
        %1081 = vst [vmem:[#allocation4 + $0x80] sm:$0xff] %v1069
        %1082 = vst [vmem:[#allocation4 + $0x88] sm:$0xff] %v1070
        %1083 = vst.msk [vmem:[#allocation4 + $0x90] sm:$0xff] %vm386, %v1071
        %v1084 = vld [vmem:[#allocation4] sm:$0xff]
        %v1085 = vld [vmem:[#allocation4 + $0x8] sm:$0xff]
        %v1086 = vld [vmem:[#allocation4 + $0x10] sm:$0xff]
        %v1087 = vld [vmem:[#allocation4 + $0x18] sm:$0xff]
        %v1088 = vld [vmem:[#allocation4 + $0x28] sm:$0xff]
        %v1089 = vld [vmem:[#allocation4 + $0x30] sm:$0xff]
        %v1090 = vld [vmem:[#allocation4 + $0x38] sm:$0xff]
        %v1091 = vld [vmem:[#allocation4 + $0x40] sm:$0xff]
        %v1092 = vld [vmem:[#allocation4 + $0x50] sm:$0xff]
        %v1093 = vld [vmem:[#allocation4 + $0x58] sm:$0xff]
        %v1094 = vld [vmem:[#allocation4 + $0x60] sm:$0xff]
        %v1095 = vld [vmem:[#allocation4 + $0x68] sm:$0xff]
        %v1096 = vld [vmem:[#allocation4 + $0x78] sm:$0xff]
        %v1097 = vld [vmem:[#allocation4 + $0x80] sm:$0xff]
        %v1098 = vld [vmem:[#allocation4 + $0x88] sm:$0xff]
        %v1099 = vld [vmem:[#allocation4 + $0x90] sm:$0xff]
        %1116 = vrot.lane.b32.xlu0 %v1084, 19
        %v1117 = vpop.permute.xlu0 %1116
        %1118 = vrot.lane.b32.xlu0 %v1085, 19
        %v1119 = vpop.permute.xlu0 %1118
        %1120 = vrot.lane.b32.xlu0 %v1086, 19
        %v1121 = vpop.permute.xlu0 %1120
        %1122 = vrot.lane.b32.xlu0 %v1087, 19
        %v1123 = vpop.permute.xlu0 %1122
        %1124 = vrot.lane.b32.xlu0 %v1088, 19
        %v1125 = vpop.permute.xlu0 %1124
        %1126 = vrot.lane.b32.xlu0 %v1089, 19
        %v1127 = vpop.permute.xlu0 %1126
        %1128 = vrot.lane.b32.xlu0 %v1090, 19
        %v1129 = vpop.permute.xlu0 %1128
        %1130 = vrot.lane.b32.xlu0 %v1091, 19
        %v1131 = vpop.permute.xlu0 %1130
        %1132 = vrot.lane.b32.xlu0 %v1092, 19
        %v1133 = vpop.permute.xlu0 %1132
        %1134 = vrot.lane.b32.xlu0 %v1093, 19
        %v1135 = vpop.permute.xlu0 %1134
        %1136 = vrot.lane.b32.xlu0 %v1094, 19
        %v1137 = vpop.permute.xlu0 %1136
        %1138 = vrot.lane.b32.xlu0 %v1095, 19
        %v1139 = vpop.permute.xlu0 %1138
        %1140 = vrot.lane.b32.xlu0 %v1096, 19
        %v1141 = vpop.permute.xlu0 %1140
        %1142 = vrot.lane.b32.xlu0 %v1097, 19
        %v1143 = vpop.permute.xlu0 %1142
        %1144 = vrot.lane.b32.xlu0 %v1098, 19
        %v1145 = vpop.permute.xlu0 %1144
        %1146 = vrot.lane.b32.xlu0 %v1099, 19
        %v1147 = vpop.permute.xlu0 %1146
        %v1148 = vsel %vm451, %v1117, %v1119
        %v1149 = vsel %vm451, %v1119, %v1121
        %v1150 = vsel %vm451, %v1121, %v1123
        %v1151 = vsel %vm451, %v1125, %v1127
        %v1152 = vsel %vm451, %v1127, %v1129
        %v1153 = vsel %vm451, %v1129, %v1131
        %v1154 = vsel %vm451, %v1133, %v1135
        %v1155 = vsel %vm451, %v1135, %v1137
        %v1156 = vsel %vm451, %v1137, %v1139
        %v1157 = vsel %vm451, %v1141, %v1143
        %v1158 = vsel %vm451, %v1143, %v1145
        %v1159 = vsel %vm451, %v1145, %v1147
        %1172 = vst [vmem:[#allocation3] sm:$0xff] %v1148
        %1173 = vst [vmem:[#allocation3 + $0x8] sm:$0xff] %v1149
        %1174 = vst.msk [vmem:[#allocation3 + $0x10] sm:$0xff] %vm386, %v1150
        %1175 = vst [vmem:[#allocation3 + $0x18] sm:$0xff] %v1151
        %1176 = vst [vmem:[#allocation3 + $0x20] sm:$0xff] %v1152
        %1177 = vst.msk [vmem:[#allocation3 + $0x28] sm:$0xff] %vm386, %v1153
        %1178 = vst [vmem:[#allocation3 + $0x30] sm:$0xff] %v1154
        %1179 = vst [vmem:[#allocation3 + $0x38] sm:$0xff] %v1155
        %1180 = vst.msk [vmem:[#allocation3 + $0x40] sm:$0xff] %vm386, %v1156
        %1181 = vst [vmem:[#allocation3 + $0x48] sm:$0xff] %v1157
        %1182 = vst [vmem:[#allocation3 + $0x50] sm:$0xff] %v1158
        %1183 = vst.msk [vmem:[#allocation3 + $0x58] sm:$0xff] %vm386, %v1159
        %v1184 = vld [vmem:[#allocation4] sm:$0xff]
        %v1185 = vld [vmem:[#allocation4 + $0x8] sm:$0xff]
        %v1186 = vld [vmem:[#allocation4 + $0x10] sm:$0xff]
        %v1187 = vld [vmem:[#allocation4 + $0x18] sm:$0xff]
        %v1188 = vld [vmem:[#allocation4 + $0x28] sm:$0xff]
        %v1189 = vld [vmem:[#allocation4 + $0x30] sm:$0xff]
        %v1190 = vld [vmem:[#allocation4 + $0x38] sm:$0xff]
        %v1191 = vld [vmem:[#allocation4 + $0x40] sm:$0xff]
        %v1192 = vld [vmem:[#allocation4 + $0x50] sm:$0xff]
        %v1193 = vld [vmem:[#allocation4 + $0x58] sm:$0xff]
        %v1194 = vld [vmem:[#allocation4 + $0x60] sm:$0xff]
        %v1195 = vld [vmem:[#allocation4 + $0x68] sm:$0xff]
        %v1196 = vld [vmem:[#allocation4 + $0x78] sm:$0xff]
        %v1197 = vld [vmem:[#allocation4 + $0x80] sm:$0xff]
        %v1198 = vld [vmem:[#allocation4 + $0x88] sm:$0xff]
        %v1199 = vld [vmem:[#allocation4 + $0x90] sm:$0xff]
        %1216 = vrot.lane.b32.xlu0 %v1184, 18
        %v1217 = vpop.permute.xlu0 %1216
        %1218 = vrot.lane.b32.xlu0 %v1185, 18
        %v1219 = vpop.permute.xlu0 %1218
        %1220 = vrot.lane.b32.xlu0 %v1186, 18
        %v1221 = vpop.permute.xlu0 %1220
        %1222 = vrot.lane.b32.xlu0 %v1187, 18
        %v1223 = vpop.permute.xlu0 %1222
        %1224 = vrot.lane.b32.xlu0 %v1188, 18
        %v1225 = vpop.permute.xlu0 %1224
        %1226 = vrot.lane.b32.xlu0 %v1189, 18
        %v1227 = vpop.permute.xlu0 %1226
        %1228 = vrot.lane.b32.xlu0 %v1190, 18
        %v1229 = vpop.permute.xlu0 %1228
        %1230 = vrot.lane.b32.xlu0 %v1191, 18
        %v1231 = vpop.permute.xlu0 %1230
        %1232 = vrot.lane.b32.xlu0 %v1192, 18
        %v1233 = vpop.permute.xlu0 %1232
        %1234 = vrot.lane.b32.xlu0 %v1193, 18
        %v1235 = vpop.permute.xlu0 %1234
        %1236 = vrot.lane.b32.xlu0 %v1194, 18
        %v1237 = vpop.permute.xlu0 %1236
        %1238 = vrot.lane.b32.xlu0 %v1195, 18
        %v1239 = vpop.permute.xlu0 %1238
        %1240 = vrot.lane.b32.xlu0 %v1196, 18
        %v1241 = vpop.permute.xlu0 %1240
        %1242 = vrot.lane.b32.xlu0 %v1197, 18
        %v1243 = vpop.permute.xlu0 %1242
        %1244 = vrot.lane.b32.xlu0 %v1198, 18
        %v1245 = vpop.permute.xlu0 %1244
        %1246 = vrot.lane.b32.xlu0 %v1199, 18
        %v1247 = vpop.permute.xlu0 %1246
        %v1248 = vsel %vm489, %v1217, %v1219
        %v1249 = vsel %vm489, %v1219, %v1221
        %v1250 = vsel %vm489, %v1221, %v1223
        %v1251 = vsel %vm489, %v1225, %v1227
        %v1252 = vsel %vm489, %v1227, %v1229
        %v1253 = vsel %vm489, %v1229, %v1231
        %v1254 = vsel %vm489, %v1233, %v1235
        %v1255 = vsel %vm489, %v1235, %v1237
        %v1256 = vsel %vm489, %v1237, %v1239
        %v1257 = vsel %vm489, %v1241, %v1243
        %v1258 = vsel %vm489, %v1243, %v1245
        %v1259 = vsel %vm489, %v1245, %v1247
        %1272 = vst [vmem:[#allocation3 + $0x60] sm:$0xff] %v1248
        %1273 = vst [vmem:[#allocation3 + $0x68] sm:$0xff] %v1249
        %1274 = vst.msk [vmem:[#allocation3 + $0x70] sm:$0xff] %vm386, %v1250
        %1275 = vst [vmem:[#allocation3 + $0x78] sm:$0xff] %v1251
        %1276 = vst [vmem:[#allocation3 + $0x80] sm:$0xff] %v1252
        %1277 = vst.msk [vmem:[#allocation3 + $0x88] sm:$0xff] %vm386, %v1253
        %1278 = vst [vmem:[#allocation3 + $0x90] sm:$0xff] %v1254
        %1279 = vst [vmem:[#allocation3 + $0x98] sm:$0xff] %v1255
        %1280 = vst.msk [vmem:[#allocation3 + $0xa0] sm:$0xff] %vm386, %v1256
        %1281 = vst [vmem:[#allocation3 + $0xa8] sm:$0xff] %v1257
        %1282 = vst [vmem:[#allocation3 + $0xb0] sm:$0xff] %v1258
        %1283 = vst.msk [vmem:[#allocation3 + $0xb8] sm:$0xff] %vm386, %v1259
        %v1284 = vld [vmem:[#allocation4] sm:$0xff]
        %v1285 = vld [vmem:[#allocation4 + $0x8] sm:$0xff]
        %v1286 = vld [vmem:[#allocation4 + $0x10] sm:$0xff]
        %v1287 = vld [vmem:[#allocation4 + $0x18] sm:$0xff]
        %v1288 = vld [vmem:[#allocation4 + $0x28] sm:$0xff]
        %v1289 = vld [vmem:[#allocation4 + $0x30] sm:$0xff]
        %v1290 = vld [vmem:[#allocation4 + $0x38] sm:$0xff]
        %v1291 = vld [vmem:[#allocation4 + $0x40] sm:$0xff]
        %v1292 = vld [vmem:[#allocation4 + $0x50] sm:$0xff]
        %v1293 = vld [vmem:[#allocation4 + $0x58] sm:$0xff]
        %v1294 = vld [vmem:[#allocation4 + $0x60] sm:$0xff]
        %v1295 = vld [vmem:[#allocation4 + $0x68] sm:$0xff]
        %v1296 = vld [vmem:[#allocation4 + $0x78] sm:$0xff]
        %v1297 = vld [vmem:[#allocation4 + $0x80] sm:$0xff]
        %v1298 = vld [vmem:[#allocation4 + $0x88] sm:$0xff]
        %v1299 = vld [vmem:[#allocation4 + $0x90] sm:$0xff]
        %1316 = vrot.lane.b32.xlu0 %v1284, 17
        %v1317 = vpop.permute.xlu0 %1316
        %1318 = vrot.lane.b32.xlu0 %v1285, 17
        %v1319 = vpop.permute.xlu0 %1318
        %1320 = vrot.lane.b32.xlu0 %v1286, 17
        %v1321 = vpop.permute.xlu0 %1320
        %1322 = vrot.lane.b32.xlu0 %v1287, 17
        %v1323 = vpop.permute.xlu0 %1322
        %1324 = vrot.lane.b32.xlu0 %v1288, 17
        %v1325 = vpop.permute.xlu0 %1324
        %1326 = vrot.lane.b32.xlu0 %v1289, 17
        %v1327 = vpop.permute.xlu0 %1326
        %1328 = vrot.lane.b32.xlu0 %v1290, 17
        %v1329 = vpop.permute.xlu0 %1328
        %1330 = vrot.lane.b32.xlu0 %v1291, 17
        %v1331 = vpop.permute.xlu0 %1330
        %1332 = vrot.lane.b32.xlu0 %v1292, 17
        %v1333 = vpop.permute.xlu0 %1332
        %1334 = vrot.lane.b32.xlu0 %v1293, 17
        %v1335 = vpop.permute.xlu0 %1334
        %1336 = vrot.lane.b32.xlu0 %v1294, 17
        %v1337 = vpop.permute.xlu0 %1336
        %1338 = vrot.lane.b32.xlu0 %v1295, 17
        %v1339 = vpop.permute.xlu0 %1338
        %1340 = vrot.lane.b32.xlu0 %v1296, 17
        %v1341 = vpop.permute.xlu0 %1340
        %1342 = vrot.lane.b32.xlu0 %v1297, 17
        %v1343 = vpop.permute.xlu0 %1342
        %1344 = vrot.lane.b32.xlu0 %v1298, 17
        %v1345 = vpop.permute.xlu0 %1344
        %1346 = vrot.lane.b32.xlu0 %v1299, 17
        %v1347 = vpop.permute.xlu0 %1346
        %v1348 = vsel %vm527, %v1317, %v1319
        %v1349 = vsel %vm527, %v1319, %v1321
        %v1350 = vsel %vm527, %v1321, %v1323
        %v1351 = vsel %vm527, %v1325, %v1327
        %v1352 = vsel %vm527, %v1327, %v1329
        %v1353 = vsel %vm527, %v1329, %v1331
        %v1354 = vsel %vm527, %v1333, %v1335
        %v1355 = vsel %vm527, %v1335, %v1337
        %v1356 = vsel %vm527, %v1337, %v1339
        %v1357 = vsel %vm527, %v1341, %v1343
        %v1358 = vsel %vm527, %v1343, %v1345
        %v1359 = vsel %vm527, %v1345, %v1347
        %1372 = vst [vmem:[#allocation3 + $0xc0] sm:$0xff] %v1348
        %1373 = vst [vmem:[#allocation3 + $0xc8] sm:$0xff] %v1349
        %1374 = vst.msk [vmem:[#allocation3 + $0xd0] sm:$0xff] %vm386, %v1350
        %1375 = vst [vmem:[#allocation3 + $0xd8] sm:$0xff] %v1351
        %1376 = vst [vmem:[#allocation3 + $0xe0] sm:$0xff] %v1352
        %1377 = vst.msk [vmem:[#allocation3 + $0xe8] sm:$0xff] %vm386, %v1353
        %1378 = vst [vmem:[#allocation3 + $0xf0] sm:$0xff] %v1354
        %1379 = vst [vmem:[#allocation3 + $0xf8] sm:$0xff] %v1355
        %1380 = vst.msk [vmem:[#allocation3 + $0x100] sm:$0xff] %vm386, %v1356
        %1381 = vst [vmem:[#allocation3 + $0x108] sm:$0xff] %v1357
        %1382 = vst [vmem:[#allocation3 + $0x110] sm:$0xff] %v1358
        %1383 = vst.msk [vmem:[#allocation3 + $0x118] sm:$0xff] %vm386, %v1359
        %v1384 = vld [vmem:[#allocation4] sm:$0xff]
        %v1385 = vld [vmem:[#allocation4 + $0x8] sm:$0xff]
        %v1386 = vld [vmem:[#allocation4 + $0x10] sm:$0xff]
        %v1387 = vld [vmem:[#allocation4 + $0x18] sm:$0xff]
        %v1388 = vld [vmem:[#allocation4 + $0x28] sm:$0xff]
        %v1389 = vld [vmem:[#allocation4 + $0x30] sm:$0xff]
        %v1390 = vld [vmem:[#allocation4 + $0x38] sm:$0xff]
        %v1391 = vld [vmem:[#allocation4 + $0x40] sm:$0xff]
        %v1392 = vld [vmem:[#allocation4 + $0x50] sm:$0xff]
        %v1393 = vld [vmem:[#allocation4 + $0x58] sm:$0xff]
        %v1394 = vld [vmem:[#allocation4 + $0x60] sm:$0xff]
        %v1395 = vld [vmem:[#allocation4 + $0x68] sm:$0xff]
        %v1396 = vld [vmem:[#allocation4 + $0x78] sm:$0xff]
        %v1397 = vld [vmem:[#allocation4 + $0x80] sm:$0xff]
        %v1398 = vld [vmem:[#allocation4 + $0x88] sm:$0xff]
        %v1399 = vld [vmem:[#allocation4 + $0x90] sm:$0xff]
        %1416 = vrot.lane.b32.xlu0 %v1384, 1
        %v1417 = vpop.permute.xlu0 %1416
        %1418 = vrot.lane.b32.xlu0 %v1385, 1
        %v1419 = vpop.permute.xlu0 %1418
        %1420 = vrot.lane.b32.xlu0 %v1386, 1
        %v1421 = vpop.permute.xlu0 %1420
        %1422 = vrot.lane.b32.xlu0 %v1387, 1
        %v1423 = vpop.permute.xlu0 %1422
        %1424 = vrot.lane.b32.xlu0 %v1388, 1
        %v1425 = vpop.permute.xlu0 %1424
        %1426 = vrot.lane.b32.xlu0 %v1389, 1
        %v1427 = vpop.permute.xlu0 %1426
        %1428 = vrot.lane.b32.xlu0 %v1390, 1
        %v1429 = vpop.permute.xlu0 %1428
        %1430 = vrot.lane.b32.xlu0 %v1391, 1
        %v1431 = vpop.permute.xlu0 %1430
        %1432 = vrot.lane.b32.xlu0 %v1392, 1
        %v1433 = vpop.permute.xlu0 %1432
        %1434 = vrot.lane.b32.xlu0 %v1393, 1
        %v1435 = vpop.permute.xlu0 %1434
        %1436 = vrot.lane.b32.xlu0 %v1394, 1
        %v1437 = vpop.permute.xlu0 %1436
        %1438 = vrot.lane.b32.xlu0 %v1395, 1
        %v1439 = vpop.permute.xlu0 %1438
        %1440 = vrot.lane.b32.xlu0 %v1396, 1
        %v1441 = vpop.permute.xlu0 %1440
        %1442 = vrot.lane.b32.xlu0 %v1397, 1
        %v1443 = vpop.permute.xlu0 %1442
        %1444 = vrot.lane.b32.xlu0 %v1398, 1
        %v1445 = vpop.permute.xlu0 %1444
        %1446 = vrot.lane.b32.xlu0 %v1399, 1
        %v1447 = vpop.permute.xlu0 %1446
        %v1448 = vsel %vm565, %v1417, %v1419
        %v1449 = vsel %vm565, %v1419, %v1421
        %v1450 = vsel %vm565, %v1421, %v1423
        %v1451 = vsel %vm565, %v1425, %v1427
        %v1452 = vsel %vm565, %v1427, %v1429
        %v1453 = vsel %vm565, %v1429, %v1431
        %v1454 = vsel %vm565, %v1433, %v1435
        %v1455 = vsel %vm565, %v1435, %v1437
        %v1456 = vsel %vm565, %v1437, %v1439
        %v1457 = vsel %vm565, %v1441, %v1443
        %v1458 = vsel %vm565, %v1443, %v1445
        %v1459 = vsel %vm565, %v1445, %v1447
        %1472 = vst [vmem:[#allocation3 + $0x120] sm:$0xff] %v1448
        %1473 = vst [vmem:[#allocation3 + $0x128] sm:$0xff] %v1449
        %1474 = vst.msk [vmem:[#allocation3 + $0x130] sm:$0xff] %vm386, %v1450
        %1475 = vst [vmem:[#allocation3 + $0x138] sm:$0xff] %v1451
        %1476 = vst [vmem:[#allocation3 + $0x140] sm:$0xff] %v1452
        %1477 = vst.msk [vmem:[#allocation3 + $0x148] sm:$0xff] %vm386, %v1453
        %1478 = vst [vmem:[#allocation3 + $0x150] sm:$0xff] %v1454
        %1479 = vst [vmem:[#allocation3 + $0x158] sm:$0xff] %v1455
        %1480 = vst.msk [vmem:[#allocation3 + $0x160] sm:$0xff] %vm386, %v1456
        %1481 = vst [vmem:[#allocation3 + $0x168] sm:$0xff] %v1457
        %1482 = vst [vmem:[#allocation3 + $0x170] sm:$0xff] %v1458
        %1483 = vst.msk [vmem:[#allocation3 + $0x178] sm:$0xff] %vm386, %v1459
        %v1484 = vld [vmem:[#allocation4 + $0x8] sm:$0xff]
        %v1485 = vld [vmem:[#allocation4 + $0x10] sm:$0xff]
        %v1486 = vld [vmem:[#allocation4 + $0x18] sm:$0xff]
        %v1487 = vld [vmem:[#allocation4 + $0x30] sm:$0xff]
        %v1488 = vld [vmem:[#allocation4 + $0x38] sm:$0xff]
        %v1489 = vld [vmem:[#allocation4 + $0x40] sm:$0xff]
        %v1490 = vld [vmem:[#allocation4 + $0x58] sm:$0xff]
        %v1491 = vld [vmem:[#allocation4 + $0x60] sm:$0xff]
        %v1492 = vld [vmem:[#allocation4 + $0x68] sm:$0xff]
        %v1493 = vld [vmem:[#allocation4 + $0x80] sm:$0xff]
        %v1494 = vld [vmem:[#allocation4 + $0x88] sm:$0xff]
        %v1495 = vld [vmem:[#allocation4 + $0x90] sm:$0xff]
        %1496 = vst [vmem:[#allocation3 + $0x180] sm:$0xff] %v1484
        %1497 = vst [vmem:[#allocation3 + $0x188] sm:$0xff] %v1485
        %1498 = vst.msk [vmem:[#allocation3 + $0x190] sm:$0xff] %vm386, %v1486
        %1499 = vst [vmem:[#allocation3 + $0x198] sm:$0xff] %v1487
        %1500 = vst [vmem:[#allocation3 + $0x1a0] sm:$0xff] %v1488
        %1501 = vst.msk [vmem:[#allocation3 + $0x1a8] sm:$0xff] %vm386, %v1489
        %1502 = vst [vmem:[#allocation3 + $0x1b0] sm:$0xff] %v1490
        %1503 = vst [vmem:[#allocation3 + $0x1b8] sm:$0xff] %v1491
        %1504 = vst.msk [vmem:[#allocation3 + $0x1c0] sm:$0xff] %vm386, %v1492
        %1505 = vst [vmem:[#allocation3 + $0x1c8] sm:$0xff] %v1493
        %1506 = vst [vmem:[#allocation3 + $0x1d0] sm:$0xff] %v1494
        %1507 = vst.msk [vmem:[#allocation3 + $0x1d8] sm:$0xff] %vm386, %v1495
        %v1508 = vld [vmem:[#allocation4 + $0x8] sm:$0xff]
        %v1509 = vld [vmem:[#allocation4 + $0x10] sm:$0xff]
        %v1510 = vld [vmem:[#allocation4 + $0x18] sm:$0xff]
        %v1511 = vld [vmem:[#allocation4 + $0x30] sm:$0xff]
        %v1512 = vld [vmem:[#allocation4 + $0x38] sm:$0xff]
        %v1513 = vld [vmem:[#allocation4 + $0x40] sm:$0xff]
        %v1514 = vld [vmem:[#allocation4 + $0x58] sm:$0xff]
        %v1515 = vld [vmem:[#allocation4 + $0x60] sm:$0xff]
        %v1516 = vld [vmem:[#allocation4 + $0x68] sm:$0xff]
        %v1517 = vld [vmem:[#allocation4 + $0x80] sm:$0xff]
        %v1518 = vld [vmem:[#allocation4 + $0x88] sm:$0xff]
        %v1519 = vld [vmem:[#allocation4 + $0x90] sm:$0xff]
        %1532 = vrot.lane.b32.xlu0 %v1508, 127
        %v1533 = vpop.permute.xlu0 %1532
        %1534 = vrot.lane.b32.xlu0 %v1509, 127
        %v1535 = vpop.permute.xlu0 %1534
        %1536 = vrot.lane.b32.xlu0 %v1510, 127
        %v1537 = vpop.permute.xlu0 %1536
        %1538 = vrot.lane.b32.xlu0 %v1511, 127
        %v1539 = vpop.permute.xlu0 %1538
        %1540 = vrot.lane.b32.xlu0 %v1512, 127
        %v1541 = vpop.permute.xlu0 %1540
        %1542 = vrot.lane.b32.xlu0 %v1513, 127
        %v1543 = vpop.permute.xlu0 %1542
        %1544 = vrot.lane.b32.xlu0 %v1514, 127
        %v1545 = vpop.permute.xlu0 %1544
        %1546 = vrot.lane.b32.xlu0 %v1515, 127
        %v1547 = vpop.permute.xlu0 %1546
        %1548 = vrot.lane.b32.xlu0 %v1516, 127
        %v1549 = vpop.permute.xlu0 %1548
        %1550 = vrot.lane.b32.xlu0 %v1517, 127
        %v1551 = vpop.permute.xlu0 %1550
        %1552 = vrot.lane.b32.xlu0 %v1518, 127
        %v1553 = vpop.permute.xlu0 %1552
        %1554 = vrot.lane.b32.xlu0 %v1519, 127
        %v1555 = vpop.permute.xlu0 %1554
        %v1556 = vsel %vm621, %v1533, %v1535
        %v1557 = vsel %vm621, %v1535, %v1537
        %v1558 = vsel %vm621, %v1539, %v1541
        %v1559 = vsel %vm621, %v1541, %v1543
        %v1560 = vsel %vm621, %v1545, %v1547
        %v1561 = vsel %vm621, %v1547, %v1549
        %v1562 = vsel %vm621, %v1551, %v1553
        %v1563 = vsel %vm621, %v1553, %v1555
        %1576 = vst [vmem:[#allocation3 + $0x1e0] sm:$0xff] %v1556
        %1577 = vst [vmem:[#allocation3 + $0x1e8] sm:$0xff] %v1557
        %1578 = vst.msk [vmem:[#allocation3 + $0x1f0] sm:$0xff] %vm386, %v1537
        %1579 = vst [vmem:[#allocation3 + $0x1f8] sm:$0xff] %v1558
        %1580 = vst [vmem:[#allocation3 + $0x200] sm:$0xff] %v1559
        %1581 = vst.msk [vmem:[#allocation3 + $0x208] sm:$0xff] %vm386, %v1543
        %1582 = vst [vmem:[#allocation3 + $0x210] sm:$0xff] %v1560
        %1583 = vst [vmem:[#allocation3 + $0x218] sm:$0xff] %v1561
        %1584 = vst.msk [vmem:[#allocation3 + $0x220] sm:$0xff] %vm386, %v1549
        %1585 = vst [vmem:[#allocation3 + $0x228] sm:$0xff] %v1562
        %1586 = vst [vmem:[#allocation3 + $0x230] sm:$0xff] %v1563
        %1587 = vst.msk [vmem:[#allocation3 + $0x238] sm:$0xff] %vm386, %v1555
        %v1588 = vld [vmem:[#allocation4 + $0x8] sm:$0xff]
        %v1589 = vld [vmem:[#allocation4 + $0x10] sm:$0xff]
        %v1590 = vld [vmem:[#allocation4 + $0x18] sm:$0xff]
        %v1591 = vld [vmem:[#allocation4 + $0x30] sm:$0xff]
        %v1592 = vld [vmem:[#allocation4 + $0x38] sm:$0xff]
        %v1593 = vld [vmem:[#allocation4 + $0x40] sm:$0xff]
        %v1594 = vld [vmem:[#allocation4 + $0x58] sm:$0xff]
        %v1595 = vld [vmem:[#allocation4 + $0x60] sm:$0xff]
        %v1596 = vld [vmem:[#allocation4 + $0x68] sm:$0xff]
        %v1597 = vld [vmem:[#allocation4 + $0x80] sm:$0xff]
        %v1598 = vld [vmem:[#allocation4 + $0x88] sm:$0xff]
        %v1599 = vld [vmem:[#allocation4 + $0x90] sm:$0xff]
        %1612 = vrot.lane.b32.xlu0 %v1588, 111
        %v1613 = vpop.permute.xlu0 %1612
        %1614 = vrot.lane.b32.xlu0 %v1589, 111
        %v1615 = vpop.permute.xlu0 %1614
        %1616 = vrot.lane.b32.xlu0 %v1590, 111
        %v1617 = vpop.permute.xlu0 %1616
        %1618 = vrot.lane.b32.xlu0 %v1591, 111
        %v1619 = vpop.permute.xlu0 %1618
        %1620 = vrot.lane.b32.xlu0 %v1592, 111
        %v1621 = vpop.permute.xlu0 %1620
        %1622 = vrot.lane.b32.xlu0 %v1593, 111
        %v1623 = vpop.permute.xlu0 %1622
        %1624 = vrot.lane.b32.xlu0 %v1594, 111
        %v1625 = vpop.permute.xlu0 %1624
        %1626 = vrot.lane.b32.xlu0 %v1595, 111
        %v1627 = vpop.permute.xlu0 %1626
        %1628 = vrot.lane.b32.xlu0 %v1596, 111
        %v1629 = vpop.permute.xlu0 %1628
        %1630 = vrot.lane.b32.xlu0 %v1597, 111
        %v1631 = vpop.permute.xlu0 %1630
        %1632 = vrot.lane.b32.xlu0 %v1598, 111
        %v1633 = vpop.permute.xlu0 %1632
        %1634 = vrot.lane.b32.xlu0 %v1599, 111
        %v1635 = vpop.permute.xlu0 %1634
        %v1636 = vsel %vm653, %v1613, %v1615
        %v1637 = vsel %vm653, %v1615, %v1617
        %v1638 = vsel %vm653, %v1619, %v1621
        %v1639 = vsel %vm653, %v1621, %v1623
        %v1640 = vsel %vm653, %v1625, %v1627
        %v1641 = vsel %vm653, %v1627, %v1629
        %v1642 = vsel %vm653, %v1631, %v1633
        %v1643 = vsel %vm653, %v1633, %v1635
        %1656 = vst [vmem:[#allocation3 + $0x240] sm:$0xff] %v1636
        %1657 = vst [vmem:[#allocation3 + $0x248] sm:$0xff] %v1637
        %1658 = vst.msk [vmem:[#allocation3 + $0x250] sm:$0xff] %vm386, %v1617
        %1659 = vst [vmem:[#allocation3 + $0x258] sm:$0xff] %v1638
        %1660 = vst [vmem:[#allocation3 + $0x260] sm:$0xff] %v1639
        %1661 = vst.msk [vmem:[#allocation3 + $0x268] sm:$0xff] %vm386, %v1623
        %1662 = vst [vmem:[#allocation3 + $0x270] sm:$0xff] %v1640
        %1663 = vst [vmem:[#allocation3 + $0x278] sm:$0xff] %v1641
        %1664 = vst.msk [vmem:[#allocation3 + $0x280] sm:$0xff] %vm386, %v1629
        %1665 = vst [vmem:[#allocation3 + $0x288] sm:$0xff] %v1642
        %1666 = vst [vmem:[#allocation3 + $0x290] sm:$0xff] %v1643
        %1667 = vst.msk [vmem:[#allocation3 + $0x298] sm:$0xff] %vm386, %v1635
        %v1668 = vld [vmem:[#allocation4 + $0x8] sm:$0xff]
        %v1669 = vld [vmem:[#allocation4 + $0x10] sm:$0xff]
        %v1670 = vld [vmem:[#allocation4 + $0x18] sm:$0xff]
        %v1671 = vld [vmem:[#allocation4 + $0x30] sm:$0xff]
        %v1672 = vld [vmem:[#allocation4 + $0x38] sm:$0xff]
        %v1673 = vld [vmem:[#allocation4 + $0x40] sm:$0xff]
        %v1674 = vld [vmem:[#allocation4 + $0x58] sm:$0xff]
        %v1675 = vld [vmem:[#allocation4 + $0x60] sm:$0xff]
        %v1676 = vld [vmem:[#allocation4 + $0x68] sm:$0xff]
        %v1677 = vld [vmem:[#allocation4 + $0x80] sm:$0xff]
        %v1678 = vld [vmem:[#allocation4 + $0x88] sm:$0xff]
        %v1679 = vld [vmem:[#allocation4 + $0x90] sm:$0xff]
        %1692 = vrot.lane.b32.xlu0 %v1668, 110
        %v1693 = vpop.permute.xlu0 %1692
        %1694 = vrot.lane.b32.xlu0 %v1669, 110
        %v1695 = vpop.permute.xlu0 %1694
        %1696 = vrot.lane.b32.xlu0 %v1670, 110
        %v1697 = vpop.permute.xlu0 %1696
        %1698 = vrot.lane.b32.xlu0 %v1671, 110
        %v1699 = vpop.permute.xlu0 %1698
        %1700 = vrot.lane.b32.xlu0 %v1672, 110
        %v1701 = vpop.permute.xlu0 %1700
        %1702 = vrot.lane.b32.xlu0 %v1673, 110
        %v1703 = vpop.permute.xlu0 %1702
        %1704 = vrot.lane.b32.xlu0 %v1674, 110
        %v1705 = vpop.permute.xlu0 %1704
        %1706 = vrot.lane.b32.xlu0 %v1675, 110
        %v1707 = vpop.permute.xlu0 %1706
        %1708 = vrot.lane.b32.xlu0 %v1676, 110
        %v1709 = vpop.permute.xlu0 %1708
        %1710 = vrot.lane.b32.xlu0 %v1677, 110
        %v1711 = vpop.permute.xlu0 %1710
        %1712 = vrot.lane.b32.xlu0 %v1678, 110
        %v1713 = vpop.permute.xlu0 %1712
        %1714 = vrot.lane.b32.xlu0 %v1679, 110
        %v1715 = vpop.permute.xlu0 %1714
        %v1716 = vsel %vm685, %v1693, %v1695
        %v1717 = vsel %vm685, %v1695, %v1697
        %v1718 = vsel %vm685, %v1699, %v1701
        %v1719 = vsel %vm685, %v1701, %v1703
        %v1720 = vsel %vm685, %v1705, %v1707
        %v1721 = vsel %vm685, %v1707, %v1709
        %v1722 = vsel %vm685, %v1711, %v1713
        %v1723 = vsel %vm685, %v1713, %v1715
        %1736 = vst [vmem:[#allocation3 + $0x2a0] sm:$0xff] %v1716
        %1737 = vst [vmem:[#allocation3 + $0x2a8] sm:$0xff] %v1717
        %1738 = vst.msk [vmem:[#allocation3 + $0x2b0] sm:$0xff] %vm386, %v1697
        %1739 = vst [vmem:[#allocation3 + $0x2b8] sm:$0xff] %v1718
        %1740 = vst [vmem:[#allocation3 + $0x2c0] sm:$0xff] %v1719
        %1741 = vst.msk [vmem:[#allocation3 + $0x2c8] sm:$0xff] %vm386, %v1703
        %1742 = vst [vmem:[#allocation3 + $0x2d0] sm:$0xff] %v1720
        %1743 = vst [vmem:[#allocation3 + $0x2d8] sm:$0xff] %v1721
        %1744 = vst.msk [vmem:[#allocation3 + $0x2e0] sm:$0xff] %vm386, %v1709
        %1745 = vst [vmem:[#allocation3 + $0x2e8] sm:$0xff] %v1722
        %1746 = vst [vmem:[#allocation3 + $0x2f0] sm:$0xff] %v1723
        %1747 = vst.msk [vmem:[#allocation3 + $0x2f8] sm:$0xff] %vm386, %v1715
        %v1748 = vld [vmem:[#allocation4 + $0x8] sm:$0xff]
        %v1749 = vld [vmem:[#allocation4 + $0x10] sm:$0xff]
        %v1750 = vld [vmem:[#allocation4 + $0x18] sm:$0xff]
        %v1751 = vld [vmem:[#allocation4 + $0x30] sm:$0xff]
        %v1752 = vld [vmem:[#allocation4 + $0x38] sm:$0xff]
        %v1753 = vld [vmem:[#allocation4 + $0x40] sm:$0xff]
        %v1754 = vld [vmem:[#allocation4 + $0x58] sm:$0xff]
        %v1755 = vld [vmem:[#allocation4 + $0x60] sm:$0xff]
        %v1756 = vld [vmem:[#allocation4 + $0x68] sm:$0xff]
        %v1757 = vld [vmem:[#allocation4 + $0x80] sm:$0xff]
        %v1758 = vld [vmem:[#allocation4 + $0x88] sm:$0xff]
        %v1759 = vld [vmem:[#allocation4 + $0x90] sm:$0xff]
        %1772 = vrot.lane.b32.xlu0 %v1748, 109
        %v1773 = vpop.permute.xlu0 %1772
        %1774 = vrot.lane.b32.xlu0 %v1749, 109
        %v1775 = vpop.permute.xlu0 %1774
        %1776 = vrot.lane.b32.xlu0 %v1750, 109
        %v1777 = vpop.permute.xlu0 %1776
        %1778 = vrot.lane.b32.xlu0 %v1751, 109
        %v1779 = vpop.permute.xlu0 %1778
        %1780 = vrot.lane.b32.xlu0 %v1752, 109
        %v1781 = vpop.permute.xlu0 %1780
        %1782 = vrot.lane.b32.xlu0 %v1753, 109
        %v1783 = vpop.permute.xlu0 %1782
        %1784 = vrot.lane.b32.xlu0 %v1754, 109
        %v1785 = vpop.permute.xlu0 %1784
        %1786 = vrot.lane.b32.xlu0 %v1755, 109
        %v1787 = vpop.permute.xlu0 %1786
        %1788 = vrot.lane.b32.xlu0 %v1756, 109
        %v1789 = vpop.permute.xlu0 %1788
        %1790 = vrot.lane.b32.xlu0 %v1757, 109
        %v1791 = vpop.permute.xlu0 %1790
        %1792 = vrot.lane.b32.xlu0 %v1758, 109
        %v1793 = vpop.permute.xlu0 %1792
        %1794 = vrot.lane.b32.xlu0 %v1759, 109
        %v1795 = vpop.permute.xlu0 %1794
        %v1796 = vsel %vm717, %v1773, %v1775
        %v1797 = vsel %vm717, %v1775, %v1777
        %v1798 = vsel %vm717, %v1779, %v1781
        %v1799 = vsel %vm717, %v1781, %v1783
        %v1800 = vsel %vm717, %v1785, %v1787
        %v1801 = vsel %vm717, %v1787, %v1789
        %v1802 = vsel %vm717, %v1791, %v1793
        %v1803 = vsel %vm717, %v1793, %v1795
        %1816 = vst [vmem:[#allocation3 + $0x300] sm:$0xff] %v1796
        %1817 = vst [vmem:[#allocation3 + $0x308] sm:$0xff] %v1797
        %1818 = vst.msk [vmem:[#allocation3 + $0x310] sm:$0xff] %vm386, %v1777
        %1819 = vst [vmem:[#allocation3 + $0x318] sm:$0xff] %v1798
        %1820 = vst [vmem:[#allocation3 + $0x320] sm:$0xff] %v1799
        %1821 = vst.msk [vmem:[#allocation3 + $0x328] sm:$0xff] %vm386, %v1783
        %1822 = vst [vmem:[#allocation3 + $0x330] sm:$0xff] %v1800
        %1823 = vst [vmem:[#allocation3 + $0x338] sm:$0xff] %v1801
        %1824 = vst.msk [vmem:[#allocation3 + $0x340] sm:$0xff] %vm386, %v1789
        %1825 = vst [vmem:[#allocation3 + $0x348] sm:$0xff] %v1802
        %1826 = vst [vmem:[#allocation3 + $0x350] sm:$0xff] %v1803
        %1827 = vst.msk [vmem:[#allocation3 + $0x358] sm:$0xff] %vm386, %v1795
        %v1828 = vld [vmem:[#allocation12] sm:$0xff]
        %v1829 = vld [vmem:[#allocation12 + $0x8] sm:$0xff]
        %v1830 = vld [vmem:[#allocation12 + $0x10] sm:$0xf]
        %v1831 = vld [vmem:[#allocation12 + $0x14] sm:$0xff]
        %v1832 = vld [vmem:[#allocation12 + $0x1c] sm:$0xff]
        %v1833 = vld [vmem:[#allocation12 + $0x24] sm:$0xf]
        %v1834 = vld [vmem:[#allocation12 + $0x28] sm:$0xff]
        %v1835 = vld [vmem:[#allocation12 + $0x30] sm:$0xff]
        %v1836 = vld [vmem:[#allocation12 + $0x38] sm:$0xf]
        %v1837 = vld [vmem:[#allocation12 + $0x3c] sm:$0xff]
        %v1838 = vld [vmem:[#allocation12 + $0x44] sm:$0xff]
        %v1839 = vld [vmem:[#allocation12 + $0x4c] sm:$0xf]
        %v1840 = vld [vmem:[#allocation12 + $0x50] sm:$0xff]
        %v1841 = vld [vmem:[#allocation12 + $0x58] sm:$0xff]
        %v1842 = vld [vmem:[#allocation12 + $0x60] sm:$0xf]
        %v1843 = vld [vmem:[#allocation12 + $0x64] sm:$0xff]
        %v1844 = vld [vmem:[#allocation12 + $0x6c] sm:$0xff]
        %v1845 = vld [vmem:[#allocation12 + $0x74] sm:$0xf]
        %v1846 = vld [vmem:[#allocation12 + $0x78] sm:$0xff]
        %v1847 = vld [vmem:[#allocation12 + $0x80] sm:$0xff]
        %v1848 = vld [vmem:[#allocation12 + $0x88] sm:$0xf]
        %v1849 = vld [vmem:[#allocation12 + $0x8c] sm:$0xff]
        %v1850 = vld [vmem:[#allocation12 + $0x94] sm:$0xff]
        %v1851 = vld [vmem:[#allocation12 + $0x9c] sm:$0xf]
        %v1852 = vld [vmem:[#allocation3] sm:$0xff]
        %v1853 = vld [vmem:[#allocation3 + $0x8] sm:$0xff]
        %v1854 = vld [vmem:[#allocation3 + $0x10] sm:$0xff]
        %v1855 = vld [vmem:[#allocation3 + $0x18] sm:$0xff]
        %v1856 = vld [vmem:[#allocation3 + $0x20] sm:$0xff]
        %v1857 = vld [vmem:[#allocation3 + $0x28] sm:$0xff]
        %v1858 = vld [vmem:[#allocation3 + $0x30] sm:$0xff]
        %v1859 = vld [vmem:[#allocation3 + $0x38] sm:$0xff]
        %v1860 = vld [vmem:[#allocation3 + $0x40] sm:$0xff]
        %v1861 = vld [vmem:[#allocation3 + $0x48] sm:$0xff]
        %v1862 = vld [vmem:[#allocation3 + $0x50] sm:$0xff]
        %v1863 = vld [vmem:[#allocation3 + $0x58] sm:$0xff]
        %v1864 = vld [vmem:[#allocation3 + $0x60] sm:$0xff]
        %v1865 = vld [vmem:[#allocation3 + $0x68] sm:$0xff]
        %v1866 = vld [vmem:[#allocation3 + $0x70] sm:$0xff]
        %v1867 = vld [vmem:[#allocation3 + $0x78] sm:$0xff]
        %v1868 = vld [vmem:[#allocation3 + $0x80] sm:$0xff]
        %v1869 = vld [vmem:[#allocation3 + $0x88] sm:$0xff]
        %v1870 = vld [vmem:[#allocation3 + $0x90] sm:$0xff]
        %v1871 = vld [vmem:[#allocation3 + $0x98] sm:$0xff]
        %v1872 = vld [vmem:[#allocation3 + $0xa0] sm:$0xff]
        %v1873 = vld [vmem:[#allocation3 + $0xa8] sm:$0xff]
        %v1874 = vld [vmem:[#allocation3 + $0xb0] sm:$0xff]
        %v1875 = vld [vmem:[#allocation3 + $0xb8] sm:$0xff]
        %v1876 = vld [vmem:[#allocation3 + $0xc0] sm:$0xff]
        %v1877 = vld [vmem:[#allocation3 + $0xc8] sm:$0xff]
        %v1878 = vld [vmem:[#allocation3 + $0xd0] sm:$0xff]
        %v1879 = vld [vmem:[#allocation3 + $0xd8] sm:$0xff]
        %v1880 = vld [vmem:[#allocation3 + $0xe0] sm:$0xff]
        %v1881 = vld [vmem:[#allocation3 + $0xe8] sm:$0xff]
        %v1882 = vld [vmem:[#allocation3 + $0xf0] sm:$0xff]
        %v1883 = vld [vmem:[#allocation3 + $0xf8] sm:$0xff]
        %v1884 = vld [vmem:[#allocation3 + $0x100] sm:$0xff]
        %v1885 = vld [vmem:[#allocation3 + $0x108] sm:$0xff]
        %v1886 = vld [vmem:[#allocation3 + $0x110] sm:$0xff]
        %v1887 = vld [vmem:[#allocation3 + $0x118] sm:$0xff]
        %v1888 = vld [vmem:[#allocation3 + $0x120] sm:$0xff]
        %v1889 = vld [vmem:[#allocation3 + $0x128] sm:$0xff]
        %v1890 = vld [vmem:[#allocation3 + $0x130] sm:$0xff]
        %v1891 = vld [vmem:[#allocation3 + $0x138] sm:$0xff]
        %v1892 = vld [vmem:[#allocation3 + $0x140] sm:$0xff]
        %v1893 = vld [vmem:[#allocation3 + $0x148] sm:$0xff]
        %v1894 = vld [vmem:[#allocation3 + $0x150] sm:$0xff]
        %v1895 = vld [vmem:[#allocation3 + $0x158] sm:$0xff]
        %v1896 = vld [vmem:[#allocation3 + $0x160] sm:$0xff]
        %v1897 = vld [vmem:[#allocation3 + $0x168] sm:$0xff]
        %v1898 = vld [vmem:[#allocation3 + $0x170] sm:$0xff]
        %v1899 = vld [vmem:[#allocation3 + $0x178] sm:$0xff]
        %v1900 = vld [vmem:[#allocation3 + $0x180] sm:$0xff]
        %v1901 = vld [vmem:[#allocation3 + $0x188] sm:$0xff]
        %v1902 = vld [vmem:[#allocation3 + $0x190] sm:$0xff]
        %v1903 = vld [vmem:[#allocation3 + $0x198] sm:$0xff]
        %v1904 = vld [vmem:[#allocation3 + $0x1a0] sm:$0xff]
        %v1905 = vld [vmem:[#allocation3 + $0x1a8] sm:$0xff]
        %v1906 = vld [vmem:[#allocation3 + $0x1b0] sm:$0xff]
        %v1907 = vld [vmem:[#allocation3 + $0x1b8] sm:$0xff]
        %v1908 = vld [vmem:[#allocation3 + $0x1c0] sm:$0xff]
        %v1909 = vld [vmem:[#allocation3 + $0x1c8] sm:$0xff]
        %v1910 = vld [vmem:[#allocation3 + $0x1d0] sm:$0xff]
        %v1911 = vld [vmem:[#allocation3 + $0x1d8] sm:$0xff]
        %v1912 = vld [vmem:[#allocation3 + $0x1e0] sm:$0xff]
        %v1913 = vld [vmem:[#allocation3 + $0x1e8] sm:$0xff]
        %v1914 = vld [vmem:[#allocation3 + $0x1f0] sm:$0xff]
        %v1915 = vld [vmem:[#allocation3 + $0x1f8] sm:$0xff]
        %v1916 = vld [vmem:[#allocation3 + $0x200] sm:$0xff]
        %v1917 = vld [vmem:[#allocation3 + $0x208] sm:$0xff]
        %v1918 = vld [vmem:[#allocation3 + $0x210] sm:$0xff]
        %v1919 = vld [vmem:[#allocation3 + $0x218] sm:$0xff]
        %v1920 = vld [vmem:[#allocation3 + $0x220] sm:$0xff]
        %v1921 = vld [vmem:[#allocation3 + $0x228] sm:$0xff]
        %v1922 = vld [vmem:[#allocation3 + $0x230] sm:$0xff]
        %v1923 = vld [vmem:[#allocation3 + $0x238] sm:$0xff]
        %v1924 = vld [vmem:[#allocation3 + $0x240] sm:$0xff]
        %v1925 = vld [vmem:[#allocation3 + $0x248] sm:$0xff]
        %v1926 = vld [vmem:[#allocation3 + $0x250] sm:$0xff]
        %v1927 = vld [vmem:[#allocation3 + $0x258] sm:$0xff]
        %v1928 = vld [vmem:[#allocation3 + $0x260] sm:$0xff]
        %v1929 = vld [vmem:[#allocation3 + $0x268] sm:$0xff]
        %v1930 = vld [vmem:[#allocation3 + $0x270] sm:$0xff]
        %v1931 = vld [vmem:[#allocation3 + $0x278] sm:$0xff]
        %v1932 = vld [vmem:[#allocation3 + $0x280] sm:$0xff]
        %v1933 = vld [vmem:[#allocation3 + $0x288] sm:$0xff]
        %v1934 = vld [vmem:[#allocation3 + $0x290] sm:$0xff]
        %v1935 = vld [vmem:[#allocation3 + $0x298] sm:$0xff]
        %v1936 = vld [vmem:[#allocation3 + $0x2a0] sm:$0xff]
        %v1937 = vld [vmem:[#allocation3 + $0x2a8] sm:$0xff]
        %v1938 = vld [vmem:[#allocation3 + $0x2b0] sm:$0xff]
        %v1939 = vld [vmem:[#allocation3 + $0x2b8] sm:$0xff]
        %v1940 = vld [vmem:[#allocation3 + $0x2c0] sm:$0xff]
        %v1941 = vld [vmem:[#allocation3 + $0x2c8] sm:$0xff]
        %v1942 = vld [vmem:[#allocation3 + $0x2d0] sm:$0xff]
        %v1943 = vld [vmem:[#allocation3 + $0x2d8] sm:$0xff]
        %v1944 = vld [vmem:[#allocation3 + $0x2e0] sm:$0xff]
        %v1945 = vld [vmem:[#allocation3 + $0x2e8] sm:$0xff]
        %v1946 = vld [vmem:[#allocation3 + $0x2f0] sm:$0xff]
        %v1947 = vld [vmem:[#allocation3 + $0x2f8] sm:$0xff]
        %v1948 = vld [vmem:[#allocation3 + $0x300] sm:$0xff]
        %v1949 = vld [vmem:[#allocation3 + $0x308] sm:$0xff]
        %v1950 = vld [vmem:[#allocation3 + $0x310] sm:$0xff]
        %v1951 = vld [vmem:[#allocation3 + $0x318] sm:$0xff]
        %v1952 = vld [vmem:[#allocation3 + $0x320] sm:$0xff]
        %v1953 = vld [vmem:[#allocation3 + $0x328] sm:$0xff]
        %v1954 = vld [vmem:[#allocation3 + $0x330] sm:$0xff]
        %v1955 = vld [vmem:[#allocation3 + $0x338] sm:$0xff]
        %v1956 = vld [vmem:[#allocation3 + $0x340] sm:$0xff]
        %v1957 = vld [vmem:[#allocation3 + $0x348] sm:$0xff]
        %v1958 = vld [vmem:[#allocation3 + $0x350] sm:$0xff]
        %v1959 = vld [vmem:[#allocation3 + $0x358] sm:$0xff]
        %v1984 = vunpack.c.l.b16 %v1828
        %v1985 = vunpack.c.h.b16 %v1828
        %v1986 = vunpack.c.l.b16 %v1829
        %v1987 = vunpack.c.h.b16 %v1829
        %v1988 = vunpack.c.l.b16 %v1830
        %v1989 = vunpack.c.l.b16 %v1831
        %v1990 = vunpack.c.h.b16 %v1831
        %v1991 = vunpack.c.l.b16 %v1832
        %v1992 = vunpack.c.h.b16 %v1832
        %v1993 = vunpack.c.l.b16 %v1833
        %v1994 = vunpack.c.l.b16 %v1834
        %v1995 = vunpack.c.h.b16 %v1834
        %v1996 = vunpack.c.l.b16 %v1835
        %v1997 = vunpack.c.h.b16 %v1835
        %v1998 = vunpack.c.l.b16 %v1836
        %v1999 = vunpack.c.l.b16 %v1837
        %v2000 = vunpack.c.h.b16 %v1837
        %v2001 = vunpack.c.l.b16 %v1838
        %v2002 = vunpack.c.h.b16 %v1838
        %v2003 = vunpack.c.l.b16 %v1839
        %v2004 = vunpack.c.l.b16 %v1840
        %v2005 = vunpack.c.h.b16 %v1840
        %v2006 = vunpack.c.l.b16 %v1841
        %v2007 = vunpack.c.h.b16 %v1841
        %v2008 = vunpack.c.l.b16 %v1842
        %v2009 = vunpack.c.l.b16 %v1843
        %v2010 = vunpack.c.h.b16 %v1843
        %v2011 = vunpack.c.l.b16 %v1844
        %v2012 = vunpack.c.h.b16 %v1844
        %v2013 = vunpack.c.l.b16 %v1845
        %v2014 = vunpack.c.l.b16 %v1846
        %v2015 = vunpack.c.h.b16 %v1846
        %v2016 = vunpack.c.l.b16 %v1847
        %v2017 = vunpack.c.h.b16 %v1847
        %v2018 = vunpack.c.l.b16 %v1848
        %v2019 = vunpack.c.l.b16 %v1849
        %v2020 = vunpack.c.h.b16 %v1849
        %v2021 = vunpack.c.l.b16 %v1850
        %v2022 = vunpack.c.h.b16 %v1850
        %v2023 = vunpack.c.l.b16 %v1851
        %v2024 = vpack.c.b16 %v1989, %v1984
        %v2025 = vpack.c.b16 %v1990, %v1985
        %v2026 = vpack.c.b16 %v1991, %v1986
        %v2027 = vpack.c.b16 %v1992, %v1987
        %v2028 = vpack.c.b16 %v1993, %v1988
        %v2029 = vpack.c.b16 %v1999, %v1994
        %v2030 = vpack.c.b16 %v2000, %v1995
        %v2031 = vpack.c.b16 %v2001, %v1996
        %v2032 = vpack.c.b16 %v2002, %v1997
        %v2033 = vpack.c.b16 %v2003, %v1998
        %v2034 = vpack.c.b16 %v2009, %v2004
        %v2035 = vpack.c.b16 %v2010, %v2005
        %v2036 = vpack.c.b16 %v2011, %v2006
        %v2037 = vpack.c.b16 %v2012, %v2007
        %v2038 = vpack.c.b16 %v2013, %v2008
        %v2039 = vpack.c.b16 %v2019, %v2014
        %v2040 = vpack.c.b16 %v2020, %v2015
        %v2041 = vpack.c.b16 %v2021, %v2016
        %v2042 = vpack.c.b16 %v2022, %v2017
        %v2043 = vpack.c.b16 %v2023, %v2018
        %vm2060 = vcmask 523264
        %v2062 = vsel %vm2060, %v2028, 0
        %v2065 = vsel %vm2060, %v2033, 0
        %v2068 = vsel %vm2060, %v2038, 0
        %v2071 = vsel %vm2060, %v2043, 0
        %2073 = vmatprep.subr.bf16.mxu0 %v1853
        %2074 = vmatpush1.bf16.msra.mxu0 %v1852
        %2075 = vmatprep.subr.bf16.mxu0 %v1856
        %2076 = vmatpush1.bf16.msra.mxu0 %v1855
        %2077 = vmatprep.subr.bf16.mxu0 %v1859
        %2078 = vmatpush1.bf16.msra.mxu0 %v1858
        %2079 = vmatprep.subr.bf16.mxu0 %v1862
        %2080 = vmatpush1.bf16.msra.mxu0 %v1861
        %2081 = vmatprep.subr.bf16.mxu0 %v1865
        %2082 = vmatpush1.bf16.msra.mxu0 %v1864
        %2083 = vmatprep.subr.bf16.mxu0 %v1868
        %2084 = vmatpush1.bf16.msra.mxu0 %v1867
        %2085 = vmatprep.subr.bf16.mxu0 %v1871
        %2086 = vmatpush1.bf16.msra.mxu0 %v1870
        %2087 = vmatprep.subr.bf16.mxu0 %v1874
        %2088 = vmatpush1.bf16.msra.mxu0 %v1873
        %2089 = vmatprep.subr.bf16.mxu0 %v1877
        %2090 = vmatpush1.bf16.msra.mxu0 %v1876
        %2091 = vmatprep.subr.bf16.mxu0 %v1880
        %2092 = vmatpush1.bf16.msra.mxu0 %v1879
        %2093 = vmatprep.subr.bf16.mxu0 %v1883
        %2094 = vmatpush1.bf16.msra.mxu0 %v1882
        %2095 = vmatprep.subr.bf16.mxu0 %v1886
        %2096 = vmatpush1.bf16.msra.mxu0 %v1885
        %2097 = vmatprep.subr.bf16.mxu0 %v1889
        %2098 = vmatpush1.bf16.msra.mxu0 %v1888
        %2099 = vmatprep.subr.bf16.mxu0 %v1892
        %2100 = vmatpush1.bf16.msra.mxu0 %v1891
        %2101 = vmatprep.subr.bf16.mxu0 %v1895
        %2102 = vmatpush1.bf16.msra.mxu0 %v1894
        %2103 = vmatprep.subr.bf16.mxu0 %v1898
        %2104 = vmatpush1.bf16.msra.mxu0 %v1897
        %2105 = vmatprep.mubr.bf16.mxu0 %v2025
        %2106 = vmatmul.mubr.bf16.gmra.mrb[0].mxu0 %v2024
        %v2107 = vpop.f32.mrb[0].mxu0
        %v2108 = vadd.f32 0.0, %v2107
        %v2109 = vpop.f32.mrb[0].mxu0
        %v2110 = vadd.f32 0.0, %v2109
        %v2111 = vpop.f32.mrb[0].mxu0
        %v2112 = vadd.f32 0.0, %v2111
        %v2113 = vpop.f32.mrb[0].mxu0
        %v2114 = vadd.f32 0.0, %v2113
        %2115 = vmatprep.mubr.bf16.mxu0 %v2030
        %2116 = vmatmul.mubr.bf16.gmra.mrb[0].mxu0 %v2029
        %v2117 = vpop.f32.mrb[0].mxu0
        %v2118 = vadd.f32 0.0, %v2117
        %v2119 = vpop.f32.mrb[0].mxu0
        %v2120 = vadd.f32 0.0, %v2119
        %v2121 = vpop.f32.mrb[0].mxu0
        %v2122 = vadd.f32 0.0, %v2121
        %v2123 = vpop.f32.mrb[0].mxu0
        %v2124 = vadd.f32 0.0, %v2123
        %2125 = vmatprep.mubr.bf16.mxu0 %v2035
        %2126 = vmatmul.mubr.bf16.gmra.mrb[0].mxu0 %v2034
        %v2127 = vpop.f32.mrb[0].mxu0
        %v2128 = vadd.f32 0.0, %v2127
        %v2129 = vpop.f32.mrb[0].mxu0
        %v2130 = vadd.f32 0.0, %v2129
        %v2131 = vpop.f32.mrb[0].mxu0
        %v2132 = vadd.f32 0.0, %v2131
        %v2133 = vpop.f32.mrb[0].mxu0
        %v2134 = vadd.f32 0.0, %v2133
        %2135 = vmatprep.mubr.bf16.mxu0 %v2040
        %2136 = vmatmul.mubr.bf16.gmra.mrb[0].mxu0 %v2039
        %v2137 = vpop.f32.mrb[0].mxu0
        %v2138 = vadd.f32 0.0, %v2137
        %v2139 = vpop.f32.mrb[0].mxu0
        %v2140 = vadd.f32 0.0, %v2139
        %v2141 = vpop.f32.mrb[0].mxu0
        %v2142 = vadd.f32 0.0, %v2141
        %v2143 = vpop.f32.mrb[0].mxu0
        %v2144 = vadd.f32 0.0, %v2143
        %2145 = vdwg.mxu0
        %2146 = vmatprep.subr.bf16.mxu0 %v1901
        %2147 = vmatpush1.bf16.msra.mxu0 %v1900
        %2148 = vmatprep.subr.bf16.mxu0 %v1904
        %2149 = vmatpush1.bf16.msra.mxu0 %v1903
        %2150 = vmatprep.subr.bf16.mxu0 %v1907
        %2151 = vmatpush1.bf16.msra.mxu0 %v1906
        %2152 = vmatprep.subr.bf16.mxu0 %v1910
        %2153 = vmatpush1.bf16.msra.mxu0 %v1909
        %2154 = vmatprep.subr.bf16.mxu0 %v1913
        %2155 = vmatpush1.bf16.msra.mxu0 %v1912
        %2156 = vmatprep.subr.bf16.mxu0 %v1916
        %2157 = vmatpush1.bf16.msra.mxu0 %v1915
        %2158 = vmatprep.subr.bf16.mxu0 %v1919
        %2159 = vmatpush1.bf16.msra.mxu0 %v1918
        %2160 = vmatprep.subr.bf16.mxu0 %v1922
        %2161 = vmatpush1.bf16.msra.mxu0 %v1921
        %2162 = vmatprep.subr.bf16.mxu0 %v1925
        %2163 = vmatpush1.bf16.msra.mxu0 %v1924
        %2164 = vmatprep.subr.bf16.mxu0 %v1928
        %2165 = vmatpush1.bf16.msra.mxu0 %v1927
        %2166 = vmatprep.subr.bf16.mxu0 %v1931
        %2167 = vmatpush1.bf16.msra.mxu0 %v1930
        %2168 = vmatprep.subr.bf16.mxu0 %v1934
        %2169 = vmatpush1.bf16.msra.mxu0 %v1933
        %2170 = vmatprep.subr.bf16.mxu0 %v1937
        %2171 = vmatpush1.bf16.msra.mxu0 %v1936
        %2172 = vmatprep.subr.bf16.mxu0 %v1940
        %2173 = vmatpush1.bf16.msra.mxu0 %v1939
        %2174 = vmatprep.subr.bf16.mxu0 %v1943
        %2175 = vmatpush1.bf16.msra.mxu0 %v1942
        %2176 = vmatprep.subr.bf16.mxu0 %v1946
        %2177 = vmatpush1.bf16.msra.mxu0 %v1945
        %2178 = vmatprep.mubr.bf16.mxu0 %v2027
        %2179 = vmatmul.mubr.bf16.gmra.mrb[0].mxu0 %v2026
        %v2180 = vpop.f32.mrb[0].mxu0
        %v2181 = vadd.f32 %v2108, %v2180
        %v2182 = vpop.f32.mrb[0].mxu0
        %v2183 = vadd.f32 %v2110, %v2182
        %v2184 = vpop.f32.mrb[0].mxu0
        %v2185 = vadd.f32 %v2112, %v2184
        %v2186 = vpop.f32.mrb[0].mxu0
        %v2187 = vadd.f32 %v2114, %v2186
        %2188 = vmatprep.mubr.bf16.mxu0 %v2032
        %2189 = vmatmul.mubr.bf16.gmra.mrb[0].mxu0 %v2031
        %v2190 = vpop.f32.mrb[0].mxu0
        %v2191 = vadd.f32 %v2118, %v2190
        %v2192 = vpop.f32.mrb[0].mxu0
        %v2193 = vadd.f32 %v2120, %v2192
        %v2194 = vpop.f32.mrb[0].mxu0
        %v2195 = vadd.f32 %v2122, %v2194
        %v2196 = vpop.f32.mrb[0].mxu0
        %v2197 = vadd.f32 %v2124, %v2196
        %2198 = vmatprep.mubr.bf16.mxu0 %v2037
        %2199 = vmatmul.mubr.bf16.gmra.mrb[0].mxu0 %v2036
        %v2200 = vpop.f32.mrb[0].mxu0
        %v2201 = vadd.f32 %v2128, %v2200
        %v2202 = vpop.f32.mrb[0].mxu0
        %v2203 = vadd.f32 %v2130, %v2202
        %v2204 = vpop.f32.mrb[0].mxu0
        %v2205 = vadd.f32 %v2132, %v2204
        %v2206 = vpop.f32.mrb[0].mxu0
        %v2207 = vadd.f32 %v2134, %v2206
        %2208 = vmatprep.mubr.bf16.mxu0 %v2042
        %2209 = vmatmul.mubr.bf16.gmra.mrb[0].mxu0 %v2041
        %v2210 = vpop.f32.mrb[0].mxu0
        %v2211 = vadd.f32 %v2138, %v2210
        %v2212 = vpop.f32.mrb[0].mxu0
        %v2213 = vadd.f32 %v2140, %v2212
        %v2214 = vpop.f32.mrb[0].mxu0
        %v2215 = vadd.f32 %v2142, %v2214
        %v2216 = vpop.f32.mrb[0].mxu0
        %v2217 = vadd.f32 %v2144, %v2216
        %2218 = vdwg.mxu0
        %2219 = vmatprep.subr.bf16.mxu0 %v1949
        %2220 = vmatpush1.bf16.msra.mxu0 %v1948
        %2221 = vmatprep.subr.bf16.mxu0 %v1952
        %2222 = vmatpush1.bf16.msra.mxu0 %v1951
        %2223 = vmatprep.subr.bf16.mxu0 %v1955
        %2224 = vmatpush1.bf16.msra.mxu0 %v1954
        %2225 = vmatprep.subr.bf16.mxu0 %v1958
        %2226 = vmatpush1.bf16.msra.mxu0 %v1957
        %2227 = vmatprep.subr.bf16.mxu0 0
        %2228 = vmatpush1.bf16.msra.mxu0 0
        %2229 = vmatprep.subr.bf16.mxu0 0
        %2230 = vmatpush1.bf16.msra.mxu0 0
        %2231 = vmatprep.subr.bf16.mxu0 0
        %2232 = vmatpush1.bf16.msra.mxu0 0
        %2233 = vmatprep.subr.bf16.mxu0 0
        %2234 = vmatpush1.bf16.msra.mxu0 0
        %2235 = vmatprep.subr.bf16.mxu0 0
        %2236 = vmatpush1.bf16.msra.mxu0 0
        %2237 = vmatprep.subr.bf16.mxu0 0
        %2238 = vmatpush1.bf16.msra.mxu0 0
        %2239 = vmatprep.subr.bf16.mxu0 0
        %2240 = vmatpush1.bf16.msra.mxu0 0
        %2241 = vmatprep.subr.bf16.mxu0 0
        %2242 = vmatpush1.bf16.msra.mxu0 0
        %2243 = vmatprep.subr.bf16.mxu0 0
        %2244 = vmatpush1.bf16.msra.mxu0 0
        %2245 = vmatprep.subr.bf16.mxu0 0
        %2246 = vmatpush1.bf16.msra.mxu0 0
        %2247 = vmatprep.subr.bf16.mxu0 0
        %2248 = vmatpush1.bf16.msra.mxu0 0
        %2249 = vmatprep.subr.bf16.mxu0 0
        %2250 = vmatpush1.bf16.msra.mxu0 0
        %2251 = vmatprep.mubr.bf16.mxu0 0
        %2252 = vmatmul.mubr.bf16.gmra.mrb[0].mxu0 %v2062
        %v2253 = vpop.f32.mrb[0].mxu0
        %v2254 = vadd.f32 %v2181, %v2253
        %v2255 = vpop.f32.mrb[0].mxu0
        %v2256 = vadd.f32 %v2183, %v2255
        %v2257 = vpop.f32.mrb[0].mxu0
        %v2258 = vadd.f32 %v2185, %v2257
        %v2259 = vpop.f32.mrb[0].mxu0
        %v2260 = vadd.f32 %v2187, %v2259
        %2261 = vmatprep.mubr.bf16.mxu0 0
        %2262 = vmatmul.mubr.bf16.gmra.mrb[0].mxu0 %v2065
        %v2263 = vpop.f32.mrb[0].mxu0
        %v2264 = vadd.f32 %v2191, %v2263
        %v2265 = vpop.f32.mrb[0].mxu0
        %v2266 = vadd.f32 %v2193, %v2265
        %v2267 = vpop.f32.mrb[0].mxu0
        %v2268 = vadd.f32 %v2195, %v2267
        %v2269 = vpop.f32.mrb[0].mxu0
        %v2270 = vadd.f32 %v2197, %v2269
        %2271 = vmatprep.mubr.bf16.mxu0 0
        %2272 = vmatmul.mubr.bf16.gmra.mrb[0].mxu0 %v2068
        %v2273 = vpop.f32.mrb[0].mxu0
        %v2274 = vadd.f32 %v2201, %v2273
        %v2275 = vpop.f32.mrb[0].mxu0
        %v2276 = vadd.f32 %v2203, %v2275
        %v2277 = vpop.f32.mrb[0].mxu0
        %v2278 = vadd.f32 %v2205, %v2277
        %v2279 = vpop.f32.mrb[0].mxu0
        %v2280 = vadd.f32 %v2207, %v2279
        %2281 = vmatprep.mubr.bf16.mxu0 0
        %2282 = vmatmul.mubr.bf16.gmra.mrb[0].mxu0 %v2071
        %v2283 = vpop.f32.mrb[0].mxu0
        %v2284 = vadd.f32 %v2211, %v2283
        %v2285 = vpop.f32.mrb[0].mxu0
        %v2286 = vadd.f32 %v2213, %v2285
        %v2287 = vpop.f32.mrb[0].mxu0
        %v2288 = vadd.f32 %v2215, %v2287
        %v2289 = vpop.f32.mrb[0].mxu0
        %v2290 = vadd.f32 %v2217, %v2289
        %2291 = vdwg.mxu0
        %2292 = vmatprep.subr.bf16.mxu0 0
        %2293 = vmatpush1.bf16.msra.mxu0 %v1854
        %2294 = vmatprep.subr.bf16.mxu0 0
        %2295 = vmatpush1.bf16.msra.mxu0 %v1857
        %2296 = vmatprep.subr.bf16.mxu0 0
        %2297 = vmatpush1.bf16.msra.mxu0 %v1860
        %2298 = vmatprep.subr.bf16.mxu0 0
        %2299 = vmatpush1.bf16.msra.mxu0 %v1863
        %2300 = vmatprep.subr.bf16.mxu0 0
        %2301 = vmatpush1.bf16.msra.mxu0 %v1866
        %2302 = vmatprep.subr.bf16.mxu0 0
        %2303 = vmatpush1.bf16.msra.mxu0 %v1869
        %2304 = vmatprep.subr.bf16.mxu0 0
        %2305 = vmatpush1.bf16.msra.mxu0 %v1872
        %2306 = vmatprep.subr.bf16.mxu0 0
        %2307 = vmatpush1.bf16.msra.mxu0 %v1875
        %2308 = vmatprep.subr.bf16.mxu0 0
        %2309 = vmatpush1.bf16.msra.mxu0 %v1878
        %2310 = vmatprep.subr.bf16.mxu0 0
        %2311 = vmatpush1.bf16.msra.mxu0 %v1881
        %2312 = vmatprep.subr.bf16.mxu0 0
        %2313 = vmatpush1.bf16.msra.mxu0 %v1884
        %2314 = vmatprep.subr.bf16.mxu0 0
        %2315 = vmatpush1.bf16.msra.mxu0 %v1887
        %2316 = vmatprep.subr.bf16.mxu0 0
        %2317 = vmatpush1.bf16.msra.mxu0 %v1890
        %2318 = vmatprep.subr.bf16.mxu0 0
        %2319 = vmatpush1.bf16.msra.mxu0 %v1893
        %2320 = vmatprep.subr.bf16.mxu0 0
        %2321 = vmatpush1.bf16.msra.mxu0 %v1896
        %2322 = vmatprep.subr.bf16.mxu0 0
        %2323 = vmatpush1.bf16.msra.mxu0 %v1899
        %2324 = vmatprep.mubr.bf16.mxu0 %v2025
        %2325 = vmatmul.mubr.bf16.gmra.mrb[0].mxu0 %v2024
        %v2326 = vpop.f32.mrb[0].mxu0
        %v2327 = vadd.f32 0.0, %v2326
        %v2328 = vpop.f32.mrb[0].mxu0
        %v2329 = vpop.f32.mrb[0].mxu0
        %v2330 = vadd.f32 0.0, %v2329
        %v2331 = vpop.f32.mrb[0].mxu0
        %2332 = vmatprep.mubr.bf16.mxu0 %v2030
        %2333 = vmatmul.mubr.bf16.gmra.mrb[0].mxu0 %v2029
        %v2334 = vpop.f32.mrb[0].mxu0
        %v2335 = vadd.f32 0.0, %v2334
        %v2336 = vpop.f32.mrb[0].mxu0
        %v2337 = vpop.f32.mrb[0].mxu0
        %v2338 = vadd.f32 0.0, %v2337
        %v2339 = vpop.f32.mrb[0].mxu0
        %2340 = vmatprep.mubr.bf16.mxu0 %v2035
        %2341 = vmatmul.mubr.bf16.gmra.mrb[0].mxu0 %v2034
        %v2342 = vpop.f32.mrb[0].mxu0
        %v2343 = vadd.f32 0.0, %v2342
        %v2344 = vpop.f32.mrb[0].mxu0
        %v2345 = vpop.f32.mrb[0].mxu0
        %v2346 = vadd.f32 0.0, %v2345
        %v2347 = vpop.f32.mrb[0].mxu0
        %2348 = vmatprep.mubr.bf16.mxu0 %v2040
        %2349 = vmatmul.mubr.bf16.gmra.mrb[0].mxu0 %v2039
        %v2350 = vpop.f32.mrb[0].mxu0
        %v2351 = vadd.f32 0.0, %v2350
        %v2352 = vpop.f32.mrb[0].mxu0
        %v2353 = vpop.f32.mrb[0].mxu0
        %v2354 = vadd.f32 0.0, %v2353
        %v2355 = vpop.f32.mrb[0].mxu0
        %2356 = vdwg.mxu0
        %2357 = vmatprep.subr.bf16.mxu0 0
        %2358 = vmatpush1.bf16.msra.mxu0 %v1902
        %2359 = vmatprep.subr.bf16.mxu0 0
        %2360 = vmatpush1.bf16.msra.mxu0 %v1905
        %2361 = vmatprep.subr.bf16.mxu0 0
        %2362 = vmatpush1.bf16.msra.mxu0 %v1908
        %2363 = vmatprep.subr.bf16.mxu0 0
        %2364 = vmatpush1.bf16.msra.mxu0 %v1911
        %2365 = vmatprep.subr.bf16.mxu0 0
        %2366 = vmatpush1.bf16.msra.mxu0 %v1914
        %2367 = vmatprep.subr.bf16.mxu0 0
        %2368 = vmatpush1.bf16.msra.mxu0 %v1917
        %2369 = vmatprep.subr.bf16.mxu0 0
        %2370 = vmatpush1.bf16.msra.mxu0 %v1920
        %2371 = vmatprep.subr.bf16.mxu0 0
        %2372 = vmatpush1.bf16.msra.mxu0 %v1923
        %2373 = vmatprep.subr.bf16.mxu0 0
        %2374 = vmatpush1.bf16.msra.mxu0 %v1926
        %2375 = vmatprep.subr.bf16.mxu0 0
        %2376 = vmatpush1.bf16.msra.mxu0 %v1929
        %2377 = vmatprep.subr.bf16.mxu0 0
        %2378 = vmatpush1.bf16.msra.mxu0 %v1932
        %2379 = vmatprep.subr.bf16.mxu0 0
        %2380 = vmatpush1.bf16.msra.mxu0 %v1935
        %2381 = vmatprep.subr.bf16.mxu0 0
        %2382 = vmatpush1.bf16.msra.mxu0 %v1938
        %2383 = vmatprep.subr.bf16.mxu0 0
        %2384 = vmatpush1.bf16.msra.mxu0 %v1941
        %2385 = vmatprep.subr.bf16.mxu0 0
        %2386 = vmatpush1.bf16.msra.mxu0 %v1944
        %2387 = vmatprep.subr.bf16.mxu0 0
        %2388 = vmatpush1.bf16.msra.mxu0 %v1947
        %2389 = vmatprep.mubr.bf16.mxu0 %v2027
        %2390 = vmatmul.mubr.bf16.gmra.mrb[0].mxu0 %v2026
        %v2391 = vpop.f32.mrb[0].mxu0
        %v2392 = vadd.f32 %v2327, %v2391
        %v2393 = vpop.f32.mrb[0].mxu0
        %v2394 = vpop.f32.mrb[0].mxu0
        %v2395 = vadd.f32 %v2330, %v2394
        %v2396 = vpop.f32.mrb[0].mxu0
        %2397 = vmatprep.mubr.bf16.mxu0 %v2032
        %2398 = vmatmul.mubr.bf16.gmra.mrb[0].mxu0 %v2031
        %v2399 = vpop.f32.mrb[0].mxu0
        %v2400 = vadd.f32 %v2335, %v2399
        %v2401 = vpop.f32.mrb[0].mxu0
        %v2402 = vpop.f32.mrb[0].mxu0
        %v2403 = vadd.f32 %v2338, %v2402
        %v2404 = vpop.f32.mrb[0].mxu0
        %2405 = vmatprep.mubr.bf16.mxu0 %v2037
        %2406 = vmatmul.mubr.bf16.gmra.mrb[0].mxu0 %v2036
        %v2407 = vpop.f32.mrb[0].mxu0
        %v2408 = vadd.f32 %v2343, %v2407
        %v2409 = vpop.f32.mrb[0].mxu0
        %v2410 = vpop.f32.mrb[0].mxu0
        %v2411 = vadd.f32 %v2346, %v2410
        %v2412 = vpop.f32.mrb[0].mxu0
        %2413 = vmatprep.mubr.bf16.mxu0 %v2042
        %2414 = vmatmul.mubr.bf16.gmra.mrb[0].mxu0 %v2041
        %v2415 = vpop.f32.mrb[0].mxu0
        %v2416 = vadd.f32 %v2351, %v2415
        %v2417 = vpop.f32.mrb[0].mxu0
        %v2418 = vpop.f32.mrb[0].mxu0
        %v2419 = vadd.f32 %v2354, %v2418
        %v2420 = vpop.f32.mrb[0].mxu0
        %2421 = vdwg.mxu0
        %2422 = vmatprep.subr.bf16.mxu0 0
        %2423 = vmatpush1.bf16.msra.mxu0 %v1950
        %2424 = vmatprep.subr.bf16.mxu0 0
        %2425 = vmatpush1.bf16.msra.mxu0 %v1953
        %2426 = vmatprep.subr.bf16.mxu0 0
        %2427 = vmatpush1.bf16.msra.mxu0 %v1956
        %2428 = vmatprep.subr.bf16.mxu0 0
        %2429 = vmatpush1.bf16.msra.mxu0 %v1959
        %2430 = vmatprep.subr.bf16.mxu0 0
        %2431 = vmatpush1.bf16.msra.mxu0 0
        %2432 = vmatprep.subr.bf16.mxu0 0
        %2433 = vmatpush1.bf16.msra.mxu0 0
        %2434 = vmatprep.subr.bf16.mxu0 0
        %2435 = vmatpush1.bf16.msra.mxu0 0
        %2436 = vmatprep.subr.bf16.mxu0 0
        %2437 = vmatpush1.bf16.msra.mxu0 0
        %2438 = vmatprep.subr.bf16.mxu0 0
        %2439 = vmatpush1.bf16.msra.mxu0 0
        %2440 = vmatprep.subr.bf16.mxu0 0
        %2441 = vmatpush1.bf16.msra.mxu0 0
        %2442 = vmatprep.subr.bf16.mxu0 0
        %2443 = vmatpush1.bf16.msra.mxu0 0
        %2444 = vmatprep.subr.bf16.mxu0 0
        %2445 = vmatpush1.bf16.msra.mxu0 0
        %2446 = vmatprep.subr.bf16.mxu0 0
        %2447 = vmatpush1.bf16.msra.mxu0 0
        %2448 = vmatprep.subr.bf16.mxu0 0
        %2449 = vmatpush1.bf16.msra.mxu0 0
        %2450 = vmatprep.subr.bf16.mxu0 0
        %2451 = vmatpush1.bf16.msra.mxu0 0
        %2452 = vmatprep.subr.bf16.mxu0 0
        %2453 = vmatpush1.bf16.msra.mxu0 0
        %2454 = vmatprep.mubr.bf16.mxu0 0
        %2455 = vmatmul.mubr.bf16.gmra.mrb[0].mxu0 %v2062
        %v2456 = vpop.f32.mrb[0].mxu0
        %v2457 = vadd.f32 %v2392, %v2456
        %v2458 = vpop.f32.mrb[0].mxu0
        %v2459 = vpop.f32.mrb[0].mxu0
        %v2460 = vadd.f32 %v2395, %v2459
        %v2461 = vpop.f32.mrb[0].mxu0
        %2462 = vmatprep.mubr.bf16.mxu0 0
        %2463 = vmatmul.mubr.bf16.gmra.mrb[0].mxu0 %v2065
        %v2464 = vpop.f32.mrb[0].mxu0
        %v2465 = vadd.f32 %v2400, %v2464
        %v2466 = vpop.f32.mrb[0].mxu0
        %v2467 = vpop.f32.mrb[0].mxu0
        %v2468 = vadd.f32 %v2403, %v2467
        %v2469 = vpop.f32.mrb[0].mxu0
        %2470 = vmatprep.mubr.bf16.mxu0 0
        %2471 = vmatmul.mubr.bf16.gmra.mrb[0].mxu0 %v2068
        %v2472 = vpop.f32.mrb[0].mxu0
        %v2473 = vadd.f32 %v2408, %v2472
        %v2474 = vpop.f32.mrb[0].mxu0
        %v2475 = vpop.f32.mrb[0].mxu0
        %v2476 = vadd.f32 %v2411, %v2475
        %v2477 = vpop.f32.mrb[0].mxu0
        %2478 = vmatprep.mubr.bf16.mxu0 0
        %2479 = vmatmul.mubr.bf16.gmra.mrb[0].mxu0 %v2071
        %v2480 = vpop.f32.mrb[0].mxu0
        %v2481 = vadd.f32 %v2416, %v2480
        %v2482 = vpop.f32.mrb[0].mxu0
        %v2483 = vpop.f32.mrb[0].mxu0
        %v2484 = vadd.f32 %v2419, %v2483
        %v2485 = vpop.f32.mrb[0].mxu0
        %2486 = vdwg.mxu0
        %v2487 = vld [vmem:[#allocation14] sm:$0xff]
        %v2488 = vld [vmem:[#allocation14 + $0x8] sm:$0xff]
        %v2489 = vld [vmem:[#allocation14 + $0x10] sm:$0xff]
        %v2490 = vld [vmem:[#allocation14 + $0x18] sm:$0xff]
        %v2491 = vld [vmem:[#allocation14 + $0x20] sm:$0xff]
        %v2492 = vld [vmem:[#allocation14 + $0x28] sm:$0xff]
        %v2493 = vld [vmem:[#allocation14 + $0x30] sm:$0xff]
        %v2494 = vld [vmem:[#allocation14 + $0x38] sm:$0xff]
        %2496 = vset.pattern.permute.xlu0 0
        %2497 = vperm.xlu0 %2496, %v2487
        %v2498 = vpop.permute.xlu0 %2497
        %2501 = vset.pattern.permute.xlu0 0
        %2502 = vperm.xlu0 %2501, %v2488
        %v2503 = vpop.permute.xlu0 %2502
        %2506 = vset.pattern.permute.xlu0 0
        %2507 = vperm.xlu0 %2506, %v2489
        %v2508 = vpop.permute.xlu0 %2507
        %2511 = vset.pattern.permute.xlu0 0
        %2512 = vperm.xlu0 %2511, %v2490
        %v2513 = vpop.permute.xlu0 %2512
        %2516 = vset.pattern.permute.xlu0 0
        %2517 = vperm.xlu0 %2516, %v2491
        %v2518 = vpop.permute.xlu0 %2517
        %2521 = vset.pattern.permute.xlu0 0
        %2522 = vperm.xlu0 %2521, %v2492
        %v2523 = vpop.permute.xlu0 %2522
        %2526 = vset.pattern.permute.xlu0 0
        %2527 = vperm.xlu0 %2526, %v2493
        %v2528 = vpop.permute.xlu0 %2527
        %2531 = vset.pattern.permute.xlu0 0
        %2532 = vperm.xlu0 %2531, %v2494
        %v2533 = vpop.permute.xlu0 %2532
        %v2535 = vmul.f32 %v2254, %v2498
        %v2536 = vmul.f32 %v2256, %v2498
        %v2537 = vmul.f32 %v2457, %v2498
        %v2538 = vmul.f32 %v2258, %v2503
        %v2539 = vmul.f32 %v2260, %v2503
        %v2540 = vmul.f32 %v2460, %v2503
        %v2541 = vmul.f32 %v2264, %v2508
        %v2542 = vmul.f32 %v2266, %v2508
        %v2543 = vmul.f32 %v2465, %v2508
        %v2544 = vmul.f32 %v2268, %v2513
        %v2545 = vmul.f32 %v2270, %v2513
        %v2546 = vmul.f32 %v2468, %v2513
        %v2547 = vmul.f32 %v2274, %v2518
        %v2548 = vmul.f32 %v2276, %v2518
        %v2549 = vmul.f32 %v2473, %v2518
        %v2550 = vmul.f32 %v2278, %v2523
        %v2551 = vmul.f32 %v2280, %v2523
        %v2552 = vmul.f32 %v2476, %v2523
        %v2553 = vmul.f32 %v2284, %v2528
        %v2554 = vmul.f32 %v2286, %v2528
        %v2555 = vmul.f32 %v2481, %v2528
        %v2556 = vmul.f32 %v2288, %v2533
        %v2557 = vmul.f32 %v2290, %v2533
        %v2558 = vmul.f32 %v2484, %v2533
        %v2559 = vld [vmem:[#allocation15] sm:$0xff]
        %v2560 = vld [vmem:[#allocation15 + $0x8] sm:$0xff]
        %v2561 = vld [vmem:[#allocation15 + $0x10] sm:$0xff]
        %v2562 = vld [vmem:[#allocation15 + $0x18] sm:$0xff]
        %v2563 = vld [vmem:[#allocation15 + $0x20] sm:$0xff]
        %v2564 = vld [vmem:[#allocation15 + $0x28] sm:$0xff]
        %v2565 = vld [vmem:[#allocation15 + $0x30] sm:$0xff]
        %v2566 = vld [vmem:[#allocation15 + $0x38] sm:$0xff]
        %2568 = vset.pattern.permute.xlu0 0
        %2569 = vperm.xlu0 %2568, %v2559
        %v2570 = vpop.permute.xlu0 %2569
        %2573 = vset.pattern.permute.xlu0 0
        %2574 = vperm.xlu0 %2573, %v2560
        %v2575 = vpop.permute.xlu0 %2574
        %2578 = vset.pattern.permute.xlu0 0
        %2579 = vperm.xlu0 %2578, %v2561
        %v2580 = vpop.permute.xlu0 %2579
        %2583 = vset.pattern.permute.xlu0 0
        %2584 = vperm.xlu0 %2583, %v2562
        %v2585 = vpop.permute.xlu0 %2584
        %2588 = vset.pattern.permute.xlu0 0
        %2589 = vperm.xlu0 %2588, %v2563
        %v2590 = vpop.permute.xlu0 %2589
        %2593 = vset.pattern.permute.xlu0 0
        %2594 = vperm.xlu0 %2593, %v2564
        %v2595 = vpop.permute.xlu0 %2594
        %2598 = vset.pattern.permute.xlu0 0
        %2599 = vperm.xlu0 %2598, %v2565
        %v2600 = vpop.permute.xlu0 %2599
        %2603 = vset.pattern.permute.xlu0 0
        %2604 = vperm.xlu0 %2603, %v2566
        %v2605 = vpop.permute.xlu0 %2604
        %v2607 = vadd.f32 %v2535, %v2570
        %v2608 = vadd.f32 %v2536, %v2570
        %v2609 = vadd.f32 %v2537, %v2570
        %v2610 = vadd.f32 %v2538, %v2575
        %v2611 = vadd.f32 %v2539, %v2575
        %v2612 = vadd.f32 %v2540, %v2575
        %v2613 = vadd.f32 %v2541, %v2580
        %v2614 = vadd.f32 %v2542, %v2580
        %v2615 = vadd.f32 %v2543, %v2580
        %v2616 = vadd.f32 %v2544, %v2585
        %v2617 = vadd.f32 %v2545, %v2585
        %v2618 = vadd.f32 %v2546, %v2585
        %v2619 = vadd.f32 %v2547, %v2590
        %v2620 = vadd.f32 %v2548, %v2590
        %v2621 = vadd.f32 %v2549, %v2590
        %v2622 = vadd.f32 %v2550, %v2595
        %v2623 = vadd.f32 %v2551, %v2595
        %v2624 = vadd.f32 %v2552, %v2595
        %v2625 = vadd.f32 %v2553, %v2600
        %v2626 = vadd.f32 %v2554, %v2600
        %v2627 = vadd.f32 %v2555, %v2600
        %v2628 = vadd.f32 %v2556, %v2605
        %v2629 = vadd.f32 %v2557, %v2605
        %v2630 = vadd.f32 %v2558, %v2605
        %vm2631 = vcmp.gt.f32.partialorder %v2607, 0.0
        %vm2632 = vcmp.gt.f32.partialorder %v2608, 0.0
        %vm2633 = vcmp.gt.f32.partialorder %v2609, 0.0
        %vm2634 = vcmp.gt.f32.partialorder %v2610, 0.0
        %vm2635 = vcmp.gt.f32.partialorder %v2611, 0.0
        %vm2636 = vcmp.gt.f32.partialorder %v2612, 0.0
        %vm2637 = vcmp.gt.f32.partialorder %v2613, 0.0
        %vm2638 = vcmp.gt.f32.partialorder %v2614, 0.0
        %vm2639 = vcmp.gt.f32.partialorder %v2615, 0.0
        %vm2640 = vcmp.gt.f32.partialorder %v2616, 0.0
        %vm2641 = vcmp.gt.f32.partialorder %v2617, 0.0
        %vm2642 = vcmp.gt.f32.partialorder %v2618, 0.0
        %vm2643 = vcmp.gt.f32.partialorder %v2619, 0.0
        %vm2644 = vcmp.gt.f32.partialorder %v2620, 0.0
        %vm2645 = vcmp.gt.f32.partialorder %v2621, 0.0
        %vm2646 = vcmp.gt.f32.partialorder %v2622, 0.0
        %vm2647 = vcmp.gt.f32.partialorder %v2623, 0.0
        %vm2648 = vcmp.gt.f32.partialorder %v2624, 0.0
        %vm2649 = vcmp.gt.f32.partialorder %v2625, 0.0
        %vm2650 = vcmp.gt.f32.partialorder %v2626, 0.0
        %vm2651 = vcmp.gt.f32.partialorder %v2627, 0.0
        %vm2652 = vcmp.gt.f32.partialorder %v2628, 0.0
        %vm2653 = vcmp.gt.f32.partialorder %v2629, 0.0
        %vm2654 = vcmp.gt.f32.partialorder %v2630, 0.0
        %v2655 = vmul.f32 %v2607, 0.01
        %v2656 = vmul.f32 %v2608, 0.01
        %v2657 = vmul.f32 %v2609, 0.01
        %v2658 = vmul.f32 %v2610, 0.01
        %v2659 = vmul.f32 %v2611, 0.01
        %v2660 = vmul.f32 %v2612, 0.01
        %v2661 = vmul.f32 %v2613, 0.01
        %v2662 = vmul.f32 %v2614, 0.01
        %v2663 = vmul.f32 %v2615, 0.01
        %v2664 = vmul.f32 %v2616, 0.01
        %v2665 = vmul.f32 %v2617, 0.01
        %v2666 = vmul.f32 %v2618, 0.01
        %v2667 = vmul.f32 %v2619, 0.01
        %v2668 = vmul.f32 %v2620, 0.01
        %v2669 = vmul.f32 %v2621, 0.01
        %v2670 = vmul.f32 %v2622, 0.01
        %v2671 = vmul.f32 %v2623, 0.01
        %v2672 = vmul.f32 %v2624, 0.01
        %v2673 = vmul.f32 %v2625, 0.01
        %v2674 = vmul.f32 %v2626, 0.01
        %v2675 = vmul.f32 %v2627, 0.01
        %v2676 = vmul.f32 %v2628, 0.01
        %v2677 = vmul.f32 %v2629, 0.01
        %v2678 = vmul.f32 %v2630, 0.01
        %v2679 = vsel %vm2631, %v2607, %v2655
        %v2680 = vsel %vm2632, %v2608, %v2656
        %v2681 = vsel %vm2633, %v2609, %v2657
        %v2682 = vsel %vm2634, %v2610, %v2658
        %v2683 = vsel %vm2635, %v2611, %v2659
        %v2684 = vsel %vm2636, %v2612, %v2660
        %v2685 = vsel %vm2637, %v2613, %v2661
        %v2686 = vsel %vm2638, %v2614, %v2662
        %v2687 = vsel %vm2639, %v2615, %v2663
        %v2688 = vsel %vm2640, %v2616, %v2664
        %v2689 = vsel %vm2641, %v2617, %v2665
        %v2690 = vsel %vm2642, %v2618, %v2666
        %v2691 = vsel %vm2643, %v2619, %v2667
        %v2692 = vsel %vm2644, %v2620, %v2668
        %v2693 = vsel %vm2645, %v2621, %v2669
        %v2694 = vsel %vm2646, %v2622, %v2670
        %v2695 = vsel %vm2647, %v2623, %v2671
        %v2696 = vsel %vm2648, %v2624, %v2672
        %v2697 = vsel %vm2649, %v2625, %v2673
        %v2698 = vsel %vm2650, %v2626, %v2674
        %v2699 = vsel %vm2651, %v2627, %v2675
        %v2700 = vsel %vm2652, %v2628, %v2676
        %v2701 = vsel %vm2653, %v2629, %v2677
        %v2702 = vsel %vm2654, %v2630, %v2678
        %v2703 = vmul.f32 %v2679, %v1024
        %v2704 = vmul.f32 %v2680, %v1028
        %v2705 = vmul.f32 %v2681, %v1032
        %v2706 = vmul.f32 %v2682, %v1024
        %v2707 = vmul.f32 %v2683, %v1028
        %v2708 = vmul.f32 %v2684, %v1032
        %v2709 = vmul.f32 %v2685, %v1024
        %v2710 = vmul.f32 %v2686, %v1028
        %v2711 = vmul.f32 %v2687, %v1032
        %v2712 = vmul.f32 %v2688, %v1024
        %v2713 = vmul.f32 %v2689, %v1028
        %v2714 = vmul.f32 %v2690, %v1032
        %v2715 = vmul.f32 %v2691, %v1024
        %v2716 = vmul.f32 %v2692, %v1028
        %v2717 = vmul.f32 %v2693, %v1032
        %v2718 = vmul.f32 %v2694, %v1024
        %v2719 = vmul.f32 %v2695, %v1028
        %v2720 = vmul.f32 %v2696, %v1032
        %v2721 = vmul.f32 %v2697, %v1024
        %v2722 = vmul.f32 %v2698, %v1028
        %v2723 = vmul.f32 %v2699, %v1032
        %v2724 = vmul.f32 %v2700, %v1024
        %v2725 = vmul.f32 %v2701, %v1028
        %v2726 = vmul.f32 %v2702, %v1032
        %v2727 = vpack.c.bf16 %v2706, %v2703
        %v2728 = vpack.c.bf16 %v2707, %v2704
        %v2729 = vpack.c.bf16 %v2708, %v2705
        %v2730 = vpack.c.bf16 %v2712, %v2709
        %v2731 = vpack.c.bf16 %v2713, %v2710
        %v2732 = vpack.c.bf16 %v2714, %v2711
        %v2733 = vpack.c.bf16 %v2718, %v2715
        %v2734 = vpack.c.bf16 %v2719, %v2716
        %v2735 = vpack.c.bf16 %v2720, %v2717
        %v2736 = vpack.c.bf16 %v2724, %v2721
        %v2737 = vpack.c.bf16 %v2725, %v2722
        %v2738 = vpack.c.bf16 %v2726, %v2723
        %2739 = vst [vmem:[#allocation5 + $0x8] sm:$0xff] %v2727
        %2740 = vst [vmem:[#allocation5 + $0x10] sm:$0xff] %v2728
        %2741 = vst.msk [vmem:[#allocation5 + $0x18] sm:$0xff] %vm386, %v2729
        %2742 = vst [vmem:[#allocation5 + $0x30] sm:$0xff] %v2730
        %2743 = vst [vmem:[#allocation5 + $0x38] sm:$0xff] %v2731
        %2744 = vst.msk [vmem:[#allocation5 + $0x40] sm:$0xff] %vm386, %v2732
        %2745 = vst [vmem:[#allocation5 + $0x58] sm:$0xff] %v2733
        %2746 = vst [vmem:[#allocation5 + $0x60] sm:$0xff] %v2734
        %2747 = vst.msk [vmem:[#allocation5 + $0x68] sm:$0xff] %vm386, %v2735
        %2748 = vst [vmem:[#allocation5 + $0x80] sm:$0xff] %v2736
        %2749 = vst [vmem:[#allocation5 + $0x88] sm:$0xff] %v2737
        %2750 = vst.msk [vmem:[#allocation5 + $0x90] sm:$0xff] %vm386, %v2738
        %v2751 = vld [vmem:[#allocation5] sm:$0xff]
        %v2752 = vld [vmem:[#allocation5 + $0x8] sm:$0xff]
        %v2753 = vld [vmem:[#allocation5 + $0x10] sm:$0xff]
        %v2754 = vld [vmem:[#allocation5 + $0x18] sm:$0xff]
        %v2755 = vld [vmem:[#allocation5 + $0x28] sm:$0xff]
        %v2756 = vld [vmem:[#allocation5 + $0x30] sm:$0xff]
        %v2757 = vld [vmem:[#allocation5 + $0x38] sm:$0xff]
        %v2758 = vld [vmem:[#allocation5 + $0x40] sm:$0xff]
        %v2759 = vld [vmem:[#allocation5 + $0x50] sm:$0xff]
        %v2760 = vld [vmem:[#allocation5 + $0x58] sm:$0xff]
        %v2761 = vld [vmem:[#allocation5 + $0x60] sm:$0xff]
        %v2762 = vld [vmem:[#allocation5 + $0x68] sm:$0xff]
        %v2763 = vld [vmem:[#allocation5 + $0x78] sm:$0xff]
        %v2764 = vld [vmem:[#allocation5 + $0x80] sm:$0xff]
        %v2765 = vld [vmem:[#allocation5 + $0x88] sm:$0xff]
        %v2766 = vld [vmem:[#allocation5 + $0x90] sm:$0xff]
        %2783 = vrot.lane.b32.xlu0 %v2751, 19
        %v2784 = vpop.permute.xlu0 %2783
        %2785 = vrot.lane.b32.xlu0 %v2752, 19
        %v2786 = vpop.permute.xlu0 %2785
        %2787 = vrot.lane.b32.xlu0 %v2753, 19
        %v2788 = vpop.permute.xlu0 %2787
        %2789 = vrot.lane.b32.xlu0 %v2754, 19
        %v2790 = vpop.permute.xlu0 %2789
        %2791 = vrot.lane.b32.xlu0 %v2755, 19
        %v2792 = vpop.permute.xlu0 %2791
        %2793 = vrot.lane.b32.xlu0 %v2756, 19
        %v2794 = vpop.permute.xlu0 %2793
        %2795 = vrot.lane.b32.xlu0 %v2757, 19
        %v2796 = vpop.permute.xlu0 %2795
        %2797 = vrot.lane.b32.xlu0 %v2758, 19
        %v2798 = vpop.permute.xlu0 %2797
        %2799 = vrot.lane.b32.xlu0 %v2759, 19
        %v2800 = vpop.permute.xlu0 %2799
        %2801 = vrot.lane.b32.xlu0 %v2760, 19
        %v2802 = vpop.permute.xlu0 %2801
        %2803 = vrot.lane.b32.xlu0 %v2761, 19
        %v2804 = vpop.permute.xlu0 %2803
        %2805 = vrot.lane.b32.xlu0 %v2762, 19
        %v2806 = vpop.permute.xlu0 %2805
        %2807 = vrot.lane.b32.xlu0 %v2763, 19
        %v2808 = vpop.permute.xlu0 %2807
        %2809 = vrot.lane.b32.xlu0 %v2764, 19
        %v2810 = vpop.permute.xlu0 %2809
        %2811 = vrot.lane.b32.xlu0 %v2765, 19
        %v2812 = vpop.permute.xlu0 %2811
        %2813 = vrot.lane.b32.xlu0 %v2766, 19
        %v2814 = vpop.permute.xlu0 %2813
        %v2815 = vsel %vm451, %v2784, %v2786
        %v2816 = vsel %vm451, %v2786, %v2788
        %v2817 = vsel %vm451, %v2788, %v2790
        %v2818 = vsel %vm451, %v2792, %v2794
        %v2819 = vsel %vm451, %v2794, %v2796
        %v2820 = vsel %vm451, %v2796, %v2798
        %v2821 = vsel %vm451, %v2800, %v2802
        %v2822 = vsel %vm451, %v2802, %v2804
        %v2823 = vsel %vm451, %v2804, %v2806
        %v2824 = vsel %vm451, %v2808, %v2810
        %v2825 = vsel %vm451, %v2810, %v2812
        %v2826 = vsel %vm451, %v2812, %v2814
        %2839 = vst [vmem:[#allocation3] sm:$0xff] %v2815
        %2840 = vst [vmem:[#allocation3 + $0x8] sm:$0xff] %v2816
        %2841 = vst.msk [vmem:[#allocation3 + $0x10] sm:$0xff] %vm386, %v2817
        %2842 = vst [vmem:[#allocation3 + $0x18] sm:$0xff] %v2818
        %2843 = vst [vmem:[#allocation3 + $0x20] sm:$0xff] %v2819
        %2844 = vst.msk [vmem:[#allocation3 + $0x28] sm:$0xff] %vm386, %v2820
        %2845 = vst [vmem:[#allocation3 + $0x30] sm:$0xff] %v2821
        %2846 = vst [vmem:[#allocation3 + $0x38] sm:$0xff] %v2822
        %2847 = vst.msk [vmem:[#allocation3 + $0x40] sm:$0xff] %vm386, %v2823
        %2848 = vst [vmem:[#allocation3 + $0x48] sm:$0xff] %v2824
        %2849 = vst [vmem:[#allocation3 + $0x50] sm:$0xff] %v2825
        %2850 = vst.msk [vmem:[#allocation3 + $0x58] sm:$0xff] %vm386, %v2826
        %v2851 = vld [vmem:[#allocation5] sm:$0xff]
        %v2852 = vld [vmem:[#allocation5 + $0x8] sm:$0xff]
        %v2853 = vld [vmem:[#allocation5 + $0x10] sm:$0xff]
        %v2854 = vld [vmem:[#allocation5 + $0x18] sm:$0xff]
        %v2855 = vld [vmem:[#allocation5 + $0x28] sm:$0xff]
        %v2856 = vld [vmem:[#allocation5 + $0x30] sm:$0xff]
        %v2857 = vld [vmem:[#allocation5 + $0x38] sm:$0xff]
        %v2858 = vld [vmem:[#allocation5 + $0x40] sm:$0xff]
        %v2859 = vld [vmem:[#allocation5 + $0x50] sm:$0xff]
        %v2860 = vld [vmem:[#allocation5 + $0x58] sm:$0xff]
        %v2861 = vld [vmem:[#allocation5 + $0x60] sm:$0xff]
        %v2862 = vld [vmem:[#allocation5 + $0x68] sm:$0xff]
        %v2863 = vld [vmem:[#allocation5 + $0x78] sm:$0xff]
        %v2864 = vld [vmem:[#allocation5 + $0x80] sm:$0xff]
        %v2865 = vld [vmem:[#allocation5 + $0x88] sm:$0xff]
        %v2866 = vld [vmem:[#allocation5 + $0x90] sm:$0xff]
        %2883 = vrot.lane.b32.xlu0 %v2851, 18
        %v2884 = vpop.permute.xlu0 %2883
        %2885 = vrot.lane.b32.xlu0 %v2852, 18
        %v2886 = vpop.permute.xlu0 %2885
        %2887 = vrot.lane.b32.xlu0 %v2853, 18
        %v2888 = vpop.permute.xlu0 %2887
        %2889 = vrot.lane.b32.xlu0 %v2854, 18
        %v2890 = vpop.permute.xlu0 %2889
        %2891 = vrot.lane.b32.xlu0 %v2855, 18
        %v2892 = vpop.permute.xlu0 %2891
        %2893 = vrot.lane.b32.xlu0 %v2856, 18
        %v2894 = vpop.permute.xlu0 %2893
        %2895 = vrot.lane.b32.xlu0 %v2857, 18
        %v2896 = vpop.permute.xlu0 %2895
        %2897 = vrot.lane.b32.xlu0 %v2858, 18
        %v2898 = vpop.permute.xlu0 %2897
        %2899 = vrot.lane.b32.xlu0 %v2859, 18
        %v2900 = vpop.permute.xlu0 %2899
        %2901 = vrot.lane.b32.xlu0 %v2860, 18
        %v2902 = vpop.permute.xlu0 %2901
        %2903 = vrot.lane.b32.xlu0 %v2861, 18
        %v2904 = vpop.permute.xlu0 %2903
        %2905 = vrot.lane.b32.xlu0 %v2862, 18
        %v2906 = vpop.permute.xlu0 %2905
        %2907 = vrot.lane.b32.xlu0 %v2863, 18
        %v2908 = vpop.permute.xlu0 %2907
        %2909 = vrot.lane.b32.xlu0 %v2864, 18
        %v2910 = vpop.permute.xlu0 %2909
        %2911 = vrot.lane.b32.xlu0 %v2865, 18
        %v2912 = vpop.permute.xlu0 %2911
        %2913 = vrot.lane.b32.xlu0 %v2866, 18
        %v2914 = vpop.permute.xlu0 %2913
        %v2915 = vsel %vm489, %v2884, %v2886
        %v2916 = vsel %vm489, %v2886, %v2888
        %v2917 = vsel %vm489, %v2888, %v2890
        %v2918 = vsel %vm489, %v2892, %v2894
        %v2919 = vsel %vm489, %v2894, %v2896
        %v2920 = vsel %vm489, %v2896, %v2898
        %v2921 = vsel %vm489, %v2900, %v2902
        %v2922 = vsel %vm489, %v2902, %v2904
        %v2923 = vsel %vm489, %v2904, %v2906
        %v2924 = vsel %vm489, %v2908, %v2910
        %v2925 = vsel %vm489, %v2910, %v2912
        %v2926 = vsel %vm489, %v2912, %v2914
        %2939 = vst [vmem:[#allocation3 + $0x60] sm:$0xff] %v2915
        %2940 = vst [vmem:[#allocation3 + $0x68] sm:$0xff] %v2916
        %2941 = vst.msk [vmem:[#allocation3 + $0x70] sm:$0xff] %vm386, %v2917
        %2942 = vst [vmem:[#allocation3 + $0x78] sm:$0xff] %v2918
        %2943 = vst [vmem:[#allocation3 + $0x80] sm:$0xff] %v2919
        %2944 = vst.msk [vmem:[#allocation3 + $0x88] sm:$0xff] %vm386, %v2920
        %2945 = vst [vmem:[#allocation3 + $0x90] sm:$0xff] %v2921
        %2946 = vst [vmem:[#allocation3 + $0x98] sm:$0xff] %v2922
        %2947 = vst.msk [vmem:[#allocation3 + $0xa0] sm:$0xff] %vm386, %v2923
        %2948 = vst [vmem:[#allocation3 + $0xa8] sm:$0xff] %v2924
        %2949 = vst [vmem:[#allocation3 + $0xb0] sm:$0xff] %v2925
        %2950 = vst.msk [vmem:[#allocation3 + $0xb8] sm:$0xff] %vm386, %v2926
        %v2951 = vld [vmem:[#allocation5] sm:$0xff]
        %v2952 = vld [vmem:[#allocation5 + $0x8] sm:$0xff]
        %v2953 = vld [vmem:[#allocation5 + $0x10] sm:$0xff]
        %v2954 = vld [vmem:[#allocation5 + $0x18] sm:$0xff]
        %v2955 = vld [vmem:[#allocation5 + $0x28] sm:$0xff]
        %v2956 = vld [vmem:[#allocation5 + $0x30] sm:$0xff]
        %v2957 = vld [vmem:[#allocation5 + $0x38] sm:$0xff]
        %v2958 = vld [vmem:[#allocation5 + $0x40] sm:$0xff]
        %v2959 = vld [vmem:[#allocation5 + $0x50] sm:$0xff]
        %v2960 = vld [vmem:[#allocation5 + $0x58] sm:$0xff]
        %v2961 = vld [vmem:[#allocation5 + $0x60] sm:$0xff]
        %v2962 = vld [vmem:[#allocation5 + $0x68] sm:$0xff]
        %v2963 = vld [vmem:[#allocation5 + $0x78] sm:$0xff]
        %v2964 = vld [vmem:[#allocation5 + $0x80] sm:$0xff]
        %v2965 = vld [vmem:[#allocation5 + $0x88] sm:$0xff]
        %v2966 = vld [vmem:[#allocation5 + $0x90] sm:$0xff]
        %2983 = vrot.lane.b32.xlu0 %v2951, 17
        %v2984 = vpop.permute.xlu0 %2983
        %2985 = vrot.lane.b32.xlu0 %v2952, 17
        %v2986 = vpop.permute.xlu0 %2985
        %2987 = vrot.lane.b32.xlu0 %v2953, 17
        %v2988 = vpop.permute.xlu0 %2987
        %2989 = vrot.lane.b32.xlu0 %v2954, 17
        %v2990 = vpop.permute.xlu0 %2989
        %2991 = vrot.lane.b32.xlu0 %v2955, 17
        %v2992 = vpop.permute.xlu0 %2991
        %2993 = vrot.lane.b32.xlu0 %v2956, 17
        %v2994 = vpop.permute.xlu0 %2993
        %2995 = vrot.lane.b32.xlu0 %v2957, 17
        %v2996 = vpop.permute.xlu0 %2995
        %2997 = vrot.lane.b32.xlu0 %v2958, 17
        %v2998 = vpop.permute.xlu0 %2997
        %2999 = vrot.lane.b32.xlu0 %v2959, 17
        %v3000 = vpop.permute.xlu0 %2999
        %3001 = vrot.lane.b32.xlu0 %v2960, 17
        %v3002 = vpop.permute.xlu0 %3001
        %3003 = vrot.lane.b32.xlu0 %v2961, 17
        %v3004 = vpop.permute.xlu0 %3003
        %3005 = vrot.lane.b32.xlu0 %v2962, 17
        %v3006 = vpop.permute.xlu0 %3005
        %3007 = vrot.lane.b32.xlu0 %v2963, 17
        %v3008 = vpop.permute.xlu0 %3007
        %3009 = vrot.lane.b32.xlu0 %v2964, 17
        %v3010 = vpop.permute.xlu0 %3009
        %3011 = vrot.lane.b32.xlu0 %v2965, 17
        %v3012 = vpop.permute.xlu0 %3011
        %3013 = vrot.lane.b32.xlu0 %v2966, 17
        %v3014 = vpop.permute.xlu0 %3013
        %v3015 = vsel %vm527, %v2984, %v2986
        %v3016 = vsel %vm527, %v2986, %v2988
        %v3017 = vsel %vm527, %v2988, %v2990
        %v3018 = vsel %vm527, %v2992, %v2994
        %v3019 = vsel %vm527, %v2994, %v2996
        %v3020 = vsel %vm527, %v2996, %v2998
        %v3021 = vsel %vm527, %v3000, %v3002
        %v3022 = vsel %vm527, %v3002, %v3004
        %v3023 = vsel %vm527, %v3004, %v3006
        %v3024 = vsel %vm527, %v3008, %v3010
        %v3025 = vsel %vm527, %v3010, %v3012
        %v3026 = vsel %vm527, %v3012, %v3014
        %3039 = vst [vmem:[#allocation3 + $0xc0] sm:$0xff] %v3015
        %3040 = vst [vmem:[#allocation3 + $0xc8] sm:$0xff] %v3016
        %3041 = vst.msk [vmem:[#allocation3 + $0xd0] sm:$0xff] %vm386, %v3017
        %3042 = vst [vmem:[#allocation3 + $0xd8] sm:$0xff] %v3018
        %3043 = vst [vmem:[#allocation3 + $0xe0] sm:$0xff] %v3019
        %3044 = vst.msk [vmem:[#allocation3 + $0xe8] sm:$0xff] %vm386, %v3020
        %3045 = vst [vmem:[#allocation3 + $0xf0] sm:$0xff] %v3021
        %3046 = vst [vmem:[#allocation3 + $0xf8] sm:$0xff] %v3022
        %3047 = vst.msk [vmem:[#allocation3 + $0x100] sm:$0xff] %vm386, %v3023
        %3048 = vst [vmem:[#allocation3 + $0x108] sm:$0xff] %v3024
        %3049 = vst [vmem:[#allocation3 + $0x110] sm:$0xff] %v3025
        %3050 = vst.msk [vmem:[#allocation3 + $0x118] sm:$0xff] %vm386, %v3026
        %v3051 = vld [vmem:[#allocation5] sm:$0xff]
        %v3052 = vld [vmem:[#allocation5 + $0x8] sm:$0xff]
        %v3053 = vld [vmem:[#allocation5 + $0x10] sm:$0xff]
        %v3054 = vld [vmem:[#allocation5 + $0x18] sm:$0xff]
        %v3055 = vld [vmem:[#allocation5 + $0x28] sm:$0xff]
        %v3056 = vld [vmem:[#allocation5 + $0x30] sm:$0xff]
        %v3057 = vld [vmem:[#allocation5 + $0x38] sm:$0xff]
        %v3058 = vld [vmem:[#allocation5 + $0x40] sm:$0xff]
        %v3059 = vld [vmem:[#allocation5 + $0x50] sm:$0xff]
        %v3060 = vld [vmem:[#allocation5 + $0x58] sm:$0xff]
        %v3061 = vld [vmem:[#allocation5 + $0x60] sm:$0xff]
        %v3062 = vld [vmem:[#allocation5 + $0x68] sm:$0xff]
        %v3063 = vld [vmem:[#allocation5 + $0x78] sm:$0xff]
        %v3064 = vld [vmem:[#allocation5 + $0x80] sm:$0xff]
        %v3065 = vld [vmem:[#allocation5 + $0x88] sm:$0xff]
        %v3066 = vld [vmem:[#allocation5 + $0x90] sm:$0xff]
        %3083 = vrot.lane.b32.xlu0 %v3051, 1
        %v3084 = vpop.permute.xlu0 %3083
        %3085 = vrot.lane.b32.xlu0 %v3052, 1
        %v3086 = vpop.permute.xlu0 %3085
        %3087 = vrot.lane.b32.xlu0 %v3053, 1
        %v3088 = vpop.permute.xlu0 %3087
        %3089 = vrot.lane.b32.xlu0 %v3054, 1
        %v3090 = vpop.permute.xlu0 %3089
        %3091 = vrot.lane.b32.xlu0 %v3055, 1
        %v3092 = vpop.permute.xlu0 %3091
        %3093 = vrot.lane.b32.xlu0 %v3056, 1
        %v3094 = vpop.permute.xlu0 %3093
        %3095 = vrot.lane.b32.xlu0 %v3057, 1
        %v3096 = vpop.permute.xlu0 %3095
        %3097 = vrot.lane.b32.xlu0 %v3058, 1
        %v3098 = vpop.permute.xlu0 %3097
        %3099 = vrot.lane.b32.xlu0 %v3059, 1
        %v3100 = vpop.permute.xlu0 %3099
        %3101 = vrot.lane.b32.xlu0 %v3060, 1
        %v3102 = vpop.permute.xlu0 %3101
        %3103 = vrot.lane.b32.xlu0 %v3061, 1
        %v3104 = vpop.permute.xlu0 %3103
        %3105 = vrot.lane.b32.xlu0 %v3062, 1
        %v3106 = vpop.permute.xlu0 %3105
        %3107 = vrot.lane.b32.xlu0 %v3063, 1
        %v3108 = vpop.permute.xlu0 %3107
        %3109 = vrot.lane.b32.xlu0 %v3064, 1
        %v3110 = vpop.permute.xlu0 %3109
        %3111 = vrot.lane.b32.xlu0 %v3065, 1
        %v3112 = vpop.permute.xlu0 %3111
        %3113 = vrot.lane.b32.xlu0 %v3066, 1
        %v3114 = vpop.permute.xlu0 %3113
        %v3115 = vsel %vm565, %v3084, %v3086
        %v3116 = vsel %vm565, %v3086, %v3088
        %v3117 = vsel %vm565, %v3088, %v3090
        %v3118 = vsel %vm565, %v3092, %v3094
        %v3119 = vsel %vm565, %v3094, %v3096
        %v3120 = vsel %vm565, %v3096, %v3098
        %v3121 = vsel %vm565, %v3100, %v3102
        %v3122 = vsel %vm565, %v3102, %v3104
        %v3123 = vsel %vm565, %v3104, %v3106
        %v3124 = vsel %vm565, %v3108, %v3110
        %v3125 = vsel %vm565, %v3110, %v3112
        %v3126 = vsel %vm565, %v3112, %v3114
        %3139 = vst [vmem:[#allocation3 + $0x120] sm:$0xff] %v3115
        %3140 = vst [vmem:[#allocation3 + $0x128] sm:$0xff] %v3116
        %3141 = vst.msk [vmem:[#allocation3 + $0x130] sm:$0xff] %vm386, %v3117
        %3142 = vst [vmem:[#allocation3 + $0x138] sm:$0xff] %v3118
        %3143 = vst [vmem:[#allocation3 + $0x140] sm:$0xff] %v3119
        %3144 = vst.msk [vmem:[#allocation3 + $0x148] sm:$0xff] %vm386, %v3120
        %3145 = vst [vmem:[#allocation3 + $0x150] sm:$0xff] %v3121
        %3146 = vst [vmem:[#allocation3 + $0x158] sm:$0xff] %v3122
        %3147 = vst.msk [vmem:[#allocation3 + $0x160] sm:$0xff] %vm386, %v3123
        %3148 = vst [vmem:[#allocation3 + $0x168] sm:$0xff] %v3124
        %3149 = vst [vmem:[#allocation3 + $0x170] sm:$0xff] %v3125
        %3150 = vst.msk [vmem:[#allocation3 + $0x178] sm:$0xff] %vm386, %v3126
        %v3151 = vld [vmem:[#allocation5 + $0x8] sm:$0xff]
        %v3152 = vld [vmem:[#allocation5 + $0x10] sm:$0xff]
        %v3153 = vld [vmem:[#allocation5 + $0x18] sm:$0xff]
        %v3154 = vld [vmem:[#allocation5 + $0x30] sm:$0xff]
        %v3155 = vld [vmem:[#allocation5 + $0x38] sm:$0xff]
        %v3156 = vld [vmem:[#allocation5 + $0x40] sm:$0xff]
        %v3157 = vld [vmem:[#allocation5 + $0x58] sm:$0xff]
        %v3158 = vld [vmem:[#allocation5 + $0x60] sm:$0xff]
        %v3159 = vld [vmem:[#allocation5 + $0x68] sm:$0xff]
        %v3160 = vld [vmem:[#allocation5 + $0x80] sm:$0xff]
        %v3161 = vld [vmem:[#allocation5 + $0x88] sm:$0xff]
        %v3162 = vld [vmem:[#allocation5 + $0x90] sm:$0xff]
        %3163 = vst [vmem:[#allocation3 + $0x180] sm:$0xff] %v3151
        %3164 = vst [vmem:[#allocation3 + $0x188] sm:$0xff] %v3152
        %3165 = vst.msk [vmem:[#allocation3 + $0x190] sm:$0xff] %vm386, %v3153
        %3166 = vst [vmem:[#allocation3 + $0x198] sm:$0xff] %v3154
        %3167 = vst [vmem:[#allocation3 + $0x1a0] sm:$0xff] %v3155
        %3168 = vst.msk [vmem:[#allocation3 + $0x1a8] sm:$0xff] %vm386, %v3156
        %3169 = vst [vmem:[#allocation3 + $0x1b0] sm:$0xff] %v3157
        %3170 = vst [vmem:[#allocation3 + $0x1b8] sm:$0xff] %v3158
        %3171 = vst.msk [vmem:[#allocation3 + $0x1c0] sm:$0xff] %vm386, %v3159
        %3172 = vst [vmem:[#allocation3 + $0x1c8] sm:$0xff] %v3160
        %3173 = vst [vmem:[#allocation3 + $0x1d0] sm:$0xff] %v3161
        %3174 = vst.msk [vmem:[#allocation3 + $0x1d8] sm:$0xff] %vm386, %v3162
        %v3175 = vld [vmem:[#allocation5 + $0x8] sm:$0xff]
        %v3176 = vld [vmem:[#allocation5 + $0x10] sm:$0xff]
        %v3177 = vld [vmem:[#allocation5 + $0x18] sm:$0xff]
        %v3178 = vld [vmem:[#allocation5 + $0x30] sm:$0xff]
        %v3179 = vld [vmem:[#allocation5 + $0x38] sm:$0xff]
        %v3180 = vld [vmem:[#allocation5 + $0x40] sm:$0xff]
        %v3181 = vld [vmem:[#allocation5 + $0x58] sm:$0xff]
        %v3182 = vld [vmem:[#allocation5 + $0x60] sm:$0xff]
        %v3183 = vld [vmem:[#allocation5 + $0x68] sm:$0xff]
        %v3184 = vld [vmem:[#allocation5 + $0x80] sm:$0xff]
        %v3185 = vld [vmem:[#allocation5 + $0x88] sm:$0xff]
        %v3186 = vld [vmem:[#allocation5 + $0x90] sm:$0xff]
        %3199 = vrot.lane.b32.xlu0 %v3175, 127
        %v3200 = vpop.permute.xlu0 %3199
        %3201 = vrot.lane.b32.xlu0 %v3176, 127
        %v3202 = vpop.permute.xlu0 %3201
        %3203 = vrot.lane.b32.xlu0 %v3177, 127
        %v3204 = vpop.permute.xlu0 %3203
        %3205 = vrot.lane.b32.xlu0 %v3178, 127
        %v3206 = vpop.permute.xlu0 %3205
        %3207 = vrot.lane.b32.xlu0 %v3179, 127
        %v3208 = vpop.permute.xlu0 %3207
        %3209 = vrot.lane.b32.xlu0 %v3180, 127
        %v3210 = vpop.permute.xlu0 %3209
        %3211 = vrot.lane.b32.xlu0 %v3181, 127
        %v3212 = vpop.permute.xlu0 %3211
        %3213 = vrot.lane.b32.xlu0 %v3182, 127
        %v3214 = vpop.permute.xlu0 %3213
        %3215 = vrot.lane.b32.xlu0 %v3183, 127
        %v3216 = vpop.permute.xlu0 %3215
        %3217 = vrot.lane.b32.xlu0 %v3184, 127
        %v3218 = vpop.permute.xlu0 %3217
        %3219 = vrot.lane.b32.xlu0 %v3185, 127
        %v3220 = vpop.permute.xlu0 %3219
        %3221 = vrot.lane.b32.xlu0 %v3186, 127
        %v3222 = vpop.permute.xlu0 %3221
        %v3223 = vsel %vm621, %v3200, %v3202
        %v3224 = vsel %vm621, %v3202, %v3204
        %v3225 = vsel %vm621, %v3206, %v3208
        %v3226 = vsel %vm621, %v3208, %v3210
        %v3227 = vsel %vm621, %v3212, %v3214
        %v3228 = vsel %vm621, %v3214, %v3216
        %v3229 = vsel %vm621, %v3218, %v3220
        %v3230 = vsel %vm621, %v3220, %v3222
        %3243 = vst [vmem:[#allocation3 + $0x1e0] sm:$0xff] %v3223
        %3244 = vst [vmem:[#allocation3 + $0x1e8] sm:$0xff] %v3224
        %3245 = vst.msk [vmem:[#allocation3 + $0x1f0] sm:$0xff] %vm386, %v3204
        %3246 = vst [vmem:[#allocation3 + $0x1f8] sm:$0xff] %v3225
        %3247 = vst [vmem:[#allocation3 + $0x200] sm:$0xff] %v3226
        %3248 = vst.msk [vmem:[#allocation3 + $0x208] sm:$0xff] %vm386, %v3210
        %3249 = vst [vmem:[#allocation3 + $0x210] sm:$0xff] %v3227
        %3250 = vst [vmem:[#allocation3 + $0x218] sm:$0xff] %v3228
        %3251 = vst.msk [vmem:[#allocation3 + $0x220] sm:$0xff] %vm386, %v3216
        %3252 = vst [vmem:[#allocation3 + $0x228] sm:$0xff] %v3229
        %3253 = vst [vmem:[#allocation3 + $0x230] sm:$0xff] %v3230
        %3254 = vst.msk [vmem:[#allocation3 + $0x238] sm:$0xff] %vm386, %v3222
        %v3255 = vld [vmem:[#allocation5 + $0x8] sm:$0xff]
        %v3256 = vld [vmem:[#allocation5 + $0x10] sm:$0xff]
        %v3257 = vld [vmem:[#allocation5 + $0x18] sm:$0xff]
        %v3258 = vld [vmem:[#allocation5 + $0x30] sm:$0xff]
        %v3259 = vld [vmem:[#allocation5 + $0x38] sm:$0xff]
        %v3260 = vld [vmem:[#allocation5 + $0x40] sm:$0xff]
        %v3261 = vld [vmem:[#allocation5 + $0x58] sm:$0xff]
        %v3262 = vld [vmem:[#allocation5 + $0x60] sm:$0xff]
        %v3263 = vld [vmem:[#allocation5 + $0x68] sm:$0xff]
        %v3264 = vld [vmem:[#allocation5 + $0x80] sm:$0xff]
        %v3265 = vld [vmem:[#allocation5 + $0x88] sm:$0xff]
        %v3266 = vld [vmem:[#allocation5 + $0x90] sm:$0xff]
        %3279 = vrot.lane.b32.xlu0 %v3255, 111
        %v3280 = vpop.permute.xlu0 %3279
        %3281 = vrot.lane.b32.xlu0 %v3256, 111
        %v3282 = vpop.permute.xlu0 %3281
        %3283 = vrot.lane.b32.xlu0 %v3257, 111
        %v3284 = vpop.permute.xlu0 %3283
        %3285 = vrot.lane.b32.xlu0 %v3258, 111
        %v3286 = vpop.permute.xlu0 %3285
        %3287 = vrot.lane.b32.xlu0 %v3259, 111
        %v3288 = vpop.permute.xlu0 %3287
        %3289 = vrot.lane.b32.xlu0 %v3260, 111
        %v3290 = vpop.permute.xlu0 %3289
        %3291 = vrot.lane.b32.xlu0 %v3261, 111
        %v3292 = vpop.permute.xlu0 %3291
        %3293 = vrot.lane.b32.xlu0 %v3262, 111
        %v3294 = vpop.permute.xlu0 %3293
        %3295 = vrot.lane.b32.xlu0 %v3263, 111
        %v3296 = vpop.permute.xlu0 %3295
        %3297 = vrot.lane.b32.xlu0 %v3264, 111
        %v3298 = vpop.permute.xlu0 %3297
        %3299 = vrot.lane.b32.xlu0 %v3265, 111
        %v3300 = vpop.permute.xlu0 %3299
        %3301 = vrot.lane.b32.xlu0 %v3266, 111
        %v3302 = vpop.permute.xlu0 %3301
        %v3303 = vsel %vm653, %v3280, %v3282
        %v3304 = vsel %vm653, %v3282, %v3284
        %v3305 = vsel %vm653, %v3286, %v3288
        %v3306 = vsel %vm653, %v3288, %v3290
        %v3307 = vsel %vm653, %v3292, %v3294
        %v3308 = vsel %vm653, %v3294, %v3296
        %v3309 = vsel %vm653, %v3298, %v3300
        %v3310 = vsel %vm653, %v3300, %v3302
        %3323 = vst [vmem:[#allocation3 + $0x240] sm:$0xff] %v3303
        %3324 = vst [vmem:[#allocation3 + $0x248] sm:$0xff] %v3304
        %3325 = vst.msk [vmem:[#allocation3 + $0x250] sm:$0xff] %vm386, %v3284
        %3326 = vst [vmem:[#allocation3 + $0x258] sm:$0xff] %v3305
        %3327 = vst [vmem:[#allocation3 + $0x260] sm:$0xff] %v3306
        %3328 = vst.msk [vmem:[#allocation3 + $0x268] sm:$0xff] %vm386, %v3290
        %3329 = vst [vmem:[#allocation3 + $0x270] sm:$0xff] %v3307
        %3330 = vst [vmem:[#allocation3 + $0x278] sm:$0xff] %v3308
        %3331 = vst.msk [vmem:[#allocation3 + $0x280] sm:$0xff] %vm386, %v3296
        %3332 = vst [vmem:[#allocation3 + $0x288] sm:$0xff] %v3309
        %3333 = vst [vmem:[#allocation3 + $0x290] sm:$0xff] %v3310
        %3334 = vst.msk [vmem:[#allocation3 + $0x298] sm:$0xff] %vm386, %v3302
        %v3335 = vld [vmem:[#allocation5 + $0x8] sm:$0xff]
        %v3336 = vld [vmem:[#allocation5 + $0x10] sm:$0xff]
        %v3337 = vld [vmem:[#allocation5 + $0x18] sm:$0xff]
        %v3338 = vld [vmem:[#allocation5 + $0x30] sm:$0xff]
        %v3339 = vld [vmem:[#allocation5 + $0x38] sm:$0xff]
        %v3340 = vld [vmem:[#allocation5 + $0x40] sm:$0xff]
        %v3341 = vld [vmem:[#allocation5 + $0x58] sm:$0xff]
        %v3342 = vld [vmem:[#allocation5 + $0x60] sm:$0xff]
        %v3343 = vld [vmem:[#allocation5 + $0x68] sm:$0xff]
        %v3344 = vld [vmem:[#allocation5 + $0x80] sm:$0xff]
        %v3345 = vld [vmem:[#allocation5 + $0x88] sm:$0xff]
        %v3346 = vld [vmem:[#allocation5 + $0x90] sm:$0xff]
        %3359 = vrot.lane.b32.xlu0 %v3335, 110
        %v3360 = vpop.permute.xlu0 %3359
        %3361 = vrot.lane.b32.xlu0 %v3336, 110
        %v3362 = vpop.permute.xlu0 %3361
        %3363 = vrot.lane.b32.xlu0 %v3337, 110
        %v3364 = vpop.permute.xlu0 %3363
        %3365 = vrot.lane.b32.xlu0 %v3338, 110
        %v3366 = vpop.permute.xlu0 %3365
        %3367 = vrot.lane.b32.xlu0 %v3339, 110
        %v3368 = vpop.permute.xlu0 %3367
        %3369 = vrot.lane.b32.xlu0 %v3340, 110
        %v3370 = vpop.permute.xlu0 %3369
        %3371 = vrot.lane.b32.xlu0 %v3341, 110
        %v3372 = vpop.permute.xlu0 %3371
        %3373 = vrot.lane.b32.xlu0 %v3342, 110
        %v3374 = vpop.permute.xlu0 %3373
        %3375 = vrot.lane.b32.xlu0 %v3343, 110
        %v3376 = vpop.permute.xlu0 %3375
        %3377 = vrot.lane.b32.xlu0 %v3344, 110
        %v3378 = vpop.permute.xlu0 %3377
        %3379 = vrot.lane.b32.xlu0 %v3345, 110
        %v3380 = vpop.permute.xlu0 %3379
        %3381 = vrot.lane.b32.xlu0 %v3346, 110
        %v3382 = vpop.permute.xlu0 %3381
        %v3383 = vsel %vm685, %v3360, %v3362
        %v3384 = vsel %vm685, %v3362, %v3364
        %v3385 = vsel %vm685, %v3366, %v3368
        %v3386 = vsel %vm685, %v3368, %v3370
        %v3387 = vsel %vm685, %v3372, %v3374
        %v3388 = vsel %vm685, %v3374, %v3376
        %v3389 = vsel %vm685, %v3378, %v3380
        %v3390 = vsel %vm685, %v3380, %v3382
        %3403 = vst [vmem:[#allocation3 + $0x2a0] sm:$0xff] %v3383
        %3404 = vst [vmem:[#allocation3 + $0x2a8] sm:$0xff] %v3384
        %3405 = vst.msk [vmem:[#allocation3 + $0x2b0] sm:$0xff] %vm386, %v3364
        %3406 = vst [vmem:[#allocation3 + $0x2b8] sm:$0xff] %v3385
        %3407 = vst [vmem:[#allocation3 + $0x2c0] sm:$0xff] %v3386
        %3408 = vst.msk [vmem:[#allocation3 + $0x2c8] sm:$0xff] %vm386, %v3370
        %3409 = vst [vmem:[#allocation3 + $0x2d0] sm:$0xff] %v3387
        %3410 = vst [vmem:[#allocation3 + $0x2d8] sm:$0xff] %v3388
        %3411 = vst.msk [vmem:[#allocation3 + $0x2e0] sm:$0xff] %vm386, %v3376
        %3412 = vst [vmem:[#allocation3 + $0x2e8] sm:$0xff] %v3389
        %3413 = vst [vmem:[#allocation3 + $0x2f0] sm:$0xff] %v3390
        %3414 = vst.msk [vmem:[#allocation3 + $0x2f8] sm:$0xff] %vm386, %v3382
        %v3415 = vld [vmem:[#allocation5 + $0x8] sm:$0xff]
        %v3416 = vld [vmem:[#allocation5 + $0x10] sm:$0xff]
        %v3417 = vld [vmem:[#allocation5 + $0x18] sm:$0xff]
        %v3418 = vld [vmem:[#allocation5 + $0x30] sm:$0xff]
        %v3419 = vld [vmem:[#allocation5 + $0x38] sm:$0xff]
        %v3420 = vld [vmem:[#allocation5 + $0x40] sm:$0xff]
        %v3421 = vld [vmem:[#allocation5 + $0x58] sm:$0xff]
        %v3422 = vld [vmem:[#allocation5 + $0x60] sm:$0xff]
        %v3423 = vld [vmem:[#allocation5 + $0x68] sm:$0xff]
        %v3424 = vld [vmem:[#allocation5 + $0x80] sm:$0xff]
        %v3425 = vld [vmem:[#allocation5 + $0x88] sm:$0xff]
        %v3426 = vld [vmem:[#allocation5 + $0x90] sm:$0xff]
        %3439 = vrot.lane.b32.xlu0 %v3415, 109
        %v3440 = vpop.permute.xlu0 %3439
        %3441 = vrot.lane.b32.xlu0 %v3416, 109
        %v3442 = vpop.permute.xlu0 %3441
        %3443 = vrot.lane.b32.xlu0 %v3417, 109
        %v3444 = vpop.permute.xlu0 %3443
        %3445 = vrot.lane.b32.xlu0 %v3418, 109
        %v3446 = vpop.permute.xlu0 %3445
        %3447 = vrot.lane.b32.xlu0 %v3419, 109
        %v3448 = vpop.permute.xlu0 %3447
        %3449 = vrot.lane.b32.xlu0 %v3420, 109
        %v3450 = vpop.permute.xlu0 %3449
        %3451 = vrot.lane.b32.xlu0 %v3421, 109
        %v3452 = vpop.permute.xlu0 %3451
        %3453 = vrot.lane.b32.xlu0 %v3422, 109
        %v3454 = vpop.permute.xlu0 %3453
        %3455 = vrot.lane.b32.xlu0 %v3423, 109
        %v3456 = vpop.permute.xlu0 %3455
        %3457 = vrot.lane.b32.xlu0 %v3424, 109
        %v3458 = vpop.permute.xlu0 %3457
        %3459 = vrot.lane.b32.xlu0 %v3425, 109
        %v3460 = vpop.permute.xlu0 %3459
        %3461 = vrot.lane.b32.xlu0 %v3426, 109
        %v3462 = vpop.permute.xlu0 %3461
        %v3463 = vsel %vm717, %v3440, %v3442
        %v3464 = vsel %vm717, %v3442, %v3444
        %v3465 = vsel %vm717, %v3446, %v3448
        %v3466 = vsel %vm717, %v3448, %v3450
        %v3467 = vsel %vm717, %v3452, %v3454
        %v3468 = vsel %vm717, %v3454, %v3456
        %v3469 = vsel %vm717, %v3458, %v3460
        %v3470 = vsel %vm717, %v3460, %v3462
        %3483 = vst [vmem:[#allocation3 + $0x300] sm:$0xff] %v3463
        %3484 = vst [vmem:[#allocation3 + $0x308] sm:$0xff] %v3464
        %3485 = vst.msk [vmem:[#allocation3 + $0x310] sm:$0xff] %vm386, %v3444
        %3486 = vst [vmem:[#allocation3 + $0x318] sm:$0xff] %v3465
        %3487 = vst [vmem:[#allocation3 + $0x320] sm:$0xff] %v3466
        %3488 = vst.msk [vmem:[#allocation3 + $0x328] sm:$0xff] %vm386, %v3450
        %3489 = vst [vmem:[#allocation3 + $0x330] sm:$0xff] %v3467
        %3490 = vst [vmem:[#allocation3 + $0x338] sm:$0xff] %v3468
        %3491 = vst.msk [vmem:[#allocation3 + $0x340] sm:$0xff] %vm386, %v3456
        %3492 = vst [vmem:[#allocation3 + $0x348] sm:$0xff] %v3469
        %3493 = vst [vmem:[#allocation3 + $0x350] sm:$0xff] %v3470
        %3494 = vst.msk [vmem:[#allocation3 + $0x358] sm:$0xff] %vm386, %v3462
        %s3495 = scalar_lea.vmem [#allocation12], 160
        %v3496 = vld [vmem:[%s3495] sm:$0xff]
        %v3497 = vld [vmem:[%s3495 + $0x8] sm:$0xff]
        %v3498 = vld [vmem:[%s3495 + $0x10] sm:$0xf]
        %v3499 = vld [vmem:[%s3495 + $0x14] sm:$0xff]
        %v3500 = vld [vmem:[%s3495 + $0x1c] sm:$0xff]
        %v3501 = vld [vmem:[%s3495 + $0x24] sm:$0xf]
        %v3502 = vld [vmem:[%s3495 + $0x28] sm:$0xff]
        %v3503 = vld [vmem:[%s3495 + $0x30] sm:$0xff]
        %v3504 = vld [vmem:[%s3495 + $0x38] sm:$0xf]
        %v3505 = vld [vmem:[%s3495 + $0x3c] sm:$0xff]
        %v3506 = vld [vmem:[%s3495 + $0x44] sm:$0xff]
        %v3507 = vld [vmem:[%s3495 + $0x4c] sm:$0xf]
        %v3508 = vld [vmem:[%s3495 + $0x50] sm:$0xff]
        %v3509 = vld [vmem:[%s3495 + $0x58] sm:$0xff]
        %v3510 = vld [vmem:[%s3495 + $0x60] sm:$0xf]
        %v3511 = vld [vmem:[%s3495 + $0x64] sm:$0xff]
        %v3512 = vld [vmem:[%s3495 + $0x6c] sm:$0xff]
        %v3513 = vld [vmem:[%s3495 + $0x74] sm:$0xf]
        %v3514 = vld [vmem:[%s3495 + $0x78] sm:$0xff]
        %v3515 = vld [vmem:[%s3495 + $0x80] sm:$0xff]
        %v3516 = vld [vmem:[%s3495 + $0x88] sm:$0xf]
        %v3517 = vld [vmem:[%s3495 + $0x8c] sm:$0xff]
        %v3518 = vld [vmem:[%s3495 + $0x94] sm:$0xff]
        %v3519 = vld [vmem:[%s3495 + $0x9c] sm:$0xf]
        %v3520 = vld [vmem:[#allocation3] sm:$0xff]
        %v3521 = vld [vmem:[#allocation3 + $0x8] sm:$0xff]
        %v3522 = vld [vmem:[#allocation3 + $0x10] sm:$0xff]
        %v3523 = vld [vmem:[#allocation3 + $0x18] sm:$0xff]
        %v3524 = vld [vmem:[#allocation3 + $0x20] sm:$0xff]
        %v3525 = vld [vmem:[#allocation3 + $0x28] sm:$0xff]
        %v3526 = vld [vmem:[#allocation3 + $0x30] sm:$0xff]
        %v3527 = vld [vmem:[#allocation3 + $0x38] sm:$0xff]
        %v3528 = vld [vmem:[#allocation3 + $0x40] sm:$0xff]
        %v3529 = vld [vmem:[#allocation3 + $0x48] sm:$0xff]
        %v3530 = vld [vmem:[#allocation3 + $0x50] sm:$0xff]
        %v3531 = vld [vmem:[#allocation3 + $0x58] sm:$0xff]
        %v3532 = vld [vmem:[#allocation3 + $0x60] sm:$0xff]
        %v3533 = vld [vmem:[#allocation3 + $0x68] sm:$0xff]
        %v3534 = vld [vmem:[#allocation3 + $0x70] sm:$0xff]
        %v3535 = vld [vmem:[#allocation3 + $0x78] sm:$0xff]
        %v3536 = vld [vmem:[#allocation3 + $0x80] sm:$0xff]
        %v3537 = vld [vmem:[#allocation3 + $0x88] sm:$0xff]
        %v3538 = vld [vmem:[#allocation3 + $0x90] sm:$0xff]
        %v3539 = vld [vmem:[#allocation3 + $0x98] sm:$0xff]
        %v3540 = vld [vmem:[#allocation3 + $0xa0] sm:$0xff]
        %v3541 = vld [vmem:[#allocation3 + $0xa8] sm:$0xff]
        %v3542 = vld [vmem:[#allocation3 + $0xb0] sm:$0xff]
        %v3543 = vld [vmem:[#allocation3 + $0xb8] sm:$0xff]
        %v3544 = vld [vmem:[#allocation3 + $0xc0] sm:$0xff]
        %v3545 = vld [vmem:[#allocation3 + $0xc8] sm:$0xff]
        %v3546 = vld [vmem:[#allocation3 + $0xd0] sm:$0xff]
        %v3547 = vld [vmem:[#allocation3 + $0xd8] sm:$0xff]
        %v3548 = vld [vmem:[#allocation3 + $0xe0] sm:$0xff]
        %v3549 = vld [vmem:[#allocation3 + $0xe8] sm:$0xff]
        %v3550 = vld [vmem:[#allocation3 + $0xf0] sm:$0xff]
        %v3551 = vld [vmem:[#allocation3 + $0xf8] sm:$0xff]
        %v3552 = vld [vmem:[#allocation3 + $0x100] sm:$0xff]
        %v3553 = vld [vmem:[#allocation3 + $0x108] sm:$0xff]
        %v3554 = vld [vmem:[#allocation3 + $0x110] sm:$0xff]
        %v3555 = vld [vmem:[#allocation3 + $0x118] sm:$0xff]
        %v3556 = vld [vmem:[#allocation3 + $0x120] sm:$0xff]
        %v3557 = vld [vmem:[#allocation3 + $0x128] sm:$0xff]
        %v3558 = vld [vmem:[#allocation3 + $0x130] sm:$0xff]
        %v3559 = vld [vmem:[#allocation3 + $0x138] sm:$0xff]
        %v3560 = vld [vmem:[#allocation3 + $0x140] sm:$0xff]
        %v3561 = vld [vmem:[#allocation3 + $0x148] sm:$0xff]
        %v3562 = vld [vmem:[#allocation3 + $0x150] sm:$0xff]
        %v3563 = vld [vmem:[#allocation3 + $0x158] sm:$0xff]
        %v3564 = vld [vmem:[#allocation3 + $0x160] sm:$0xff]
        %v3565 = vld [vmem:[#allocation3 + $0x168] sm:$0xff]
        %v3566 = vld [vmem:[#allocation3 + $0x170] sm:$0xff]
        %v3567 = vld [vmem:[#allocation3 + $0x178] sm:$0xff]
        %v3568 = vld [vmem:[#allocation3 + $0x180] sm:$0xff]
        %v3569 = vld [vmem:[#allocation3 + $0x188] sm:$0xff]
        %v3570 = vld [vmem:[#allocation3 + $0x190] sm:$0xff]
        %v3571 = vld [vmem:[#allocation3 + $0x198] sm:$0xff]
        %v3572 = vld [vmem:[#allocation3 + $0x1a0] sm:$0xff]
        %v3573 = vld [vmem:[#allocation3 + $0x1a8] sm:$0xff]
        %v3574 = vld [vmem:[#allocation3 + $0x1b0] sm:$0xff]
        %v3575 = vld [vmem:[#allocation3 + $0x1b8] sm:$0xff]
        %v3576 = vld [vmem:[#allocation3 + $0x1c0] sm:$0xff]
        %v3577 = vld [vmem:[#allocation3 + $0x1c8] sm:$0xff]
        %v3578 = vld [vmem:[#allocation3 + $0x1d0] sm:$0xff]
        %v3579 = vld [vmem:[#allocation3 + $0x1d8] sm:$0xff]
        %v3580 = vld [vmem:[#allocation3 + $0x1e0] sm:$0xff]
        %v3581 = vld [vmem:[#allocation3 + $0x1e8] sm:$0xff]
        %v3582 = vld [vmem:[#allocation3 + $0x1f0] sm:$0xff]
        %v3583 = vld [vmem:[#allocation3 + $0x1f8] sm:$0xff]
        %v3584 = vld [vmem:[#allocation3 + $0x200] sm:$0xff]
        %v3585 = vld [vmem:[#allocation3 + $0x208] sm:$0xff]
        %v3586 = vld [vmem:[#allocation3 + $0x210] sm:$0xff]
        %v3587 = vld [vmem:[#allocation3 + $0x218] sm:$0xff]
        %v3588 = vld [vmem:[#allocation3 + $0x220] sm:$0xff]
        %v3589 = vld [vmem:[#allocation3 + $0x228] sm:$0xff]
        %v3590 = vld [vmem:[#allocation3 + $0x230] sm:$0xff]
        %v3591 = vld [vmem:[#allocation3 + $0x238] sm:$0xff]
        %v3592 = vld [vmem:[#allocation3 + $0x240] sm:$0xff]
        %v3593 = vld [vmem:[#allocation3 + $0x248] sm:$0xff]
        %v3594 = vld [vmem:[#allocation3 + $0x250] sm:$0xff]
        %v3595 = vld [vmem:[#allocation3 + $0x258] sm:$0xff]
        %v3596 = vld [vmem:[#allocation3 + $0x260] sm:$0xff]
        %v3597 = vld [vmem:[#allocation3 + $0x268] sm:$0xff]
        %v3598 = vld [vmem:[#allocation3 + $0x270] sm:$0xff]
        %v3599 = vld [vmem:[#allocation3 + $0x278] sm:$0xff]
        %v3600 = vld [vmem:[#allocation3 + $0x280] sm:$0xff]
        %v3601 = vld [vmem:[#allocation3 + $0x288] sm:$0xff]
        %v3602 = vld [vmem:[#allocation3 + $0x290] sm:$0xff]
        %v3603 = vld [vmem:[#allocation3 + $0x298] sm:$0xff]
        %v3604 = vld [vmem:[#allocation3 + $0x2a0] sm:$0xff]
        %v3605 = vld [vmem:[#allocation3 + $0x2a8] sm:$0xff]
        %v3606 = vld [vmem:[#allocation3 + $0x2b0] sm:$0xff]
        %v3607 = vld [vmem:[#allocation3 + $0x2b8] sm:$0xff]
        %v3608 = vld [vmem:[#allocation3 + $0x2c0] sm:$0xff]
        %v3609 = vld [vmem:[#allocation3 + $0x2c8] sm:$0xff]
        %v3610 = vld [vmem:[#allocation3 + $0x2d0] sm:$0xff]
        %v3611 = vld [vmem:[#allocation3 + $0x2d8] sm:$0xff]
        %v3612 = vld [vmem:[#allocation3 + $0x2e0] sm:$0xff]
        %v3613 = vld [vmem:[#allocation3 + $0x2e8] sm:$0xff]
        %v3614 = vld [vmem:[#allocation3 + $0x2f0] sm:$0xff]
        %v3615 = vld [vmem:[#allocation3 + $0x2f8] sm:$0xff]
        %v3616 = vld [vmem:[#allocation3 + $0x300] sm:$0xff]
        %v3617 = vld [vmem:[#allocation3 + $0x308] sm:$0xff]
        %v3618 = vld [vmem:[#allocation3 + $0x310] sm:$0xff]
        %v3619 = vld [vmem:[#allocation3 + $0x318] sm:$0xff]
        %v3620 = vld [vmem:[#allocation3 + $0x320] sm:$0xff]
        %v3621 = vld [vmem:[#allocation3 + $0x328] sm:$0xff]
        %v3622 = vld [vmem:[#allocation3 + $0x330] sm:$0xff]
        %v3623 = vld [vmem:[#allocation3 + $0x338] sm:$0xff]
        %v3624 = vld [vmem:[#allocation3 + $0x340] sm:$0xff]
        %v3625 = vld [vmem:[#allocation3 + $0x348] sm:$0xff]
        %v3626 = vld [vmem:[#allocation3 + $0x350] sm:$0xff]
        %v3627 = vld [vmem:[#allocation3 + $0x358] sm:$0xff]
        %v3652 = vunpack.c.l.b16 %v3496
        %v3653 = vunpack.c.h.b16 %v3496
        %v3654 = vunpack.c.l.b16 %v3497
        %v3655 = vunpack.c.h.b16 %v3497
        %v3656 = vunpack.c.l.b16 %v3498
        %v3657 = vunpack.c.l.b16 %v3499
        %v3658 = vunpack.c.h.b16 %v3499
        %v3659 = vunpack.c.l.b16 %v3500
        %v3660 = vunpack.c.h.b16 %v3500
        %v3661 = vunpack.c.l.b16 %v3501
        %v3662 = vunpack.c.l.b16 %v3502
        %v3663 = vunpack.c.h.b16 %v3502
        %v3664 = vunpack.c.l.b16 %v3503
        %v3665 = vunpack.c.h.b16 %v3503
        %v3666 = vunpack.c.l.b16 %v3504
        %v3667 = vunpack.c.l.b16 %v3505
        %v3668 = vunpack.c.h.b16 %v3505
        %v3669 = vunpack.c.l.b16 %v3506
        %v3670 = vunpack.c.h.b16 %v3506
        %v3671 = vunpack.c.l.b16 %v3507
        %v3672 = vunpack.c.l.b16 %v3508
        %v3673 = vunpack.c.h.b16 %v3508
        %v3674 = vunpack.c.l.b16 %v3509
        %v3675 = vunpack.c.h.b16 %v3509
        %v3676 = vunpack.c.l.b16 %v3510
        %v3677 = vunpack.c.l.b16 %v3511
        %v3678 = vunpack.c.h.b16 %v3511
        %v3679 = vunpack.c.l.b16 %v3512
        %v3680 = vunpack.c.h.b16 %v3512
        %v3681 = vunpack.c.l.b16 %v3513
        %v3682 = vunpack.c.l.b16 %v3514
        %v3683 = vunpack.c.h.b16 %v3514
        %v3684 = vunpack.c.l.b16 %v3515
        %v3685 = vunpack.c.h.b16 %v3515
        %v3686 = vunpack.c.l.b16 %v3516
        %v3687 = vunpack.c.l.b16 %v3517
        %v3688 = vunpack.c.h.b16 %v3517
        %v3689 = vunpack.c.l.b16 %v3518
        %v3690 = vunpack.c.h.b16 %v3518
        %v3691 = vunpack.c.l.b16 %v3519
        %v3692 = vpack.c.b16 %v3657, %v3652
        %v3693 = vpack.c.b16 %v3658, %v3653
        %v3694 = vpack.c.b16 %v3659, %v3654
        %v3695 = vpack.c.b16 %v3660, %v3655
        %v3696 = vpack.c.b16 %v3661, %v3656
        %v3697 = vpack.c.b16 %v3667, %v3662
        %v3698 = vpack.c.b16 %v3668, %v3663
        %v3699 = vpack.c.b16 %v3669, %v3664
        %v3700 = vpack.c.b16 %v3670, %v3665
        %v3701 = vpack.c.b16 %v3671, %v3666
        %v3702 = vpack.c.b16 %v3677, %v3672
        %v3703 = vpack.c.b16 %v3678, %v3673
        %v3704 = vpack.c.b16 %v3679, %v3674
        %v3705 = vpack.c.b16 %v3680, %v3675
        %v3706 = vpack.c.b16 %v3681, %v3676
        %v3707 = vpack.c.b16 %v3687, %v3682
        %v3708 = vpack.c.b16 %v3688, %v3683
        %v3709 = vpack.c.b16 %v3689, %v3684
        %v3710 = vpack.c.b16 %v3690, %v3685
        %v3711 = vpack.c.b16 %v3691, %v3686
        %v3729 = vsel %vm2060, %v3696, 0
        %v3732 = vsel %vm2060, %v3701, 0
        %v3735 = vsel %vm2060, %v3706, 0
        %v3738 = vsel %vm2060, %v3711, 0
        %3740 = vmatprep.subr.bf16.mxu0 %v3521
        %3741 = vmatpush1.bf16.msra.mxu0 %v3520
        %3742 = vmatprep.subr.bf16.mxu0 %v3524
        %3743 = vmatpush1.bf16.msra.mxu0 %v3523
        %3744 = vmatprep.subr.bf16.mxu0 %v3527
        %3745 = vmatpush1.bf16.msra.mxu0 %v3526
        %3746 = vmatprep.subr.bf16.mxu0 %v3530
        %3747 = vmatpush1.bf16.msra.mxu0 %v3529
        %3748 = vmatprep.subr.bf16.mxu0 %v3533
        %3749 = vmatpush1.bf16.msra.mxu0 %v3532
        %3750 = vmatprep.subr.bf16.mxu0 %v3536
        %3751 = vmatpush1.bf16.msra.mxu0 %v3535
        %3752 = vmatprep.subr.bf16.mxu0 %v3539
        %3753 = vmatpush1.bf16.msra.mxu0 %v3538
        %3754 = vmatprep.subr.bf16.mxu0 %v3542
        %3755 = vmatpush1.bf16.msra.mxu0 %v3541
        %3756 = vmatprep.subr.bf16.mxu0 %v3545
        %3757 = vmatpush1.bf16.msra.mxu0 %v3544
        %3758 = vmatprep.subr.bf16.mxu0 %v3548
        %3759 = vmatpush1.bf16.msra.mxu0 %v3547
        %3760 = vmatprep.subr.bf16.mxu0 %v3551
        %3761 = vmatpush1.bf16.msra.mxu0 %v3550
        %3762 = vmatprep.subr.bf16.mxu0 %v3554
        %3763 = vmatpush1.bf16.msra.mxu0 %v3553
        %3764 = vmatprep.subr.bf16.mxu0 %v3557
        %3765 = vmatpush1.bf16.msra.mxu0 %v3556
        %3766 = vmatprep.subr.bf16.mxu0 %v3560
        %3767 = vmatpush1.bf16.msra.mxu0 %v3559
        %3768 = vmatprep.subr.bf16.mxu0 %v3563
        %3769 = vmatpush1.bf16.msra.mxu0 %v3562
        %3770 = vmatprep.subr.bf16.mxu0 %v3566
        %3771 = vmatpush1.bf16.msra.mxu0 %v3565
        %3772 = vmatprep.mubr.bf16.mxu0 %v3693
        %3773 = vmatmul.mubr.bf16.gmra.mrb[0].mxu0 %v3692
        %v3774 = vpop.f32.mrb[0].mxu0
        %v3775 = vadd.f32 0.0, %v3774
        %v3776 = vpop.f32.mrb[0].mxu0
        %v3777 = vadd.f32 0.0, %v3776
        %v3778 = vpop.f32.mrb[0].mxu0
        %v3779 = vadd.f32 0.0, %v3778
        %v3780 = vpop.f32.mrb[0].mxu0
        %v3781 = vadd.f32 0.0, %v3780
        %3782 = vmatprep.mubr.bf16.mxu0 %v3698
        %3783 = vmatmul.mubr.bf16.gmra.mrb[0].mxu0 %v3697
        %v3784 = vpop.f32.mrb[0].mxu0
        %v3785 = vadd.f32 0.0, %v3784
        %v3786 = vpop.f32.mrb[0].mxu0
        %v3787 = vadd.f32 0.0, %v3786
        %v3788 = vpop.f32.mrb[0].mxu0
        %v3789 = vadd.f32 0.0, %v3788
        %v3790 = vpop.f32.mrb[0].mxu0
        %v3791 = vadd.f32 0.0, %v3790
        %3792 = vmatprep.mubr.bf16.mxu0 %v3703
        %3793 = vmatmul.mubr.bf16.gmra.mrb[0].mxu0 %v3702
        %v3794 = vpop.f32.mrb[0].mxu0
        %v3795 = vadd.f32 0.0, %v3794
        %v3796 = vpop.f32.mrb[0].mxu0
        %v3797 = vadd.f32 0.0, %v3796
        %v3798 = vpop.f32.mrb[0].mxu0
        %v3799 = vadd.f32 0.0, %v3798
        %v3800 = vpop.f32.mrb[0].mxu0
        %v3801 = vadd.f32 0.0, %v3800
        %3802 = vmatprep.mubr.bf16.mxu0 %v3708
        %3803 = vmatmul.mubr.bf16.gmra.mrb[0].mxu0 %v3707
        %v3804 = vpop.f32.mrb[0].mxu0
        %v3805 = vadd.f32 0.0, %v3804
        %v3806 = vpop.f32.mrb[0].mxu0
        %v3807 = vadd.f32 0.0, %v3806
        %v3808 = vpop.f32.mrb[0].mxu0
        %v3809 = vadd.f32 0.0, %v3808
        %v3810 = vpop.f32.mrb[0].mxu0
        %v3811 = vadd.f32 0.0, %v3810
        %3812 = vdwg.mxu0
        %3813 = vmatprep.subr.bf16.mxu0 %v3569
        %3814 = vmatpush1.bf16.msra.mxu0 %v3568
        %3815 = vmatprep.subr.bf16.mxu0 %v3572
        %3816 = vmatpush1.bf16.msra.mxu0 %v3571
        %3817 = vmatprep.subr.bf16.mxu0 %v3575
        %3818 = vmatpush1.bf16.msra.mxu0 %v3574
        %3819 = vmatprep.subr.bf16.mxu0 %v3578
        %3820 = vmatpush1.bf16.msra.mxu0 %v3577
        %3821 = vmatprep.subr.bf16.mxu0 %v3581
        %3822 = vmatpush1.bf16.msra.mxu0 %v3580
        %3823 = vmatprep.subr.bf16.mxu0 %v3584
        %3824 = vmatpush1.bf16.msra.mxu0 %v3583
        %3825 = vmatprep.subr.bf16.mxu0 %v3587
        %3826 = vmatpush1.bf16.msra.mxu0 %v3586
        %3827 = vmatprep.subr.bf16.mxu0 %v3590
        %3828 = vmatpush1.bf16.msra.mxu0 %v3589
        %3829 = vmatprep.subr.bf16.mxu0 %v3593
        %3830 = vmatpush1.bf16.msra.mxu0 %v3592
        %3831 = vmatprep.subr.bf16.mxu0 %v3596
        %3832 = vmatpush1.bf16.msra.mxu0 %v3595
        %3833 = vmatprep.subr.bf16.mxu0 %v3599
        %3834 = vmatpush1.bf16.msra.mxu0 %v3598
        %3835 = vmatprep.subr.bf16.mxu0 %v3602
        %3836 = vmatpush1.bf16.msra.mxu0 %v3601
        %3837 = vmatprep.subr.bf16.mxu0 %v3605
        %3838 = vmatpush1.bf16.msra.mxu0 %v3604
        %3839 = vmatprep.subr.bf16.mxu0 %v3608
        %3840 = vmatpush1.bf16.msra.mxu0 %v3607
        %3841 = vmatprep.subr.bf16.mxu0 %v3611
        %3842 = vmatpush1.bf16.msra.mxu0 %v3610
        %3843 = vmatprep.subr.bf16.mxu0 %v3614
        %3844 = vmatpush1.bf16.msra.mxu0 %v3613
        %3845 = vmatprep.mubr.bf16.mxu0 %v3695
        %3846 = vmatmul.mubr.bf16.gmra.mrb[0].mxu0 %v3694
        %v3847 = vpop.f32.mrb[0].mxu0
        %v3848 = vadd.f32 %v3775, %v3847
        %v3849 = vpop.f32.mrb[0].mxu0
        %v3850 = vadd.f32 %v3777, %v3849
        %v3851 = vpop.f32.mrb[0].mxu0
        %v3852 = vadd.f32 %v3779, %v3851
        %v3853 = vpop.f32.mrb[0].mxu0
        %v3854 = vadd.f32 %v3781, %v3853
        %3855 = vmatprep.mubr.bf16.mxu0 %v3700
        %3856 = vmatmul.mubr.bf16.gmra.mrb[0].mxu0 %v3699
        %v3857 = vpop.f32.mrb[0].mxu0
        %v3858 = vadd.f32 %v3785, %v3857
        %v3859 = vpop.f32.mrb[0].mxu0
        %v3860 = vadd.f32 %v3787, %v3859
        %v3861 = vpop.f32.mrb[0].mxu0
        %v3862 = vadd.f32 %v3789, %v3861
        %v3863 = vpop.f32.mrb[0].mxu0
        %v3864 = vadd.f32 %v3791, %v3863
        %3865 = vmatprep.mubr.bf16.mxu0 %v3705
        %3866 = vmatmul.mubr.bf16.gmra.mrb[0].mxu0 %v3704
        %v3867 = vpop.f32.mrb[0].mxu0
        %v3868 = vadd.f32 %v3795, %v3867
        %v3869 = vpop.f32.mrb[0].mxu0
        %v3870 = vadd.f32 %v3797, %v3869
        %v3871 = vpop.f32.mrb[0].mxu0
        %v3872 = vadd.f32 %v3799, %v3871
        %v3873 = vpop.f32.mrb[0].mxu0
        %v3874 = vadd.f32 %v3801, %v3873
        %3875 = vmatprep.mubr.bf16.mxu0 %v3710
        %3876 = vmatmul.mubr.bf16.gmra.mrb[0].mxu0 %v3709
        %v3877 = vpop.f32.mrb[0].mxu0
        %v3878 = vadd.f32 %v3805, %v3877
        %v3879 = vpop.f32.mrb[0].mxu0
        %v3880 = vadd.f32 %v3807, %v3879
        %v3881 = vpop.f32.mrb[0].mxu0
        %v3882 = vadd.f32 %v3809, %v3881
        %v3883 = vpop.f32.mrb[0].mxu0
        %v3884 = vadd.f32 %v3811, %v3883
        %3885 = vdwg.mxu0
        %3886 = vmatprep.subr.bf16.mxu0 %v3617
        %3887 = vmatpush1.bf16.msra.mxu0 %v3616
        %3888 = vmatprep.subr.bf16.mxu0 %v3620
        %3889 = vmatpush1.bf16.msra.mxu0 %v3619
        %3890 = vmatprep.subr.bf16.mxu0 %v3623
        %3891 = vmatpush1.bf16.msra.mxu0 %v3622
        %3892 = vmatprep.subr.bf16.mxu0 %v3626
        %3893 = vmatpush1.bf16.msra.mxu0 %v3625
        %3894 = vmatprep.subr.bf16.mxu0 0
        %3895 = vmatpush1.bf16.msra.mxu0 0
        %3896 = vmatprep.subr.bf16.mxu0 0
        %3897 = vmatpush1.bf16.msra.mxu0 0
        %3898 = vmatprep.subr.bf16.mxu0 0
        %3899 = vmatpush1.bf16.msra.mxu0 0
        %3900 = vmatprep.subr.bf16.mxu0 0
        %3901 = vmatpush1.bf16.msra.mxu0 0
        %3902 = vmatprep.subr.bf16.mxu0 0
        %3903 = vmatpush1.bf16.msra.mxu0 0
        %3904 = vmatprep.subr.bf16.mxu0 0
        %3905 = vmatpush1.bf16.msra.mxu0 0
        %3906 = vmatprep.subr.bf16.mxu0 0
        %3907 = vmatpush1.bf16.msra.mxu0 0
        %3908 = vmatprep.subr.bf16.mxu0 0
        %3909 = vmatpush1.bf16.msra.mxu0 0
        %3910 = vmatprep.subr.bf16.mxu0 0
        %3911 = vmatpush1.bf16.msra.mxu0 0
        %3912 = vmatprep.subr.bf16.mxu0 0
        %3913 = vmatpush1.bf16.msra.mxu0 0
        %3914 = vmatprep.subr.bf16.mxu0 0
        %3915 = vmatpush1.bf16.msra.mxu0 0
        %3916 = vmatprep.subr.bf16.mxu0 0
        %3917 = vmatpush1.bf16.msra.mxu0 0
        %3918 = vmatprep.mubr.bf16.mxu0 0
        %3919 = vmatmul.mubr.bf16.gmra.mrb[0].mxu0 %v3729
        %v3920 = vpop.f32.mrb[0].mxu0
        %v3921 = vadd.f32 %v3848, %v3920
        %v3922 = vpop.f32.mrb[0].mxu0
        %v3923 = vadd.f32 %v3850, %v3922
        %v3924 = vpop.f32.mrb[0].mxu0
        %v3925 = vadd.f32 %v3852, %v3924
        %v3926 = vpop.f32.mrb[0].mxu0
        %v3927 = vadd.f32 %v3854, %v3926
        %3928 = vmatprep.mubr.bf16.mxu0 0
        %3929 = vmatmul.mubr.bf16.gmra.mrb[0].mxu0 %v3732
        %v3930 = vpop.f32.mrb[0].mxu0
        %v3931 = vadd.f32 %v3858, %v3930
        %v3932 = vpop.f32.mrb[0].mxu0
        %v3933 = vadd.f32 %v3860, %v3932
        %v3934 = vpop.f32.mrb[0].mxu0
        %v3935 = vadd.f32 %v3862, %v3934
        %v3936 = vpop.f32.mrb[0].mxu0
        %v3937 = vadd.f32 %v3864, %v3936
        %3938 = vmatprep.mubr.bf16.mxu0 0
        %3939 = vmatmul.mubr.bf16.gmra.mrb[0].mxu0 %v3735
        %v3940 = vpop.f32.mrb[0].mxu0
        %v3941 = vadd.f32 %v3868, %v3940
        %v3942 = vpop.f32.mrb[0].mxu0
        %v3943 = vadd.f32 %v3870, %v3942
        %v3944 = vpop.f32.mrb[0].mxu0
        %v3945 = vadd.f32 %v3872, %v3944
        %v3946 = vpop.f32.mrb[0].mxu0
        %v3947 = vadd.f32 %v3874, %v3946
        %3948 = vmatprep.mubr.bf16.mxu0 0
        %3949 = vmatmul.mubr.bf16.gmra.mrb[0].mxu0 %v3738
        %v3950 = vpop.f32.mrb[0].mxu0
        %v3951 = vadd.f32 %v3878, %v3950
        %v3952 = vpop.f32.mrb[0].mxu0
        %v3953 = vadd.f32 %v3880, %v3952
        %v3954 = vpop.f32.mrb[0].mxu0
        %v3955 = vadd.f32 %v3882, %v3954
        %v3956 = vpop.f32.mrb[0].mxu0
        %v3957 = vadd.f32 %v3884, %v3956
        %3958 = vdwg.mxu0
        %3959 = vmatprep.subr.bf16.mxu0 0
        %3960 = vmatpush1.bf16.msra.mxu0 %v3522
        %3961 = vmatprep.subr.bf16.mxu0 0
        %3962 = vmatpush1.bf16.msra.mxu0 %v3525
        %3963 = vmatprep.subr.bf16.mxu0 0
        %3964 = vmatpush1.bf16.msra.mxu0 %v3528
        %3965 = vmatprep.subr.bf16.mxu0 0
        %3966 = vmatpush1.bf16.msra.mxu0 %v3531
        %3967 = vmatprep.subr.bf16.mxu0 0
        %3968 = vmatpush1.bf16.msra.mxu0 %v3534
        %3969 = vmatprep.subr.bf16.mxu0 0
        %3970 = vmatpush1.bf16.msra.mxu0 %v3537
        %3971 = vmatprep.subr.bf16.mxu0 0
        %3972 = vmatpush1.bf16.msra.mxu0 %v3540
        %3973 = vmatprep.subr.bf16.mxu0 0
        %3974 = vmatpush1.bf16.msra.mxu0 %v3543
        %3975 = vmatprep.subr.bf16.mxu0 0
        %3976 = vmatpush1.bf16.msra.mxu0 %v3546
        %3977 = vmatprep.subr.bf16.mxu0 0
        %3978 = vmatpush1.bf16.msra.mxu0 %v3549
        %3979 = vmatprep.subr.bf16.mxu0 0
        %3980 = vmatpush1.bf16.msra.mxu0 %v3552
        %3981 = vmatprep.subr.bf16.mxu0 0
        %3982 = vmatpush1.bf16.msra.mxu0 %v3555
        %3983 = vmatprep.subr.bf16.mxu0 0
        %3984 = vmatpush1.bf16.msra.mxu0 %v3558
        %3985 = vmatprep.subr.bf16.mxu0 0
        %3986 = vmatpush1.bf16.msra.mxu0 %v3561
        %3987 = vmatprep.subr.bf16.mxu0 0
        %3988 = vmatpush1.bf16.msra.mxu0 %v3564
        %3989 = vmatprep.subr.bf16.mxu0 0
        %3990 = vmatpush1.bf16.msra.mxu0 %v3567
        %3991 = vmatprep.mubr.bf16.mxu0 %v3693
        %3992 = vmatmul.mubr.bf16.gmra.mrb[0].mxu0 %v3692
        %v3993 = vpop.f32.mrb[0].mxu0
        %v3994 = vadd.f32 0.0, %v3993
        %v3995 = vpop.f32.mrb[0].mxu0
        %v3996 = vpop.f32.mrb[0].mxu0
        %v3997 = vadd.f32 0.0, %v3996
        %v3998 = vpop.f32.mrb[0].mxu0
        %3999 = vmatprep.mubr.bf16.mxu0 %v3698
        %4000 = vmatmul.mubr.bf16.gmra.mrb[0].mxu0 %v3697
        %v4001 = vpop.f32.mrb[0].mxu0
        %v4002 = vadd.f32 0.0, %v4001
        %v4003 = vpop.f32.mrb[0].mxu0
        %v4004 = vpop.f32.mrb[0].mxu0
        %v4005 = vadd.f32 0.0, %v4004
        %v4006 = vpop.f32.mrb[0].mxu0
        %4007 = vmatprep.mubr.bf16.mxu0 %v3703
        %4008 = vmatmul.mubr.bf16.gmra.mrb[0].mxu0 %v3702
        %v4009 = vpop.f32.mrb[0].mxu0
        %v4010 = vadd.f32 0.0, %v4009
        %v4011 = vpop.f32.mrb[0].mxu0
        %v4012 = vpop.f32.mrb[0].mxu0
        %v4013 = vadd.f32 0.0, %v4012
        %v4014 = vpop.f32.mrb[0].mxu0
        %4015 = vmatprep.mubr.bf16.mxu0 %v3708
        %4016 = vmatmul.mubr.bf16.gmra.mrb[0].mxu0 %v3707
        %v4017 = vpop.f32.mrb[0].mxu0
        %v4018 = vadd.f32 0.0, %v4017
        %v4019 = vpop.f32.mrb[0].mxu0
        %v4020 = vpop.f32.mrb[0].mxu0
        %v4021 = vadd.f32 0.0, %v4020
        %v4022 = vpop.f32.mrb[0].mxu0
        %4023 = vdwg.mxu0
        %4024 = vmatprep.subr.bf16.mxu0 0
        %4025 = vmatpush1.bf16.msra.mxu0 %v3570
        %4026 = vmatprep.subr.bf16.mxu0 0
        %4027 = vmatpush1.bf16.msra.mxu0 %v3573
        %4028 = vmatprep.subr.bf16.mxu0 0
        %4029 = vmatpush1.bf16.msra.mxu0 %v3576
        %4030 = vmatprep.subr.bf16.mxu0 0
        %4031 = vmatpush1.bf16.msra.mxu0 %v3579
        %4032 = vmatprep.subr.bf16.mxu0 0
        %4033 = vmatpush1.bf16.msra.mxu0 %v3582
        %4034 = vmatprep.subr.bf16.mxu0 0
        %4035 = vmatpush1.bf16.msra.mxu0 %v3585
        %4036 = vmatprep.subr.bf16.mxu0 0
        %4037 = vmatpush1.bf16.msra.mxu0 %v3588
        %4038 = vmatprep.subr.bf16.mxu0 0
        %4039 = vmatpush1.bf16.msra.mxu0 %v3591
        %4040 = vmatprep.subr.bf16.mxu0 0
        %4041 = vmatpush1.bf16.msra.mxu0 %v3594
        %4042 = vmatprep.subr.bf16.mxu0 0
        %4043 = vmatpush1.bf16.msra.mxu0 %v3597
        %4044 = vmatprep.subr.bf16.mxu0 0
        %4045 = vmatpush1.bf16.msra.mxu0 %v3600
        %4046 = vmatprep.subr.bf16.mxu0 0
        %4047 = vmatpush1.bf16.msra.mxu0 %v3603
        %4048 = vmatprep.subr.bf16.mxu0 0
        %4049 = vmatpush1.bf16.msra.mxu0 %v3606
        %4050 = vmatprep.subr.bf16.mxu0 0
        %4051 = vmatpush1.bf16.msra.mxu0 %v3609
        %4052 = vmatprep.subr.bf16.mxu0 0
        %4053 = vmatpush1.bf16.msra.mxu0 %v3612
        %4054 = vmatprep.subr.bf16.mxu0 0
        %4055 = vmatpush1.bf16.msra.mxu0 %v3615
        %4056 = vmatprep.mubr.bf16.mxu0 %v3695
        %4057 = vmatmul.mubr.bf16.gmra.mrb[0].mxu0 %v3694
        %v4058 = vpop.f32.mrb[0].mxu0
        %v4059 = vadd.f32 %v3994, %v4058
        %v4060 = vpop.f32.mrb[0].mxu0
        %v4061 = vpop.f32.mrb[0].mxu0
        %v4062 = vadd.f32 %v3997, %v4061
        %v4063 = vpop.f32.mrb[0].mxu0
        %4064 = vmatprep.mubr.bf16.mxu0 %v3700
        %4065 = vmatmul.mubr.bf16.gmra.mrb[0].mxu0 %v3699
        %v4066 = vpop.f32.mrb[0].mxu0
        %v4067 = vadd.f32 %v4002, %v4066
        %v4068 = vpop.f32.mrb[0].mxu0
        %v4069 = vpop.f32.mrb[0].mxu0
        %v4070 = vadd.f32 %v4005, %v4069
        %v4071 = vpop.f32.mrb[0].mxu0
        %4072 = vmatprep.mubr.bf16.mxu0 %v3705
        %4073 = vmatmul.mubr.bf16.gmra.mrb[0].mxu0 %v3704
        %v4074 = vpop.f32.mrb[0].mxu0
        %v4075 = vadd.f32 %v4010, %v4074
        %v4076 = vpop.f32.mrb[0].mxu0
        %v4077 = vpop.f32.mrb[0].mxu0
        %v4078 = vadd.f32 %v4013, %v4077
        %v4079 = vpop.f32.mrb[0].mxu0
        %4080 = vmatprep.mubr.bf16.mxu0 %v3710
        %4081 = vmatmul.mubr.bf16.gmra.mrb[0].mxu0 %v3709
        %v4082 = vpop.f32.mrb[0].mxu0
        %v4083 = vadd.f32 %v4018, %v4082
        %v4084 = vpop.f32.mrb[0].mxu0
        %v4085 = vpop.f32.mrb[0].mxu0
        %v4086 = vadd.f32 %v4021, %v4085
        %v4087 = vpop.f32.mrb[0].mxu0
        %4088 = vdwg.mxu0
        %4089 = vmatprep.subr.bf16.mxu0 0
        %4090 = vmatpush1.bf16.msra.mxu0 %v3618
        %4091 = vmatprep.subr.bf16.mxu0 0
        %4092 = vmatpush1.bf16.msra.mxu0 %v3621
        %4093 = vmatprep.subr.bf16.mxu0 0
        %4094 = vmatpush1.bf16.msra.mxu0 %v3624
        %4095 = vmatprep.subr.bf16.mxu0 0
        %4096 = vmatpush1.bf16.msra.mxu0 %v3627
        %4097 = vmatprep.subr.bf16.mxu0 0
        %4098 = vmatpush1.bf16.msra.mxu0 0
        %4099 = vmatprep.subr.bf16.mxu0 0
        %4100 = vmatpush1.bf16.msra.mxu0 0
        %4101 = vmatprep.subr.bf16.mxu0 0
        %4102 = vmatpush1.bf16.msra.mxu0 0
        %4103 = vmatprep.subr.bf16.mxu0 0
        %4104 = vmatpush1.bf16.msra.mxu0 0
        %4105 = vmatprep.subr.bf16.mxu0 0
        %4106 = vmatpush1.bf16.msra.mxu0 0
        %4107 = vmatprep.subr.bf16.mxu0 0
        %4108 = vmatpush1.bf16.msra.mxu0 0
        %4109 = vmatprep.subr.bf16.mxu0 0
        %4110 = vmatpush1.bf16.msra.mxu0 0
        %4111 = vmatprep.subr.bf16.mxu0 0
        %4112 = vmatpush1.bf16.msra.mxu0 0
        %4113 = vmatprep.subr.bf16.mxu0 0
        %4114 = vmatpush1.bf16.msra.mxu0 0
        %4115 = vmatprep.subr.bf16.mxu0 0
        %4116 = vmatpush1.bf16.msra.mxu0 0
        %4117 = vmatprep.subr.bf16.mxu0 0
        %4118 = vmatpush1.bf16.msra.mxu0 0
        %4119 = vmatprep.subr.bf16.mxu0 0
        %4120 = vmatpush1.bf16.msra.mxu0 0
        %4121 = vmatprep.mubr.bf16.mxu0 0
        %4122 = vmatmul.mubr.bf16.gmra.mrb[0].mxu0 %v3729
        %v4123 = vpop.f32.mrb[0].mxu0
        %v4124 = vadd.f32 %v4059, %v4123
        %v4125 = vpop.f32.mrb[0].mxu0
        %v4126 = vpop.f32.mrb[0].mxu0
        %v4127 = vadd.f32 %v4062, %v4126
        %v4128 = vpop.f32.mrb[0].mxu0
        %4129 = vmatprep.mubr.bf16.mxu0 0
        %4130 = vmatmul.mubr.bf16.gmra.mrb[0].mxu0 %v3732
        %v4131 = vpop.f32.mrb[0].mxu0
        %v4132 = vadd.f32 %v4067, %v4131
        %v4133 = vpop.f32.mrb[0].mxu0
        %v4134 = vpop.f32.mrb[0].mxu0
        %v4135 = vadd.f32 %v4070, %v4134
        %v4136 = vpop.f32.mrb[0].mxu0
        %4137 = vmatprep.mubr.bf16.mxu0 0
        %4138 = vmatmul.mubr.bf16.gmra.mrb[0].mxu0 %v3735
        %v4139 = vpop.f32.mrb[0].mxu0
        %v4140 = vadd.f32 %v4075, %v4139
        %v4141 = vpop.f32.mrb[0].mxu0
        %v4142 = vpop.f32.mrb[0].mxu0
        %v4143 = vadd.f32 %v4078, %v4142
        %v4144 = vpop.f32.mrb[0].mxu0
        %4145 = vmatprep.mubr.bf16.mxu0 0
        %4146 = vmatmul.mubr.bf16.gmra.mrb[0].mxu0 %v3738
        %v4147 = vpop.f32.mrb[0].mxu0
        %v4148 = vadd.f32 %v4083, %v4147
        %v4149 = vpop.f32.mrb[0].mxu0
        %v4150 = vpop.f32.mrb[0].mxu0
        %v4151 = vadd.f32 %v4086, %v4150
        %v4152 = vpop.f32.mrb[0].mxu0
        %4153 = vdwg.mxu0
        %s4154 = scalar_lea.vmem [#allocation14], 64
        %v4155 = vld [vmem:[%s4154] sm:$0xff]
        %v4156 = vld [vmem:[%s4154 + $0x8] sm:$0xff]
        %v4157 = vld [vmem:[%s4154 + $0x10] sm:$0xff]
        %v4158 = vld [vmem:[%s4154 + $0x18] sm:$0xff]
        %v4159 = vld [vmem:[%s4154 + $0x20] sm:$0xff]
        %v4160 = vld [vmem:[%s4154 + $0x28] sm:$0xff]
        %v4161 = vld [vmem:[%s4154 + $0x30] sm:$0xff]
        %v4162 = vld [vmem:[%s4154 + $0x38] sm:$0xff]
        %4164 = vset.pattern.permute.xlu0 0
        %4165 = vperm.xlu0 %4164, %v4155
        %v4166 = vpop.permute.xlu0 %4165
        %4169 = vset.pattern.permute.xlu0 0
        %4170 = vperm.xlu0 %4169, %v4156
        %v4171 = vpop.permute.xlu0 %4170
        %4174 = vset.pattern.permute.xlu0 0
        %4175 = vperm.xlu0 %4174, %v4157
        %v4176 = vpop.permute.xlu0 %4175
        %4179 = vset.pattern.permute.xlu0 0
        %4180 = vperm.xlu0 %4179, %v4158
        %v4181 = vpop.permute.xlu0 %4180
        %4184 = vset.pattern.permute.xlu0 0
        %4185 = vperm.xlu0 %4184, %v4159
        %v4186 = vpop.permute.xlu0 %4185
        %4189 = vset.pattern.permute.xlu0 0
        %4190 = vperm.xlu0 %4189, %v4160
        %v4191 = vpop.permute.xlu0 %4190
        %4194 = vset.pattern.permute.xlu0 0
        %4195 = vperm.xlu0 %4194, %v4161
        %v4196 = vpop.permute.xlu0 %4195
        %4199 = vset.pattern.permute.xlu0 0
        %4200 = vperm.xlu0 %4199, %v4162
        %v4201 = vpop.permute.xlu0 %4200
        %v4203 = vmul.f32 %v3921, %v4166
        %v4204 = vmul.f32 %v3923, %v4166
        %v4205 = vmul.f32 %v4124, %v4166
        %v4206 = vmul.f32 %v3925, %v4171
        %v4207 = vmul.f32 %v3927, %v4171
        %v4208 = vmul.f32 %v4127, %v4171
        %v4209 = vmul.f32 %v3931, %v4176
        %v4210 = vmul.f32 %v3933, %v4176
        %v4211 = vmul.f32 %v4132, %v4176
        %v4212 = vmul.f32 %v3935, %v4181
        %v4213 = vmul.f32 %v3937, %v4181
        %v4214 = vmul.f32 %v4135, %v4181
        %v4215 = vmul.f32 %v3941, %v4186
        %v4216 = vmul.f32 %v3943, %v4186
        %v4217 = vmul.f32 %v4140, %v4186
        %v4218 = vmul.f32 %v3945, %v4191
        %v4219 = vmul.f32 %v3947, %v4191
        %v4220 = vmul.f32 %v4143, %v4191
        %v4221 = vmul.f32 %v3951, %v4196
        %v4222 = vmul.f32 %v3953, %v4196
        %v4223 = vmul.f32 %v4148, %v4196
        %v4224 = vmul.f32 %v3955, %v4201
        %v4225 = vmul.f32 %v3957, %v4201
        %v4226 = vmul.f32 %v4151, %v4201
        %s4227 = scalar_lea.vmem [#allocation15], 64
        %v4228 = vld [vmem:[%s4227] sm:$0xff]
        %v4229 = vld [vmem:[%s4227 + $0x8] sm:$0xff]
        %v4230 = vld [vmem:[%s4227 + $0x10] sm:$0xff]
        %v4231 = vld [vmem:[%s4227 + $0x18] sm:$0xff]
        %v4232 = vld [vmem:[%s4227 + $0x20] sm:$0xff]
        %v4233 = vld [vmem:[%s4227 + $0x28] sm:$0xff]
        %v4234 = vld [vmem:[%s4227 + $0x30] sm:$0xff]
        %v4235 = vld [vmem:[%s4227 + $0x38] sm:$0xff]
        %4237 = vset.pattern.permute.xlu0 0
        %4238 = vperm.xlu0 %4237, %v4228
        %v4239 = vpop.permute.xlu0 %4238
        %4242 = vset.pattern.permute.xlu0 0
        %4243 = vperm.xlu0 %4242, %v4229
        %v4244 = vpop.permute.xlu0 %4243
        %4247 = vset.pattern.permute.xlu0 0
        %4248 = vperm.xlu0 %4247, %v4230
        %v4249 = vpop.permute.xlu0 %4248
        %4252 = vset.pattern.permute.xlu0 0
        %4253 = vperm.xlu0 %4252, %v4231
        %v4254 = vpop.permute.xlu0 %4253
        %4257 = vset.pattern.permute.xlu0 0
        %4258 = vperm.xlu0 %4257, %v4232
        %v4259 = vpop.permute.xlu0 %4258
        %4262 = vset.pattern.permute.xlu0 0
        %4263 = vperm.xlu0 %4262, %v4233
        %v4264 = vpop.permute.xlu0 %4263
        %4267 = vset.pattern.permute.xlu0 0
        %4268 = vperm.xlu0 %4267, %v4234
        %v4269 = vpop.permute.xlu0 %4268
        %4272 = vset.pattern.permute.xlu0 0
        %4273 = vperm.xlu0 %4272, %v4235
        %v4274 = vpop.permute.xlu0 %4273
        %v4276 = vadd.f32 %v4203, %v4239
        %v4277 = vadd.f32 %v4204, %v4239
        %v4278 = vadd.f32 %v4205, %v4239
        %v4279 = vadd.f32 %v4206, %v4244
        %v4280 = vadd.f32 %v4207, %v4244
        %v4281 = vadd.f32 %v4208, %v4244
        %v4282 = vadd.f32 %v4209, %v4249
        %v4283 = vadd.f32 %v4210, %v4249
        %v4284 = vadd.f32 %v4211, %v4249
        %v4285 = vadd.f32 %v4212, %v4254
        %v4286 = vadd.f32 %v4213, %v4254
        %v4287 = vadd.f32 %v4214, %v4254
        %v4288 = vadd.f32 %v4215, %v4259
        %v4289 = vadd.f32 %v4216, %v4259
        %v4290 = vadd.f32 %v4217, %v4259
        %v4291 = vadd.f32 %v4218, %v4264
        %v4292 = vadd.f32 %v4219, %v4264
        %v4293 = vadd.f32 %v4220, %v4264
        %v4294 = vadd.f32 %v4221, %v4269
        %v4295 = vadd.f32 %v4222, %v4269
        %v4296 = vadd.f32 %v4223, %v4269
        %v4297 = vadd.f32 %v4224, %v4274
        %v4298 = vadd.f32 %v4225, %v4274
        %v4299 = vadd.f32 %v4226, %v4274
        %vm4300 = vcmp.gt.f32.partialorder %v4276, 0.0
        %vm4301 = vcmp.gt.f32.partialorder %v4277, 0.0
        %vm4302 = vcmp.gt.f32.partialorder %v4278, 0.0
        %vm4303 = vcmp.gt.f32.partialorder %v4279, 0.0
        %vm4304 = vcmp.gt.f32.partialorder %v4280, 0.0
        %vm4305 = vcmp.gt.f32.partialorder %v4281, 0.0
        %vm4306 = vcmp.gt.f32.partialorder %v4282, 0.0
        %vm4307 = vcmp.gt.f32.partialorder %v4283, 0.0
        %vm4308 = vcmp.gt.f32.partialorder %v4284, 0.0
        %vm4309 = vcmp.gt.f32.partialorder %v4285, 0.0
        %vm4310 = vcmp.gt.f32.partialorder %v4286, 0.0
        %vm4311 = vcmp.gt.f32.partialorder %v4287, 0.0
        %vm4312 = vcmp.gt.f32.partialorder %v4288, 0.0
        %vm4313 = vcmp.gt.f32.partialorder %v4289, 0.0
        %vm4314 = vcmp.gt.f32.partialorder %v4290, 0.0
        %vm4315 = vcmp.gt.f32.partialorder %v4291, 0.0
        %vm4316 = vcmp.gt.f32.partialorder %v4292, 0.0
        %vm4317 = vcmp.gt.f32.partialorder %v4293, 0.0
        %vm4318 = vcmp.gt.f32.partialorder %v4294, 0.0
        %vm4319 = vcmp.gt.f32.partialorder %v4295, 0.0
        %vm4320 = vcmp.gt.f32.partialorder %v4296, 0.0
        %vm4321 = vcmp.gt.f32.partialorder %v4297, 0.0
        %vm4322 = vcmp.gt.f32.partialorder %v4298, 0.0
        %vm4323 = vcmp.gt.f32.partialorder %v4299, 0.0
        %v4324 = vmul.f32 %v4276, 0.01
        %v4325 = vmul.f32 %v4277, 0.01
        %v4326 = vmul.f32 %v4278, 0.01
        %v4327 = vmul.f32 %v4279, 0.01
        %v4328 = vmul.f32 %v4280, 0.01
        %v4329 = vmul.f32 %v4281, 0.01
        %v4330 = vmul.f32 %v4282, 0.01
        %v4331 = vmul.f32 %v4283, 0.01
        %v4332 = vmul.f32 %v4284, 0.01
        %v4333 = vmul.f32 %v4285, 0.01
        %v4334 = vmul.f32 %v4286, 0.01
        %v4335 = vmul.f32 %v4287, 0.01
        %v4336 = vmul.f32 %v4288, 0.01
        %v4337 = vmul.f32 %v4289, 0.01
        %v4338 = vmul.f32 %v4290, 0.01
        %v4339 = vmul.f32 %v4291, 0.01
        %v4340 = vmul.f32 %v4292, 0.01
        %v4341 = vmul.f32 %v4293, 0.01
        %v4342 = vmul.f32 %v4294, 0.01
        %v4343 = vmul.f32 %v4295, 0.01
        %v4344 = vmul.f32 %v4296, 0.01
        %v4345 = vmul.f32 %v4297, 0.01
        %v4346 = vmul.f32 %v4298, 0.01
        %v4347 = vmul.f32 %v4299, 0.01
        %v4348 = vsel %vm4300, %v4276, %v4324
        %v4349 = vsel %vm4301, %v4277, %v4325
        %v4350 = vsel %vm4302, %v4278, %v4326
        %v4351 = vsel %vm4303, %v4279, %v4327
        %v4352 = vsel %vm4304, %v4280, %v4328
        %v4353 = vsel %vm4305, %v4281, %v4329
        %v4354 = vsel %vm4306, %v4282, %v4330
        %v4355 = vsel %vm4307, %v4283, %v4331
        %v4356 = vsel %vm4308, %v4284, %v4332
        %v4357 = vsel %vm4309, %v4285, %v4333
        %v4358 = vsel %vm4310, %v4286, %v4334
        %v4359 = vsel %vm4311, %v4287, %v4335
        %v4360 = vsel %vm4312, %v4288, %v4336
        %v4361 = vsel %vm4313, %v4289, %v4337
        %v4362 = vsel %vm4314, %v4290, %v4338
        %v4363 = vsel %vm4315, %v4291, %v4339
        %v4364 = vsel %vm4316, %v4292, %v4340
        %v4365 = vsel %vm4317, %v4293, %v4341
        %v4366 = vsel %vm4318, %v4294, %v4342
        %v4367 = vsel %vm4319, %v4295, %v4343
        %v4368 = vsel %vm4320, %v4296, %v4344
        %v4369 = vsel %vm4321, %v4297, %v4345
        %v4370 = vsel %vm4322, %v4298, %v4346
        %v4371 = vsel %vm4323, %v4299, %v4347
        %v4372 = vmul.f32 %v4348, %v1024
        %v4373 = vmul.f32 %v4349, %v1028
        %v4374 = vmul.f32 %v4350, %v1032
        %v4375 = vmul.f32 %v4351, %v1024
        %v4376 = vmul.f32 %v4352, %v1028
        %v4377 = vmul.f32 %v4353, %v1032
        %v4378 = vmul.f32 %v4354, %v1024
        %v4379 = vmul.f32 %v4355, %v1028
        %v4380 = vmul.f32 %v4356, %v1032
        %v4381 = vmul.f32 %v4357, %v1024
        %v4382 = vmul.f32 %v4358, %v1028
        %v4383 = vmul.f32 %v4359, %v1032
        %v4384 = vmul.f32 %v4360, %v1024
        %v4385 = vmul.f32 %v4361, %v1028
        %v4386 = vmul.f32 %v4362, %v1032
        %v4387 = vmul.f32 %v4363, %v1024
        %v4388 = vmul.f32 %v4364, %v1028
        %v4389 = vmul.f32 %v4365, %v1032
        %v4390 = vmul.f32 %v4366, %v1024
        %v4391 = vmul.f32 %v4367, %v1028
        %v4392 = vmul.f32 %v4368, %v1032
        %v4393 = vmul.f32 %v4369, %v1024
        %v4394 = vmul.f32 %v4370, %v1028
        %v4395 = vmul.f32 %v4371, %v1032
        %v4396 = vpack.c.bf16 %v4375, %v4372
        %v4397 = vpack.c.bf16 %v4376, %v4373
        %v4398 = vpack.c.bf16 %v4377, %v4374
        %v4399 = vpack.c.bf16 %v4381, %v4378
        %v4400 = vpack.c.bf16 %v4382, %v4379
        %v4401 = vpack.c.bf16 %v4383, %v4380
        %v4402 = vpack.c.bf16 %v4387, %v4384
        %v4403 = vpack.c.bf16 %v4388, %v4385
        %v4404 = vpack.c.bf16 %v4389, %v4386
        %v4405 = vpack.c.bf16 %v4393, %v4390
        %v4406 = vpack.c.bf16 %v4394, %v4391
        %v4407 = vpack.c.bf16 %v4395, %v4392
        %4408 = vst [vmem:[#allocation4 + $0x8] sm:$0xff] %v4396
        %4409 = vst [vmem:[#allocation4 + $0x10] sm:$0xff] %v4397
        %4410 = vst.msk [vmem:[#allocation4 + $0x18] sm:$0xff] %vm386, %v4398
        %4411 = vst [vmem:[#allocation4 + $0x30] sm:$0xff] %v4399
        %4412 = vst [vmem:[#allocation4 + $0x38] sm:$0xff] %v4400
        %4413 = vst.msk [vmem:[#allocation4 + $0x40] sm:$0xff] %vm386, %v4401
        %4414 = vst [vmem:[#allocation4 + $0x58] sm:$0xff] %v4402
        %4415 = vst [vmem:[#allocation4 + $0x60] sm:$0xff] %v4403
        %4416 = vst.msk [vmem:[#allocation4 + $0x68] sm:$0xff] %vm386, %v4404
        %4417 = vst [vmem:[#allocation4 + $0x80] sm:$0xff] %v4405
        %4418 = vst [vmem:[#allocation4 + $0x88] sm:$0xff] %v4406
        %4419 = vst.msk [vmem:[#allocation4 + $0x90] sm:$0xff] %vm386, %v4407
        %v4420 = vld [vmem:[#allocation4] sm:$0xff]
        %v4421 = vld [vmem:[#allocation4 + $0x8] sm:$0xff]
        %v4422 = vld [vmem:[#allocation4 + $0x10] sm:$0xff]
        %v4423 = vld [vmem:[#allocation4 + $0x18] sm:$0xff]
        %v4424 = vld [vmem:[#allocation4 + $0x28] sm:$0xff]
        %v4425 = vld [vmem:[#allocation4 + $0x30] sm:$0xff]
        %v4426 = vld [vmem:[#allocation4 + $0x38] sm:$0xff]
        %v4427 = vld [vmem:[#allocation4 + $0x40] sm:$0xff]
        %v4428 = vld [vmem:[#allocation4 + $0x50] sm:$0xff]
        %v4429 = vld [vmem:[#allocation4 + $0x58] sm:$0xff]
        %v4430 = vld [vmem:[#allocation4 + $0x60] sm:$0xff]
        %v4431 = vld [vmem:[#allocation4 + $0x68] sm:$0xff]
        %v4432 = vld [vmem:[#allocation4 + $0x78] sm:$0xff]
        %v4433 = vld [vmem:[#allocation4 + $0x80] sm:$0xff]
        %v4434 = vld [vmem:[#allocation4 + $0x88] sm:$0xff]
        %v4435 = vld [vmem:[#allocation4 + $0x90] sm:$0xff]
        %4452 = vrot.lane.b32.xlu0 %v4420, 19
        %v4453 = vpop.permute.xlu0 %4452
        %4454 = vrot.lane.b32.xlu0 %v4421, 19
        %v4455 = vpop.permute.xlu0 %4454
        %4456 = vrot.lane.b32.xlu0 %v4422, 19
        %v4457 = vpop.permute.xlu0 %4456
        %4458 = vrot.lane.b32.xlu0 %v4423, 19
        %v4459 = vpop.permute.xlu0 %4458
        %4460 = vrot.lane.b32.xlu0 %v4424, 19
        %v4461 = vpop.permute.xlu0 %4460
        %4462 = vrot.lane.b32.xlu0 %v4425, 19
        %v4463 = vpop.permute.xlu0 %4462
        %4464 = vrot.lane.b32.xlu0 %v4426, 19
        %v4465 = vpop.permute.xlu0 %4464
        %4466 = vrot.lane.b32.xlu0 %v4427, 19
        %v4467 = vpop.permute.xlu0 %4466
        %4468 = vrot.lane.b32.xlu0 %v4428, 19
        %v4469 = vpop.permute.xlu0 %4468
        %4470 = vrot.lane.b32.xlu0 %v4429, 19
        %v4471 = vpop.permute.xlu0 %4470
        %4472 = vrot.lane.b32.xlu0 %v4430, 19
        %v4473 = vpop.permute.xlu0 %4472
        %4474 = vrot.lane.b32.xlu0 %v4431, 19
        %v4475 = vpop.permute.xlu0 %4474
        %4476 = vrot.lane.b32.xlu0 %v4432, 19
        %v4477 = vpop.permute.xlu0 %4476
        %4478 = vrot.lane.b32.xlu0 %v4433, 19
        %v4479 = vpop.permute.xlu0 %4478
        %4480 = vrot.lane.b32.xlu0 %v4434, 19
        %v4481 = vpop.permute.xlu0 %4480
        %4482 = vrot.lane.b32.xlu0 %v4435, 19
        %v4483 = vpop.permute.xlu0 %4482
        %v4484 = vsel %vm451, %v4453, %v4455
        %v4485 = vsel %vm451, %v4455, %v4457
        %v4486 = vsel %vm451, %v4457, %v4459
        %v4487 = vsel %vm451, %v4461, %v4463
        %v4488 = vsel %vm451, %v4463, %v4465
        %v4489 = vsel %vm451, %v4465, %v4467
        %v4490 = vsel %vm451, %v4469, %v4471
        %v4491 = vsel %vm451, %v4471, %v4473
        %v4492 = vsel %vm451, %v4473, %v4475
        %v4493 = vsel %vm451, %v4477, %v4479
        %v4494 = vsel %vm451, %v4479, %v4481
        %v4495 = vsel %vm451, %v4481, %v4483
        %4508 = vst [vmem:[#allocation3] sm:$0xff] %v4484
        %4509 = vst [vmem:[#allocation3 + $0x8] sm:$0xff] %v4485
        %4510 = vst.msk [vmem:[#allocation3 + $0x10] sm:$0xff] %vm386, %v4486
        %4511 = vst [vmem:[#allocation3 + $0x18] sm:$0xff] %v4487
        %4512 = vst [vmem:[#allocation3 + $0x20] sm:$0xff] %v4488
        %4513 = vst.msk [vmem:[#allocation3 + $0x28] sm:$0xff] %vm386, %v4489
        %4514 = vst [vmem:[#allocation3 + $0x30] sm:$0xff] %v4490
        %4515 = vst [vmem:[#allocation3 + $0x38] sm:$0xff] %v4491
        %4516 = vst.msk [vmem:[#allocation3 + $0x40] sm:$0xff] %vm386, %v4492
        %4517 = vst [vmem:[#allocation3 + $0x48] sm:$0xff] %v4493
        %4518 = vst [vmem:[#allocation3 + $0x50] sm:$0xff] %v4494
        %4519 = vst.msk [vmem:[#allocation3 + $0x58] sm:$0xff] %vm386, %v4495
        %v4520 = vld [vmem:[#allocation4] sm:$0xff]
        %v4521 = vld [vmem:[#allocation4 + $0x8] sm:$0xff]
        %v4522 = vld [vmem:[#allocation4 + $0x10] sm:$0xff]
        %v4523 = vld [vmem:[#allocation4 + $0x18] sm:$0xff]
        %v4524 = vld [vmem:[#allocation4 + $0x28] sm:$0xff]
        %v4525 = vld [vmem:[#allocation4 + $0x30] sm:$0xff]
        %v4526 = vld [vmem:[#allocation4 + $0x38] sm:$0xff]
        %v4527 = vld [vmem:[#allocation4 + $0x40] sm:$0xff]
        %v4528 = vld [vmem:[#allocation4 + $0x50] sm:$0xff]
        %v4529 = vld [vmem:[#allocation4 + $0x58] sm:$0xff]
        %v4530 = vld [vmem:[#allocation4 + $0x60] sm:$0xff]
        %v4531 = vld [vmem:[#allocation4 + $0x68] sm:$0xff]
        %v4532 = vld [vmem:[#allocation4 + $0x78] sm:$0xff]
        %v4533 = vld [vmem:[#allocation4 + $0x80] sm:$0xff]
        %v4534 = vld [vmem:[#allocation4 + $0x88] sm:$0xff]
        %v4535 = vld [vmem:[#allocation4 + $0x90] sm:$0xff]
        %4552 = vrot.lane.b32.xlu0 %v4520, 18
        %v4553 = vpop.permute.xlu0 %4552
        %4554 = vrot.lane.b32.xlu0 %v4521, 18
        %v4555 = vpop.permute.xlu0 %4554
        %4556 = vrot.lane.b32.xlu0 %v4522, 18
        %v4557 = vpop.permute.xlu0 %4556
        %4558 = vrot.lane.b32.xlu0 %v4523, 18
        %v4559 = vpop.permute.xlu0 %4558
        %4560 = vrot.lane.b32.xlu0 %v4524, 18
        %v4561 = vpop.permute.xlu0 %4560
        %4562 = vrot.lane.b32.xlu0 %v4525, 18
        %v4563 = vpop.permute.xlu0 %4562
        %4564 = vrot.lane.b32.xlu0 %v4526, 18
        %v4565 = vpop.permute.xlu0 %4564
        %4566 = vrot.lane.b32.xlu0 %v4527, 18
        %v4567 = vpop.permute.xlu0 %4566
        %4568 = vrot.lane.b32.xlu0 %v4528, 18
        %v4569 = vpop.permute.xlu0 %4568
        %4570 = vrot.lane.b32.xlu0 %v4529, 18
        %v4571 = vpop.permute.xlu0 %4570
        %4572 = vrot.lane.b32.xlu0 %v4530, 18
        %v4573 = vpop.permute.xlu0 %4572
        %4574 = vrot.lane.b32.xlu0 %v4531, 18
        %v4575 = vpop.permute.xlu0 %4574
        %4576 = vrot.lane.b32.xlu0 %v4532, 18
        %v4577 = vpop.permute.xlu0 %4576
        %4578 = vrot.lane.b32.xlu0 %v4533, 18
        %v4579 = vpop.permute.xlu0 %4578
        %4580 = vrot.lane.b32.xlu0 %v4534, 18
        %v4581 = vpop.permute.xlu0 %4580
        %4582 = vrot.lane.b32.xlu0 %v4535, 18
        %v4583 = vpop.permute.xlu0 %4582
        %v4584 = vsel %vm489, %v4553, %v4555
        %v4585 = vsel %vm489, %v4555, %v4557
        %v4586 = vsel %vm489, %v4557, %v4559
        %v4587 = vsel %vm489, %v4561, %v4563
        %v4588 = vsel %vm489, %v4563, %v4565
        %v4589 = vsel %vm489, %v4565, %v4567
        %v4590 = vsel %vm489, %v4569, %v4571
        %v4591 = vsel %vm489, %v4571, %v4573
        %v4592 = vsel %vm489, %v4573, %v4575
        %v4593 = vsel %vm489, %v4577, %v4579
        %v4594 = vsel %vm489, %v4579, %v4581
        %v4595 = vsel %vm489, %v4581, %v4583
        %4608 = vst [vmem:[#allocation3 + $0x60] sm:$0xff] %v4584
        %4609 = vst [vmem:[#allocation3 + $0x68] sm:$0xff] %v4585
        %4610 = vst.msk [vmem:[#allocation3 + $0x70] sm:$0xff] %vm386, %v4586
        %4611 = vst [vmem:[#allocation3 + $0x78] sm:$0xff] %v4587
        %4612 = vst [vmem:[#allocation3 + $0x80] sm:$0xff] %v4588
        %4613 = vst.msk [vmem:[#allocation3 + $0x88] sm:$0xff] %vm386, %v4589
        %4614 = vst [vmem:[#allocation3 + $0x90] sm:$0xff] %v4590
        %4615 = vst [vmem:[#allocation3 + $0x98] sm:$0xff] %v4591
        %4616 = vst.msk [vmem:[#allocation3 + $0xa0] sm:$0xff] %vm386, %v4592
        %4617 = vst [vmem:[#allocation3 + $0xa8] sm:$0xff] %v4593
        %4618 = vst [vmem:[#allocation3 + $0xb0] sm:$0xff] %v4594
        %4619 = vst.msk [vmem:[#allocation3 + $0xb8] sm:$0xff] %vm386, %v4595
        %v4620 = vld [vmem:[#allocation4] sm:$0xff]
        %v4621 = vld [vmem:[#allocation4 + $0x8] sm:$0xff]
        %v4622 = vld [vmem:[#allocation4 + $0x10] sm:$0xff]
        %v4623 = vld [vmem:[#allocation4 + $0x18] sm:$0xff]
        %v4624 = vld [vmem:[#allocation4 + $0x28] sm:$0xff]
        %v4625 = vld [vmem:[#allocation4 + $0x30] sm:$0xff]
        %v4626 = vld [vmem:[#allocation4 + $0x38] sm:$0xff]
        %v4627 = vld [vmem:[#allocation4 + $0x40] sm:$0xff]
        %v4628 = vld [vmem:[#allocation4 + $0x50] sm:$0xff]
        %v4629 = vld [vmem:[#allocation4 + $0x58] sm:$0xff]
        %v4630 = vld [vmem:[#allocation4 + $0x60] sm:$0xff]
        %v4631 = vld [vmem:[#allocation4 + $0x68] sm:$0xff]
        %v4632 = vld [vmem:[#allocation4 + $0x78] sm:$0xff]
        %v4633 = vld [vmem:[#allocation4 + $0x80] sm:$0xff]
        %v4634 = vld [vmem:[#allocation4 + $0x88] sm:$0xff]
        %v4635 = vld [vmem:[#allocation4 + $0x90] sm:$0xff]
        %4652 = vrot.lane.b32.xlu0 %v4620, 17
        %v4653 = vpop.permute.xlu0 %4652
        %4654 = vrot.lane.b32.xlu0 %v4621, 17
        %v4655 = vpop.permute.xlu0 %4654
        %4656 = vrot.lane.b32.xlu0 %v4622, 17
        %v4657 = vpop.permute.xlu0 %4656
        %4658 = vrot.lane.b32.xlu0 %v4623, 17
        %v4659 = vpop.permute.xlu0 %4658
        %4660 = vrot.lane.b32.xlu0 %v4624, 17
        %v4661 = vpop.permute.xlu0 %4660
        %4662 = vrot.lane.b32.xlu0 %v4625, 17
        %v4663 = vpop.permute.xlu0 %4662
        %4664 = vrot.lane.b32.xlu0 %v4626, 17
        %v4665 = vpop.permute.xlu0 %4664
        %4666 = vrot.lane.b32.xlu0 %v4627, 17
        %v4667 = vpop.permute.xlu0 %4666
        %4668 = vrot.lane.b32.xlu0 %v4628, 17
        %v4669 = vpop.permute.xlu0 %4668
        %4670 = vrot.lane.b32.xlu0 %v4629, 17
        %v4671 = vpop.permute.xlu0 %4670
        %4672 = vrot.lane.b32.xlu0 %v4630, 17
        %v4673 = vpop.permute.xlu0 %4672
        %4674 = vrot.lane.b32.xlu0 %v4631, 17
        %v4675 = vpop.permute.xlu0 %4674
        %4676 = vrot.lane.b32.xlu0 %v4632, 17
        %v4677 = vpop.permute.xlu0 %4676
        %4678 = vrot.lane.b32.xlu0 %v4633, 17
        %v4679 = vpop.permute.xlu0 %4678
        %4680 = vrot.lane.b32.xlu0 %v4634, 17
        %v4681 = vpop.permute.xlu0 %4680
        %4682 = vrot.lane.b32.xlu0 %v4635, 17
        %v4683 = vpop.permute.xlu0 %4682
        %v4684 = vsel %vm527, %v4653, %v4655
        %v4685 = vsel %vm527, %v4655, %v4657
        %v4686 = vsel %vm527, %v4657, %v4659
        %v4687 = vsel %vm527, %v4661, %v4663
        %v4688 = vsel %vm527, %v4663, %v4665
        %v4689 = vsel %vm527, %v4665, %v4667
        %v4690 = vsel %vm527, %v4669, %v4671
        %v4691 = vsel %vm527, %v4671, %v4673
        %v4692 = vsel %vm527, %v4673, %v4675
        %v4693 = vsel %vm527, %v4677, %v4679
        %v4694 = vsel %vm527, %v4679, %v4681
        %v4695 = vsel %vm527, %v4681, %v4683
        %4708 = vst [vmem:[#allocation3 + $0xc0] sm:$0xff] %v4684
        %4709 = vst [vmem:[#allocation3 + $0xc8] sm:$0xff] %v4685
        %4710 = vst.msk [vmem:[#allocation3 + $0xd0] sm:$0xff] %vm386, %v4686
        %4711 = vst [vmem:[#allocation3 + $0xd8] sm:$0xff] %v4687
        %4712 = vst [vmem:[#allocation3 + $0xe0] sm:$0xff] %v4688
        %4713 = vst.msk [vmem:[#allocation3 + $0xe8] sm:$0xff] %vm386, %v4689
        %4714 = vst [vmem:[#allocation3 + $0xf0] sm:$0xff] %v4690
        %4715 = vst [vmem:[#allocation3 + $0xf8] sm:$0xff] %v4691
        %4716 = vst.msk [vmem:[#allocation3 + $0x100] sm:$0xff] %vm386, %v4692
        %4717 = vst [vmem:[#allocation3 + $0x108] sm:$0xff] %v4693
        %4718 = vst [vmem:[#allocation3 + $0x110] sm:$0xff] %v4694
        %4719 = vst.msk [vmem:[#allocation3 + $0x118] sm:$0xff] %vm386, %v4695
        %v4720 = vld [vmem:[#allocation4] sm:$0xff]
        %v4721 = vld [vmem:[#allocation4 + $0x8] sm:$0xff]
        %v4722 = vld [vmem:[#allocation4 + $0x10] sm:$0xff]
        %v4723 = vld [vmem:[#allocation4 + $0x18] sm:$0xff]
        %v4724 = vld [vmem:[#allocation4 + $0x28] sm:$0xff]
        %v4725 = vld [vmem:[#allocation4 + $0x30] sm:$0xff]
        %v4726 = vld [vmem:[#allocation4 + $0x38] sm:$0xff]
        %v4727 = vld [vmem:[#allocation4 + $0x40] sm:$0xff]
        %v4728 = vld [vmem:[#allocation4 + $0x50] sm:$0xff]
        %v4729 = vld [vmem:[#allocation4 + $0x58] sm:$0xff]
        %v4730 = vld [vmem:[#allocation4 + $0x60] sm:$0xff]
        %v4731 = vld [vmem:[#allocation4 + $0x68] sm:$0xff]
        %v4732 = vld [vmem:[#allocation4 + $0x78] sm:$0xff]
        %v4733 = vld [vmem:[#allocation4 + $0x80] sm:$0xff]
        %v4734 = vld [vmem:[#allocation4 + $0x88] sm:$0xff]
        %v4735 = vld [vmem:[#allocation4 + $0x90] sm:$0xff]
        %4752 = vrot.lane.b32.xlu0 %v4720, 1
        %v4753 = vpop.permute.xlu0 %4752
        %4754 = vrot.lane.b32.xlu0 %v4721, 1
        %v4755 = vpop.permute.xlu0 %4754
        %4756 = vrot.lane.b32.xlu0 %v4722, 1
        %v4757 = vpop.permute.xlu0 %4756
        %4758 = vrot.lane.b32.xlu0 %v4723, 1
        %v4759 = vpop.permute.xlu0 %4758
        %4760 = vrot.lane.b32.xlu0 %v4724, 1
        %v4761 = vpop.permute.xlu0 %4760
        %4762 = vrot.lane.b32.xlu0 %v4725, 1
        %v4763 = vpop.permute.xlu0 %4762
        %4764 = vrot.lane.b32.xlu0 %v4726, 1
        %v4765 = vpop.permute.xlu0 %4764
        %4766 = vrot.lane.b32.xlu0 %v4727, 1
        %v4767 = vpop.permute.xlu0 %4766
        %4768 = vrot.lane.b32.xlu0 %v4728, 1
        %v4769 = vpop.permute.xlu0 %4768
        %4770 = vrot.lane.b32.xlu0 %v4729, 1
        %v4771 = vpop.permute.xlu0 %4770
        %4772 = vrot.lane.b32.xlu0 %v4730, 1
        %v4773 = vpop.permute.xlu0 %4772
        %4774 = vrot.lane.b32.xlu0 %v4731, 1
        %v4775 = vpop.permute.xlu0 %4774
        %4776 = vrot.lane.b32.xlu0 %v4732, 1
        %v4777 = vpop.permute.xlu0 %4776
        %4778 = vrot.lane.b32.xlu0 %v4733, 1
        %v4779 = vpop.permute.xlu0 %4778
        %4780 = vrot.lane.b32.xlu0 %v4734, 1
        %v4781 = vpop.permute.xlu0 %4780
        %4782 = vrot.lane.b32.xlu0 %v4735, 1
        %v4783 = vpop.permute.xlu0 %4782
        %v4784 = vsel %vm565, %v4753, %v4755
        %v4785 = vsel %vm565, %v4755, %v4757
        %v4786 = vsel %vm565, %v4757, %v4759
        %v4787 = vsel %vm565, %v4761, %v4763
        %v4788 = vsel %vm565, %v4763, %v4765
        %v4789 = vsel %vm565, %v4765, %v4767
        %v4790 = vsel %vm565, %v4769, %v4771
        %v4791 = vsel %vm565, %v4771, %v4773
        %v4792 = vsel %vm565, %v4773, %v4775
        %v4793 = vsel %vm565, %v4777, %v4779
        %v4794 = vsel %vm565, %v4779, %v4781
        %v4795 = vsel %vm565, %v4781, %v4783
        %4808 = vst [vmem:[#allocation3 + $0x120] sm:$0xff] %v4784
        %4809 = vst [vmem:[#allocation3 + $0x128] sm:$0xff] %v4785
        %4810 = vst.msk [vmem:[#allocation3 + $0x130] sm:$0xff] %vm386, %v4786
        %4811 = vst [vmem:[#allocation3 + $0x138] sm:$0xff] %v4787
        %4812 = vst [vmem:[#allocation3 + $0x140] sm:$0xff] %v4788
        %4813 = vst.msk [vmem:[#allocation3 + $0x148] sm:$0xff] %vm386, %v4789
        %4814 = vst [vmem:[#allocation3 + $0x150] sm:$0xff] %v4790
        %4815 = vst [vmem:[#allocation3 + $0x158] sm:$0xff] %v4791
        %4816 = vst.msk [vmem:[#allocation3 + $0x160] sm:$0xff] %vm386, %v4792
        %4817 = vst [vmem:[#allocation3 + $0x168] sm:$0xff] %v4793
        %4818 = vst [vmem:[#allocation3 + $0x170] sm:$0xff] %v4794
        %4819 = vst.msk [vmem:[#allocation3 + $0x178] sm:$0xff] %vm386, %v4795
        %v4820 = vld [vmem:[#allocation4 + $0x8] sm:$0xff]
        %v4821 = vld [vmem:[#allocation4 + $0x10] sm:$0xff]
        %v4822 = vld [vmem:[#allocation4 + $0x18] sm:$0xff]
        %v4823 = vld [vmem:[#allocation4 + $0x30] sm:$0xff]
        %v4824 = vld [vmem:[#allocation4 + $0x38] sm:$0xff]
        %v4825 = vld [vmem:[#allocation4 + $0x40] sm:$0xff]
        %v4826 = vld [vmem:[#allocation4 + $0x58] sm:$0xff]
        %v4827 = vld [vmem:[#allocation4 + $0x60] sm:$0xff]
        %v4828 = vld [vmem:[#allocation4 + $0x68] sm:$0xff]
        %v4829 = vld [vmem:[#allocation4 + $0x80] sm:$0xff]
        %v4830 = vld [vmem:[#allocation4 + $0x88] sm:$0xff]
        %v4831 = vld [vmem:[#allocation4 + $0x90] sm:$0xff]
        %4832 = vst [vmem:[#allocation3 + $0x180] sm:$0xff] %v4820
        %4833 = vst [vmem:[#allocation3 + $0x188] sm:$0xff] %v4821
        %4834 = vst.msk [vmem:[#allocation3 + $0x190] sm:$0xff] %vm386, %v4822
        %4835 = vst [vmem:[#allocation3 + $0x198] sm:$0xff] %v4823
        %4836 = vst [vmem:[#allocation3 + $0x1a0] sm:$0xff] %v4824
        %4837 = vst.msk [vmem:[#allocation3 + $0x1a8] sm:$0xff] %vm386, %v4825
        %4838 = vst [vmem:[#allocation3 + $0x1b0] sm:$0xff] %v4826
        %4839 = vst [vmem:[#allocation3 + $0x1b8] sm:$0xff] %v4827
        %4840 = vst.msk [vmem:[#allocation3 + $0x1c0] sm:$0xff] %vm386, %v4828
        %4841 = vst [vmem:[#allocation3 + $0x1c8] sm:$0xff] %v4829
        %4842 = vst [vmem:[#allocation3 + $0x1d0] sm:$0xff] %v4830
        %4843 = vst.msk [vmem:[#allocation3 + $0x1d8] sm:$0xff] %vm386, %v4831
        %v4844 = vld [vmem:[#allocation4 + $0x8] sm:$0xff]
        %v4845 = vld [vmem:[#allocation4 + $0x10] sm:$0xff]
        %v4846 = vld [vmem:[#allocation4 + $0x18] sm:$0xff]
        %v4847 = vld [vmem:[#allocation4 + $0x30] sm:$0xff]
        %v4848 = vld [vmem:[#allocation4 + $0x38] sm:$0xff]
        %v4849 = vld [vmem:[#allocation4 + $0x40] sm:$0xff]
        %v4850 = vld [vmem:[#allocation4 + $0x58] sm:$0xff]
        %v4851 = vld [vmem:[#allocation4 + $0x60] sm:$0xff]
        %v4852 = vld [vmem:[#allocation4 + $0x68] sm:$0xff]
        %v4853 = vld [vmem:[#allocation4 + $0x80] sm:$0xff]
        %v4854 = vld [vmem:[#allocation4 + $0x88] sm:$0xff]
        %v4855 = vld [vmem:[#allocation4 + $0x90] sm:$0xff]
        %4868 = vrot.lane.b32.xlu0 %v4844, 127
        %v4869 = vpop.permute.xlu0 %4868
        %4870 = vrot.lane.b32.xlu0 %v4845, 127
        %v4871 = vpop.permute.xlu0 %4870
        %4872 = vrot.lane.b32.xlu0 %v4846, 127
        %v4873 = vpop.permute.xlu0 %4872
        %4874 = vrot.lane.b32.xlu0 %v4847, 127
        %v4875 = vpop.permute.xlu0 %4874
        %4876 = vrot.lane.b32.xlu0 %v4848, 127
        %v4877 = vpop.permute.xlu0 %4876
        %4878 = vrot.lane.b32.xlu0 %v4849, 127
        %v4879 = vpop.permute.xlu0 %4878
        %4880 = vrot.lane.b32.xlu0 %v4850, 127
        %v4881 = vpop.permute.xlu0 %4880
        %4882 = vrot.lane.b32.xlu0 %v4851, 127
        %v4883 = vpop.permute.xlu0 %4882
        %4884 = vrot.lane.b32.xlu0 %v4852, 127
        %v4885 = vpop.permute.xlu0 %4884
        %4886 = vrot.lane.b32.xlu0 %v4853, 127
        %v4887 = vpop.permute.xlu0 %4886
        %4888 = vrot.lane.b32.xlu0 %v4854, 127
        %v4889 = vpop.permute.xlu0 %4888
        %4890 = vrot.lane.b32.xlu0 %v4855, 127
        %v4891 = vpop.permute.xlu0 %4890
        %v4892 = vsel %vm621, %v4869, %v4871
        %v4893 = vsel %vm621, %v4871, %v4873
        %v4894 = vsel %vm621, %v4875, %v4877
        %v4895 = vsel %vm621, %v4877, %v4879
        %v4896 = vsel %vm621, %v4881, %v4883
        %v4897 = vsel %vm621, %v4883, %v4885
        %v4898 = vsel %vm621, %v4887, %v4889
        %v4899 = vsel %vm621, %v4889, %v4891
        %4912 = vst [vmem:[#allocation3 + $0x1e0] sm:$0xff] %v4892
        %4913 = vst [vmem:[#allocation3 + $0x1e8] sm:$0xff] %v4893
        %4914 = vst.msk [vmem:[#allocation3 + $0x1f0] sm:$0xff] %vm386, %v4873
        %4915 = vst [vmem:[#allocation3 + $0x1f8] sm:$0xff] %v4894
        %4916 = vst [vmem:[#allocation3 + $0x200] sm:$0xff] %v4895
        %4917 = vst.msk [vmem:[#allocation3 + $0x208] sm:$0xff] %vm386, %v4879
        %4918 = vst [vmem:[#allocation3 + $0x210] sm:$0xff] %v4896
        %4919 = vst [vmem:[#allocation3 + $0x218] sm:$0xff] %v4897
        %4920 = vst.msk [vmem:[#allocation3 + $0x220] sm:$0xff] %vm386, %v4885
        %4921 = vst [vmem:[#allocation3 + $0x228] sm:$0xff] %v4898
        %4922 = vst [vmem:[#allocation3 + $0x230] sm:$0xff] %v4899
        %4923 = vst.msk [vmem:[#allocation3 + $0x238] sm:$0xff] %vm386, %v4891
        %v4924 = vld [vmem:[#allocation4 + $0x8] sm:$0xff]
        %v4925 = vld [vmem:[#allocation4 + $0x10] sm:$0xff]
        %v4926 = vld [vmem:[#allocation4 + $0x18] sm:$0xff]
        %v4927 = vld [vmem:[#allocation4 + $0x30] sm:$0xff]
        %v4928 = vld [vmem:[#allocation4 + $0x38] sm:$0xff]
        %v4929 = vld [vmem:[#allocation4 + $0x40] sm:$0xff]
        %v4930 = vld [vmem:[#allocation4 + $0x58] sm:$0xff]
        %v4931 = vld [vmem:[#allocation4 + $0x60] sm:$0xff]
        %v4932 = vld [vmem:[#allocation4 + $0x68] sm:$0xff]
        %v4933 = vld [vmem:[#allocation4 + $0x80] sm:$0xff]
        %v4934 = vld [vmem:[#allocation4 + $0x88] sm:$0xff]
        %v4935 = vld [vmem:[#allocation4 + $0x90] sm:$0xff]
        %4948 = vrot.lane.b32.xlu0 %v4924, 111
        %v4949 = vpop.permute.xlu0 %4948
        %4950 = vrot.lane.b32.xlu0 %v4925, 111
        %v4951 = vpop.permute.xlu0 %4950
        %4952 = vrot.lane.b32.xlu0 %v4926, 111
        %v4953 = vpop.permute.xlu0 %4952
        %4954 = vrot.lane.b32.xlu0 %v4927, 111
        %v4955 = vpop.permute.xlu0 %4954
        %4956 = vrot.lane.b32.xlu0 %v4928, 111
        %v4957 = vpop.permute.xlu0 %4956
        %4958 = vrot.lane.b32.xlu0 %v4929, 111
        %v4959 = vpop.permute.xlu0 %4958
        %4960 = vrot.lane.b32.xlu0 %v4930, 111
        %v4961 = vpop.permute.xlu0 %4960
        %4962 = vrot.lane.b32.xlu0 %v4931, 111
        %v4963 = vpop.permute.xlu0 %4962
        %4964 = vrot.lane.b32.xlu0 %v4932, 111
        %v4965 = vpop.permute.xlu0 %4964
        %4966 = vrot.lane.b32.xlu0 %v4933, 111
        %v4967 = vpop.permute.xlu0 %4966
        %4968 = vrot.lane.b32.xlu0 %v4934, 111
        %v4969 = vpop.permute.xlu0 %4968
        %4970 = vrot.lane.b32.xlu0 %v4935, 111
        %v4971 = vpop.permute.xlu0 %4970
        %v4972 = vsel %vm653, %v4949, %v4951
        %v4973 = vsel %vm653, %v4951, %v4953
        %v4974 = vsel %vm653, %v4955, %v4957
        %v4975 = vsel %vm653, %v4957, %v4959
        %v4976 = vsel %vm653, %v4961, %v4963
        %v4977 = vsel %vm653, %v4963, %v4965
        %v4978 = vsel %vm653, %v4967, %v4969
        %v4979 = vsel %vm653, %v4969, %v4971
        %4992 = vst [vmem:[#allocation3 + $0x240] sm:$0xff] %v4972
        %4993 = vst [vmem:[#allocation3 + $0x248] sm:$0xff] %v4973
        %4994 = vst.msk [vmem:[#allocation3 + $0x250] sm:$0xff] %vm386, %v4953
        %4995 = vst [vmem:[#allocation3 + $0x258] sm:$0xff] %v4974
        %4996 = vst [vmem:[#allocation3 + $0x260] sm:$0xff] %v4975
        %4997 = vst.msk [vmem:[#allocation3 + $0x268] sm:$0xff] %vm386, %v4959
        %4998 = vst [vmem:[#allocation3 + $0x270] sm:$0xff] %v4976
        %4999 = vst [vmem:[#allocation3 + $0x278] sm:$0xff] %v4977
        %5000 = vst.msk [vmem:[#allocation3 + $0x280] sm:$0xff] %vm386, %v4965
        %5001 = vst [vmem:[#allocation3 + $0x288] sm:$0xff] %v4978
        %5002 = vst [vmem:[#allocation3 + $0x290] sm:$0xff] %v4979
        %5003 = vst.msk [vmem:[#allocation3 + $0x298] sm:$0xff] %vm386, %v4971
        %v5004 = vld [vmem:[#allocation4 + $0x8] sm:$0xff]
        %v5005 = vld [vmem:[#allocation4 + $0x10] sm:$0xff]
        %v5006 = vld [vmem:[#allocation4 + $0x18] sm:$0xff]
        %v5007 = vld [vmem:[#allocation4 + $0x30] sm:$0xff]
        %v5008 = vld [vmem:[#allocation4 + $0x38] sm:$0xff]
        %v5009 = vld [vmem:[#allocation4 + $0x40] sm:$0xff]
        %v5010 = vld [vmem:[#allocation4 + $0x58] sm:$0xff]
        %v5011 = vld [vmem:[#allocation4 + $0x60] sm:$0xff]
        %v5012 = vld [vmem:[#allocation4 + $0x68] sm:$0xff]
        %v5013 = vld [vmem:[#allocation4 + $0x80] sm:$0xff]
        %v5014 = vld [vmem:[#allocation4 + $0x88] sm:$0xff]
        %v5015 = vld [vmem:[#allocation4 + $0x90] sm:$0xff]
        %5028 = vrot.lane.b32.xlu0 %v5004, 110
        %v5029 = vpop.permute.xlu0 %5028
        %5030 = vrot.lane.b32.xlu0 %v5005, 110
        %v5031 = vpop.permute.xlu0 %5030
        %5032 = vrot.lane.b32.xlu0 %v5006, 110
        %v5033 = vpop.permute.xlu0 %5032
        %5034 = vrot.lane.b32.xlu0 %v5007, 110
        %v5035 = vpop.permute.xlu0 %5034
        %5036 = vrot.lane.b32.xlu0 %v5008, 110
        %v5037 = vpop.permute.xlu0 %5036
        %5038 = vrot.lane.b32.xlu0 %v5009, 110
        %v5039 = vpop.permute.xlu0 %5038
        %5040 = vrot.lane.b32.xlu0 %v5010, 110
        %v5041 = vpop.permute.xlu0 %5040
        %5042 = vrot.lane.b32.xlu0 %v5011, 110
        %v5043 = vpop.permute.xlu0 %5042
        %5044 = vrot.lane.b32.xlu0 %v5012, 110
        %v5045 = vpop.permute.xlu0 %5044
        %5046 = vrot.lane.b32.xlu0 %v5013, 110
        %v5047 = vpop.permute.xlu0 %5046
        %5048 = vrot.lane.b32.xlu0 %v5014, 110
        %v5049 = vpop.permute.xlu0 %5048
        %5050 = vrot.lane.b32.xlu0 %v5015, 110
        %v5051 = vpop.permute.xlu0 %5050
        %v5052 = vsel %vm685, %v5029, %v5031
        %v5053 = vsel %vm685, %v5031, %v5033
        %v5054 = vsel %vm685, %v5035, %v5037
        %v5055 = vsel %vm685, %v5037, %v5039
        %v5056 = vsel %vm685, %v5041, %v5043
        %v5057 = vsel %vm685, %v5043, %v5045
        %v5058 = vsel %vm685, %v5047, %v5049
        %v5059 = vsel %vm685, %v5049, %v5051
        %5072 = vst [vmem:[#allocation3 + $0x2a0] sm:$0xff] %v5052
        %5073 = vst [vmem:[#allocation3 + $0x2a8] sm:$0xff] %v5053
        %5074 = vst.msk [vmem:[#allocation3 + $0x2b0] sm:$0xff] %vm386, %v5033
        %5075 = vst [vmem:[#allocation3 + $0x2b8] sm:$0xff] %v5054
        %5076 = vst [vmem:[#allocation3 + $0x2c0] sm:$0xff] %v5055
        %5077 = vst.msk [vmem:[#allocation3 + $0x2c8] sm:$0xff] %vm386, %v5039
        %5078 = vst [vmem:[#allocation3 + $0x2d0] sm:$0xff] %v5056
        %5079 = vst [vmem:[#allocation3 + $0x2d8] sm:$0xff] %v5057
        %5080 = vst.msk [vmem:[#allocation3 + $0x2e0] sm:$0xff] %vm386, %v5045
        %5081 = vst [vmem:[#allocation3 + $0x2e8] sm:$0xff] %v5058
        %5082 = vst [vmem:[#allocation3 + $0x2f0] sm:$0xff] %v5059
        %5083 = vst.msk [vmem:[#allocation3 + $0x2f8] sm:$0xff] %vm386, %v5051
        %v5084 = vld [vmem:[#allocation4 + $0x8] sm:$0xff]
        %v5085 = vld [vmem:[#allocation4 + $0x10] sm:$0xff]
        %v5086 = vld [vmem:[#allocation4 + $0x18] sm:$0xff]
        %v5087 = vld [vmem:[#allocation4 + $0x30] sm:$0xff]
        %v5088 = vld [vmem:[#allocation4 + $0x38] sm:$0xff]
        %v5089 = vld [vmem:[#allocation4 + $0x40] sm:$0xff]
        %v5090 = vld [vmem:[#allocation4 + $0x58] sm:$0xff]
        %v5091 = vld [vmem:[#allocation4 + $0x60] sm:$0xff]
        %v5092 = vld [vmem:[#allocation4 + $0x68] sm:$0xff]
        %v5093 = vld [vmem:[#allocation4 + $0x80] sm:$0xff]
        %v5094 = vld [vmem:[#allocation4 + $0x88] sm:$0xff]
        %v5095 = vld [vmem:[#allocation4 + $0x90] sm:$0xff]
        %5108 = vrot.lane.b32.xlu0 %v5084, 109
        %v5109 = vpop.permute.xlu0 %5108
        %5110 = vrot.lane.b32.xlu0 %v5085, 109
        %v5111 = vpop.permute.xlu0 %5110
        %5112 = vrot.lane.b32.xlu0 %v5086, 109
        %v5113 = vpop.permute.xlu0 %5112
        %5114 = vrot.lane.b32.xlu0 %v5087, 109
        %v5115 = vpop.permute.xlu0 %5114
        %5116 = vrot.lane.b32.xlu0 %v5088, 109
        %v5117 = vpop.permute.xlu0 %5116
        %5118 = vrot.lane.b32.xlu0 %v5089, 109
        %v5119 = vpop.permute.xlu0 %5118
        %5120 = vrot.lane.b32.xlu0 %v5090, 109
        %v5121 = vpop.permute.xlu0 %5120
        %5122 = vrot.lane.b32.xlu0 %v5091, 109
        %v5123 = vpop.permute.xlu0 %5122
        %5124 = vrot.lane.b32.xlu0 %v5092, 109
        %v5125 = vpop.permute.xlu0 %5124
        %5126 = vrot.lane.b32.xlu0 %v5093, 109
        %v5127 = vpop.permute.xlu0 %5126
        %5128 = vrot.lane.b32.xlu0 %v5094, 109
        %v5129 = vpop.permute.xlu0 %5128
        %5130 = vrot.lane.b32.xlu0 %v5095, 109
        %v5131 = vpop.permute.xlu0 %5130
        %v5132 = vsel %vm717, %v5109, %v5111
        %v5133 = vsel %vm717, %v5111, %v5113
        %v5134 = vsel %vm717, %v5115, %v5117
        %v5135 = vsel %vm717, %v5117, %v5119
        %v5136 = vsel %vm717, %v5121, %v5123
        %v5137 = vsel %vm717, %v5123, %v5125
        %v5138 = vsel %vm717, %v5127, %v5129
        %v5139 = vsel %vm717, %v5129, %v5131
        %5152 = vst [vmem:[#allocation3 + $0x300] sm:$0xff] %v5132
        %5153 = vst [vmem:[#allocation3 + $0x308] sm:$0xff] %v5133
        %5154 = vst.msk [vmem:[#allocation3 + $0x310] sm:$0xff] %vm386, %v5113
        %5155 = vst [vmem:[#allocation3 + $0x318] sm:$0xff] %v5134
        %5156 = vst [vmem:[#allocation3 + $0x320] sm:$0xff] %v5135
        %5157 = vst.msk [vmem:[#allocation3 + $0x328] sm:$0xff] %vm386, %v5119
        %5158 = vst [vmem:[#allocation3 + $0x330] sm:$0xff] %v5136
        %5159 = vst [vmem:[#allocation3 + $0x338] sm:$0xff] %v5137
        %5160 = vst.msk [vmem:[#allocation3 + $0x340] sm:$0xff] %vm386, %v5125
        %5161 = vst [vmem:[#allocation3 + $0x348] sm:$0xff] %v5138
        %5162 = vst [vmem:[#allocation3 + $0x350] sm:$0xff] %v5139
        %5163 = vst.msk [vmem:[#allocation3 + $0x358] sm:$0xff] %vm386, %v5131
        %s5164 = scalar_lea.vmem [#allocation12], 320
        %v5165 = vld [vmem:[%s5164] sm:$0xff]
        %v5166 = vld [vmem:[%s5164 + $0x8] sm:$0xff]
        %v5167 = vld [vmem:[%s5164 + $0x10] sm:$0xf]
        %v5168 = vld [vmem:[%s5164 + $0x14] sm:$0xff]
        %v5169 = vld [vmem:[%s5164 + $0x1c] sm:$0xff]
        %v5170 = vld [vmem:[%s5164 + $0x24] sm:$0xf]
        %v5171 = vld [vmem:[%s5164 + $0x28] sm:$0xff]
        %v5172 = vld [vmem:[%s5164 + $0x30] sm:$0xff]
        %v5173 = vld [vmem:[%s5164 + $0x38] sm:$0xf]
        %v5174 = vld [vmem:[%s5164 + $0x3c] sm:$0xff]
        %v5175 = vld [vmem:[%s5164 + $0x44] sm:$0xff]
        %v5176 = vld [vmem:[%s5164 + $0x4c] sm:$0xf]
        %v5177 = vld [vmem:[%s5164 + $0x50] sm:$0xff]
        %v5178 = vld [vmem:[%s5164 + $0x58] sm:$0xff]
        %v5179 = vld [vmem:[%s5164 + $0x60] sm:$0xf]
        %v5180 = vld [vmem:[%s5164 + $0x64] sm:$0xff]
        %v5181 = vld [vmem:[%s5164 + $0x6c] sm:$0xff]
        %v5182 = vld [vmem:[%s5164 + $0x74] sm:$0xf]
        %v5183 = vld [vmem:[%s5164 + $0x78] sm:$0xff]
        %v5184 = vld [vmem:[%s5164 + $0x80] sm:$0xff]
        %v5185 = vld [vmem:[%s5164 + $0x88] sm:$0xf]
        %v5186 = vld [vmem:[%s5164 + $0x8c] sm:$0xff]
        %v5187 = vld [vmem:[%s5164 + $0x94] sm:$0xff]
        %v5188 = vld [vmem:[%s5164 + $0x9c] sm:$0xf]
        %v5189 = vld [vmem:[#allocation3] sm:$0xff]
        %v5190 = vld [vmem:[#allocation3 + $0x8] sm:$0xff]
        %v5191 = vld [vmem:[#allocation3 + $0x10] sm:$0xff]
        %v5192 = vld [vmem:[#allocation3 + $0x18] sm:$0xff]
        %v5193 = vld [vmem:[#allocation3 + $0x20] sm:$0xff]
        %v5194 = vld [vmem:[#allocation3 + $0x28] sm:$0xff]
        %v5195 = vld [vmem:[#allocation3 + $0x30] sm:$0xff]
        %v5196 = vld [vmem:[#allocation3 + $0x38] sm:$0xff]
        %v5197 = vld [vmem:[#allocation3 + $0x40] sm:$0xff]
        %v5198 = vld [vmem:[#allocation3 + $0x48] sm:$0xff]
        %v5199 = vld [vmem:[#allocation3 + $0x50] sm:$0xff]
        %v5200 = vld [vmem:[#allocation3 + $0x58] sm:$0xff]
        %v5201 = vld [vmem:[#allocation3 + $0x60] sm:$0xff]
        %v5202 = vld [vmem:[#allocation3 + $0x68] sm:$0xff]
        %v5203 = vld [vmem:[#allocation3 + $0x70] sm:$0xff]
        %v5204 = vld [vmem:[#allocation3 + $0x78] sm:$0xff]
        %v5205 = vld [vmem:[#allocation3 + $0x80] sm:$0xff]
        %v5206 = vld [vmem:[#allocation3 + $0x88] sm:$0xff]
        %v5207 = vld [vmem:[#allocation3 + $0x90] sm:$0xff]
        %v5208 = vld [vmem:[#allocation3 + $0x98] sm:$0xff]
        %v5209 = vld [vmem:[#allocation3 + $0xa0] sm:$0xff]
        %v5210 = vld [vmem:[#allocation3 + $0xa8] sm:$0xff]
        %v5211 = vld [vmem:[#allocation3 + $0xb0] sm:$0xff]
        %v5212 = vld [vmem:[#allocation3 + $0xb8] sm:$0xff]
        %v5213 = vld [vmem:[#allocation3 + $0xc0] sm:$0xff]
        %v5214 = vld [vmem:[#allocation3 + $0xc8] sm:$0xff]
        %v5215 = vld [vmem:[#allocation3 + $0xd0] sm:$0xff]
        %v5216 = vld [vmem:[#allocation3 + $0xd8] sm:$0xff]
        %v5217 = vld [vmem:[#allocation3 + $0xe0] sm:$0xff]
        %v5218 = vld [vmem:[#allocation3 + $0xe8] sm:$0xff]
        %v5219 = vld [vmem:[#allocation3 + $0xf0] sm:$0xff]
        %v5220 = vld [vmem:[#allocation3 + $0xf8] sm:$0xff]
        %v5221 = vld [vmem:[#allocation3 + $0x100] sm:$0xff]
        %v5222 = vld [vmem:[#allocation3 + $0x108] sm:$0xff]
        %v5223 = vld [vmem:[#allocation3 + $0x110] sm:$0xff]
        %v5224 = vld [vmem:[#allocation3 + $0x118] sm:$0xff]
        %v5225 = vld [vmem:[#allocation3 + $0x120] sm:$0xff]
        %v5226 = vld [vmem:[#allocation3 + $0x128] sm:$0xff]
        %v5227 = vld [vmem:[#allocation3 + $0x130] sm:$0xff]
        %v5228 = vld [vmem:[#allocation3 + $0x138] sm:$0xff]
        %v5229 = vld [vmem:[#allocation3 + $0x140] sm:$0xff]
        %v5230 = vld [vmem:[#allocation3 + $0x148] sm:$0xff]
        %v5231 = vld [vmem:[#allocation3 + $0x150] sm:$0xff]
        %v5232 = vld [vmem:[#allocation3 + $0x158] sm:$0xff]
        %v5233 = vld [vmem:[#allocation3 + $0x160] sm:$0xff]
        %v5234 = vld [vmem:[#allocation3 + $0x168] sm:$0xff]
        %v5235 = vld [vmem:[#allocation3 + $0x170] sm:$0xff]
        %v5236 = vld [vmem:[#allocation3 + $0x178] sm:$0xff]
        %v5237 = vld [vmem:[#allocation3 + $0x180] sm:$0xff]
        %v5238 = vld [vmem:[#allocation3 + $0x188] sm:$0xff]
        %v5239 = vld [vmem:[#allocation3 + $0x190] sm:$0xff]
        %v5240 = vld [vmem:[#allocation3 + $0x198] sm:$0xff]
        %v5241 = vld [vmem:[#allocation3 + $0x1a0] sm:$0xff]
        %v5242 = vld [vmem:[#allocation3 + $0x1a8] sm:$0xff]
        %v5243 = vld [vmem:[#allocation3 + $0x1b0] sm:$0xff]
        %v5244 = vld [vmem:[#allocation3 + $0x1b8] sm:$0xff]
        %v5245 = vld [vmem:[#allocation3 + $0x1c0] sm:$0xff]
        %v5246 = vld [vmem:[#allocation3 + $0x1c8] sm:$0xff]
        %v5247 = vld [vmem:[#allocation3 + $0x1d0] sm:$0xff]
        %v5248 = vld [vmem:[#allocation3 + $0x1d8] sm:$0xff]
        %v5249 = vld [vmem:[#allocation3 + $0x1e0] sm:$0xff]
        %v5250 = vld [vmem:[#allocation3 + $0x1e8] sm:$0xff]
        %v5251 = vld [vmem:[#allocation3 + $0x1f0] sm:$0xff]
        %v5252 = vld [vmem:[#allocation3 + $0x1f8] sm:$0xff]
        %v5253 = vld [vmem:[#allocation3 + $0x200] sm:$0xff]
        %v5254 = vld [vmem:[#allocation3 + $0x208] sm:$0xff]
        %v5255 = vld [vmem:[#allocation3 + $0x210] sm:$0xff]
        %v5256 = vld [vmem:[#allocation3 + $0x218] sm:$0xff]
        %v5257 = vld [vmem:[#allocation3 + $0x220] sm:$0xff]
        %v5258 = vld [vmem:[#allocation3 + $0x228] sm:$0xff]
        %v5259 = vld [vmem:[#allocation3 + $0x230] sm:$0xff]
        %v5260 = vld [vmem:[#allocation3 + $0x238] sm:$0xff]
        %v5261 = vld [vmem:[#allocation3 + $0x240] sm:$0xff]
        %v5262 = vld [vmem:[#allocation3 + $0x248] sm:$0xff]
        %v5263 = vld [vmem:[#allocation3 + $0x250] sm:$0xff]
        %v5264 = vld [vmem:[#allocation3 + $0x258] sm:$0xff]
        %v5265 = vld [vmem:[#allocation3 + $0x260] sm:$0xff]
        %v5266 = vld [vmem:[#allocation3 + $0x268] sm:$0xff]
        %v5267 = vld [vmem:[#allocation3 + $0x270] sm:$0xff]
        %v5268 = vld [vmem:[#allocation3 + $0x278] sm:$0xff]
        %v5269 = vld [vmem:[#allocation3 + $0x280] sm:$0xff]
        %v5270 = vld [vmem:[#allocation3 + $0x288] sm:$0xff]
        %v5271 = vld [vmem:[#allocation3 + $0x290] sm:$0xff]
        %v5272 = vld [vmem:[#allocation3 + $0x298] sm:$0xff]
        %v5273 = vld [vmem:[#allocation3 + $0x2a0] sm:$0xff]
        %v5274 = vld [vmem:[#allocation3 + $0x2a8] sm:$0xff]
        %v5275 = vld [vmem:[#allocation3 + $0x2b0] sm:$0xff]
        %v5276 = vld [vmem:[#allocation3 + $0x2b8] sm:$0xff]
        %v5277 = vld [vmem:[#allocation3 + $0x2c0] sm:$0xff]
        %v5278 = vld [vmem:[#allocation3 + $0x2c8] sm:$0xff]
        %v5279 = vld [vmem:[#allocation3 + $0x2d0] sm:$0xff]
        %v5280 = vld [vmem:[#allocation3 + $0x2d8] sm:$0xff]
        %v5281 = vld [vmem:[#allocation3 + $0x2e0] sm:$0xff]
        %v5282 = vld [vmem:[#allocation3 + $0x2e8] sm:$0xff]
        %v5283 = vld [vmem:[#allocation3 + $0x2f0] sm:$0xff]
        %v5284 = vld [vmem:[#allocation3 + $0x2f8] sm:$0xff]
        %v5285 = vld [vmem:[#allocation3 + $0x300] sm:$0xff]
        %v5286 = vld [vmem:[#allocation3 + $0x308] sm:$0xff]
        %v5287 = vld [vmem:[#allocation3 + $0x310] sm:$0xff]
        %v5288 = vld [vmem:[#allocation3 + $0x318] sm:$0xff]
        %v5289 = vld [vmem:[#allocation3 + $0x320] sm:$0xff]
        %v5290 = vld [vmem:[#allocation3 + $0x328] sm:$0xff]
        %v5291 = vld [vmem:[#allocation3 + $0x330] sm:$0xff]
        %v5292 = vld [vmem:[#allocation3 + $0x338] sm:$0xff]
        %v5293 = vld [vmem:[#allocation3 + $0x340] sm:$0xff]
        %v5294 = vld [vmem:[#allocation3 + $0x348] sm:$0xff]
        %v5295 = vld [vmem:[#allocation3 + $0x350] sm:$0xff]
        %v5296 = vld [vmem:[#allocation3 + $0x358] sm:$0xff]
        %v5321 = vunpack.c.l.b16 %v5165
        %v5322 = vunpack.c.h.b16 %v5165
        %v5323 = vunpack.c.l.b16 %v5166
        %v5324 = vunpack.c.h.b16 %v5166
        %v5325 = vunpack.c.l.b16 %v5167
        %v5326 = vunpack.c.l.b16 %v5168
        %v5327 = vunpack.c.h.b16 %v5168
        %v5328 = vunpack.c.l.b16 %v5169
        %v5329 = vunpack.c.h.b16 %v5169
        %v5330 = vunpack.c.l.b16 %v5170
        %v5331 = vunpack.c.l.b16 %v5171
        %v5332 = vunpack.c.h.b16 %v5171
        %v5333 = vunpack.c.l.b16 %v5172
        %v5334 = vunpack.c.h.b16 %v5172
        %v5335 = vunpack.c.l.b16 %v5173
        %v5336 = vunpack.c.l.b16 %v5174
        %v5337 = vunpack.c.h.b16 %v5174
        %v5338 = vunpack.c.l.b16 %v5175
        %v5339 = vunpack.c.h.b16 %v5175
        %v5340 = vunpack.c.l.b16 %v5176
        %v5341 = vunpack.c.l.b16 %v5177
        %v5342 = vunpack.c.h.b16 %v5177
        %v5343 = vunpack.c.l.b16 %v5178
        %v5344 = vunpack.c.h.b16 %v5178
        %v5345 = vunpack.c.l.b16 %v5179
        %v5346 = vunpack.c.l.b16 %v5180
        %v5347 = vunpack.c.h.b16 %v5180
        %v5348 = vunpack.c.l.b16 %v5181
        %v5349 = vunpack.c.h.b16 %v5181
        %v5350 = vunpack.c.l.b16 %v5182
        %v5351 = vunpack.c.l.b16 %v5183
        %v5352 = vunpack.c.h.b16 %v5183
        %v5353 = vunpack.c.l.b16 %v5184
        %v5354 = vunpack.c.h.b16 %v5184
        %v5355 = vunpack.c.l.b16 %v5185
        %v5356 = vunpack.c.l.b16 %v5186
        %v5357 = vunpack.c.h.b16 %v5186
        %v5358 = vunpack.c.l.b16 %v5187
        %v5359 = vunpack.c.h.b16 %v5187
        %v5360 = vunpack.c.l.b16 %v5188
        %v5361 = vpack.c.b16 %v5326, %v5321
        %v5362 = vpack.c.b16 %v5327, %v5322
        %v5363 = vpack.c.b16 %v5328, %v5323
        %v5364 = vpack.c.b16 %v5329, %v5324
        %v5365 = vpack.c.b16 %v5330, %v5325
        %v5366 = vpack.c.b16 %v5336, %v5331
        %v5367 = vpack.c.b16 %v5337, %v5332
        %v5368 = vpack.c.b16 %v5338, %v5333
        %v5369 = vpack.c.b16 %v5339, %v5334
        %v5370 = vpack.c.b16 %v5340, %v5335
        %v5371 = vpack.c.b16 %v5346, %v5341
        %v5372 = vpack.c.b16 %v5347, %v5342
        %v5373 = vpack.c.b16 %v5348, %v5343
        %v5374 = vpack.c.b16 %v5349, %v5344
        %v5375 = vpack.c.b16 %v5350, %v5345
        %v5376 = vpack.c.b16 %v5356, %v5351
        %v5377 = vpack.c.b16 %v5357, %v5352
        %v5378 = vpack.c.b16 %v5358, %v5353
        %v5379 = vpack.c.b16 %v5359, %v5354
        %v5380 = vpack.c.b16 %v5360, %v5355
        %v5398 = vsel %vm2060, %v5365, 0
        %v5401 = vsel %vm2060, %v5370, 0
        %v5404 = vsel %vm2060, %v5375, 0
        %v5407 = vsel %vm2060, %v5380, 0
        %5409 = vmatprep.subr.bf16.mxu0 %v5190
        %5410 = vmatpush1.bf16.msra.mxu0 %v5189
        %5411 = vmatprep.subr.bf16.mxu0 %v5193
        %5412 = vmatpush1.bf16.msra.mxu0 %v5192
        %5413 = vmatprep.subr.bf16.mxu0 %v5196
        %5414 = vmatpush1.bf16.msra.mxu0 %v5195
        %5415 = vmatprep.subr.bf16.mxu0 %v5199
        %5416 = vmatpush1.bf16.msra.mxu0 %v5198
        %5417 = vmatprep.subr.bf16.mxu0 %v5202
        %5418 = vmatpush1.bf16.msra.mxu0 %v5201
        %5419 = vmatprep.subr.bf16.mxu0 %v5205
        %5420 = vmatpush1.bf16.msra.mxu0 %v5204
        %5421 = vmatprep.subr.bf16.mxu0 %v5208
        %5422 = vmatpush1.bf16.msra.mxu0 %v5207
        %5423 = vmatprep.subr.bf16.mxu0 %v5211
        %5424 = vmatpush1.bf16.msra.mxu0 %v5210
        %5425 = vmatprep.subr.bf16.mxu0 %v5214
        %5426 = vmatpush1.bf16.msra.mxu0 %v5213
        %5427 = vmatprep.subr.bf16.mxu0 %v5217
        %5428 = vmatpush1.bf16.msra.mxu0 %v5216
        %5429 = vmatprep.subr.bf16.mxu0 %v5220
        %5430 = vmatpush1.bf16.msra.mxu0 %v5219
        %5431 = vmatprep.subr.bf16.mxu0 %v5223
        %5432 = vmatpush1.bf16.msra.mxu0 %v5222
        %5433 = vmatprep.subr.bf16.mxu0 %v5226
        %5434 = vmatpush1.bf16.msra.mxu0 %v5225
        %5435 = vmatprep.subr.bf16.mxu0 %v5229
        %5436 = vmatpush1.bf16.msra.mxu0 %v5228
        %5437 = vmatprep.subr.bf16.mxu0 %v5232
        %5438 = vmatpush1.bf16.msra.mxu0 %v5231
        %5439 = vmatprep.subr.bf16.mxu0 %v5235
        %5440 = vmatpush1.bf16.msra.mxu0 %v5234
        %5441 = vmatprep.mubr.bf16.mxu0 %v5362
        %5442 = vmatmul.mubr.bf16.gmra.mrb[0].mxu0 %v5361
        %v5443 = vpop.f32.mrb[0].mxu0
        %v5444 = vadd.f32 0.0, %v5443
        %v5445 = vpop.f32.mrb[0].mxu0
        %v5446 = vadd.f32 0.0, %v5445
        %v5447 = vpop.f32.mrb[0].mxu0
        %v5448 = vadd.f32 0.0, %v5447
        %v5449 = vpop.f32.mrb[0].mxu0
        %v5450 = vadd.f32 0.0, %v5449
        %5451 = vmatprep.mubr.bf16.mxu0 %v5367
        %5452 = vmatmul.mubr.bf16.gmra.mrb[0].mxu0 %v5366
        %v5453 = vpop.f32.mrb[0].mxu0
        %v5454 = vadd.f32 0.0, %v5453
        %v5455 = vpop.f32.mrb[0].mxu0
        %v5456 = vadd.f32 0.0, %v5455
        %v5457 = vpop.f32.mrb[0].mxu0
        %v5458 = vadd.f32 0.0, %v5457
        %v5459 = vpop.f32.mrb[0].mxu0
        %v5460 = vadd.f32 0.0, %v5459
        %5461 = vmatprep.mubr.bf16.mxu0 %v5372
        %5462 = vmatmul.mubr.bf16.gmra.mrb[0].mxu0 %v5371
        %v5463 = vpop.f32.mrb[0].mxu0
        %v5464 = vadd.f32 0.0, %v5463
        %v5465 = vpop.f32.mrb[0].mxu0
        %v5466 = vadd.f32 0.0, %v5465
        %v5467 = vpop.f32.mrb[0].mxu0
        %v5468 = vadd.f32 0.0, %v5467
        %v5469 = vpop.f32.mrb[0].mxu0
        %v5470 = vadd.f32 0.0, %v5469
        %5471 = vmatprep.mubr.bf16.mxu0 %v5377
        %5472 = vmatmul.mubr.bf16.gmra.mrb[0].mxu0 %v5376
        %v5473 = vpop.f32.mrb[0].mxu0
        %v5474 = vadd.f32 0.0, %v5473
        %v5475 = vpop.f32.mrb[0].mxu0
        %v5476 = vadd.f32 0.0, %v5475
        %v5477 = vpop.f32.mrb[0].mxu0
        %v5478 = vadd.f32 0.0, %v5477
        %v5479 = vpop.f32.mrb[0].mxu0
        %v5480 = vadd.f32 0.0, %v5479
        %5481 = vdwg.mxu0
        %5482 = vmatprep.subr.bf16.mxu0 %v5238
        %5483 = vmatpush1.bf16.msra.mxu0 %v5237
        %5484 = vmatprep.subr.bf16.mxu0 %v5241
        %5485 = vmatpush1.bf16.msra.mxu0 %v5240
        %5486 = vmatprep.subr.bf16.mxu0 %v5244
        %5487 = vmatpush1.bf16.msra.mxu0 %v5243
        %5488 = vmatprep.subr.bf16.mxu0 %v5247
        %5489 = vmatpush1.bf16.msra.mxu0 %v5246
        %5490 = vmatprep.subr.bf16.mxu0 %v5250
        %5491 = vmatpush1.bf16.msra.mxu0 %v5249
        %5492 = vmatprep.subr.bf16.mxu0 %v5253
        %5493 = vmatpush1.bf16.msra.mxu0 %v5252
        %5494 = vmatprep.subr.bf16.mxu0 %v5256
        %5495 = vmatpush1.bf16.msra.mxu0 %v5255
        %5496 = vmatprep.subr.bf16.mxu0 %v5259
        %5497 = vmatpush1.bf16.msra.mxu0 %v5258
        %5498 = vmatprep.subr.bf16.mxu0 %v5262
        %5499 = vmatpush1.bf16.msra.mxu0 %v5261
        %5500 = vmatprep.subr.bf16.mxu0 %v5265
        %5501 = vmatpush1.bf16.msra.mxu0 %v5264
        %5502 = vmatprep.subr.bf16.mxu0 %v5268
        %5503 = vmatpush1.bf16.msra.mxu0 %v5267
        %5504 = vmatprep.subr.bf16.mxu0 %v5271
        %5505 = vmatpush1.bf16.msra.mxu0 %v5270
        %5506 = vmatprep.subr.bf16.mxu0 %v5274
        %5507 = vmatpush1.bf16.msra.mxu0 %v5273
        %5508 = vmatprep.subr.bf16.mxu0 %v5277
        %5509 = vmatpush1.bf16.msra.mxu0 %v5276
        %5510 = vmatprep.subr.bf16.mxu0 %v5280
        %5511 = vmatpush1.bf16.msra.mxu0 %v5279
        %5512 = vmatprep.subr.bf16.mxu0 %v5283
        %5513 = vmatpush1.bf16.msra.mxu0 %v5282
        %5514 = vmatprep.mubr.bf16.mxu0 %v5364
        %5515 = vmatmul.mubr.bf16.gmra.mrb[0].mxu0 %v5363
        %v5516 = vpop.f32.mrb[0].mxu0
        %v5517 = vadd.f32 %v5444, %v5516
        %v5518 = vpop.f32.mrb[0].mxu0
        %v5519 = vadd.f32 %v5446, %v5518
        %v5520 = vpop.f32.mrb[0].mxu0
        %v5521 = vadd.f32 %v5448, %v5520
        %v5522 = vpop.f32.mrb[0].mxu0
        %v5523 = vadd.f32 %v5450, %v5522
        %5524 = vmatprep.mubr.bf16.mxu0 %v5369
        %5525 = vmatmul.mubr.bf16.gmra.mrb[0].mxu0 %v5368
        %v5526 = vpop.f32.mrb[0].mxu0
        %v5527 = vadd.f32 %v5454, %v5526
        %v5528 = vpop.f32.mrb[0].mxu0
        %v5529 = vadd.f32 %v5456, %v5528
        %v5530 = vpop.f32.mrb[0].mxu0
        %v5531 = vadd.f32 %v5458, %v5530
        %v5532 = vpop.f32.mrb[0].mxu0
        %v5533 = vadd.f32 %v5460, %v5532
        %5534 = vmatprep.mubr.bf16.mxu0 %v5374
        %5535 = vmatmul.mubr.bf16.gmra.mrb[0].mxu0 %v5373
        %v5536 = vpop.f32.mrb[0].mxu0
        %v5537 = vadd.f32 %v5464, %v5536
        %v5538 = vpop.f32.mrb[0].mxu0
        %v5539 = vadd.f32 %v5466, %v5538
        %v5540 = vpop.f32.mrb[0].mxu0
        %v5541 = vadd.f32 %v5468, %v5540
        %v5542 = vpop.f32.mrb[0].mxu0
        %v5543 = vadd.f32 %v5470, %v5542
        %5544 = vmatprep.mubr.bf16.mxu0 %v5379
        %5545 = vmatmul.mubr.bf16.gmra.mrb[0].mxu0 %v5378
        %v5546 = vpop.f32.mrb[0].mxu0
        %v5547 = vadd.f32 %v5474, %v5546
        %v5548 = vpop.f32.mrb[0].mxu0
        %v5549 = vadd.f32 %v5476, %v5548
        %v5550 = vpop.f32.mrb[0].mxu0
        %v5551 = vadd.f32 %v5478, %v5550
        %v5552 = vpop.f32.mrb[0].mxu0
        %v5553 = vadd.f32 %v5480, %v5552
        %5554 = vdwg.mxu0
        %5555 = vmatprep.subr.bf16.mxu0 %v5286
        %5556 = vmatpush1.bf16.msra.mxu0 %v5285
        %5557 = vmatprep.subr.bf16.mxu0 %v5289
        %5558 = vmatpush1.bf16.msra.mxu0 %v5288
        %5559 = vmatprep.subr.bf16.mxu0 %v5292
        %5560 = vmatpush1.bf16.msra.mxu0 %v5291
        %5561 = vmatprep.subr.bf16.mxu0 %v5295
        %5562 = vmatpush1.bf16.msra.mxu0 %v5294
        %5563 = vmatprep.subr.bf16.mxu0 0
        %5564 = vmatpush1.bf16.msra.mxu0 0
        %5565 = vmatprep.subr.bf16.mxu0 0
        %5566 = vmatpush1.bf16.msra.mxu0 0
        %5567 = vmatprep.subr.bf16.mxu0 0
        %5568 = vmatpush1.bf16.msra.mxu0 0
        %5569 = vmatprep.subr.bf16.mxu0 0
        %5570 = vmatpush1.bf16.msra.mxu0 0
        %5571 = vmatprep.subr.bf16.mxu0 0
        %5572 = vmatpush1.bf16.msra.mxu0 0
        %5573 = vmatprep.subr.bf16.mxu0 0
        %5574 = vmatpush1.bf16.msra.mxu0 0
        %5575 = vmatprep.subr.bf16.mxu0 0
        %5576 = vmatpush1.bf16.msra.mxu0 0
        %5577 = vmatprep.subr.bf16.mxu0 0
        %5578 = vmatpush1.bf16.msra.mxu0 0
        %5579 = vmatprep.subr.bf16.mxu0 0
        %5580 = vmatpush1.bf16.msra.mxu0 0
        %5581 = vmatprep.subr.bf16.mxu0 0
        %5582 = vmatpush1.bf16.msra.mxu0 0
        %5583 = vmatprep.subr.bf16.mxu0 0
        %5584 = vmatpush1.bf16.msra.mxu0 0
        %5585 = vmatprep.subr.bf16.mxu0 0
        %5586 = vmatpush1.bf16.msra.mxu0 0
        %5587 = vmatprep.mubr.bf16.mxu0 0
        %5588 = vmatmul.mubr.bf16.gmra.mrb[0].mxu0 %v5398
        %v5589 = vpop.f32.mrb[0].mxu0
        %v5590 = vadd.f32 %v5517, %v5589
        %v5591 = vpop.f32.mrb[0].mxu0
        %v5592 = vadd.f32 %v5519, %v5591
        %v5593 = vpop.f32.mrb[0].mxu0
        %v5594 = vadd.f32 %v5521, %v5593
        %v5595 = vpop.f32.mrb[0].mxu0
        %v5596 = vadd.f32 %v5523, %v5595
        %5597 = vmatprep.mubr.bf16.mxu0 0
        %5598 = vmatmul.mubr.bf16.gmra.mrb[0].mxu0 %v5401
        %v5599 = vpop.f32.mrb[0].mxu0
        %v5600 = vadd.f32 %v5527, %v5599
        %v5601 = vpop.f32.mrb[0].mxu0
        %v5602 = vadd.f32 %v5529, %v5601
        %v5603 = vpop.f32.mrb[0].mxu0
        %v5604 = vadd.f32 %v5531, %v5603
        %v5605 = vpop.f32.mrb[0].mxu0
        %v5606 = vadd.f32 %v5533, %v5605
        %5607 = vmatprep.mubr.bf16.mxu0 0
        %5608 = vmatmul.mubr.bf16.gmra.mrb[0].mxu0 %v5404
        %v5609 = vpop.f32.mrb[0].mxu0
        %v5610 = vadd.f32 %v5537, %v5609
        %v5611 = vpop.f32.mrb[0].mxu0
        %v5612 = vadd.f32 %v5539, %v5611
        %v5613 = vpop.f32.mrb[0].mxu0
        %v5614 = vadd.f32 %v5541, %v5613
        %v5615 = vpop.f32.mrb[0].mxu0
        %v5616 = vadd.f32 %v5543, %v5615
        %5617 = vmatprep.mubr.bf16.mxu0 0
        %5618 = vmatmul.mubr.bf16.gmra.mrb[0].mxu0 %v5407
        %v5619 = vpop.f32.mrb[0].mxu0
        %v5620 = vadd.f32 %v5547, %v5619
        %v5621 = vpop.f32.mrb[0].mxu0
        %v5622 = vadd.f32 %v5549, %v5621
        %v5623 = vpop.f32.mrb[0].mxu0
        %v5624 = vadd.f32 %v5551, %v5623
        %v5625 = vpop.f32.mrb[0].mxu0
        %v5626 = vadd.f32 %v5553, %v5625
        %5627 = vdwg.mxu0
        %5628 = vmatprep.subr.bf16.mxu0 0
        %5629 = vmatpush1.bf16.msra.mxu0 %v5191
        %5630 = vmatprep.subr.bf16.mxu0 0
        %5631 = vmatpush1.bf16.msra.mxu0 %v5194
        %5632 = vmatprep.subr.bf16.mxu0 0
        %5633 = vmatpush1.bf16.msra.mxu0 %v5197
        %5634 = vmatprep.subr.bf16.mxu0 0
        %5635 = vmatpush1.bf16.msra.mxu0 %v5200
        %5636 = vmatprep.subr.bf16.mxu0 0
        %5637 = vmatpush1.bf16.msra.mxu0 %v5203
        %5638 = vmatprep.subr.bf16.mxu0 0
        %5639 = vmatpush1.bf16.msra.mxu0 %v5206
        %5640 = vmatprep.subr.bf16.mxu0 0
        %5641 = vmatpush1.bf16.msra.mxu0 %v5209
        %5642 = vmatprep.subr.bf16.mxu0 0
        %5643 = vmatpush1.bf16.msra.mxu0 %v5212
        %5644 = vmatprep.subr.bf16.mxu0 0
        %5645 = vmatpush1.bf16.msra.mxu0 %v5215
        %5646 = vmatprep.subr.bf16.mxu0 0
        %5647 = vmatpush1.bf16.msra.mxu0 %v5218
        %5648 = vmatprep.subr.bf16.mxu0 0
        %5649 = vmatpush1.bf16.msra.mxu0 %v5221
        %5650 = vmatprep.subr.bf16.mxu0 0
        %5651 = vmatpush1.bf16.msra.mxu0 %v5224
        %5652 = vmatprep.subr.bf16.mxu0 0
        %5653 = vmatpush1.bf16.msra.mxu0 %v5227
        %5654 = vmatprep.subr.bf16.mxu0 0
        %5655 = vmatpush1.bf16.msra.mxu0 %v5230
        %5656 = vmatprep.subr.bf16.mxu0 0
        %5657 = vmatpush1.bf16.msra.mxu0 %v5233
        %5658 = vmatprep.subr.bf16.mxu0 0
        %5659 = vmatpush1.bf16.msra.mxu0 %v5236
        %5660 = vmatprep.mubr.bf16.mxu0 %v5362
        %5661 = vmatmul.mubr.bf16.gmra.mrb[0].mxu0 %v5361
        %v5662 = vpop.f32.mrb[0].mxu0
        %v5663 = vadd.f32 0.0, %v5662
        %v5664 = vpop.f32.mrb[0].mxu0
        %v5665 = vpop.f32.mrb[0].mxu0
        %v5666 = vadd.f32 0.0, %v5665
        %v5667 = vpop.f32.mrb[0].mxu0
        %5668 = vmatprep.mubr.bf16.mxu0 %v5367
        %5669 = vmatmul.mubr.bf16.gmra.mrb[0].mxu0 %v5366
        %v5670 = vpop.f32.mrb[0].mxu0
        %v5671 = vadd.f32 0.0, %v5670
        %v5672 = vpop.f32.mrb[0].mxu0
        %v5673 = vpop.f32.mrb[0].mxu0
        %v5674 = vadd.f32 0.0, %v5673
        %v5675 = vpop.f32.mrb[0].mxu0
        %5676 = vmatprep.mubr.bf16.mxu0 %v5372
        %5677 = vmatmul.mubr.bf16.gmra.mrb[0].mxu0 %v5371
        %v5678 = vpop.f32.mrb[0].mxu0
        %v5679 = vadd.f32 0.0, %v5678
        %v5680 = vpop.f32.mrb[0].mxu0
        %v5681 = vpop.f32.mrb[0].mxu0
        %v5682 = vadd.f32 0.0, %v5681
        %v5683 = vpop.f32.mrb[0].mxu0
        %5684 = vmatprep.mubr.bf16.mxu0 %v5377
        %5685 = vmatmul.mubr.bf16.gmra.mrb[0].mxu0 %v5376
        %v5686 = vpop.f32.mrb[0].mxu0
        %v5687 = vadd.f32 0.0, %v5686
        %v5688 = vpop.f32.mrb[0].mxu0
        %v5689 = vpop.f32.mrb[0].mxu0
        %v5690 = vadd.f32 0.0, %v5689
        %v5691 = vpop.f32.mrb[0].mxu0
        %5692 = vdwg.mxu0
        %5693 = vmatprep.subr.bf16.mxu0 0
        %5694 = vmatpush1.bf16.msra.mxu0 %v5239
        %5695 = vmatprep.subr.bf16.mxu0 0
        %5696 = vmatpush1.bf16.msra.mxu0 %v5242
        %5697 = vmatprep.subr.bf16.mxu0 0
        %5698 = vmatpush1.bf16.msra.mxu0 %v5245
        %5699 = vmatprep.subr.bf16.mxu0 0
        %5700 = vmatpush1.bf16.msra.mxu0 %v5248
        %5701 = vmatprep.subr.bf16.mxu0 0
        %5702 = vmatpush1.bf16.msra.mxu0 %v5251
        %5703 = vmatprep.subr.bf16.mxu0 0
        %5704 = vmatpush1.bf16.msra.mxu0 %v5254
        %5705 = vmatprep.subr.bf16.mxu0 0
        %5706 = vmatpush1.bf16.msra.mxu0 %v5257
        %5707 = vmatprep.subr.bf16.mxu0 0
        %5708 = vmatpush1.bf16.msra.mxu0 %v5260
        %5709 = vmatprep.subr.bf16.mxu0 0
        %5710 = vmatpush1.bf16.msra.mxu0 %v5263
        %5711 = vmatprep.subr.bf16.mxu0 0
        %5712 = vmatpush1.bf16.msra.mxu0 %v5266
        %5713 = vmatprep.subr.bf16.mxu0 0
        %5714 = vmatpush1.bf16.msra.mxu0 %v5269
        %5715 = vmatprep.subr.bf16.mxu0 0
        %5716 = vmatpush1.bf16.msra.mxu0 %v5272
        %5717 = vmatprep.subr.bf16.mxu0 0
        %5718 = vmatpush1.bf16.msra.mxu0 %v5275
        %5719 = vmatprep.subr.bf16.mxu0 0
        %5720 = vmatpush1.bf16.msra.mxu0 %v5278
        %5721 = vmatprep.subr.bf16.mxu0 0
        %5722 = vmatpush1.bf16.msra.mxu0 %v5281
        %5723 = vmatprep.subr.bf16.mxu0 0
        %5724 = vmatpush1.bf16.msra.mxu0 %v5284
        %5725 = vmatprep.mubr.bf16.mxu0 %v5364
        %5726 = vmatmul.mubr.bf16.gmra.mrb[0].mxu0 %v5363
        %v5727 = vpop.f32.mrb[0].mxu0
        %v5728 = vadd.f32 %v5663, %v5727
        %v5729 = vpop.f32.mrb[0].mxu0
        %v5730 = vpop.f32.mrb[0].mxu0
        %v5731 = vadd.f32 %v5666, %v5730
        %v5732 = vpop.f32.mrb[0].mxu0
        %5733 = vmatprep.mubr.bf16.mxu0 %v5369
        %5734 = vmatmul.mubr.bf16.gmra.mrb[0].mxu0 %v5368
        %v5735 = vpop.f32.mrb[0].mxu0
        %v5736 = vadd.f32 %v5671, %v5735
        %v5737 = vpop.f32.mrb[0].mxu0
        %v5738 = vpop.f32.mrb[0].mxu0
        %v5739 = vadd.f32 %v5674, %v5738
        %v5740 = vpop.f32.mrb[0].mxu0
        %5741 = vmatprep.mubr.bf16.mxu0 %v5374
        %5742 = vmatmul.mubr.bf16.gmra.mrb[0].mxu0 %v5373
        %v5743 = vpop.f32.mrb[0].mxu0
        %v5744 = vadd.f32 %v5679, %v5743
        %v5745 = vpop.f32.mrb[0].mxu0
        %v5746 = vpop.f32.mrb[0].mxu0
        %v5747 = vadd.f32 %v5682, %v5746
        %v5748 = vpop.f32.mrb[0].mxu0
        %5749 = vmatprep.mubr.bf16.mxu0 %v5379
        %5750 = vmatmul.mubr.bf16.gmra.mrb[0].mxu0 %v5378
        %v5751 = vpop.f32.mrb[0].mxu0
        %v5752 = vadd.f32 %v5687, %v5751
        %v5753 = vpop.f32.mrb[0].mxu0
        %v5754 = vpop.f32.mrb[0].mxu0
        %v5755 = vadd.f32 %v5690, %v5754
        %v5756 = vpop.f32.mrb[0].mxu0
        %5757 = vdwg.mxu0
        %5758 = vmatprep.subr.bf16.mxu0 0
        %5759 = vmatpush1.bf16.msra.mxu0 %v5287
        %5760 = vmatprep.subr.bf16.mxu0 0
        %5761 = vmatpush1.bf16.msra.mxu0 %v5290
        %5762 = vmatprep.subr.bf16.mxu0 0
        %5763 = vmatpush1.bf16.msra.mxu0 %v5293
        %5764 = vmatprep.subr.bf16.mxu0 0
        %5765 = vmatpush1.bf16.msra.mxu0 %v5296
        %5766 = vmatprep.subr.bf16.mxu0 0
        %5767 = vmatpush1.bf16.msra.mxu0 0
        %5768 = vmatprep.subr.bf16.mxu0 0
        %5769 = vmatpush1.bf16.msra.mxu0 0
        %5770 = vmatprep.subr.bf16.mxu0 0
        %5771 = vmatpush1.bf16.msra.mxu0 0
        %5772 = vmatprep.subr.bf16.mxu0 0
        %5773 = vmatpush1.bf16.msra.mxu0 0
        %5774 = vmatprep.subr.bf16.mxu0 0
        %5775 = vmatpush1.bf16.msra.mxu0 0
        %5776 = vmatprep.subr.bf16.mxu0 0
        %5777 = vmatpush1.bf16.msra.mxu0 0
        %5778 = vmatprep.subr.bf16.mxu0 0
        %5779 = vmatpush1.bf16.msra.mxu0 0
        %5780 = vmatprep.subr.bf16.mxu0 0
        %5781 = vmatpush1.bf16.msra.mxu0 0
        %5782 = vmatprep.subr.bf16.mxu0 0
        %5783 = vmatpush1.bf16.msra.mxu0 0
        %5784 = vmatprep.subr.bf16.mxu0 0
        %5785 = vmatpush1.bf16.msra.mxu0 0
        %5786 = vmatprep.subr.bf16.mxu0 0
        %5787 = vmatpush1.bf16.msra.mxu0 0
        %5788 = vmatprep.subr.bf16.mxu0 0
        %5789 = vmatpush1.bf16.msra.mxu0 0
        %5790 = vmatprep.mubr.bf16.mxu0 0
        %5791 = vmatmul.mubr.bf16.gmra.mrb[0].mxu0 %v5398
        %v5792 = vpop.f32.mrb[0].mxu0
        %v5793 = vadd.f32 %v5728, %v5792
        %v5794 = vpop.f32.mrb[0].mxu0
        %v5795 = vpop.f32.mrb[0].mxu0
        %v5796 = vadd.f32 %v5731, %v5795
        %v5797 = vpop.f32.mrb[0].mxu0
        %5798 = vmatprep.mubr.bf16.mxu0 0
        %5799 = vmatmul.mubr.bf16.gmra.mrb[0].mxu0 %v5401
        %v5800 = vpop.f32.mrb[0].mxu0
        %v5801 = vadd.f32 %v5736, %v5800
        %v5802 = vpop.f32.mrb[0].mxu0
        %v5803 = vpop.f32.mrb[0].mxu0
        %v5804 = vadd.f32 %v5739, %v5803
        %v5805 = vpop.f32.mrb[0].mxu0
        %5806 = vmatprep.mubr.bf16.mxu0 0
        %5807 = vmatmul.mubr.bf16.gmra.mrb[0].mxu0 %v5404
        %v5808 = vpop.f32.mrb[0].mxu0
        %v5809 = vadd.f32 %v5744, %v5808
        %v5810 = vpop.f32.mrb[0].mxu0
        %v5811 = vpop.f32.mrb[0].mxu0
        %v5812 = vadd.f32 %v5747, %v5811
        %v5813 = vpop.f32.mrb[0].mxu0
        %5814 = vmatprep.mubr.bf16.mxu0 0
        %5815 = vmatmul.mubr.bf16.gmra.mrb[0].mxu0 %v5407
        %v5816 = vpop.f32.mrb[0].mxu0
        %v5817 = vadd.f32 %v5752, %v5816
        %v5818 = vpop.f32.mrb[0].mxu0
        %v5819 = vpop.f32.mrb[0].mxu0
        %v5820 = vadd.f32 %v5755, %v5819
        %v5821 = vpop.f32.mrb[0].mxu0
        %5822 = vdwg.mxu0
        %s5823 = scalar_lea.vmem [#allocation14], 128
        %v5824 = vld [vmem:[%s5823] sm:$0xff]
        %v5825 = vld [vmem:[%s5823 + $0x8] sm:$0xff]
        %v5826 = vld [vmem:[%s5823 + $0x10] sm:$0xff]
        %v5827 = vld [vmem:[%s5823 + $0x18] sm:$0xff]
        %v5828 = vld [vmem:[%s5823 + $0x20] sm:$0xff]
        %v5829 = vld [vmem:[%s5823 + $0x28] sm:$0xff]
        %v5830 = vld [vmem:[%s5823 + $0x30] sm:$0xff]
        %v5831 = vld [vmem:[%s5823 + $0x38] sm:$0xff]
        %5833 = vset.pattern.permute.xlu0 0
        %5834 = vperm.xlu0 %5833, %v5824
        %v5835 = vpop.permute.xlu0 %5834
        %5838 = vset.pattern.permute.xlu0 0
        %5839 = vperm.xlu0 %5838, %v5825
        %v5840 = vpop.permute.xlu0 %5839
        %5843 = vset.pattern.permute.xlu0 0
        %5844 = vperm.xlu0 %5843, %v5826
        %v5845 = vpop.permute.xlu0 %5844
        %5848 = vset.pattern.permute.xlu0 0
        %5849 = vperm.xlu0 %5848, %v5827
        %v5850 = vpop.permute.xlu0 %5849
        %5853 = vset.pattern.permute.xlu0 0
        %5854 = vperm.xlu0 %5853, %v5828
        %v5855 = vpop.permute.xlu0 %5854
        %5858 = vset.pattern.permute.xlu0 0
        %5859 = vperm.xlu0 %5858, %v5829
        %v5860 = vpop.permute.xlu0 %5859
        %5863 = vset.pattern.permute.xlu0 0
        %5864 = vperm.xlu0 %5863, %v5830
        %v5865 = vpop.permute.xlu0 %5864
        %5868 = vset.pattern.permute.xlu0 0
        %5869 = vperm.xlu0 %5868, %v5831
        %v5870 = vpop.permute.xlu0 %5869
        %v5872 = vmul.f32 %v5590, %v5835
        %v5873 = vmul.f32 %v5592, %v5835
        %v5874 = vmul.f32 %v5793, %v5835
        %v5875 = vmul.f32 %v5594, %v5840
        %v5876 = vmul.f32 %v5596, %v5840
        %v5877 = vmul.f32 %v5796, %v5840
        %v5878 = vmul.f32 %v5600, %v5845
        %v5879 = vmul.f32 %v5602, %v5845
        %v5880 = vmul.f32 %v5801, %v5845
        %v5881 = vmul.f32 %v5604, %v5850
        %v5882 = vmul.f32 %v5606, %v5850
        %v5883 = vmul.f32 %v5804, %v5850
        %v5884 = vmul.f32 %v5610, %v5855
        %v5885 = vmul.f32 %v5612, %v5855
        %v5886 = vmul.f32 %v5809, %v5855
        %v5887 = vmul.f32 %v5614, %v5860
        %v5888 = vmul.f32 %v5616, %v5860
        %v5889 = vmul.f32 %v5812, %v5860
        %v5890 = vmul.f32 %v5620, %v5865
        %v5891 = vmul.f32 %v5622, %v5865
        %v5892 = vmul.f32 %v5817, %v5865
        %v5893 = vmul.f32 %v5624, %v5870
        %v5894 = vmul.f32 %v5626, %v5870
        %v5895 = vmul.f32 %v5820, %v5870
        %s5896 = scalar_lea.vmem [#allocation15], 128
        %v5897 = vld [vmem:[%s5896] sm:$0xff]
        %v5898 = vld [vmem:[%s5896 + $0x8] sm:$0xff]
        %v5899 = vld [vmem:[%s5896 + $0x10] sm:$0xff]
        %v5900 = vld [vmem:[%s5896 + $0x18] sm:$0xff]
        %v5901 = vld [vmem:[%s5896 + $0x20] sm:$0xff]
        %v5902 = vld [vmem:[%s5896 + $0x28] sm:$0xff]
        %v5903 = vld [vmem:[%s5896 + $0x30] sm:$0xff]
        %v5904 = vld [vmem:[%s5896 + $0x38] sm:$0xff]
        %5906 = vset.pattern.permute.xlu0 0
        %5907 = vperm.xlu0 %5906, %v5897
        %v5908 = vpop.permute.xlu0 %5907
        %5911 = vset.pattern.permute.xlu0 0
        %5912 = vperm.xlu0 %5911, %v5898
        %v5913 = vpop.permute.xlu0 %5912
        %5916 = vset.pattern.permute.xlu0 0
        %5917 = vperm.xlu0 %5916, %v5899
        %v5918 = vpop.permute.xlu0 %5917
        %5921 = vset.pattern.permute.xlu0 0
        %5922 = vperm.xlu0 %5921, %v5900
        %v5923 = vpop.permute.xlu0 %5922
        %5926 = vset.pattern.permute.xlu0 0
        %5927 = vperm.xlu0 %5926, %v5901
        %v5928 = vpop.permute.xlu0 %5927
        %5931 = vset.pattern.permute.xlu0 0
        %5932 = vperm.xlu0 %5931, %v5902
        %v5933 = vpop.permute.xlu0 %5932
        %5936 = vset.pattern.permute.xlu0 0
        %5937 = vperm.xlu0 %5936, %v5903
        %v5938 = vpop.permute.xlu0 %5937
        %5941 = vset.pattern.permute.xlu0 0
        %5942 = vperm.xlu0 %5941, %v5904
        %v5943 = vpop.permute.xlu0 %5942
        %v5945 = vadd.f32 %v5872, %v5908
        %v5946 = vadd.f32 %v5873, %v5908
        %v5947 = vadd.f32 %v5874, %v5908
        %v5948 = vadd.f32 %v5875, %v5913
        %v5949 = vadd.f32 %v5876, %v5913
        %v5950 = vadd.f32 %v5877, %v5913
        %v5951 = vadd.f32 %v5878, %v5918
        %v5952 = vadd.f32 %v5879, %v5918
        %v5953 = vadd.f32 %v5880, %v5918
        %v5954 = vadd.f32 %v5881, %v5923
        %v5955 = vadd.f32 %v5882, %v5923
        %v5956 = vadd.f32 %v5883, %v5923
        %v5957 = vadd.f32 %v5884, %v5928
        %v5958 = vadd.f32 %v5885, %v5928
        %v5959 = vadd.f32 %v5886, %v5928
        %v5960 = vadd.f32 %v5887, %v5933
        %v5961 = vadd.f32 %v5888, %v5933
        %v5962 = vadd.f32 %v5889, %v5933
        %v5963 = vadd.f32 %v5890, %v5938
        %v5964 = vadd.f32 %v5891, %v5938
        %v5965 = vadd.f32 %v5892, %v5938
        %v5966 = vadd.f32 %v5893, %v5943
        %v5967 = vadd.f32 %v5894, %v5943
        %v5968 = vadd.f32 %v5895, %v5943
        %vm5969 = vcmp.gt.f32.partialorder %v5945, 0.0
        %vm5970 = vcmp.gt.f32.partialorder %v5946, 0.0
        %vm5971 = vcmp.gt.f32.partialorder %v5947, 0.0
        %vm5972 = vcmp.gt.f32.partialorder %v5948, 0.0
        %vm5973 = vcmp.gt.f32.partialorder %v5949, 0.0
        %vm5974 = vcmp.gt.f32.partialorder %v5950, 0.0
        %vm5975 = vcmp.gt.f32.partialorder %v5951, 0.0
        %vm5976 = vcmp.gt.f32.partialorder %v5952, 0.0
        %vm5977 = vcmp.gt.f32.partialorder %v5953, 0.0
        %vm5978 = vcmp.gt.f32.partialorder %v5954, 0.0
        %vm5979 = vcmp.gt.f32.partialorder %v5955, 0.0
        %vm5980 = vcmp.gt.f32.partialorder %v5956, 0.0
        %vm5981 = vcmp.gt.f32.partialorder %v5957, 0.0
        %vm5982 = vcmp.gt.f32.partialorder %v5958, 0.0
        %vm5983 = vcmp.gt.f32.partialorder %v5959, 0.0
        %vm5984 = vcmp.gt.f32.partialorder %v5960, 0.0
        %vm5985 = vcmp.gt.f32.partialorder %v5961, 0.0
        %vm5986 = vcmp.gt.f32.partialorder %v5962, 0.0
        %vm5987 = vcmp.gt.f32.partialorder %v5963, 0.0
        %vm5988 = vcmp.gt.f32.partialorder %v5964, 0.0
        %vm5989 = vcmp.gt.f32.partialorder %v5965, 0.0
        %vm5990 = vcmp.gt.f32.partialorder %v5966, 0.0
        %vm5991 = vcmp.gt.f32.partialorder %v5967, 0.0
        %vm5992 = vcmp.gt.f32.partialorder %v5968, 0.0
        %v5993 = vmul.f32 %v5945, 0.01
        %v5994 = vmul.f32 %v5946, 0.01
        %v5995 = vmul.f32 %v5947, 0.01
        %v5996 = vmul.f32 %v5948, 0.01
        %v5997 = vmul.f32 %v5949, 0.01
        %v5998 = vmul.f32 %v5950, 0.01
        %v5999 = vmul.f32 %v5951, 0.01
        %v6000 = vmul.f32 %v5952, 0.01
        %v6001 = vmul.f32 %v5953, 0.01
        %v6002 = vmul.f32 %v5954, 0.01
        %v6003 = vmul.f32 %v5955, 0.01
        %v6004 = vmul.f32 %v5956, 0.01
        %v6005 = vmul.f32 %v5957, 0.01
        %v6006 = vmul.f32 %v5958, 0.01
        %v6007 = vmul.f32 %v5959, 0.01
        %v6008 = vmul.f32 %v5960, 0.01
        %v6009 = vmul.f32 %v5961, 0.01
        %v6010 = vmul.f32 %v5962, 0.01
        %v6011 = vmul.f32 %v5963, 0.01
        %v6012 = vmul.f32 %v5964, 0.01
        %v6013 = vmul.f32 %v5965, 0.01
        %v6014 = vmul.f32 %v5966, 0.01
        %v6015 = vmul.f32 %v5967, 0.01
        %v6016 = vmul.f32 %v5968, 0.01
        %v6017 = vsel %vm5969, %v5945, %v5993
        %v6018 = vsel %vm5970, %v5946, %v5994
        %v6019 = vsel %vm5971, %v5947, %v5995
        %v6020 = vsel %vm5972, %v5948, %v5996
        %v6021 = vsel %vm5973, %v5949, %v5997
        %v6022 = vsel %vm5974, %v5950, %v5998
        %v6023 = vsel %vm5975, %v5951, %v5999
        %v6024 = vsel %vm5976, %v5952, %v6000
        %v6025 = vsel %vm5977, %v5953, %v6001
        %v6026 = vsel %vm5978, %v5954, %v6002
        %v6027 = vsel %vm5979, %v5955, %v6003
        %v6028 = vsel %vm5980, %v5956, %v6004
        %v6029 = vsel %vm5981, %v5957, %v6005
        %v6030 = vsel %vm5982, %v5958, %v6006
        %v6031 = vsel %vm5983, %v5959, %v6007
        %v6032 = vsel %vm5984, %v5960, %v6008
        %v6033 = vsel %vm5985, %v5961, %v6009
        %v6034 = vsel %vm5986, %v5962, %v6010
        %v6035 = vsel %vm5987, %v5963, %v6011
        %v6036 = vsel %vm5988, %v5964, %v6012
        %v6037 = vsel %vm5989, %v5965, %v6013
        %v6038 = vsel %vm5990, %v5966, %v6014
        %v6039 = vsel %vm5991, %v5967, %v6015
        %v6040 = vsel %vm5992, %v5968, %v6016
        %v6041 = vmul.f32 %v6017, %v1024
        %v6042 = vmul.f32 %v6018, %v1028
        %v6043 = vmul.f32 %v6019, %v1032
        %v6044 = vmul.f32 %v6020, %v1024
        %v6045 = vmul.f32 %v6021, %v1028
        %v6046 = vmul.f32 %v6022, %v1032
        %v6047 = vmul.f32 %v6023, %v1024
        %v6048 = vmul.f32 %v6024, %v1028
        %v6049 = vmul.f32 %v6025, %v1032
        %v6050 = vmul.f32 %v6026, %v1024
        %v6051 = vmul.f32 %v6027, %v1028
        %v6052 = vmul.f32 %v6028, %v1032
        %v6053 = vmul.f32 %v6029, %v1024
        %v6054 = vmul.f32 %v6030, %v1028
        %v6055 = vmul.f32 %v6031, %v1032
        %v6056 = vmul.f32 %v6032, %v1024
        %v6057 = vmul.f32 %v6033, %v1028
        %v6058 = vmul.f32 %v6034, %v1032
        %v6059 = vmul.f32 %v6035, %v1024
        %v6060 = vmul.f32 %v6036, %v1028
        %v6061 = vmul.f32 %v6037, %v1032
        %v6062 = vmul.f32 %v6038, %v1024
        %v6063 = vmul.f32 %v6039, %v1028
        %v6064 = vmul.f32 %v6040, %v1032
        %v6065 = vpack.c.bf16 %v6044, %v6041
        %v6066 = vpack.c.bf16 %v6045, %v6042
        %v6067 = vpack.c.bf16 %v6046, %v6043
        %v6068 = vpack.c.bf16 %v6050, %v6047
        %v6069 = vpack.c.bf16 %v6051, %v6048
        %v6070 = vpack.c.bf16 %v6052, %v6049
        %v6071 = vpack.c.bf16 %v6056, %v6053
        %v6072 = vpack.c.bf16 %v6057, %v6054
        %v6073 = vpack.c.bf16 %v6058, %v6055
        %v6074 = vpack.c.bf16 %v6062, %v6059
        %v6075 = vpack.c.bf16 %v6063, %v6060
        %v6076 = vpack.c.bf16 %v6064, %v6061
        %6077 = vst [vmem:[#allocation5 + $0x8] sm:$0xff] %v6065
        %6078 = vst [vmem:[#allocation5 + $0x10] sm:$0xff] %v6066
        %6079 = vst.msk [vmem:[#allocation5 + $0x18] sm:$0xff] %vm386, %v6067
        %6080 = vst [vmem:[#allocation5 + $0x30] sm:$0xff] %v6068
        %6081 = vst [vmem:[#allocation5 + $0x38] sm:$0xff] %v6069
        %6082 = vst.msk [vmem:[#allocation5 + $0x40] sm:$0xff] %vm386, %v6070
        %6083 = vst [vmem:[#allocation5 + $0x58] sm:$0xff] %v6071
        %6084 = vst [vmem:[#allocation5 + $0x60] sm:$0xff] %v6072
        %6085 = vst.msk [vmem:[#allocation5 + $0x68] sm:$0xff] %vm386, %v6073
        %6086 = vst [vmem:[#allocation5 + $0x80] sm:$0xff] %v6074
        %6087 = vst [vmem:[#allocation5 + $0x88] sm:$0xff] %v6075
        %6088 = vst.msk [vmem:[#allocation5 + $0x90] sm:$0xff] %vm386, %v6076
        %v6089 = vld [vmem:[#allocation5] sm:$0xff]
        %v6090 = vld [vmem:[#allocation5 + $0x8] sm:$0xff]
        %v6091 = vld [vmem:[#allocation5 + $0x10] sm:$0xff]
        %v6092 = vld [vmem:[#allocation5 + $0x18] sm:$0xff]
        %v6093 = vld [vmem:[#allocation5 + $0x28] sm:$0xff]
        %v6094 = vld [vmem:[#allocation5 + $0x30] sm:$0xff]
        %v6095 = vld [vmem:[#allocation5 + $0x38] sm:$0xff]
        %v6096 = vld [vmem:[#allocation5 + $0x40] sm:$0xff]
        %v6097 = vld [vmem:[#allocation5 + $0x50] sm:$0xff]
        %v6098 = vld [vmem:[#allocation5 + $0x58] sm:$0xff]
        %v6099 = vld [vmem:[#allocation5 + $0x60] sm:$0xff]
        %v6100 = vld [vmem:[#allocation5 + $0x68] sm:$0xff]
        %v6101 = vld [vmem:[#allocation5 + $0x78] sm:$0xff]
        %v6102 = vld [vmem:[#allocation5 + $0x80] sm:$0xff]
        %v6103 = vld [vmem:[#allocation5 + $0x88] sm:$0xff]
        %v6104 = vld [vmem:[#allocation5 + $0x90] sm:$0xff]
        %6121 = vrot.lane.b32.xlu0 %v6089, 19
        %v6122 = vpop.permute.xlu0 %6121
        %6123 = vrot.lane.b32.xlu0 %v6090, 19
        %v6124 = vpop.permute.xlu0 %6123
        %6125 = vrot.lane.b32.xlu0 %v6091, 19
        %v6126 = vpop.permute.xlu0 %6125
        %6127 = vrot.lane.b32.xlu0 %v6092, 19
        %v6128 = vpop.permute.xlu0 %6127
        %6129 = vrot.lane.b32.xlu0 %v6093, 19
        %v6130 = vpop.permute.xlu0 %6129
        %6131 = vrot.lane.b32.xlu0 %v6094, 19
        %v6132 = vpop.permute.xlu0 %6131
        %6133 = vrot.lane.b32.xlu0 %v6095, 19
        %v6134 = vpop.permute.xlu0 %6133
        %6135 = vrot.lane.b32.xlu0 %v6096, 19
        %v6136 = vpop.permute.xlu0 %6135
        %6137 = vrot.lane.b32.xlu0 %v6097, 19
        %v6138 = vpop.permute.xlu0 %6137
        %6139 = vrot.lane.b32.xlu0 %v6098, 19
        %v6140 = vpop.permute.xlu0 %6139
        %6141 = vrot.lane.b32.xlu0 %v6099, 19
        %v6142 = vpop.permute.xlu0 %6141
        %6143 = vrot.lane.b32.xlu0 %v6100, 19
        %v6144 = vpop.permute.xlu0 %6143
        %6145 = vrot.lane.b32.xlu0 %v6101, 19
        %v6146 = vpop.permute.xlu0 %6145
        %6147 = vrot.lane.b32.xlu0 %v6102, 19
        %v6148 = vpop.permute.xlu0 %6147
        %6149 = vrot.lane.b32.xlu0 %v6103, 19
        %v6150 = vpop.permute.xlu0 %6149
        %6151 = vrot.lane.b32.xlu0 %v6104, 19
        %v6152 = vpop.permute.xlu0 %6151
        %v6153 = vsel %vm451, %v6122, %v6124
        %v6154 = vsel %vm451, %v6124, %v6126
        %v6155 = vsel %vm451, %v6126, %v6128
        %v6156 = vsel %vm451, %v6130, %v6132
        %v6157 = vsel %vm451, %v6132, %v6134
        %v6158 = vsel %vm451, %v6134, %v6136
        %v6159 = vsel %vm451, %v6138, %v6140
        %v6160 = vsel %vm451, %v6140, %v6142
        %v6161 = vsel %vm451, %v6142, %v6144
        %v6162 = vsel %vm451, %v6146, %v6148
        %v6163 = vsel %vm451, %v6148, %v6150
        %v6164 = vsel %vm451, %v6150, %v6152
        %6177 = vst [vmem:[#allocation3] sm:$0xff] %v6153
        %6178 = vst [vmem:[#allocation3 + $0x8] sm:$0xff] %v6154
        %6179 = vst.msk [vmem:[#allocation3 + $0x10] sm:$0xff] %vm386, %v6155
        %6180 = vst [vmem:[#allocation3 + $0x18] sm:$0xff] %v6156
        %6181 = vst [vmem:[#allocation3 + $0x20] sm:$0xff] %v6157
        %6182 = vst.msk [vmem:[#allocation3 + $0x28] sm:$0xff] %vm386, %v6158
        %6183 = vst [vmem:[#allocation3 + $0x30] sm:$0xff] %v6159
        %6184 = vst [vmem:[#allocation3 + $0x38] sm:$0xff] %v6160
        %6185 = vst.msk [vmem:[#allocation3 + $0x40] sm:$0xff] %vm386, %v6161
        %6186 = vst [vmem:[#allocation3 + $0x48] sm:$0xff] %v6162
        %6187 = vst [vmem:[#allocation3 + $0x50] sm:$0xff] %v6163
        %6188 = vst.msk [vmem:[#allocation3 + $0x58] sm:$0xff] %vm386, %v6164
        %v6189 = vld [vmem:[#allocation5] sm:$0xff]
        %v6190 = vld [vmem:[#allocation5 + $0x8] sm:$0xff]
        %v6191 = vld [vmem:[#allocation5 + $0x10] sm:$0xff]
        %v6192 = vld [vmem:[#allocation5 + $0x18] sm:$0xff]
        %v6193 = vld [vmem:[#allocation5 + $0x28] sm:$0xff]
        %v6194 = vld [vmem:[#allocation5 + $0x30] sm:$0xff]
        %v6195 = vld [vmem:[#allocation5 + $0x38] sm:$0xff]
        %v6196 = vld [vmem:[#allocation5 + $0x40] sm:$0xff]
        %v6197 = vld [vmem:[#allocation5 + $0x50] sm:$0xff]
        %v6198 = vld [vmem:[#allocation5 + $0x58] sm:$0xff]
        %v6199 = vld [vmem:[#allocation5 + $0x60] sm:$0xff]
        %v6200 = vld [vmem:[#allocation5 + $0x68] sm:$0xff]
        %v6201 = vld [vmem:[#allocation5 + $0x78] sm:$0xff]
        %v6202 = vld [vmem:[#allocation5 + $0x80] sm:$0xff]
        %v6203 = vld [vmem:[#allocation5 + $0x88] sm:$0xff]
        %v6204 = vld [vmem:[#allocation5 + $0x90] sm:$0xff]
        %6221 = vrot.lane.b32.xlu0 %v6189, 18
        %v6222 = vpop.permute.xlu0 %6221
        %6223 = vrot.lane.b32.xlu0 %v6190, 18
        %v6224 = vpop.permute.xlu0 %6223
        %6225 = vrot.lane.b32.xlu0 %v6191, 18
        %v6226 = vpop.permute.xlu0 %6225
        %6227 = vrot.lane.b32.xlu0 %v6192, 18
        %v6228 = vpop.permute.xlu0 %6227
        %6229 = vrot.lane.b32.xlu0 %v6193, 18
        %v6230 = vpop.permute.xlu0 %6229
        %6231 = vrot.lane.b32.xlu0 %v6194, 18
        %v6232 = vpop.permute.xlu0 %6231
        %6233 = vrot.lane.b32.xlu0 %v6195, 18
        %v6234 = vpop.permute.xlu0 %6233
        %6235 = vrot.lane.b32.xlu0 %v6196, 18
        %v6236 = vpop.permute.xlu0 %6235
        %6237 = vrot.lane.b32.xlu0 %v6197, 18
        %v6238 = vpop.permute.xlu0 %6237
        %6239 = vrot.lane.b32.xlu0 %v6198, 18
        %v6240 = vpop.permute.xlu0 %6239
        %6241 = vrot.lane.b32.xlu0 %v6199, 18
        %v6242 = vpop.permute.xlu0 %6241
        %6243 = vrot.lane.b32.xlu0 %v6200, 18
        %v6244 = vpop.permute.xlu0 %6243
        %6245 = vrot.lane.b32.xlu0 %v6201, 18
        %v6246 = vpop.permute.xlu0 %6245
        %6247 = vrot.lane.b32.xlu0 %v6202, 18
        %v6248 = vpop.permute.xlu0 %6247
        %6249 = vrot.lane.b32.xlu0 %v6203, 18
        %v6250 = vpop.permute.xlu0 %6249
        %6251 = vrot.lane.b32.xlu0 %v6204, 18
        %v6252 = vpop.permute.xlu0 %6251
        %v6253 = vsel %vm489, %v6222, %v6224
        %v6254 = vsel %vm489, %v6224, %v6226
        %v6255 = vsel %vm489, %v6226, %v6228
        %v6256 = vsel %vm489, %v6230, %v6232
        %v6257 = vsel %vm489, %v6232, %v6234
        %v6258 = vsel %vm489, %v6234, %v6236
        %v6259 = vsel %vm489, %v6238, %v6240
        %v6260 = vsel %vm489, %v6240, %v6242
        %v6261 = vsel %vm489, %v6242, %v6244
        %v6262 = vsel %vm489, %v6246, %v6248
        %v6263 = vsel %vm489, %v6248, %v6250
        %v6264 = vsel %vm489, %v6250, %v6252
        %6277 = vst [vmem:[#allocation3 + $0x60] sm:$0xff] %v6253
        %6278 = vst [vmem:[#allocation3 + $0x68] sm:$0xff] %v6254
        %6279 = vst.msk [vmem:[#allocation3 + $0x70] sm:$0xff] %vm386, %v6255
        %6280 = vst [vmem:[#allocation3 + $0x78] sm:$0xff] %v6256
        %6281 = vst [vmem:[#allocation3 + $0x80] sm:$0xff] %v6257
        %6282 = vst.msk [vmem:[#allocation3 + $0x88] sm:$0xff] %vm386, %v6258
        %6283 = vst [vmem:[#allocation3 + $0x90] sm:$0xff] %v6259
        %6284 = vst [vmem:[#allocation3 + $0x98] sm:$0xff] %v6260
        %6285 = vst.msk [vmem:[#allocation3 + $0xa0] sm:$0xff] %vm386, %v6261
        %6286 = vst [vmem:[#allocation3 + $0xa8] sm:$0xff] %v6262
        %6287 = vst [vmem:[#allocation3 + $0xb0] sm:$0xff] %v6263
        %6288 = vst.msk [vmem:[#allocation3 + $0xb8] sm:$0xff] %vm386, %v6264
        %v6289 = vld [vmem:[#allocation5] sm:$0xff]
        %v6290 = vld [vmem:[#allocation5 + $0x8] sm:$0xff]
        %v6291 = vld [vmem:[#allocation5 + $0x10] sm:$0xff]
        %v6292 = vld [vmem:[#allocation5 + $0x18] sm:$0xff]
        %v6293 = vld [vmem:[#allocation5 + $0x28] sm:$0xff]
        %v6294 = vld [vmem:[#allocation5 + $0x30] sm:$0xff]
        %v6295 = vld [vmem:[#allocation5 + $0x38] sm:$0xff]
        %v6296 = vld [vmem:[#allocation5 + $0x40] sm:$0xff]
        %v6297 = vld [vmem:[#allocation5 + $0x50] sm:$0xff]
        %v6298 = vld [vmem:[#allocation5 + $0x58] sm:$0xff]
        %v6299 = vld [vmem:[#allocation5 + $0x60] sm:$0xff]
        %v6300 = vld [vmem:[#allocation5 + $0x68] sm:$0xff]
        %v6301 = vld [vmem:[#allocation5 + $0x78] sm:$0xff]
        %v6302 = vld [vmem:[#allocation5 + $0x80] sm:$0xff]
        %v6303 = vld [vmem:[#allocation5 + $0x88] sm:$0xff]
        %v6304 = vld [vmem:[#allocation5 + $0x90] sm:$0xff]
        %6321 = vrot.lane.b32.xlu0 %v6289, 17
        %v6322 = vpop.permute.xlu0 %6321
        %6323 = vrot.lane.b32.xlu0 %v6290, 17
        %v6324 = vpop.permute.xlu0 %6323
        %6325 = vrot.lane.b32.xlu0 %v6291, 17
        %v6326 = vpop.permute.xlu0 %6325
        %6327 = vrot.lane.b32.xlu0 %v6292, 17
        %v6328 = vpop.permute.xlu0 %6327
        %6329 = vrot.lane.b32.xlu0 %v6293, 17
        %v6330 = vpop.permute.xlu0 %6329
        %6331 = vrot.lane.b32.xlu0 %v6294, 17
        %v6332 = vpop.permute.xlu0 %6331
        %6333 = vrot.lane.b32.xlu0 %v6295, 17
        %v6334 = vpop.permute.xlu0 %6333
        %6335 = vrot.lane.b32.xlu0 %v6296, 17
        %v6336 = vpop.permute.xlu0 %6335
        %6337 = vrot.lane.b32.xlu0 %v6297, 17
        %v6338 = vpop.permute.xlu0 %6337
        %6339 = vrot.lane.b32.xlu0 %v6298, 17
        %v6340 = vpop.permute.xlu0 %6339
        %6341 = vrot.lane.b32.xlu0 %v6299, 17
        %v6342 = vpop.permute.xlu0 %6341
        %6343 = vrot.lane.b32.xlu0 %v6300, 17
        %v6344 = vpop.permute.xlu0 %6343
        %6345 = vrot.lane.b32.xlu0 %v6301, 17
        %v6346 = vpop.permute.xlu0 %6345
        %6347 = vrot.lane.b32.xlu0 %v6302, 17
        %v6348 = vpop.permute.xlu0 %6347
        %6349 = vrot.lane.b32.xlu0 %v6303, 17
        %v6350 = vpop.permute.xlu0 %6349
        %6351 = vrot.lane.b32.xlu0 %v6304, 17
        %v6352 = vpop.permute.xlu0 %6351
        %v6353 = vsel %vm527, %v6322, %v6324
        %v6354 = vsel %vm527, %v6324, %v6326
        %v6355 = vsel %vm527, %v6326, %v6328
        %v6356 = vsel %vm527, %v6330, %v6332
        %v6357 = vsel %vm527, %v6332, %v6334
        %v6358 = vsel %vm527, %v6334, %v6336
        %v6359 = vsel %vm527, %v6338, %v6340
        %v6360 = vsel %vm527, %v6340, %v6342
        %v6361 = vsel %vm527, %v6342, %v6344
        %v6362 = vsel %vm527, %v6346, %v6348
        %v6363 = vsel %vm527, %v6348, %v6350
        %v6364 = vsel %vm527, %v6350, %v6352
        %6377 = vst [vmem:[#allocation3 + $0xc0] sm:$0xff] %v6353
        %6378 = vst [vmem:[#allocation3 + $0xc8] sm:$0xff] %v6354
        %6379 = vst.msk [vmem:[#allocation3 + $0xd0] sm:$0xff] %vm386, %v6355
        %6380 = vst [vmem:[#allocation3 + $0xd8] sm:$0xff] %v6356
        %6381 = vst [vmem:[#allocation3 + $0xe0] sm:$0xff] %v6357
        %6382 = vst.msk [vmem:[#allocation3 + $0xe8] sm:$0xff] %vm386, %v6358
        %6383 = vst [vmem:[#allocation3 + $0xf0] sm:$0xff] %v6359
        %6384 = vst [vmem:[#allocation3 + $0xf8] sm:$0xff] %v6360
        %6385 = vst.msk [vmem:[#allocation3 + $0x100] sm:$0xff] %vm386, %v6361
        %6386 = vst [vmem:[#allocation3 + $0x108] sm:$0xff] %v6362
        %6387 = vst [vmem:[#allocation3 + $0x110] sm:$0xff] %v6363
        %6388 = vst.msk [vmem:[#allocation3 + $0x118] sm:$0xff] %vm386, %v6364
        %v6389 = vld [vmem:[#allocation5] sm:$0xff]
        %v6390 = vld [vmem:[#allocation5 + $0x8] sm:$0xff]
        %v6391 = vld [vmem:[#allocation5 + $0x10] sm:$0xff]
        %v6392 = vld [vmem:[#allocation5 + $0x18] sm:$0xff]
        %v6393 = vld [vmem:[#allocation5 + $0x28] sm:$0xff]
        %v6394 = vld [vmem:[#allocation5 + $0x30] sm:$0xff]
        %v6395 = vld [vmem:[#allocation5 + $0x38] sm:$0xff]
        %v6396 = vld [vmem:[#allocation5 + $0x40] sm:$0xff]
        %v6397 = vld [vmem:[#allocation5 + $0x50] sm:$0xff]
        %v6398 = vld [vmem:[#allocation5 + $0x58] sm:$0xff]
        %v6399 = vld [vmem:[#allocation5 + $0x60] sm:$0xff]
        %v6400 = vld [vmem:[#allocation5 + $0x68] sm:$0xff]
        %v6401 = vld [vmem:[#allocation5 + $0x78] sm:$0xff]
        %v6402 = vld [vmem:[#allocation5 + $0x80] sm:$0xff]
        %v6403 = vld [vmem:[#allocation5 + $0x88] sm:$0xff]
        %v6404 = vld [vmem:[#allocation5 + $0x90] sm:$0xff]
        %6421 = vrot.lane.b32.xlu0 %v6389, 1
        %v6422 = vpop.permute.xlu0 %6421
        %6423 = vrot.lane.b32.xlu0 %v6390, 1
        %v6424 = vpop.permute.xlu0 %6423
        %6425 = vrot.lane.b32.xlu0 %v6391, 1
        %v6426 = vpop.permute.xlu0 %6425
        %6427 = vrot.lane.b32.xlu0 %v6392, 1
        %v6428 = vpop.permute.xlu0 %6427
        %6429 = vrot.lane.b32.xlu0 %v6393, 1
        %v6430 = vpop.permute.xlu0 %6429
        %6431 = vrot.lane.b32.xlu0 %v6394, 1
        %v6432 = vpop.permute.xlu0 %6431
        %6433 = vrot.lane.b32.xlu0 %v6395, 1
        %v6434 = vpop.permute.xlu0 %6433
        %6435 = vrot.lane.b32.xlu0 %v6396, 1
        %v6436 = vpop.permute.xlu0 %6435
        %6437 = vrot.lane.b32.xlu0 %v6397, 1
        %v6438 = vpop.permute.xlu0 %6437
        %6439 = vrot.lane.b32.xlu0 %v6398, 1
        %v6440 = vpop.permute.xlu0 %6439
        %6441 = vrot.lane.b32.xlu0 %v6399, 1
        %v6442 = vpop.permute.xlu0 %6441
        %6443 = vrot.lane.b32.xlu0 %v6400, 1
        %v6444 = vpop.permute.xlu0 %6443
        %6445 = vrot.lane.b32.xlu0 %v6401, 1
        %v6446 = vpop.permute.xlu0 %6445
        %6447 = vrot.lane.b32.xlu0 %v6402, 1
        %v6448 = vpop.permute.xlu0 %6447
        %6449 = vrot.lane.b32.xlu0 %v6403, 1
        %v6450 = vpop.permute.xlu0 %6449
        %6451 = vrot.lane.b32.xlu0 %v6404, 1
        %v6452 = vpop.permute.xlu0 %6451
        %v6453 = vsel %vm565, %v6422, %v6424
        %v6454 = vsel %vm565, %v6424, %v6426
        %v6455 = vsel %vm565, %v6426, %v6428
        %v6456 = vsel %vm565, %v6430, %v6432
        %v6457 = vsel %vm565, %v6432, %v6434
        %v6458 = vsel %vm565, %v6434, %v6436
        %v6459 = vsel %vm565, %v6438, %v6440
        %v6460 = vsel %vm565, %v6440, %v6442
        %v6461 = vsel %vm565, %v6442, %v6444
        %v6462 = vsel %vm565, %v6446, %v6448
        %v6463 = vsel %vm565, %v6448, %v6450
        %v6464 = vsel %vm565, %v6450, %v6452
        %6477 = vst [vmem:[#allocation3 + $0x120] sm:$0xff] %v6453
        %6478 = vst [vmem:[#allocation3 + $0x128] sm:$0xff] %v6454
        %6479 = vst.msk [vmem:[#allocation3 + $0x130] sm:$0xff] %vm386, %v6455
        %6480 = vst [vmem:[#allocation3 + $0x138] sm:$0xff] %v6456
        %6481 = vst [vmem:[#allocation3 + $0x140] sm:$0xff] %v6457
        %6482 = vst.msk [vmem:[#allocation3 + $0x148] sm:$0xff] %vm386, %v6458
        %6483 = vst [vmem:[#allocation3 + $0x150] sm:$0xff] %v6459
        %6484 = vst [vmem:[#allocation3 + $0x158] sm:$0xff] %v6460
        %6485 = vst.msk [vmem:[#allocation3 + $0x160] sm:$0xff] %vm386, %v6461
        %6486 = vst [vmem:[#allocation3 + $0x168] sm:$0xff] %v6462
        %6487 = vst [vmem:[#allocation3 + $0x170] sm:$0xff] %v6463
        %6488 = vst.msk [vmem:[#allocation3 + $0x178] sm:$0xff] %vm386, %v6464
        %v6489 = vld [vmem:[#allocation5 + $0x8] sm:$0xff]
        %v6490 = vld [vmem:[#allocation5 + $0x10] sm:$0xff]
        %v6491 = vld [vmem:[#allocation5 + $0x18] sm:$0xff]
        %v6492 = vld [vmem:[#allocation5 + $0x30] sm:$0xff]
        %v6493 = vld [vmem:[#allocation5 + $0x38] sm:$0xff]
        %v6494 = vld [vmem:[#allocation5 + $0x40] sm:$0xff]
        %v6495 = vld [vmem:[#allocation5 + $0x58] sm:$0xff]
        %v6496 = vld [vmem:[#allocation5 + $0x60] sm:$0xff]
        %v6497 = vld [vmem:[#allocation5 + $0x68] sm:$0xff]
        %v6498 = vld [vmem:[#allocation5 + $0x80] sm:$0xff]
        %v6499 = vld [vmem:[#allocation5 + $0x88] sm:$0xff]
        %v6500 = vld [vmem:[#allocation5 + $0x90] sm:$0xff]
        %6501 = vst [vmem:[#allocation3 + $0x180] sm:$0xff] %v6489
        %6502 = vst [vmem:[#allocation3 + $0x188] sm:$0xff] %v6490
        %6503 = vst.msk [vmem:[#allocation3 + $0x190] sm:$0xff] %vm386, %v6491
        %6504 = vst [vmem:[#allocation3 + $0x198] sm:$0xff] %v6492
        %6505 = vst [vmem:[#allocation3 + $0x1a0] sm:$0xff] %v6493
        %6506 = vst.msk [vmem:[#allocation3 + $0x1a8] sm:$0xff] %vm386, %v6494
        %6507 = vst [vmem:[#allocation3 + $0x1b0] sm:$0xff] %v6495
        %6508 = vst [vmem:[#allocation3 + $0x1b8] sm:$0xff] %v6496
        %6509 = vst.msk [vmem:[#allocation3 + $0x1c0] sm:$0xff] %vm386, %v6497
        %6510 = vst [vmem:[#allocation3 + $0x1c8] sm:$0xff] %v6498
        %6511 = vst [vmem:[#allocation3 + $0x1d0] sm:$0xff] %v6499
        %6512 = vst.msk [vmem:[#allocation3 + $0x1d8] sm:$0xff] %vm386, %v6500
        %v6513 = vld [vmem:[#allocation5 + $0x8] sm:$0xff]
        %v6514 = vld [vmem:[#allocation5 + $0x10] sm:$0xff]
        %v6515 = vld [vmem:[#allocation5 + $0x18] sm:$0xff]
        %v6516 = vld [vmem:[#allocation5 + $0x30] sm:$0xff]
        %v6517 = vld [vmem:[#allocation5 + $0x38] sm:$0xff]
        %v6518 = vld [vmem:[#allocation5 + $0x40] sm:$0xff]
        %v6519 = vld [vmem:[#allocation5 + $0x58] sm:$0xff]
        %v6520 = vld [vmem:[#allocation5 + $0x60] sm:$0xff]
        %v6521 = vld [vmem:[#allocation5 + $0x68] sm:$0xff]
        %v6522 = vld [vmem:[#allocation5 + $0x80] sm:$0xff]
        %v6523 = vld [vmem:[#allocation5 + $0x88] sm:$0xff]
        %v6524 = vld [vmem:[#allocation5 + $0x90] sm:$0xff]
        %6537 = vrot.lane.b32.xlu0 %v6513, 127
        %v6538 = vpop.permute.xlu0 %6537
        %6539 = vrot.lane.b32.xlu0 %v6514, 127
        %v6540 = vpop.permute.xlu0 %6539
        %6541 = vrot.lane.b32.xlu0 %v6515, 127
        %v6542 = vpop.permute.xlu0 %6541
        %6543 = vrot.lane.b32.xlu0 %v6516, 127
        %v6544 = vpop.permute.xlu0 %6543
        %6545 = vrot.lane.b32.xlu0 %v6517, 127
        %v6546 = vpop.permute.xlu0 %6545
        %6547 = vrot.lane.b32.xlu0 %v6518, 127
        %v6548 = vpop.permute.xlu0 %6547
        %6549 = vrot.lane.b32.xlu0 %v6519, 127
        %v6550 = vpop.permute.xlu0 %6549
        %6551 = vrot.lane.b32.xlu0 %v6520, 127
        %v6552 = vpop.permute.xlu0 %6551
        %6553 = vrot.lane.b32.xlu0 %v6521, 127
        %v6554 = vpop.permute.xlu0 %6553
        %6555 = vrot.lane.b32.xlu0 %v6522, 127
        %v6556 = vpop.permute.xlu0 %6555
        %6557 = vrot.lane.b32.xlu0 %v6523, 127
        %v6558 = vpop.permute.xlu0 %6557
        %6559 = vrot.lane.b32.xlu0 %v6524, 127
        %v6560 = vpop.permute.xlu0 %6559
        %v6561 = vsel %vm621, %v6538, %v6540
        %v6562 = vsel %vm621, %v6540, %v6542
        %v6563 = vsel %vm621, %v6544, %v6546
        %v6564 = vsel %vm621, %v6546, %v6548
        %v6565 = vsel %vm621, %v6550, %v6552
        %v6566 = vsel %vm621, %v6552, %v6554
        %v6567 = vsel %vm621, %v6556, %v6558
        %v6568 = vsel %vm621, %v6558, %v6560
        %6581 = vst [vmem:[#allocation3 + $0x1e0] sm:$0xff] %v6561
        %6582 = vst [vmem:[#allocation3 + $0x1e8] sm:$0xff] %v6562
        %6583 = vst.msk [vmem:[#allocation3 + $0x1f0] sm:$0xff] %vm386, %v6542
        %6584 = vst [vmem:[#allocation3 + $0x1f8] sm:$0xff] %v6563
        %6585 = vst [vmem:[#allocation3 + $0x200] sm:$0xff] %v6564
        %6586 = vst.msk [vmem:[#allocation3 + $0x208] sm:$0xff] %vm386, %v6548
        %6587 = vst [vmem:[#allocation3 + $0x210] sm:$0xff] %v6565
        %6588 = vst [vmem:[#allocation3 + $0x218] sm:$0xff] %v6566
        %6589 = vst.msk [vmem:[#allocation3 + $0x220] sm:$0xff] %vm386, %v6554
        %6590 = vst [vmem:[#allocation3 + $0x228] sm:$0xff] %v6567
        %6591 = vst [vmem:[#allocation3 + $0x230] sm:$0xff] %v6568
        %6592 = vst.msk [vmem:[#allocation3 + $0x238] sm:$0xff] %vm386, %v6560
        %v6593 = vld [vmem:[#allocation5 + $0x8] sm:$0xff]
        %v6594 = vld [vmem:[#allocation5 + $0x10] sm:$0xff]
        %v6595 = vld [vmem:[#allocation5 + $0x18] sm:$0xff]
        %v6596 = vld [vmem:[#allocation5 + $0x30] sm:$0xff]
        %v6597 = vld [vmem:[#allocation5 + $0x38] sm:$0xff]
        %v6598 = vld [vmem:[#allocation5 + $0x40] sm:$0xff]
        %v6599 = vld [vmem:[#allocation5 + $0x58] sm:$0xff]
        %v6600 = vld [vmem:[#allocation5 + $0x60] sm:$0xff]
        %v6601 = vld [vmem:[#allocation5 + $0x68] sm:$0xff]
        %v6602 = vld [vmem:[#allocation5 + $0x80] sm:$0xff]
        %v6603 = vld [vmem:[#allocation5 + $0x88] sm:$0xff]
        %v6604 = vld [vmem:[#allocation5 + $0x90] sm:$0xff]
        %6617 = vrot.lane.b32.xlu0 %v6593, 111
        %v6618 = vpop.permute.xlu0 %6617
        %6619 = vrot.lane.b32.xlu0 %v6594, 111
        %v6620 = vpop.permute.xlu0 %6619
        %6621 = vrot.lane.b32.xlu0 %v6595, 111
        %v6622 = vpop.permute.xlu0 %6621
        %6623 = vrot.lane.b32.xlu0 %v6596, 111
        %v6624 = vpop.permute.xlu0 %6623
        %6625 = vrot.lane.b32.xlu0 %v6597, 111
        %v6626 = vpop.permute.xlu0 %6625
        %6627 = vrot.lane.b32.xlu0 %v6598, 111
        %v6628 = vpop.permute.xlu0 %6627
        %6629 = vrot.lane.b32.xlu0 %v6599, 111
        %v6630 = vpop.permute.xlu0 %6629
        %6631 = vrot.lane.b32.xlu0 %v6600, 111
        %v6632 = vpop.permute.xlu0 %6631
        %6633 = vrot.lane.b32.xlu0 %v6601, 111
        %v6634 = vpop.permute.xlu0 %6633
        %6635 = vrot.lane.b32.xlu0 %v6602, 111
        %v6636 = vpop.permute.xlu0 %6635
        %6637 = vrot.lane.b32.xlu0 %v6603, 111
        %v6638 = vpop.permute.xlu0 %6637
        %6639 = vrot.lane.b32.xlu0 %v6604, 111
        %v6640 = vpop.permute.xlu0 %6639
        %v6641 = vsel %vm653, %v6618, %v6620
        %v6642 = vsel %vm653, %v6620, %v6622
        %v6643 = vsel %vm653, %v6624, %v6626
        %v6644 = vsel %vm653, %v6626, %v6628
        %v6645 = vsel %vm653, %v6630, %v6632
        %v6646 = vsel %vm653, %v6632, %v6634
        %v6647 = vsel %vm653, %v6636, %v6638
        %v6648 = vsel %vm653, %v6638, %v6640
        %6661 = vst [vmem:[#allocation3 + $0x240] sm:$0xff] %v6641
        %6662 = vst [vmem:[#allocation3 + $0x248] sm:$0xff] %v6642
        %6663 = vst.msk [vmem:[#allocation3 + $0x250] sm:$0xff] %vm386, %v6622
        %6664 = vst [vmem:[#allocation3 + $0x258] sm:$0xff] %v6643
        %6665 = vst [vmem:[#allocation3 + $0x260] sm:$0xff] %v6644
        %6666 = vst.msk [vmem:[#allocation3 + $0x268] sm:$0xff] %vm386, %v6628
        %6667 = vst [vmem:[#allocation3 + $0x270] sm:$0xff] %v6645
        %6668 = vst [vmem:[#allocation3 + $0x278] sm:$0xff] %v6646
        %6669 = vst.msk [vmem:[#allocation3 + $0x280] sm:$0xff] %vm386, %v6634
        %6670 = vst [vmem:[#allocation3 + $0x288] sm:$0xff] %v6647
        %6671 = vst [vmem:[#allocation3 + $0x290] sm:$0xff] %v6648
        %6672 = vst.msk [vmem:[#allocation3 + $0x298] sm:$0xff] %vm386, %v6640
        %v6673 = vld [vmem:[#allocation5 + $0x8] sm:$0xff]
        %v6674 = vld [vmem:[#allocation5 + $0x10] sm:$0xff]
        %v6675 = vld [vmem:[#allocation5 + $0x18] sm:$0xff]
        %v6676 = vld [vmem:[#allocation5 + $0x30] sm:$0xff]
        %v6677 = vld [vmem:[#allocation5 + $0x38] sm:$0xff]
        %v6678 = vld [vmem:[#allocation5 + $0x40] sm:$0xff]
        %v6679 = vld [vmem:[#allocation5 + $0x58] sm:$0xff]
        %v6680 = vld [vmem:[#allocation5 + $0x60] sm:$0xff]
        %v6681 = vld [vmem:[#allocation5 + $0x68] sm:$0xff]
        %v6682 = vld [vmem:[#allocation5 + $0x80] sm:$0xff]
        %v6683 = vld [vmem:[#allocation5 + $0x88] sm:$0xff]
        %v6684 = vld [vmem:[#allocation5 + $0x90] sm:$0xff]
        %6697 = vrot.lane.b32.xlu0 %v6673, 110
        %v6698 = vpop.permute.xlu0 %6697
        %6699 = vrot.lane.b32.xlu0 %v6674, 110
        %v6700 = vpop.permute.xlu0 %6699
        %6701 = vrot.lane.b32.xlu0 %v6675, 110
        %v6702 = vpop.permute.xlu0 %6701
        %6703 = vrot.lane.b32.xlu0 %v6676, 110
        %v6704 = vpop.permute.xlu0 %6703
        %6705 = vrot.lane.b32.xlu0 %v6677, 110
        %v6706 = vpop.permute.xlu0 %6705
        %6707 = vrot.lane.b32.xlu0 %v6678, 110
        %v6708 = vpop.permute.xlu0 %6707
        %6709 = vrot.lane.b32.xlu0 %v6679, 110
        %v6710 = vpop.permute.xlu0 %6709
        %6711 = vrot.lane.b32.xlu0 %v6680, 110
        %v6712 = vpop.permute.xlu0 %6711
        %6713 = vrot.lane.b32.xlu0 %v6681, 110
        %v6714 = vpop.permute.xlu0 %6713
        %6715 = vrot.lane.b32.xlu0 %v6682, 110
        %v6716 = vpop.permute.xlu0 %6715
        %6717 = vrot.lane.b32.xlu0 %v6683, 110
        %v6718 = vpop.permute.xlu0 %6717
        %6719 = vrot.lane.b32.xlu0 %v6684, 110
        %v6720 = vpop.permute.xlu0 %6719
        %v6721 = vsel %vm685, %v6698, %v6700
        %v6722 = vsel %vm685, %v6700, %v6702
        %v6723 = vsel %vm685, %v6704, %v6706
        %v6724 = vsel %vm685, %v6706, %v6708
        %v6725 = vsel %vm685, %v6710, %v6712
        %v6726 = vsel %vm685, %v6712, %v6714
        %v6727 = vsel %vm685, %v6716, %v6718
        %v6728 = vsel %vm685, %v6718, %v6720
        %6741 = vst [vmem:[#allocation3 + $0x2a0] sm:$0xff] %v6721
        %6742 = vst [vmem:[#allocation3 + $0x2a8] sm:$0xff] %v6722
        %6743 = vst.msk [vmem:[#allocation3 + $0x2b0] sm:$0xff] %vm386, %v6702
        %6744 = vst [vmem:[#allocation3 + $0x2b8] sm:$0xff] %v6723
        %6745 = vst [vmem:[#allocation3 + $0x2c0] sm:$0xff] %v6724
        %6746 = vst.msk [vmem:[#allocation3 + $0x2c8] sm:$0xff] %vm386, %v6708
        %6747 = vst [vmem:[#allocation3 + $0x2d0] sm:$0xff] %v6725
        %6748 = vst [vmem:[#allocation3 + $0x2d8] sm:$0xff] %v6726
        %6749 = vst.msk [vmem:[#allocation3 + $0x2e0] sm:$0xff] %vm386, %v6714
        %6750 = vst [vmem:[#allocation3 + $0x2e8] sm:$0xff] %v6727
        %6751 = vst [vmem:[#allocation3 + $0x2f0] sm:$0xff] %v6728
        %6752 = vst.msk [vmem:[#allocation3 + $0x2f8] sm:$0xff] %vm386, %v6720
        %v6753 = vld [vmem:[#allocation5 + $0x8] sm:$0xff]
        %v6754 = vld [vmem:[#allocation5 + $0x10] sm:$0xff]
        %v6755 = vld [vmem:[#allocation5 + $0x18] sm:$0xff]
        %v6756 = vld [vmem:[#allocation5 + $0x30] sm:$0xff]
        %v6757 = vld [vmem:[#allocation5 + $0x38] sm:$0xff]
        %v6758 = vld [vmem:[#allocation5 + $0x40] sm:$0xff]
        %v6759 = vld [vmem:[#allocation5 + $0x58] sm:$0xff]
        %v6760 = vld [vmem:[#allocation5 + $0x60] sm:$0xff]
        %v6761 = vld [vmem:[#allocation5 + $0x68] sm:$0xff]
        %v6762 = vld [vmem:[#allocation5 + $0x80] sm:$0xff]
        %v6763 = vld [vmem:[#allocation5 + $0x88] sm:$0xff]
        %v6764 = vld [vmem:[#allocation5 + $0x90] sm:$0xff]
        %6777 = vrot.lane.b32.xlu0 %v6753, 109
        %v6778 = vpop.permute.xlu0 %6777
        %6779 = vrot.lane.b32.xlu0 %v6754, 109
        %v6780 = vpop.permute.xlu0 %6779
        %6781 = vrot.lane.b32.xlu0 %v6755, 109
        %v6782 = vpop.permute.xlu0 %6781
        %6783 = vrot.lane.b32.xlu0 %v6756, 109
        %v6784 = vpop.permute.xlu0 %6783
        %6785 = vrot.lane.b32.xlu0 %v6757, 109
        %v6786 = vpop.permute.xlu0 %6785
        %6787 = vrot.lane.b32.xlu0 %v6758, 109
        %v6788 = vpop.permute.xlu0 %6787
        %6789 = vrot.lane.b32.xlu0 %v6759, 109
        %v6790 = vpop.permute.xlu0 %6789
        %6791 = vrot.lane.b32.xlu0 %v6760, 109
        %v6792 = vpop.permute.xlu0 %6791
        %6793 = vrot.lane.b32.xlu0 %v6761, 109
        %v6794 = vpop.permute.xlu0 %6793
        %6795 = vrot.lane.b32.xlu0 %v6762, 109
        %v6796 = vpop.permute.xlu0 %6795
        %6797 = vrot.lane.b32.xlu0 %v6763, 109
        %v6798 = vpop.permute.xlu0 %6797
        %6799 = vrot.lane.b32.xlu0 %v6764, 109
        %v6800 = vpop.permute.xlu0 %6799
        %v6801 = vsel %vm717, %v6778, %v6780
        %v6802 = vsel %vm717, %v6780, %v6782
        %v6803 = vsel %vm717, %v6784, %v6786
        %v6804 = vsel %vm717, %v6786, %v6788
        %v6805 = vsel %vm717, %v6790, %v6792
        %v6806 = vsel %vm717, %v6792, %v6794
        %v6807 = vsel %vm717, %v6796, %v6798
        %v6808 = vsel %vm717, %v6798, %v6800
        %6821 = vst [vmem:[#allocation3 + $0x300] sm:$0xff] %v6801
        %6822 = vst [vmem:[#allocation3 + $0x308] sm:$0xff] %v6802
        %6823 = vst.msk [vmem:[#allocation3 + $0x310] sm:$0xff] %vm386, %v6782
        %6824 = vst [vmem:[#allocation3 + $0x318] sm:$0xff] %v6803
        %6825 = vst [vmem:[#allocation3 + $0x320] sm:$0xff] %v6804
        %6826 = vst.msk [vmem:[#allocation3 + $0x328] sm:$0xff] %vm386, %v6788
        %6827 = vst [vmem:[#allocation3 + $0x330] sm:$0xff] %v6805
        %6828 = vst [vmem:[#allocation3 + $0x338] sm:$0xff] %v6806
        %6829 = vst.msk [vmem:[#allocation3 + $0x340] sm:$0xff] %vm386, %v6794
        %6830 = vst [vmem:[#allocation3 + $0x348] sm:$0xff] %v6807
        %6831 = vst [vmem:[#allocation3 + $0x350] sm:$0xff] %v6808
        %6832 = vst.msk [vmem:[#allocation3 + $0x358] sm:$0xff] %vm386, %v6800
        %v6833 = vld [vmem:[#allocation17] sm:$0xff]
        %v6834 = vld [vmem:[#allocation17 + $0x8] sm:$0x3]
        %v6835 = vld [vmem:[#allocation3] sm:$0xff]
        %v6836 = vld [vmem:[#allocation3 + $0x8] sm:$0xff]
        %v6837 = vld [vmem:[#allocation3 + $0x10] sm:$0xff]
        %v6838 = vld [vmem:[#allocation3 + $0x18] sm:$0xff]
        %v6839 = vld [vmem:[#allocation3 + $0x20] sm:$0xff]
        %v6840 = vld [vmem:[#allocation3 + $0x28] sm:$0xff]
        %v6841 = vld [vmem:[#allocation3 + $0x30] sm:$0xff]
        %v6842 = vld [vmem:[#allocation3 + $0x38] sm:$0xff]
        %v6843 = vld [vmem:[#allocation3 + $0x40] sm:$0xff]
        %v6844 = vld [vmem:[#allocation3 + $0x48] sm:$0xff]
        %v6845 = vld [vmem:[#allocation3 + $0x50] sm:$0xff]
        %v6846 = vld [vmem:[#allocation3 + $0x58] sm:$0xff]
        %v6847 = vld [vmem:[#allocation3 + $0x60] sm:$0xff]
        %v6848 = vld [vmem:[#allocation3 + $0x68] sm:$0xff]
        %v6849 = vld [vmem:[#allocation3 + $0x70] sm:$0xff]
        %v6850 = vld [vmem:[#allocation3 + $0x78] sm:$0xff]
        %v6851 = vld [vmem:[#allocation3 + $0x80] sm:$0xff]
        %v6852 = vld [vmem:[#allocation3 + $0x88] sm:$0xff]
        %v6853 = vld [vmem:[#allocation3 + $0x90] sm:$0xff]
        %v6854 = vld [vmem:[#allocation3 + $0x98] sm:$0xff]
        %v6855 = vld [vmem:[#allocation3 + $0xa0] sm:$0xff]
        %v6856 = vld [vmem:[#allocation3 + $0xa8] sm:$0xff]
        %v6857 = vld [vmem:[#allocation3 + $0xb0] sm:$0xff]
        %v6858 = vld [vmem:[#allocation3 + $0xb8] sm:$0xff]
        %v6859 = vld [vmem:[#allocation3 + $0xc0] sm:$0xff]
        %v6860 = vld [vmem:[#allocation3 + $0xc8] sm:$0xff]
        %v6861 = vld [vmem:[#allocation3 + $0xd0] sm:$0xff]
        %v6862 = vld [vmem:[#allocation3 + $0xd8] sm:$0xff]
        %v6863 = vld [vmem:[#allocation3 + $0xe0] sm:$0xff]
        %v6864 = vld [vmem:[#allocation3 + $0xe8] sm:$0xff]
        %v6865 = vld [vmem:[#allocation3 + $0xf0] sm:$0xff]
        %v6866 = vld [vmem:[#allocation3 + $0xf8] sm:$0xff]
        %v6867 = vld [vmem:[#allocation3 + $0x100] sm:$0xff]
        %v6868 = vld [vmem:[#allocation3 + $0x108] sm:$0xff]
        %v6869 = vld [vmem:[#allocation3 + $0x110] sm:$0xff]
        %v6870 = vld [vmem:[#allocation3 + $0x118] sm:$0xff]
        %v6871 = vld [vmem:[#allocation3 + $0x120] sm:$0xff]
        %v6872 = vld [vmem:[#allocation3 + $0x128] sm:$0xff]
        %v6873 = vld [vmem:[#allocation3 + $0x130] sm:$0xff]
        %v6874 = vld [vmem:[#allocation3 + $0x138] sm:$0xff]
        %v6875 = vld [vmem:[#allocation3 + $0x140] sm:$0xff]
        %v6876 = vld [vmem:[#allocation3 + $0x148] sm:$0xff]
        %v6877 = vld [vmem:[#allocation3 + $0x150] sm:$0xff]
        %v6878 = vld [vmem:[#allocation3 + $0x158] sm:$0xff]
        %v6879 = vld [vmem:[#allocation3 + $0x160] sm:$0xff]
        %v6880 = vld [vmem:[#allocation3 + $0x168] sm:$0xff]
        %v6881 = vld [vmem:[#allocation3 + $0x170] sm:$0xff]
        %v6882 = vld [vmem:[#allocation3 + $0x178] sm:$0xff]
        %v6883 = vld [vmem:[#allocation3 + $0x180] sm:$0xff]
        %v6884 = vld [vmem:[#allocation3 + $0x188] sm:$0xff]
        %v6885 = vld [vmem:[#allocation3 + $0x190] sm:$0xff]
        %v6886 = vld [vmem:[#allocation3 + $0x198] sm:$0xff]
        %v6887 = vld [vmem:[#allocation3 + $0x1a0] sm:$0xff]
        %v6888 = vld [vmem:[#allocation3 + $0x1a8] sm:$0xff]
        %v6889 = vld [vmem:[#allocation3 + $0x1b0] sm:$0xff]
        %v6890 = vld [vmem:[#allocation3 + $0x1b8] sm:$0xff]
        %v6891 = vld [vmem:[#allocation3 + $0x1c0] sm:$0xff]
        %v6892 = vld [vmem:[#allocation3 + $0x1c8] sm:$0xff]
        %v6893 = vld [vmem:[#allocation3 + $0x1d0] sm:$0xff]
        %v6894 = vld [vmem:[#allocation3 + $0x1d8] sm:$0xff]
        %v6895 = vld [vmem:[#allocation3 + $0x1e0] sm:$0xff]
        %v6896 = vld [vmem:[#allocation3 + $0x1e8] sm:$0xff]
        %v6897 = vld [vmem:[#allocation3 + $0x1f0] sm:$0xff]
        %v6898 = vld [vmem:[#allocation3 + $0x1f8] sm:$0xff]
        %v6899 = vld [vmem:[#allocation3 + $0x200] sm:$0xff]
        %v6900 = vld [vmem:[#allocation3 + $0x208] sm:$0xff]
        %v6901 = vld [vmem:[#allocation3 + $0x210] sm:$0xff]
        %v6902 = vld [vmem:[#allocation3 + $0x218] sm:$0xff]
        %v6903 = vld [vmem:[#allocation3 + $0x220] sm:$0xff]
        %v6904 = vld [vmem:[#allocation3 + $0x228] sm:$0xff]
        %v6905 = vld [vmem:[#allocation3 + $0x230] sm:$0xff]
        %v6906 = vld [vmem:[#allocation3 + $0x238] sm:$0xff]
        %v6907 = vld [vmem:[#allocation3 + $0x240] sm:$0xff]
        %v6908 = vld [vmem:[#allocation3 + $0x248] sm:$0xff]
        %v6909 = vld [vmem:[#allocation3 + $0x250] sm:$0xff]
        %v6910 = vld [vmem:[#allocation3 + $0x258] sm:$0xff]
        %v6911 = vld [vmem:[#allocation3 + $0x260] sm:$0xff]
        %v6912 = vld [vmem:[#allocation3 + $0x268] sm:$0xff]
        %v6913 = vld [vmem:[#allocation3 + $0x270] sm:$0xff]
        %v6914 = vld [vmem:[#allocation3 + $0x278] sm:$0xff]
        %v6915 = vld [vmem:[#allocation3 + $0x280] sm:$0xff]
        %v6916 = vld [vmem:[#allocation3 + $0x288] sm:$0xff]
        %v6917 = vld [vmem:[#allocation3 + $0x290] sm:$0xff]
        %v6918 = vld [vmem:[#allocation3 + $0x298] sm:$0xff]
        %v6919 = vld [vmem:[#allocation3 + $0x2a0] sm:$0xff]
        %v6920 = vld [vmem:[#allocation3 + $0x2a8] sm:$0xff]
        %v6921 = vld [vmem:[#allocation3 + $0x2b0] sm:$0xff]
        %v6922 = vld [vmem:[#allocation3 + $0x2b8] sm:$0xff]
        %v6923 = vld [vmem:[#allocation3 + $0x2c0] sm:$0xff]
        %v6924 = vld [vmem:[#allocation3 + $0x2c8] sm:$0xff]
        %v6925 = vld [vmem:[#allocation3 + $0x2d0] sm:$0xff]
        %v6926 = vld [vmem:[#allocation3 + $0x2d8] sm:$0xff]
        %v6927 = vld [vmem:[#allocation3 + $0x2e0] sm:$0xff]
        %v6928 = vld [vmem:[#allocation3 + $0x2e8] sm:$0xff]
        %v6929 = vld [vmem:[#allocation3 + $0x2f0] sm:$0xff]
        %v6930 = vld [vmem:[#allocation3 + $0x2f8] sm:$0xff]
        %v6931 = vld [vmem:[#allocation3 + $0x300] sm:$0xff]
        %v6932 = vld [vmem:[#allocation3 + $0x308] sm:$0xff]
        %v6933 = vld [vmem:[#allocation3 + $0x310] sm:$0xff]
        %v6934 = vld [vmem:[#allocation3 + $0x318] sm:$0xff]
        %v6935 = vld [vmem:[#allocation3 + $0x320] sm:$0xff]
        %v6936 = vld [vmem:[#allocation3 + $0x328] sm:$0xff]
        %v6937 = vld [vmem:[#allocation3 + $0x330] sm:$0xff]
        %v6938 = vld [vmem:[#allocation3 + $0x338] sm:$0xff]
        %v6939 = vld [vmem:[#allocation3 + $0x340] sm:$0xff]
        %v6940 = vld [vmem:[#allocation3 + $0x348] sm:$0xff]
        %v6941 = vld [vmem:[#allocation3 + $0x350] sm:$0xff]
        %v6942 = vld [vmem:[#allocation3 + $0x358] sm:$0xff]
        %v6945 = vcombine.high %v6833, %v6833
        %v6947 = vunpack.c.l.s4 1983009808
        %v6948 = vunpack.c.0.s8 %v6947
        %v6949 = vlaneseq
        %v6950 = vshrl.u32 %v6949, 7
        %v6951 = vsub.s32 %v6948, %v6950
        %v6952 = vrot.slane %v6833, %v6951
        %v6954 = vunpack.c.l.s4 1983009808
        %v6955 = vunpack.c.0.s8 %v6954
        %v6956 = vlaneseq
        %v6957 = vshrl.u32 %v6956, 7
        %v6958 = vsub.s32 %v6955, %v6957
        %v6959 = vrot.slane %v6945, %v6958
        %v6960 = vcombine.high %v6952, %v6952
        %v6961 = vcombine.high %v6959, %v6959
        %v6963 = vunpack.c.l.s4 1983009808
        %v6964 = vunpack.c.0.s8 %v6963
        %v6965 = vlaneseq
        %v6966 = vshrl.u32 %v6965, 7
        %v6967 = vsub.s32 %v6964, %v6966
        %v6968 = vrot.slane %v6834, %v6967
        %v6974 = vsel %vm2060, %v6968, 0
        %6976 = vmatprep.subr.bf16.mxu0 %v6836
        %6977 = vmatpush1.bf16.msra.mxu0 %v6835
        %6978 = vmatprep.subr.bf16.mxu0 %v6839
        %6979 = vmatpush1.bf16.msra.mxu0 %v6838
        %6980 = vmatprep.subr.bf16.mxu0 %v6842
        %6981 = vmatpush1.bf16.msra.mxu0 %v6841
        %6982 = vmatprep.subr.bf16.mxu0 %v6845
        %6983 = vmatpush1.bf16.msra.mxu0 %v6844
        %6984 = vmatprep.subr.bf16.mxu0 %v6848
        %6985 = vmatpush1.bf16.msra.mxu0 %v6847
        %6986 = vmatprep.subr.bf16.mxu0 %v6851
        %6987 = vmatpush1.bf16.msra.mxu0 %v6850
        %6988 = vmatprep.subr.bf16.mxu0 %v6854
        %6989 = vmatpush1.bf16.msra.mxu0 %v6853
        %6990 = vmatprep.subr.bf16.mxu0 %v6857
        %6991 = vmatpush1.bf16.msra.mxu0 %v6856
        %6992 = vmatprep.subr.bf16.mxu0 %v6860
        %6993 = vmatpush1.bf16.msra.mxu0 %v6859
        %6994 = vmatprep.subr.bf16.mxu0 %v6863
        %6995 = vmatpush1.bf16.msra.mxu0 %v6862
        %6996 = vmatprep.subr.bf16.mxu0 %v6866
        %6997 = vmatpush1.bf16.msra.mxu0 %v6865
        %6998 = vmatprep.subr.bf16.mxu0 %v6869
        %6999 = vmatpush1.bf16.msra.mxu0 %v6868
        %7000 = vmatprep.subr.bf16.mxu0 %v6872
        %7001 = vmatpush1.bf16.msra.mxu0 %v6871
        %7002 = vmatprep.subr.bf16.mxu0 %v6875
        %7003 = vmatpush1.bf16.msra.mxu0 %v6874
        %7004 = vmatprep.subr.bf16.mxu0 %v6878
        %7005 = vmatpush1.bf16.msra.mxu0 %v6877
        %7006 = vmatprep.subr.bf16.mxu0 %v6881
        %7007 = vmatpush1.bf16.msra.mxu0 %v6880
        %7008 = vmatprep.mubr.bf16.mxu0 %v6960
        %7009 = vmatmul.mubr.bf16.gmra.mrb[0].mxu0 %v6952
        %v7010 = vpop.f32.mrb[0].mxu0
        %v7011 = vadd.f32 0.0, %v7010
        %v7012 = vpop.f32.mrb[0].mxu0
        %v7013 = vadd.f32 0.0, %v7012
        %v7014 = vpop.f32.mrb[0].mxu0
        %v7015 = vpop.f32.mrb[0].mxu0
        %7016 = vdwg.mxu0
        %7017 = vmatprep.subr.bf16.mxu0 %v6884
        %7018 = vmatpush1.bf16.msra.mxu0 %v6883
        %7019 = vmatprep.subr.bf16.mxu0 %v6887
        %7020 = vmatpush1.bf16.msra.mxu0 %v6886
        %7021 = vmatprep.subr.bf16.mxu0 %v6890
        %7022 = vmatpush1.bf16.msra.mxu0 %v6889
        %7023 = vmatprep.subr.bf16.mxu0 %v6893
        %7024 = vmatpush1.bf16.msra.mxu0 %v6892
        %7025 = vmatprep.subr.bf16.mxu0 %v6896
        %7026 = vmatpush1.bf16.msra.mxu0 %v6895
        %7027 = vmatprep.subr.bf16.mxu0 %v6899
        %7028 = vmatpush1.bf16.msra.mxu0 %v6898
        %7029 = vmatprep.subr.bf16.mxu0 %v6902
        %7030 = vmatpush1.bf16.msra.mxu0 %v6901
        %7031 = vmatprep.subr.bf16.mxu0 %v6905
        %7032 = vmatpush1.bf16.msra.mxu0 %v6904
        %7033 = vmatprep.subr.bf16.mxu0 %v6908
        %7034 = vmatpush1.bf16.msra.mxu0 %v6907
        %7035 = vmatprep.subr.bf16.mxu0 %v6911
        %7036 = vmatpush1.bf16.msra.mxu0 %v6910
        %7037 = vmatprep.subr.bf16.mxu0 %v6914
        %7038 = vmatpush1.bf16.msra.mxu0 %v6913
        %7039 = vmatprep.subr.bf16.mxu0 %v6917
        %7040 = vmatpush1.bf16.msra.mxu0 %v6916
        %7041 = vmatprep.subr.bf16.mxu0 %v6920
        %7042 = vmatpush1.bf16.msra.mxu0 %v6919
        %7043 = vmatprep.subr.bf16.mxu0 %v6923
        %7044 = vmatpush1.bf16.msra.mxu0 %v6922
        %7045 = vmatprep.subr.bf16.mxu0 %v6926
        %7046 = vmatpush1.bf16.msra.mxu0 %v6925
        %7047 = vmatprep.subr.bf16.mxu0 %v6929
        %7048 = vmatpush1.bf16.msra.mxu0 %v6928
        %7049 = vmatprep.mubr.bf16.mxu0 %v6961
        %7050 = vmatmul.mubr.bf16.gmra.mrb[0].mxu0 %v6959
        %v7051 = vpop.f32.mrb[0].mxu0
        %v7052 = vadd.f32 %v7011, %v7051
        %v7053 = vpop.f32.mrb[0].mxu0
        %v7054 = vadd.f32 %v7013, %v7053
        %v7055 = vpop.f32.mrb[0].mxu0
        %v7056 = vpop.f32.mrb[0].mxu0
        %7057 = vdwg.mxu0
        %7058 = vmatprep.subr.bf16.mxu0 %v6932
        %7059 = vmatpush1.bf16.msra.mxu0 %v6931
        %7060 = vmatprep.subr.bf16.mxu0 %v6935
        %7061 = vmatpush1.bf16.msra.mxu0 %v6934
        %7062 = vmatprep.subr.bf16.mxu0 %v6938
        %7063 = vmatpush1.bf16.msra.mxu0 %v6937
        %7064 = vmatprep.subr.bf16.mxu0 %v6941
        %7065 = vmatpush1.bf16.msra.mxu0 %v6940
        %7066 = vmatprep.subr.bf16.mxu0 0
        %7067 = vmatpush1.bf16.msra.mxu0 0
        %7068 = vmatprep.subr.bf16.mxu0 0
        %7069 = vmatpush1.bf16.msra.mxu0 0
        %7070 = vmatprep.subr.bf16.mxu0 0
        %7071 = vmatpush1.bf16.msra.mxu0 0
        %7072 = vmatprep.subr.bf16.mxu0 0
        %7073 = vmatpush1.bf16.msra.mxu0 0
        %7074 = vmatprep.subr.bf16.mxu0 0
        %7075 = vmatpush1.bf16.msra.mxu0 0
        %7076 = vmatprep.subr.bf16.mxu0 0
        %7077 = vmatpush1.bf16.msra.mxu0 0
        %7078 = vmatprep.subr.bf16.mxu0 0
        %7079 = vmatpush1.bf16.msra.mxu0 0
        %7080 = vmatprep.subr.bf16.mxu0 0
        %7081 = vmatpush1.bf16.msra.mxu0 0
        %7082 = vmatprep.subr.bf16.mxu0 0
        %7083 = vmatpush1.bf16.msra.mxu0 0
        %7084 = vmatprep.subr.bf16.mxu0 0
        %7085 = vmatpush1.bf16.msra.mxu0 0
        %7086 = vmatprep.subr.bf16.mxu0 0
        %7087 = vmatpush1.bf16.msra.mxu0 0
        %7088 = vmatprep.subr.bf16.mxu0 0
        %7089 = vmatpush1.bf16.msra.mxu0 0
        %7090 = vmatprep.mubr.bf16.mxu0 0
        %7091 = vmatmul.mubr.bf16.gmra.mrb[0].mxu0 %v6974
        %v7092 = vpop.f32.mrb[0].mxu0
        %v7093 = vadd.f32 %v7052, %v7092
        %v7094 = vpop.f32.mrb[0].mxu0
        %v7095 = vadd.f32 %v7054, %v7094
        %v7096 = vpop.f32.mrb[0].mxu0
        %v7097 = vpop.f32.mrb[0].mxu0
        %7098 = vdwg.mxu0
        %7099 = vmatprep.subr.bf16.mxu0 0
        %7100 = vmatpush1.bf16.msra.mxu0 %v6837
        %7101 = vmatprep.subr.bf16.mxu0 0
        %7102 = vmatpush1.bf16.msra.mxu0 %v6840
        %7103 = vmatprep.subr.bf16.mxu0 0
        %7104 = vmatpush1.bf16.msra.mxu0 %v6843
        %7105 = vmatprep.subr.bf16.mxu0 0
        %7106 = vmatpush1.bf16.msra.mxu0 %v6846
        %7107 = vmatprep.subr.bf16.mxu0 0
        %7108 = vmatpush1.bf16.msra.mxu0 %v6849
        %7109 = vmatprep.subr.bf16.mxu0 0
        %7110 = vmatpush1.bf16.msra.mxu0 %v6852
        %7111 = vmatprep.subr.bf16.mxu0 0
        %7112 = vmatpush1.bf16.msra.mxu0 %v6855
        %7113 = vmatprep.subr.bf16.mxu0 0
        %7114 = vmatpush1.bf16.msra.mxu0 %v6858
        %7115 = vmatprep.subr.bf16.mxu0 0
        %7116 = vmatpush1.bf16.msra.mxu0 %v6861
        %7117 = vmatprep.subr.bf16.mxu0 0
        %7118 = vmatpush1.bf16.msra.mxu0 %v6864
        %7119 = vmatprep.subr.bf16.mxu0 0
        %7120 = vmatpush1.bf16.msra.mxu0 %v6867
        %7121 = vmatprep.subr.bf16.mxu0 0
        %7122 = vmatpush1.bf16.msra.mxu0 %v6870
        %7123 = vmatprep.subr.bf16.mxu0 0
        %7124 = vmatpush1.bf16.msra.mxu0 %v6873
        %7125 = vmatprep.subr.bf16.mxu0 0
        %7126 = vmatpush1.bf16.msra.mxu0 %v6876
        %7127 = vmatprep.subr.bf16.mxu0 0
        %7128 = vmatpush1.bf16.msra.mxu0 %v6879
        %7129 = vmatprep.subr.bf16.mxu0 0
        %7130 = vmatpush1.bf16.msra.mxu0 %v6882
        %7131 = vmatprep.mubr.bf16.mxu0 %v6960
        %7132 = vmatmul.mubr.bf16.gmra.mrb[0].mxu0 %v6952
        %v7133 = vpop.f32.mrb[0].mxu0
        %v7134 = vadd.f32 0.0, %v7133
        %v7135 = vpop.f32.mrb[0].mxu0
        %v7136 = vpop.f32.mrb[0].mxu0
        %v7137 = vpop.f32.mrb[0].mxu0
        %7138 = vdwg.mxu0
        %7139 = vmatprep.subr.bf16.mxu0 0
        %7140 = vmatpush1.bf16.msra.mxu0 %v6885
        %7141 = vmatprep.subr.bf16.mxu0 0
        %7142 = vmatpush1.bf16.msra.mxu0 %v6888
        %7143 = vmatprep.subr.bf16.mxu0 0
        %7144 = vmatpush1.bf16.msra.mxu0 %v6891
        %7145 = vmatprep.subr.bf16.mxu0 0
        %7146 = vmatpush1.bf16.msra.mxu0 %v6894
        %7147 = vmatprep.subr.bf16.mxu0 0
        %7148 = vmatpush1.bf16.msra.mxu0 %v6897
        %7149 = vmatprep.subr.bf16.mxu0 0
        %7150 = vmatpush1.bf16.msra.mxu0 %v6900
        %7151 = vmatprep.subr.bf16.mxu0 0
        %7152 = vmatpush1.bf16.msra.mxu0 %v6903
        %7153 = vmatprep.subr.bf16.mxu0 0
        %7154 = vmatpush1.bf16.msra.mxu0 %v6906
        %7155 = vmatprep.subr.bf16.mxu0 0
        %7156 = vmatpush1.bf16.msra.mxu0 %v6909
        %7157 = vmatprep.subr.bf16.mxu0 0
        %7158 = vmatpush1.bf16.msra.mxu0 %v6912
        %7159 = vmatprep.subr.bf16.mxu0 0
        %7160 = vmatpush1.bf16.msra.mxu0 %v6915
        %7161 = vmatprep.subr.bf16.mxu0 0
        %7162 = vmatpush1.bf16.msra.mxu0 %v6918
        %7163 = vmatprep.subr.bf16.mxu0 0
        %7164 = vmatpush1.bf16.msra.mxu0 %v6921
        %7165 = vmatprep.subr.bf16.mxu0 0
        %7166 = vmatpush1.bf16.msra.mxu0 %v6924
        %7167 = vmatprep.subr.bf16.mxu0 0
        %7168 = vmatpush1.bf16.msra.mxu0 %v6927
        %7169 = vmatprep.subr.bf16.mxu0 0
        %7170 = vmatpush1.bf16.msra.mxu0 %v6930
        %7171 = vmatprep.mubr.bf16.mxu0 %v6961
        %7172 = vmatmul.mubr.bf16.gmra.mrb[0].mxu0 %v6959
        %v7173 = vpop.f32.mrb[0].mxu0
        %v7174 = vadd.f32 %v7134, %v7173
        %v7175 = vpop.f32.mrb[0].mxu0
        %v7176 = vpop.f32.mrb[0].mxu0
        %v7177 = vpop.f32.mrb[0].mxu0
        %7178 = vdwg.mxu0
        %7179 = vmatprep.subr.bf16.mxu0 0
        %7180 = vmatpush1.bf16.msra.mxu0 %v6933
        %7181 = vmatprep.subr.bf16.mxu0 0
        %7182 = vmatpush1.bf16.msra.mxu0 %v6936
        %7183 = vmatprep.subr.bf16.mxu0 0
        %7184 = vmatpush1.bf16.msra.mxu0 %v6939
        %7185 = vmatprep.subr.bf16.mxu0 0
        %7186 = vmatpush1.bf16.msra.mxu0 %v6942
        %7187 = vmatprep.subr.bf16.mxu0 0
        %7188 = vmatpush1.bf16.msra.mxu0 0
        %7189 = vmatprep.subr.bf16.mxu0 0
        %7190 = vmatpush1.bf16.msra.mxu0 0
        %7191 = vmatprep.subr.bf16.mxu0 0
        %7192 = vmatpush1.bf16.msra.mxu0 0
        %7193 = vmatprep.subr.bf16.mxu0 0
        %7194 = vmatpush1.bf16.msra.mxu0 0
        %7195 = vmatprep.subr.bf16.mxu0 0
        %7196 = vmatpush1.bf16.msra.mxu0 0
        %7197 = vmatprep.subr.bf16.mxu0 0
        %7198 = vmatpush1.bf16.msra.mxu0 0
        %7199 = vmatprep.subr.bf16.mxu0 0
        %7200 = vmatpush1.bf16.msra.mxu0 0
        %7201 = vmatprep.subr.bf16.mxu0 0
        %7202 = vmatpush1.bf16.msra.mxu0 0
        %7203 = vmatprep.subr.bf16.mxu0 0
        %7204 = vmatpush1.bf16.msra.mxu0 0
        %7205 = vmatprep.subr.bf16.mxu0 0
        %7206 = vmatpush1.bf16.msra.mxu0 0
        %7207 = vmatprep.subr.bf16.mxu0 0
        %7208 = vmatpush1.bf16.msra.mxu0 0
        %7209 = vmatprep.subr.bf16.mxu0 0
        %7210 = vmatpush1.bf16.msra.mxu0 0
        %7211 = vmatprep.mubr.bf16.mxu0 0
        %7212 = vmatmul.mubr.bf16.gmra.mrb[0].mxu0 %v6974
        %v7213 = vpop.f32.mrb[0].mxu0
        %v7214 = vadd.f32 %v7174, %v7213
        %v7215 = vpop.f32.mrb[0].mxu0
        %v7216 = vpop.f32.mrb[0].mxu0
        %v7217 = vpop.f32.mrb[0].mxu0
        %7218 = vdwg.mxu0
        %v7221 = vcombine.low %v7093, %v7095
        %7223 = vst [vmem:[%s379] sm:$0xff] %v7221
        %vm7224 = vcmask 551936
        %7225 = vst.msk [vmem:[%s379 + $0x8] sm:$0xf] %vm7224, %v7214
        %s7226 = sand.u32 %s187, 1
        %s7227 = scalar_lea.sflag [#allocation8], %s7226
        %s7228 = sand.u32 %s187, 1
        %s7229 = smul.addr %s7228, 12
        %s7230 = scalar_lea.vmem [#allocation18], %s7229
        // Predicated region
        $region77: #{dncnn_forward.1} parent=47 // pred_check
          %p7231 = pneg %p197
        $region78: #{dncnn_forward.1} parent=47 // pred_check_branch
          %7233 = sbr.rel (%p7231) target = $region80
        $region79: #{dncnn_forward.1} parent=47 // pred_region
          %s7235 = ssub.s32 192, 192
          %7236 = vsyncadd %s7227, %s7235
          %s7237 = smul.addr %s27, 3
          %s7238 = smul.addr %s7237, 64
          %s7239 = scalar_lea.hbm %s7, %s7238
          %s7241 = sshll.u32 %s7230, 4
          %s7242 = int_to_ptr.vmem [resolvable:$true] %s7241
          %7244 = dma.vmem_to_hbm [thread:$0]  %s7242, 192, %s7239, %s7227
        $region80: #{dncnn_forward.1} parent=47 // pred_fallthru
          _
      $region48: #{dncnn_forward.1} parent=5 // pred_fallthru
        _
      %p7245 = scmp.le.s32.totalorder 2, %s22
      // Predicated region
      $region81: #{dncnn_forward.1} parent=5 // pred_check
        %p7246 = pneg %p7245
      $region82: #{dncnn_forward.1} parent=5 // pred_check_branch
        %7248 = sbr.rel (%p7246) target = $region84
      $region83: #{dncnn_forward.1} parent=5 // pred_region
        %s7249 = ssub.s32 %s22, 2
        // Predicated region
        $region85: #{dncnn_forward.1} parent=83 // pred_check
          %p7250 = pneg %p203
        $region86: #{dncnn_forward.1} parent=83 // pred_check_branch
          %7252 = sbr.rel (%p7250) target = $region88
        $region87: #{dncnn_forward.1} parent=83 // pred_region
          %s7253 = sand.u32 %s188, 1
          %s7254 = scalar_lea.sflag [#allocation8], %s7253
          %s7255 = sand.u32 %s188, 1
          %s7256 = smul.addr %s7255, 12
          %s7257 = scalar_lea.vmem [#allocation18], %s7256
          %7258 = dma.done %s7254, 192
        $region88: #{dncnn_forward.1} parent=83 // pred_fallthru
          _
      $region84: #{dncnn_forward.1} parent=5 // pred_fallthru
        _
    $region6: #{dncnn_forward.1} parent=1 // loop_footer
      %s26 = sadd.s32 1, %s22
    $region7: #{dncnn_forward.1} parent=1 // loop_footer_branch
      %21 = sbr.rel target = $region3
    $region8: #{dncnn_forward.1} parent=1 // loop_exit
      _
    %7259 = vsyncpa [#allocation7], 1
    %s7260 = scalar_lea.sflag [#allocation7], 1
    %7261 = vsyncpa %s7260, 1
    %7262 = vsyncpa [#allocation10], 1
    %7263 = vsyncpa [#allocation13], 1
    %7264 = vsyncpa [#allocation16], 1
    %7265 = vsyncpa [#allocation8], 1
    %s7266 = scalar_lea.sflag [#allocation8], 1
    %7267 = vsyncpa %s7266, 1

</llo_original>
